<compile_context>
chip_gen: v7x
topology: tpu7x:2x2x1
jax: 0.10.0
libtpu: 0.0.40
codegen_flags: <defaults>
</compile_context>

<pallas_src>
import jax
import jax.numpy as jnp
import numpy as np
from jax.experimental import pallas as pl
from jax.experimental.pallas import tpu as pltpu


def _geometry(D, H, W):
    """Padded-volume geometry and the 27 flat tap shifts."""
    Dp, Hp, Wp = D + 2, H + 2, W + 2
    S = Dp * Hp * Wp
    max_shift = Hp * Wp + Wp + 1
    EXT = ((max_shift + 127) // 128) * 128        # lane-aligned halo extension
    shifts = tuple((kd - 1) * Hp * Wp + (kh - 1) * Wp + (kw - 1)
                   for kd in range(3) for kh in range(3) for kw in range(3))
    return S, EXT, shifts


def _chunks(total, size):
    out, start = [], 0
    while start < total:
        out.append((start, min(size, total - start)))
        start += size
    return out


def _make_kernel(Cin, Cout, S, EXT, shifts, KP1, SC):
    K1 = 27 * Cin
    col_chunks = _chunks(S, SC)

    def kernel(xin_ref, w01_ref, w2_ref, b1_ref, b2_ref, mask_ref,
               out_ref, ext_ref, stk1_ref, stk2_ref, res_ref):
        # Zero only what is needed (cheap, lane-dense): the K-padding rows of
        # the phase-1 im2col scratch and the two halo extensions of the
        # conv2-input buffer.  Done every grid step so it is safe under
        # "parallel" megacore sharding.
        if KP1 > K1:
            stk1_ref[K1:, :] = jnp.zeros((KP1 - K1, SC), jnp.bfloat16)
        ext_ref[:, :EXT] = jnp.zeros((Cout, EXT), jnp.bfloat16)
        ext_ref[:, EXT + S:] = jnp.zeros((Cout, EXT), jnp.bfloat16)

        # ---- phase 1: residual = conv0(x);  o1 = relu(bn1(conv1(x))) ----
        for c0, cs in col_chunks:
            # im2col block (27*Cin, cs) from lane-shifted slices of the input
            for t, s in enumerate(shifts):
                stk1_ref[t * Cin:(t + 1) * Cin, :cs] = (
                    xin_ref[:, EXT + s + c0: EXT + s + c0 + cs])
            # one fused MXU call computes conv0 and conv1 together (K = KP1)
            both = jnp.dot(w01_ref[...], stk1_ref[:, :cs],
                           preferred_element_type=jnp.float32)   # (2*Cout, cs)
            res_ref[:, c0:c0 + cs] = both[:Cout, :]
            o1 = jnp.maximum(both[Cout:, :] + b1_ref[...], 0.0)
            # zeroing the halo positions == zero-padding conv2's input
            o1 = o1 * mask_ref[:, c0:c0 + cs]
            ext_ref[:, EXT + c0: EXT + c0 + cs] = o1.astype(jnp.bfloat16)

        # ---- phase 2: out = relu(bn2(conv2(o1)) + residual) ----
        for c0, cs in col_chunks:
            for t, s in enumerate(shifts):
                stk2_ref[t * Cout:(t + 1) * Cout, :cs] = (
                    ext_ref[:, EXT + s + c0: EXT + s + c0 + cs])
            o2 = jnp.dot(w2_ref[...], stk2_ref[:, :cs],
                         preferred_element_type=jnp.float32)      # (Cout, cs)
            o2 = o2 + b2_ref[...] + res_ref[:, c0:c0 + cs]
            out_ref[:, c0:c0 + cs] = jnp.maximum(o2, 0.0)

    return kernel


def basic_block_forward(x_ncdhw, w0, w1, w2, scale1, shift1, scale2, shift2):
    """x_ncdhw: (N, Cin, D, H, W) f32.  w*: (3,3,3,Cin|Cout,Cout) DHWIO."""
    N, Cin, D, H, W = x_ncdhw.shape
    Cout = w0.shape[-1]
    Dp, Hp, Wp = D + 2, H + 2, W + 2
    S, EXT, shifts = _geometry(D, H, W)
    K1 = 27 * Cin
    KP1 = ((K1 + 127) // 128) * 128     # pad fused-K to a multiple of 128
    SC = min(256, S)                    # lane chunk for the in-kernel dots

    # ---- activations: NCDHW -> channel-major, flattened, lane-extended ----
    xp = jnp.pad(x_ncdhw, ((0, 0), (0, 0), (1, 1), (1, 1), (1, 1)))
    x_flat = xp.reshape(N, Cin, S)
    x_ext = jnp.pad(x_flat, ((0, 0), (0, 0), (EXT, EXT))).astype(jnp.bfloat16)

    # ---- weights: fold BN scales, pack as (Cout, 27*C), cast to bf16 ----
    w0b = w0.astype(jnp.bfloat16)
    w1b = (w1 * scale1).astype(jnp.bfloat16)          # bn1 scale folded
    w2b = (w2 * scale2).astype(jnp.bfloat16)          # bn2 scale folded
    w0p = w0b.reshape(K1, Cout).T                     # (Cout, 27*Cin)
    w1p = w1b.reshape(K1, Cout).T
    w01 = jnp.concatenate([w0p, w1p], axis=0)         # (2*Cout, 27*Cin)
    w01 = jnp.pad(w01, ((0, 0), (0, KP1 - K1)))       # (2*Cout, KP1)
    w2p = w2b.reshape(27 * Cout, Cout).T              # (Cout, 27*Cout)

    b1 = shift1.reshape(Cout, 1).astype(jnp.float32)
    b2 = shift2.reshape(Cout, 1).astype(jnp.float32)

    # interior mask: 1 at valid output (= interior padded) positions
    m = np.zeros((Dp, Hp, Wp), np.float32)
    m[1:-1, 1:-1, 1:-1] = 1.0
    mask = jnp.asarray(m.reshape(1, S))

    kernel = _make_kernel(Cin, Cout, S, EXT, shifts, KP1, SC)

    def batch_spec(shape):
        return pl.BlockSpec((None,) + shape, lambda n: (n, 0, 0))

    def bcast_spec(shape):
        return pl.BlockSpec(shape, lambda n: (0, 0))

    out_flat = pl.pallas_call(
        kernel,
        out_shape=jax.ShapeDtypeStruct((N, Cout, S), jnp.float32),
        grid=(N,),
        in_specs=[
            batch_spec((Cin, S + 2 * EXT)),       # x (flat, lane-extended)
            bcast_spec((2 * Cout, KP1)),          # conv0|conv1 weight pack
            bcast_spec((Cout, 27 * Cout)),        # conv2 weight pack
            bcast_spec((Cout, 1)),                # bn1 shift
            bcast_spec((Cout, 1)),                # bn2 shift
            bcast_spec((1, S)),                   # interior mask
        ],
        out_specs=batch_spec((Cout, S)),
        scratch_shapes=[
            pltpu.VMEM((Cout, S + 2 * EXT), jnp.bfloat16),  # conv2 input (zero-padded)
            pltpu.VMEM((KP1, SC), jnp.bfloat16),            # phase-1 im2col block
            pltpu.VMEM((27 * Cout, SC), jnp.bfloat16),      # phase-2 im2col block
            pltpu.VMEM((Cout, S), jnp.float32),             # residual (conv0 output)
        ],
        compiler_params=pltpu.CompilerParams(
            dimension_semantics=("parallel",)),
    )(x_ext, w01, w2p, b1, b2, mask)

    # drop halo positions; result is already NCDHW
    out = out_flat.reshape(N, Cout, Dp, Hp, Wp)[:, :, 1:-1, 1:-1, 1:-1]
    return out


def _reference_forward(x, w0, w1, w2, s1, b1, s2, b2):
    """Pure-JAX reference with the same numerics (bf16 MXU inputs, f32 acc,
    BN scales folded before the bf16 cast) so the check is tight."""
    xb = jnp.transpose(x, (0, 2, 3, 4, 1)).astype(jnp.bfloat16)
    w0b = w0.astype(jnp.bfloat16)
    w1b = (w1 * s1).astype(jnp.bfloat16)
    w2b = (w2 * s2).astype(jnp.bfloat16)
    conv = lambda v, w: jax.lax.conv_general_dilated(
        v, w, window_strides=(1, 1, 1), padding="SAME",
        dimension_numbers=("NDHWC", "DHWIO", "NDHWC"),
        preferred_element_type=jnp.float32)
    residual = conv(xb, w0b)
    o1 = jnp.maximum(conv(xb, w1b) + b1, 0.0)
    o2 = conv(o1.astype(jnp.bfloat16), w2b) + b2
    out = jnp.maximum(o2 + residual, 0.0)
    return jnp.transpose(out, (0, 4, 1, 2, 3))


if __name__ == "__main__":
    # Small shapes consistent with the module: in_planes=4, planes=8, stride=1
    N, Cin, Cout = 2, 4, 8
    D = H = W = 8

    key = jax.random.PRNGKey(0)
    kx, k0, k1, k2, kg1, kb1, kg2, kb2 = jax.random.split(key, 8)

    x = jax.random.normal(kx, (N, Cin, D, H, W), dtype=jnp.float32)

    # conv weights (DHWIO), kaiming-ish scale, no bias (matches conv3x3x3)
    fan_in0 = Cin * 27
    fan_in2 = Cout * 27
    w0 = jax.random.normal(k0, (3, 3, 3, Cin, Cout), jnp.float32) / np.sqrt(fan_in0)
    w1 = jax.random.normal(k1, (3, 3, 3, Cin, Cout), jnp.float32) / np.sqrt(fan_in0)
    w2 = jax.random.normal(k2, (3, 3, 3, Cout, Cout), jnp.float32) / np.sqrt(fan_in2)

    # BatchNorm3d (inference form): running_mean=0, running_var=1, eps=1e-5
    eps = 1e-5
    gamma1 = 1.0 + 0.1 * jax.random.normal(kg1, (Cout,), jnp.float32)
    beta1 = 0.1 * jax.random.normal(kb1, (Cout,), jnp.float32)
    gamma2 = 1.0 + 0.1 * jax.random.normal(kg2, (Cout,), jnp.float32)
    beta2 = 0.1 * jax.random.normal(kb2, (Cout,), jnp.float32)
    scale1 = gamma1 / jnp.sqrt(1.0 + eps)
    shift1 = beta1
    scale2 = gamma2 / jnp.sqrt(1.0 + eps)
    shift2 = beta2

    fwd = jax.jit(basic_block_forward)
    out = jax.block_until_ready(
        fwd(x, w0, w1, w2, scale1, shift1, scale2, shift2))
    ref = jax.block_until_ready(
        _reference_forward(x, w0, w1, w2, scale1, shift1, scale2, shift2))

    assert out.shape == (N, Cout, D, H, W), out.shape
    np.testing.assert_allclose(np.asarray(out), np.asarray(ref),
                               rtol=2e-3, atol=2e-3)
    print("KERNEL_OK")
</pallas_src>

<mosaic_0001>
module attributes {stable_mosaic.version = 11 : i64} {
  func.func @kernel(%arg0: i32, %arg1: memref<1x4x1256xbf16, #tpu.memory_space<vmem>>, %arg2: memref<16x128xbf16, #tpu.memory_space<vmem>>, %arg3: memref<8x216xbf16, #tpu.memory_space<vmem>>, %arg4: memref<8x1xf32, #tpu.memory_space<vmem>>, %arg5: memref<8x1xf32, #tpu.memory_space<vmem>>, %arg6: memref<1x1000xf32, #tpu.memory_space<vmem>>, %arg7: memref<1x8x1000xf32, #tpu.memory_space<vmem>>, %arg8: memref<8x1256xbf16, #tpu.memory_space<vmem>>, %arg9: memref<128x256xbf16, #tpu.memory_space<vmem>>, %arg10: memref<216x256xbf16, #tpu.memory_space<vmem>>, %arg11: memref<8x1000xf32, #tpu.memory_space<vmem>>) attributes {dimension_semantics = [#tpu.dimension_semantics<parallel>], iteration_bounds = array<i64: 2>, scalar_prefetch = 0 : i64, scratch_operands = 4 : i64, tpu.core_type = #tpu.core_type<tc>, window_params = [{transform_indices = @transform_0, window_bounds = array<i64: 1, 4, 1256>}, {pipeline_mode = #tpu.pipeline_mode<synchronous>, transform_indices = @transform_1, window_bounds = array<i64: 16, 128>}, {pipeline_mode = #tpu.pipeline_mode<synchronous>, transform_indices = @transform_2, window_bounds = array<i64: 8, 216>}, {pipeline_mode = #tpu.pipeline_mode<synchronous>, transform_indices = @transform_3, window_bounds = array<i64: 8, 1>}, {pipeline_mode = #tpu.pipeline_mode<synchronous>, transform_indices = @transform_4, window_bounds = array<i64: 8, 1>}, {pipeline_mode = #tpu.pipeline_mode<synchronous>, transform_indices = @transform_5, window_bounds = array<i64: 1, 1000>}, {transform_indices = @transform_6, window_bounds = array<i64: 1, 8, 1000>}]} {
    %cst = arith.constant 0.000000e+00 : bf16
    %0 = vector.broadcast %cst : bf16 to vector<20x256xbf16>
    %c108 = arith.constant 108 : index
    %c0 = arith.constant 0 : index
    %1 = vector.load %arg9[%c108, %c0] : memref<128x256xbf16, #tpu.memory_space<vmem>>, vector<20x256xbf16>
    tpu.vector_store %arg9[%c108, %c0], %0 {strides = array<i32>} : memref<128x256xbf16, #tpu.memory_space<vmem>>, vector<20x256xbf16>,
    %cst_0 = arith.constant 0.000000e+00 : bf16
    %2 = vector.broadcast %cst_0 : bf16 to vector<8x128xbf16>
    %c0_1 = arith.constant 0 : index
    %c0_2 = arith.constant 0 : index
    %3 = vector.load %arg8[%c0_1, %c0_2] : memref<8x1256xbf16, #tpu.memory_space<vmem>>, vector<8x128xbf16>
    tpu.vector_store %arg8[%c0_1, %c0_2], %2 {strides = array<i32>} : memref<8x1256xbf16, #tpu.memory_space<vmem>>, vector<8x128xbf16>,
    %cst_3 = arith.constant 0.000000e+00 : bf16
    %4 = vector.broadcast %cst_3 : bf16 to vector<8x128xbf16>
    %c0_4 = arith.constant 0 : index
    %c1128 = arith.constant 1128 : index
    %5 = vector.load %arg8[%c0_4, %c1128] : memref<8x1256xbf16, #tpu.memory_space<vmem>>, vector<8x128xbf16>
    tpu.vector_store %arg8[%c0_4, %c1128], %4 {strides = array<i32>} : memref<8x1256xbf16, #tpu.memory_space<vmem>>, vector<8x128xbf16>,
    %c0_5 = arith.constant 0 : index
    %c0_6 = arith.constant 0 : index
    %c17 = arith.constant 17 : index
    %6 = vector.load %arg1[%c0_5, %c0_6, %c17] : memref<1x4x1256xbf16, #tpu.memory_space<vmem>>, vector<1x4x256xbf16>
    %7 = vector.shape_cast %6 : vector<1x4x256xbf16> to vector<4x256xbf16>
    %c0_7 = arith.constant 0 : index
    %c0_8 = arith.constant 0 : index
    %8 = vector.load %arg9[%c0_7, %c0_8] : memref<128x256xbf16, #tpu.memory_space<vmem>>, vector<4x256xbf16>
    tpu.vector_store %arg9[%c0_7, %c0_8], %7 {strides = array<i32>} : memref<128x256xbf16, #tpu.memory_space<vmem>>, vector<4x256xbf16>,
    %c0_9 = arith.constant 0 : index
    %c0_10 = arith.constant 0 : index
    %c18 = arith.constant 18 : index
    %9 = vector.load %arg1[%c0_9, %c0_10, %c18] : memref<1x4x1256xbf16, #tpu.memory_space<vmem>>, vector<1x4x256xbf16>
    %10 = vector.shape_cast %9 : vector<1x4x256xbf16> to vector<4x256xbf16>
    %c4 = arith.constant 4 : index
    %c0_11 = arith.constant 0 : index
    %11 = vector.load %arg9[%c4, %c0_11] : memref<128x256xbf16, #tpu.memory_space<vmem>>, vector<4x256xbf16>
    tpu.vector_store %arg9[%c4, %c0_11], %10 {strides = array<i32>} : memref<128x256xbf16, #tpu.memory_space<vmem>>, vector<4x256xbf16>,
    %c0_12 = arith.constant 0 : index
    %c0_13 = arith.constant 0 : index
    %c19 = arith.constant 19 : index
    %12 = vector.load %arg1[%c0_12, %c0_13, %c19] : memref<1x4x1256xbf16, #tpu.memory_space<vmem>>, vector<1x4x256xbf16>
    %13 = vector.shape_cast %12 : vector<1x4x256xbf16> to vector<4x256xbf16>
    %c8 = arith.constant 8 : index
    %c0_14 = arith.constant 0 : index
    %14 = vector.load %arg9[%c8, %c0_14] : memref<128x256xbf16, #tpu.memory_space<vmem>>, vector<4x256xbf16>
    tpu.vector_store %arg9[%c8, %c0_14], %13 {strides = array<i32>} : memref<128x256xbf16, #tpu.memory_space<vmem>>, vector<4x256xbf16>,
    %c0_15 = arith.constant 0 : index
    %c0_16 = arith.constant 0 : index
    %c27 = arith.constant 27 : index
    %15 = vector.load %arg1[%c0_15, %c0_16, %c27] : memref<1x4x1256xbf16, #tpu.memory_space<vmem>>, vector<1x4x256xbf16>
    %16 = vector.shape_cast %15 : vector<1x4x256xbf16> to vector<4x256xbf16>
    %c12 = arith.constant 12 : index
    %c0_17 = arith.constant 0 : index
    %17 = vector.load %arg9[%c12, %c0_17] : memref<128x256xbf16, #tpu.memory_space<vmem>>, vector<4x256xbf16>
    tpu.vector_store %arg9[%c12, %c0_17], %16 {strides = array<i32>} : memref<128x256xbf16, #tpu.memory_space<vmem>>, vector<4x256xbf16>,
    %c0_18 = arith.constant 0 : index
    %c0_19 = arith.constant 0 : index
    %c28 = arith.constant 28 : index
    %18 = vector.load %arg1[%c0_18, %c0_19, %c28] : memref<1x4x1256xbf16, #tpu.memory_space<vmem>>, vector<1x4x256xbf16>
    %19 = vector.shape_cast %18 : vector<1x4x256xbf16> to vector<4x256xbf16>
    %c16 = arith.constant 16 : index
    %c0_20 = arith.constant 0 : index
    %20 = vector.load %arg9[%c16, %c0_20] : memref<128x256xbf16, #tpu.memory_space<vmem>>, vector<4x256xbf16>
    tpu.vector_store %arg9[%c16, %c0_20], %19 {strides = array<i32>} : memref<128x256xbf16, #tpu.memory_space<vmem>>, vector<4x256xbf16>,
    %c0_21 = arith.constant 0 : index
    %c0_22 = arith.constant 0 : index
    %c29 = arith.constant 29 : index
    %21 = vector.load %arg1[%c0_21, %c0_22, %c29] : memref<1x4x1256xbf16, #tpu.memory_space<vmem>>, vector<1x4x256xbf16>
    %22 = vector.shape_cast %21 : vector<1x4x256xbf16> to vector<4x256xbf16>
    %c20 = arith.constant 20 : index
    %c0_23 = arith.constant 0 : index
    %23 = vector.load %arg9[%c20, %c0_23] : memref<128x256xbf16, #tpu.memory_space<vmem>>, vector<4x256xbf16>
    tpu.vector_store %arg9[%c20, %c0_23], %22 {strides = array<i32>} : memref<128x256xbf16, #tpu.memory_space<vmem>>, vector<4x256xbf16>,
    %c0_24 = arith.constant 0 : index
    %c0_25 = arith.constant 0 : index
    %c37 = arith.constant 37 : index
    %24 = vector.load %arg1[%c0_24, %c0_25, %c37] : memref<1x4x1256xbf16, #tpu.memory_space<vmem>>, vector<1x4x256xbf16>
    %25 = vector.shape_cast %24 : vector<1x4x256xbf16> to vector<4x256xbf16>
    %c24 = arith.constant 24 : index
    %c0_26 = arith.constant 0 : index
    %26 = vector.load %arg9[%c24, %c0_26] : memref<128x256xbf16, #tpu.memory_space<vmem>>, vector<4x256xbf16>
    tpu.vector_store %arg9[%c24, %c0_26], %25 {strides = array<i32>} : memref<128x256xbf16, #tpu.memory_space<vmem>>, vector<4x256xbf16>,
    %c0_27 = arith.constant 0 : index
    %c0_28 = arith.constant 0 : index
    %c38 = arith.constant 38 : index
    %27 = vector.load %arg1[%c0_27, %c0_28, %c38] : memref<1x4x1256xbf16, #tpu.memory_space<vmem>>, vector<1x4x256xbf16>
    %28 = vector.shape_cast %27 : vector<1x4x256xbf16> to vector<4x256xbf16>
    %c28_29 = arith.constant 28 : index
    %c0_30 = arith.constant 0 : index
    %29 = vector.load %arg9[%c28_29, %c0_30] : memref<128x256xbf16, #tpu.memory_space<vmem>>, vector<4x256xbf16>
    tpu.vector_store %arg9[%c28_29, %c0_30], %28 {strides = array<i32>} : memref<128x256xbf16, #tpu.memory_space<vmem>>, vector<4x256xbf16>,
    %c0_31 = arith.constant 0 : index
    %c0_32 = arith.constant 0 : index
    %c39 = arith.constant 39 : index
    %30 = vector.load %arg1[%c0_31, %c0_32, %c39] : memref<1x4x1256xbf16, #tpu.memory_space<vmem>>, vector<1x4x256xbf16>
    %31 = vector.shape_cast %30 : vector<1x4x256xbf16> to vector<4x256xbf16>
    %c32 = arith.constant 32 : index
    %c0_33 = arith.constant 0 : index
    %32 = vector.load %arg9[%c32, %c0_33] : memref<128x256xbf16, #tpu.memory_space<vmem>>, vector<4x256xbf16>
    tpu.vector_store %arg9[%c32, %c0_33], %31 {strides = array<i32>} : memref<128x256xbf16, #tpu.memory_space<vmem>>, vector<4x256xbf16>,
    %c0_34 = arith.constant 0 : index
    %c0_35 = arith.constant 0 : index
    %c117 = arith.constant 117 : index
    %33 = vector.load %arg1[%c0_34, %c0_35, %c117] : memref<1x4x1256xbf16, #tpu.memory_space<vmem>>, vector<1x4x256xbf16>
    %34 = vector.shape_cast %33 : vector<1x4x256xbf16> to vector<4x256xbf16>
    %c36 = arith.constant 36 : index
    %c0_36 = arith.constant 0 : index
    %35 = vector.load %arg9[%c36, %c0_36] : memref<128x256xbf16, #tpu.memory_space<vmem>>, vector<4x256xbf16>
    tpu.vector_store %arg9[%c36, %c0_36], %34 {strides = array<i32>} : memref<128x256xbf16, #tpu.memory_space<vmem>>, vector<4x256xbf16>,
    %c0_37 = arith.constant 0 : index
    %c0_38 = arith.constant 0 : index
    %c118 = arith.constant 118 : index
    %36 = vector.load %arg1[%c0_37, %c0_38, %c118] : memref<1x4x1256xbf16, #tpu.memory_space<vmem>>, vector<1x4x256xbf16>
    %37 = vector.shape_cast %36 : vector<1x4x256xbf16> to vector<4x256xbf16>
    %c40 = arith.constant 40 : index
    %c0_39 = arith.constant 0 : index
    %38 = vector.load %arg9[%c40, %c0_39] : memref<128x256xbf16, #tpu.memory_space<vmem>>, vector<4x256xbf16>
    tpu.vector_store %arg9[%c40, %c0_39], %37 {strides = array<i32>} : memref<128x256xbf16, #tpu.memory_space<vmem>>, vector<4x256xbf16>,
    %c0_40 = arith.constant 0 : index
    %c0_41 = arith.constant 0 : index
    %c119 = arith.constant 119 : index
    %39 = vector.load %arg1[%c0_40, %c0_41, %c119] : memref<1x4x1256xbf16, #tpu.memory_space<vmem>>, vector<1x4x256xbf16>
    %40 = vector.shape_cast %39 : vector<1x4x256xbf16> to vector<4x256xbf16>
    %c44 = arith.constant 44 : index
    %c0_42 = arith.constant 0 : index
    %41 = vector.load %arg9[%c44, %c0_42] : memref<128x256xbf16, #tpu.memory_space<vmem>>, vector<4x256xbf16>
    tpu.vector_store %arg9[%c44, %c0_42], %40 {strides = array<i32>} : memref<128x256xbf16, #tpu.memory_space<vmem>>, vector<4x256xbf16>,
    %c0_43 = arith.constant 0 : index
    %c0_44 = arith.constant 0 : index
    %c127 = arith.constant 127 : index
    %42 = vector.load %arg1[%c0_43, %c0_44, %c127] : memref<1x4x1256xbf16, #tpu.memory_space<vmem>>, vector<1x4x256xbf16>
    %43 = vector.shape_cast %42 : vector<1x4x256xbf16> to vector<4x256xbf16>
    %c48 = arith.constant 48 : index
    %c0_45 = arith.constant 0 : index
    %44 = vector.load %arg9[%c48, %c0_45] : memref<128x256xbf16, #tpu.memory_space<vmem>>, vector<4x256xbf16>
    tpu.vector_store %arg9[%c48, %c0_45], %43 {strides = array<i32>} : memref<128x256xbf16, #tpu.memory_space<vmem>>, vector<4x256xbf16>,
    %c0_46 = arith.constant 0 : index
    %c0_47 = arith.constant 0 : index
    %c128 = arith.constant 128 : index
    %45 = vector.load %arg1[%c0_46, %c0_47, %c128] : memref<1x4x1256xbf16, #tpu.memory_space<vmem>>, vector<1x4x256xbf16>
    %46 = vector.shape_cast %45 : vector<1x4x256xbf16> to vector<4x256xbf16>
    %c52 = arith.constant 52 : index
    %c0_48 = arith.constant 0 : index
    %47 = vector.load %arg9[%c52, %c0_48] : memref<128x256xbf16, #tpu.memory_space<vmem>>, vector<4x256xbf16>
    tpu.vector_store %arg9[%c52, %c0_48], %46 {strides = array<i32>} : memref<128x256xbf16, #tpu.memory_space<vmem>>, vector<4x256xbf16>,
    %c0_49 = arith.constant 0 : index
    %c0_50 = arith.constant 0 : index
    %c129 = arith.constant 129 : index
    %48 = vector.load %arg1[%c0_49, %c0_50, %c129] : memref<1x4x1256xbf16, #tpu.memory_space<vmem>>, vector<1x4x256xbf16>
    %49 = vector.shape_cast %48 : vector<1x4x256xbf16> to vector<4x256xbf16>
    %c56 = arith.constant 56 : index
    %c0_51 = arith.constant 0 : index
    %50 = vector.load %arg9[%c56, %c0_51] : memref<128x256xbf16, #tpu.memory_space<vmem>>, vector<4x256xbf16>
    tpu.vector_store %arg9[%c56, %c0_51], %49 {strides = array<i32>} : memref<128x256xbf16, #tpu.memory_space<vmem>>, vector<4x256xbf16>,
    %c0_52 = arith.constant 0 : index
    %c0_53 = arith.constant 0 : index
    %c137 = arith.constant 137 : index
    %51 = vector.load %arg1[%c0_52, %c0_53, %c137] : memref<1x4x1256xbf16, #tpu.memory_space<vmem>>, vector<1x4x256xbf16>
    %52 = vector.shape_cast %51 : vector<1x4x256xbf16> to vector<4x256xbf16>
    %c60 = arith.constant 60 : index
    %c0_54 = arith.constant 0 : index
    %53 = vector.load %arg9[%c60, %c0_54] : memref<128x256xbf16, #tpu.memory_space<vmem>>, vector<4x256xbf16>
    tpu.vector_store %arg9[%c60, %c0_54], %52 {strides = array<i32>} : memref<128x256xbf16, #tpu.memory_space<vmem>>, vector<4x256xbf16>,
    %c0_55 = arith.constant 0 : index
    %c0_56 = arith.constant 0 : index
    %c138 = arith.constant 138 : index
    %54 = vector.load %arg1[%c0_55, %c0_56, %c138] : memref<1x4x1256xbf16, #tpu.memory_space<vmem>>, vector<1x4x256xbf16>
    %55 = vector.shape_cast %54 : vector<1x4x256xbf16> to vector<4x256xbf16>
    %c64 = arith.constant 64 : index
    %c0_57 = arith.constant 0 : index
    %56 = vector.load %arg9[%c64, %c0_57] : memref<128x256xbf16, #tpu.memory_space<vmem>>, vector<4x256xbf16>
    tpu.vector_store %arg9[%c64, %c0_57], %55 {strides = array<i32>} : memref<128x256xbf16, #tpu.memory_space<vmem>>, vector<4x256xbf16>,
    %c0_58 = arith.constant 0 : index
    %c0_59 = arith.constant 0 : index
    %c139 = arith.constant 139 : index
    %57 = vector.load %arg1[%c0_58, %c0_59, %c139] : memref<1x4x1256xbf16, #tpu.memory_space<vmem>>, vector<1x4x256xbf16>
    %58 = vector.shape_cast %57 : vector<1x4x256xbf16> to vector<4x256xbf16>
    %c68 = arith.constant 68 : index
    %c0_60 = arith.constant 0 : index
    %59 = vector.load %arg9[%c68, %c0_60] : memref<128x256xbf16, #tpu.memory_space<vmem>>, vector<4x256xbf16>
    tpu.vector_store %arg9[%c68, %c0_60], %58 {strides = array<i32>} : memref<128x256xbf16, #tpu.memory_space<vmem>>, vector<4x256xbf16>,
    %c0_61 = arith.constant 0 : index
    %c0_62 = arith.constant 0 : index
    %c217 = arith.constant 217 : index
    %60 = vector.load %arg1[%c0_61, %c0_62, %c217] : memref<1x4x1256xbf16, #tpu.memory_space<vmem>>, vector<1x4x256xbf16>
    %61 = vector.shape_cast %60 : vector<1x4x256xbf16> to vector<4x256xbf16>
    %c72 = arith.constant 72 : index
    %c0_63 = arith.constant 0 : index
    %62 = vector.load %arg9[%c72, %c0_63] : memref<128x256xbf16, #tpu.memory_space<vmem>>, vector<4x256xbf16>
    tpu.vector_store %arg9[%c72, %c0_63], %61 {strides = array<i32>} : memref<128x256xbf16, #tpu.memory_space<vmem>>, vector<4x256xbf16>,
    %c0_64 = arith.constant 0 : index
    %c0_65 = arith.constant 0 : index
    %c218 = arith.constant 218 : index
    %63 = vector.load %arg1[%c0_64, %c0_65, %c218] : memref<1x4x1256xbf16, #tpu.memory_space<vmem>>, vector<1x4x256xbf16>
    %64 = vector.shape_cast %63 : vector<1x4x256xbf16> to vector<4x256xbf16>
    %c76 = arith.constant 76 : index
    %c0_66 = arith.constant 0 : index
    %65 = vector.load %arg9[%c76, %c0_66] : memref<128x256xbf16, #tpu.memory_space<vmem>>, vector<4x256xbf16>
    tpu.vector_store %arg9[%c76, %c0_66], %64 {strides = array<i32>} : memref<128x256xbf16, #tpu.memory_space<vmem>>, vector<4x256xbf16>,
    %c0_67 = arith.constant 0 : index
    %c0_68 = arith.constant 0 : index
    %c219 = arith.constant 219 : index
    %66 = vector.load %arg1[%c0_67, %c0_68, %c219] : memref<1x4x1256xbf16, #tpu.memory_space<vmem>>, vector<1x4x256xbf16>
    %67 = vector.shape_cast %66 : vector<1x4x256xbf16> to vector<4x256xbf16>
    %c80 = arith.constant 80 : index
    %c0_69 = arith.constant 0 : index
    %68 = vector.load %arg9[%c80, %c0_69] : memref<128x256xbf16, #tpu.memory_space<vmem>>, vector<4x256xbf16>
    tpu.vector_store %arg9[%c80, %c0_69], %67 {strides = array<i32>} : memref<128x256xbf16, #tpu.memory_space<vmem>>, vector<4x256xbf16>,
    %c0_70 = arith.constant 0 : index
    %c0_71 = arith.constant 0 : index
    %c227 = arith.constant 227 : index
    %69 = vector.load %arg1[%c0_70, %c0_71, %c227] : memref<1x4x1256xbf16, #tpu.memory_space<vmem>>, vector<1x4x256xbf16>
    %70 = vector.shape_cast %69 : vector<1x4x256xbf16> to vector<4x256xbf16>
    %c84 = arith.constant 84 : index
    %c0_72 = arith.constant 0 : index
    %71 = vector.load %arg9[%c84, %c0_72] : memref<128x256xbf16, #tpu.memory_space<vmem>>, vector<4x256xbf16>
    tpu.vector_store %arg9[%c84, %c0_72], %70 {strides = array<i32>} : memref<128x256xbf16, #tpu.memory_space<vmem>>, vector<4x256xbf16>,
    %c0_73 = arith.constant 0 : index
    %c0_74 = arith.constant 0 : index
    %c228 = arith.constant 228 : index
    %72 = vector.load %arg1[%c0_73, %c0_74, %c228] : memref<1x4x1256xbf16, #tpu.memory_space<vmem>>, vector<1x4x256xbf16>
    %73 = vector.shape_cast %72 : vector<1x4x256xbf16> to vector<4x256xbf16>
    %c88 = arith.constant 88 : index
    %c0_75 = arith.constant 0 : index
    %74 = vector.load %arg9[%c88, %c0_75] : memref<128x256xbf16, #tpu.memory_space<vmem>>, vector<4x256xbf16>
    tpu.vector_store %arg9[%c88, %c0_75], %73 {strides = array<i32>} : memref<128x256xbf16, #tpu.memory_space<vmem>>, vector<4x256xbf16>,
    %c0_76 = arith.constant 0 : index
    %c0_77 = arith.constant 0 : index
    %c229 = arith.constant 229 : index
    %75 = vector.load %arg1[%c0_76, %c0_77, %c229] : memref<1x4x1256xbf16, #tpu.memory_space<vmem>>, vector<1x4x256xbf16>
    %76 = vector.shape_cast %75 : vector<1x4x256xbf16> to vector<4x256xbf16>
    %c92 = arith.constant 92 : index
    %c0_78 = arith.constant 0 : index
    %77 = vector.load %arg9[%c92, %c0_78] : memref<128x256xbf16, #tpu.memory_space<vmem>>, vector<4x256xbf16>
    tpu.vector_store %arg9[%c92, %c0_78], %76 {strides = array<i32>} : memref<128x256xbf16, #tpu.memory_space<vmem>>, vector<4x256xbf16>,
    %c0_79 = arith.constant 0 : index
    %c0_80 = arith.constant 0 : index
    %c237 = arith.constant 237 : index
    %78 = vector.load %arg1[%c0_79, %c0_80, %c237] : memref<1x4x1256xbf16, #tpu.memory_space<vmem>>, vector<1x4x256xbf16>
    %79 = vector.shape_cast %78 : vector<1x4x256xbf16> to vector<4x256xbf16>
    %c96 = arith.constant 96 : index
    %c0_81 = arith.constant 0 : index
    %80 = vector.load %arg9[%c96, %c0_81] : memref<128x256xbf16, #tpu.memory_space<vmem>>, vector<4x256xbf16>
    tpu.vector_store %arg9[%c96, %c0_81], %79 {strides = array<i32>} : memref<128x256xbf16, #tpu.memory_space<vmem>>, vector<4x256xbf16>,
    %c0_82 = arith.constant 0 : index
    %c0_83 = arith.constant 0 : index
    %c238 = arith.constant 238 : index
    %81 = vector.load %arg1[%c0_82, %c0_83, %c238] : memref<1x4x1256xbf16, #tpu.memory_space<vmem>>, vector<1x4x256xbf16>
    %82 = vector.shape_cast %81 : vector<1x4x256xbf16> to vector<4x256xbf16>
    %c100 = arith.constant 100 : index
    %c0_84 = arith.constant 0 : index
    %83 = vector.load %arg9[%c100, %c0_84] : memref<128x256xbf16, #tpu.memory_space<vmem>>, vector<4x256xbf16>
    tpu.vector_store %arg9[%c100, %c0_84], %82 {strides = array<i32>} : memref<128x256xbf16, #tpu.memory_space<vmem>>, vector<4x256xbf16>,
    %c0_85 = arith.constant 0 : index
    %c0_86 = arith.constant 0 : index
    %c239 = arith.constant 239 : index
    %84 = vector.load %arg1[%c0_85, %c0_86, %c239] : memref<1x4x1256xbf16, #tpu.memory_space<vmem>>, vector<1x4x256xbf16>
    %85 = vector.shape_cast %84 : vector<1x4x256xbf16> to vector<4x256xbf16>
    %c104 = arith.constant 104 : index
    %c0_87 = arith.constant 0 : index
    %86 = vector.load %arg9[%c104, %c0_87] : memref<128x256xbf16, #tpu.memory_space<vmem>>, vector<4x256xbf16>
    tpu.vector_store %arg9[%c104, %c0_87], %85 {strides = array<i32>} : memref<128x256xbf16, #tpu.memory_space<vmem>>, vector<4x256xbf16>,
    %c0_88 = arith.constant 0 : index
    %c0_89 = arith.constant 0 : index
    %87 = vector.load %arg2[%c0_88, %c0_89] : memref<16x128xbf16, #tpu.memory_space<vmem>>, vector<16x128xbf16>
    %c0_90 = arith.constant 0 : index
    %c0_91 = arith.constant 0 : index
    %88 = vector.load %arg9[%c0_90, %c0_91] : memref<128x256xbf16, #tpu.memory_space<vmem>>, vector<128x256xbf16>
    %cst_92 = arith.constant dense<0.000000e+00> : vector<16x256xf32>
    %89 = tpu.matmul %87, %88, %cst_92 {dimension_numbers = #tpu.dot_dimension_numbers<[1], [0], [0], [1], [0, 0, 1, 1], [], []>} : vector<16x128xbf16>, vector<128x256xbf16>, vector<16x256xf32> -> vector<16x256xf32>
    %90 = vector.extract_strided_slice %89 {offsets = [0, 0], sizes = [8, 256], strides = [1, 1]} : vector<16x256xf32> to vector<8x256xf32>
    %c0_93 = arith.constant 0 : index
    %c0_94 = arith.constant 0 : index
    %91 = vector.load %arg11[%c0_93, %c0_94] : memref<8x1000xf32, #tpu.memory_space<vmem>>, vector<8x256xf32>
    tpu.vector_store %arg11[%c0_93, %c0_94], %90 {strides = array<i32>} : memref<8x1000xf32, #tpu.memory_space<vmem>>, vector<8x256xf32>,
    %92 = vector.extract_strided_slice %89 {offsets = [8, 0], sizes = [8, 256], strides = [1, 1]} : vector<16x256xf32> to vector<8x256xf32>
    %c0_95 = arith.constant 0 : index
    %c0_96 = arith.constant 0 : index
    %93 = vector.load %arg4[%c0_95, %c0_96] : memref<8x1xf32, #tpu.memory_space<vmem>>, vector<8x1xf32>
    %94 = vector.broadcast %93 : vector<8x1xf32> to vector<8x256xf32>
    %95 = arith.addf %92, %94 : vector<8x256xf32>
    %cst_97 = arith.constant 0.000000e+00 : f32
    %96 = vector.broadcast %cst_97 : f32 to vector<8x256xf32>
    %97 = arith.maximumf %95, %96 : vector<8x256xf32>
    %c0_98 = arith.constant 0 : index
    %c0_99 = arith.constant 0 : index
    %98 = vector.load %arg6[%c0_98, %c0_99] : memref<1x1000xf32, #tpu.memory_space<vmem>>, vector<1x256xf32>
    %99 = vector.broadcast %98 : vector<1x256xf32> to vector<8x256xf32>
    %100 = arith.mulf %97, %99 : vector<8x256xf32>
    %101 = arith.truncf %100 : vector<8x256xf32> to vector<8x256xbf16>
    %c0_100 = arith.constant 0 : index
    %c128_101 = arith.constant 128 : index
    %102 = vector.load %arg8[%c0_100, %c128_101] : memref<8x1256xbf16, #tpu.memory_space<vmem>>, vector<8x256xbf16>
    tpu.vector_store %arg8[%c0_100, %c128_101], %101 {strides = array<i32>} : memref<8x1256xbf16, #tpu.memory_space<vmem>>, vector<8x256xbf16>,
    %c0_102 = arith.constant 0 : index
    %c0_103 = arith.constant 0 : index
    %c273 = arith.constant 273 : index
    %103 = vector.load %arg1[%c0_102, %c0_103, %c273] : memref<1x4x1256xbf16, #tpu.memory_space<vmem>>, vector<1x4x256xbf16>
    %104 = vector.shape_cast %103 : vector<1x4x256xbf16> to vector<4x256xbf16>
    %c0_104 = arith.constant 0 : index
    %c0_105 = arith.constant 0 : index
    %105 = vector.load %arg9[%c0_104, %c0_105] : memref<128x256xbf16, #tpu.memory_space<vmem>>, vector<4x256xbf16>
    tpu.vector_store %arg9[%c0_104, %c0_105], %104 {strides = array<i32>} : memref<128x256xbf16, #tpu.memory_space<vmem>>, vector<4x256xbf16>,
    %c0_106 = arith.constant 0 : index
    %c0_107 = arith.constant 0 : index
    %c274 = arith.constant 274 : index
    %106 = vector.load %arg1[%c0_106, %c0_107, %c274] : memref<1x4x1256xbf16, #tpu.memory_space<vmem>>, vector<1x4x256xbf16>
    %107 = vector.shape_cast %106 : vector<1x4x256xbf16> to vector<4x256xbf16>
    %c4_108 = arith.constant 4 : index
    %c0_109 = arith.constant 0 : index
    %108 = vector.load %arg9[%c4_108, %c0_109] : memref<128x256xbf16, #tpu.memory_space<vmem>>, vector<4x256xbf16>
    tpu.vector_store %arg9[%c4_108, %c0_109], %107 {strides = array<i32>} : memref<128x256xbf16, #tpu.memory_space<vmem>>, vector<4x256xbf16>,
    %c0_110 = arith.constant 0 : index
    %c0_111 = arith.constant 0 : index
    %c275 = arith.constant 275 : index
    %109 = vector.load %arg1[%c0_110, %c0_111, %c275] : memref<1x4x1256xbf16, #tpu.memory_space<vmem>>, vector<1x4x256xbf16>
    %110 = vector.shape_cast %109 : vector<1x4x256xbf16> to vector<4x256xbf16>
    %c8_112 = arith.constant 8 : index
    %c0_113 = arith.constant 0 : index
    %111 = vector.load %arg9[%c8_112, %c0_113] : memref<128x256xbf16, #tpu.memory_space<vmem>>, vector<4x256xbf16>
    tpu.vector_store %arg9[%c8_112, %c0_113], %110 {strides = array<i32>} : memref<128x256xbf16, #tpu.memory_space<vmem>>, vector<4x256xbf16>,
    %c0_114 = arith.constant 0 : index
    %c0_115 = arith.constant 0 : index
    %c283 = arith.constant 283 : index
    %112 = vector.load %arg1[%c0_114, %c0_115, %c283] : memref<1x4x1256xbf16, #tpu.memory_space<vmem>>, vector<1x4x256xbf16>
    %113 = vector.shape_cast %112 : vector<1x4x256xbf16> to vector<4x256xbf16>
    %c12_116 = arith.constant 12 : index
    %c0_117 = arith.constant 0 : index
    %114 = vector.load %arg9[%c12_116, %c0_117] : memref<128x256xbf16, #tpu.memory_space<vmem>>, vector<4x256xbf16>
    tpu.vector_store %arg9[%c12_116, %c0_117], %113 {strides = array<i32>} : memref<128x256xbf16, #tpu.memory_space<vmem>>, vector<4x256xbf16>,
    %c0_118 = arith.constant 0 : index
    %c0_119 = arith.constant 0 : index
    %c284 = arith.constant 284 : index
    %115 = vector.load %arg1[%c0_118, %c0_119, %c284] : memref<1x4x1256xbf16, #tpu.memory_space<vmem>>, vector<1x4x256xbf16>
    %116 = vector.shape_cast %115 : vector<1x4x256xbf16> to vector<4x256xbf16>
    %c16_120 = arith.constant 16 : index
    %c0_121 = arith.constant 0 : index
    %117 = vector.load %arg9[%c16_120, %c0_121] : memref<128x256xbf16, #tpu.memory_space<vmem>>, vector<4x256xbf16>
    tpu.vector_store %arg9[%c16_120, %c0_121], %116 {strides = array<i32>} : memref<128x256xbf16, #tpu.memory_space<vmem>>, vector<4x256xbf16>,
    %c0_122 = arith.constant 0 : index
    %c0_123 = arith.constant 0 : index
    %c285 = arith.constant 285 : index
    %118 = vector.load %arg1[%c0_122, %c0_123, %c285] : memref<1x4x1256xbf16, #tpu.memory_space<vmem>>, vector<1x4x256xbf16>
    %119 = vector.shape_cast %118 : vector<1x4x256xbf16> to vector<4x256xbf16>
    %c20_124 = arith.constant 20 : index
    %c0_125 = arith.constant 0 : index
    %120 = vector.load %arg9[%c20_124, %c0_125] : memref<128x256xbf16, #tpu.memory_space<vmem>>, vector<4x256xbf16>
    tpu.vector_store %arg9[%c20_124, %c0_125], %119 {strides = array<i32>} : memref<128x256xbf16, #tpu.memory_space<vmem>>, vector<4x256xbf16>,
    %c0_126 = arith.constant 0 : index
    %c0_127 = arith.constant 0 : index
    %c293 = arith.constant 293 : index
    %121 = vector.load %arg1[%c0_126, %c0_127, %c293] : memref<1x4x1256xbf16, #tpu.memory_space<vmem>>, vector<1x4x256xbf16>
    %122 = vector.shape_cast %121 : vector<1x4x256xbf16> to vector<4x256xbf16>
    %c24_128 = arith.constant 24 : index
    %c0_129 = arith.constant 0 : index
    %123 = vector.load %arg9[%c24_128, %c0_129] : memref<128x256xbf16, #tpu.memory_space<vmem>>, vector<4x256xbf16>
    tpu.vector_store %arg9[%c24_128, %c0_129], %122 {strides = array<i32>} : memref<128x256xbf16, #tpu.memory_space<vmem>>, vector<4x256xbf16>,
    %c0_130 = arith.constant 0 : index
    %c0_131 = arith.constant 0 : index
    %c294 = arith.constant 294 : index
    %124 = vector.load %arg1[%c0_130, %c0_131, %c294] : memref<1x4x1256xbf16, #tpu.memory_space<vmem>>, vector<1x4x256xbf16>
    %125 = vector.shape_cast %124 : vector<1x4x256xbf16> to vector<4x256xbf16>
    %c28_132 = arith.constant 28 : index
    %c0_133 = arith.constant 0 : index
    %126 = vector.load %arg9[%c28_132, %c0_133] : memref<128x256xbf16, #tpu.memory_space<vmem>>, vector<4x256xbf16>
    tpu.vector_store %arg9[%c28_132, %c0_133], %125 {strides = array<i32>} : memref<128x256xbf16, #tpu.memory_space<vmem>>, vector<4x256xbf16>,
    %c0_134 = arith.constant 0 : index
    %c0_135 = arith.constant 0 : index
    %c295 = arith.constant 295 : index
    %127 = vector.load %arg1[%c0_134, %c0_135, %c295] : memref<1x4x1256xbf16, #tpu.memory_space<vmem>>, vector<1x4x256xbf16>
    %128 = vector.shape_cast %127 : vector<1x4x256xbf16> to vector<4x256xbf16>
    %c32_136 = arith.constant 32 : index
    %c0_137 = arith.constant 0 : index
    %129 = vector.load %arg9[%c32_136, %c0_137] : memref<128x256xbf16, #tpu.memory_space<vmem>>, vector<4x256xbf16>
    tpu.vector_store %arg9[%c32_136, %c0_137], %128 {strides = array<i32>} : memref<128x256xbf16, #tpu.memory_space<vmem>>, vector<4x256xbf16>,
    %c0_138 = arith.constant 0 : index
    %c0_139 = arith.constant 0 : index
    %c373 = arith.constant 373 : index
    %130 = vector.load %arg1[%c0_138, %c0_139, %c373] : memref<1x4x1256xbf16, #tpu.memory_space<vmem>>, vector<1x4x256xbf16>
    %131 = vector.shape_cast %130 : vector<1x4x256xbf16> to vector<4x256xbf16>
    %c36_140 = arith.constant 36 : index
    %c0_141 = arith.constant 0 : index
    %132 = vector.load %arg9[%c36_140, %c0_141] : memref<128x256xbf16, #tpu.memory_space<vmem>>, vector<4x256xbf16>
    tpu.vector_store %arg9[%c36_140, %c0_141], %131 {strides = array<i32>} : memref<128x256xbf16, #tpu.memory_space<vmem>>, vector<4x256xbf16>,
    %c0_142 = arith.constant 0 : index
    %c0_143 = arith.constant 0 : index
    %c374 = arith.constant 374 : index
    %133 = vector.load %arg1[%c0_142, %c0_143, %c374] : memref<1x4x1256xbf16, #tpu.memory_space<vmem>>, vector<1x4x256xbf16>
    %134 = vector.shape_cast %133 : vector<1x4x256xbf16> to vector<4x256xbf16>
    %c40_144 = arith.constant 40 : index
    %c0_145 = arith.constant 0 : index
    %135 = vector.load %arg9[%c40_144, %c0_145] : memref<128x256xbf16, #tpu.memory_space<vmem>>, vector<4x256xbf16>
    tpu.vector_store %arg9[%c40_144, %c0_145], %134 {strides = array<i32>} : memref<128x256xbf16, #tpu.memory_space<vmem>>, vector<4x256xbf16>,
    %c0_146 = arith.constant 0 : index
    %c0_147 = arith.constant 0 : index
    %c375 = arith.constant 375 : index
    %136 = vector.load %arg1[%c0_146, %c0_147, %c375] : memref<1x4x1256xbf16, #tpu.memory_space<vmem>>, vector<1x4x256xbf16>
    %137 = vector.shape_cast %136 : vector<1x4x256xbf16> to vector<4x256xbf16>
    %c44_148 = arith.constant 44 : index
    %c0_149 = arith.constant 0 : index
    %138 = vector.load %arg9[%c44_148, %c0_149] : memref<128x256xbf16, #tpu.memory_space<vmem>>, vector<4x256xbf16>
    tpu.vector_store %arg9[%c44_148, %c0_149], %137 {strides = array<i32>} : memref<128x256xbf16, #tpu.memory_space<vmem>>, vector<4x256xbf16>,
    %c0_150 = arith.constant 0 : index
    %c0_151 = arith.constant 0 : index
    %c383 = arith.constant 383 : index
    %139 = vector.load %arg1[%c0_150, %c0_151, %c383] : memref<1x4x1256xbf16, #tpu.memory_space<vmem>>, vector<1x4x256xbf16>
    %140 = vector.shape_cast %139 : vector<1x4x256xbf16> to vector<4x256xbf16>
    %c48_152 = arith.constant 48 : index
    %c0_153 = arith.constant 0 : index
    %141 = vector.load %arg9[%c48_152, %c0_153] : memref<128x256xbf16, #tpu.memory_space<vmem>>, vector<4x256xbf16>
    tpu.vector_store %arg9[%c48_152, %c0_153], %140 {strides = array<i32>} : memref<128x256xbf16, #tpu.memory_space<vmem>>, vector<4x256xbf16>,
    %c0_154 = arith.constant 0 : index
    %c0_155 = arith.constant 0 : index
    %c384 = arith.constant 384 : index
    %142 = vector.load %arg1[%c0_154, %c0_155, %c384] : memref<1x4x1256xbf16, #tpu.memory_space<vmem>>, vector<1x4x256xbf16>
    %143 = vector.shape_cast %142 : vector<1x4x256xbf16> to vector<4x256xbf16>
    %c52_156 = arith.constant 52 : index
    %c0_157 = arith.constant 0 : index
    %144 = vector.load %arg9[%c52_156, %c0_157] : memref<128x256xbf16, #tpu.memory_space<vmem>>, vector<4x256xbf16>
    tpu.vector_store %arg9[%c52_156, %c0_157], %143 {strides = array<i32>} : memref<128x256xbf16, #tpu.memory_space<vmem>>, vector<4x256xbf16>,
    %c0_158 = arith.constant 0 : index
    %c0_159 = arith.constant 0 : index
    %c385 = arith.constant 385 : index
    %145 = vector.load %arg1[%c0_158, %c0_159, %c385] : memref<1x4x1256xbf16, #tpu.memory_space<vmem>>, vector<1x4x256xbf16>
    %146 = vector.shape_cast %145 : vector<1x4x256xbf16> to vector<4x256xbf16>
    %c56_160 = arith.constant 56 : index
    %c0_161 = arith.constant 0 : index
    %147 = vector.load %arg9[%c56_160, %c0_161] : memref<128x256xbf16, #tpu.memory_space<vmem>>, vector<4x256xbf16>
    tpu.vector_store %arg9[%c56_160, %c0_161], %146 {strides = array<i32>} : memref<128x256xbf16, #tpu.memory_space<vmem>>, vector<4x256xbf16>,
    %c0_162 = arith.constant 0 : index
    %c0_163 = arith.constant 0 : index
    %c393 = arith.constant 393 : index
    %148 = vector.load %arg1[%c0_162, %c0_163, %c393] : memref<1x4x1256xbf16, #tpu.memory_space<vmem>>, vector<1x4x256xbf16>
    %149 = vector.shape_cast %148 : vector<1x4x256xbf16> to vector<4x256xbf16>
    %c60_164 = arith.constant 60 : index
    %c0_165 = arith.constant 0 : index
    %150 = vector.load %arg9[%c60_164, %c0_165] : memref<128x256xbf16, #tpu.memory_space<vmem>>, vector<4x256xbf16>
    tpu.vector_store %arg9[%c60_164, %c0_165], %149 {strides = array<i32>} : memref<128x256xbf16, #tpu.memory_space<vmem>>, vector<4x256xbf16>,
    %c0_166 = arith.constant 0 : index
    %c0_167 = arith.constant 0 : index
    %c394 = arith.constant 394 : index
    %151 = vector.load %arg1[%c0_166, %c0_167, %c394] : memref<1x4x1256xbf16, #tpu.memory_space<vmem>>, vector<1x4x256xbf16>
    %152 = vector.shape_cast %151 : vector<1x4x256xbf16> to vector<4x256xbf16>
    %c64_168 = arith.constant 64 : index
    %c0_169 = arith.constant 0 : index
    %153 = vector.load %arg9[%c64_168, %c0_169] : memref<128x256xbf16, #tpu.memory_space<vmem>>, vector<4x256xbf16>
    tpu.vector_store %arg9[%c64_168, %c0_169], %152 {strides = array<i32>} : memref<128x256xbf16, #tpu.memory_space<vmem>>, vector<4x256xbf16>,
    %c0_170 = arith.constant 0 : index
    %c0_171 = arith.constant 0 : index
    %c395 = arith.constant 395 : index
    %154 = vector.load %arg1[%c0_170, %c0_171, %c395] : memref<1x4x1256xbf16, #tpu.memory_space<vmem>>, vector<1x4x256xbf16>
    %155 = vector.shape_cast %154 : vector<1x4x256xbf16> to vector<4x256xbf16>
    %c68_172 = arith.constant 68 : index
    %c0_173 = arith.constant 0 : index
    %156 = vector.load %arg9[%c68_172, %c0_173] : memref<128x256xbf16, #tpu.memory_space<vmem>>, vector<4x256xbf16>
    tpu.vector_store %arg9[%c68_172, %c0_173], %155 {strides = array<i32>} : memref<128x256xbf16, #tpu.memory_space<vmem>>, vector<4x256xbf16>,
    %c0_174 = arith.constant 0 : index
    %c0_175 = arith.constant 0 : index
    %c473 = arith.constant 473 : index
    %157 = vector.load %arg1[%c0_174, %c0_175, %c473] : memref<1x4x1256xbf16, #tpu.memory_space<vmem>>, vector<1x4x256xbf16>
    %158 = vector.shape_cast %157 : vector<1x4x256xbf16> to vector<4x256xbf16>
    %c72_176 = arith.constant 72 : index
    %c0_177 = arith.constant 0 : index
    %159 = vector.load %arg9[%c72_176, %c0_177] : memref<128x256xbf16, #tpu.memory_space<vmem>>, vector<4x256xbf16>
    tpu.vector_store %arg9[%c72_176, %c0_177], %158 {strides = array<i32>} : memref<128x256xbf16, #tpu.memory_space<vmem>>, vector<4x256xbf16>,
    %c0_178 = arith.constant 0 : index
    %c0_179 = arith.constant 0 : index
    %c474 = arith.constant 474 : index
    %160 = vector.load %arg1[%c0_178, %c0_179, %c474] : memref<1x4x1256xbf16, #tpu.memory_space<vmem>>, vector<1x4x256xbf16>
    %161 = vector.shape_cast %160 : vector<1x4x256xbf16> to vector<4x256xbf16>
    %c76_180 = arith.constant 76 : index
    %c0_181 = arith.constant 0 : index
    %162 = vector.load %arg9[%c76_180, %c0_181] : memref<128x256xbf16, #tpu.memory_space<vmem>>, vector<4x256xbf16>
    tpu.vector_store %arg9[%c76_180, %c0_181], %161 {strides = array<i32>} : memref<128x256xbf16, #tpu.memory_space<vmem>>, vector<4x256xbf16>,
    %c0_182 = arith.constant 0 : index
    %c0_183 = arith.constant 0 : index
    %c475 = arith.constant 475 : index
    %163 = vector.load %arg1[%c0_182, %c0_183, %c475] : memref<1x4x1256xbf16, #tpu.memory_space<vmem>>, vector<1x4x256xbf16>
    %164 = vector.shape_cast %163 : vector<1x4x256xbf16> to vector<4x256xbf16>
    %c80_184 = arith.constant 80 : index
    %c0_185 = arith.constant 0 : index
    %165 = vector.load %arg9[%c80_184, %c0_185] : memref<128x256xbf16, #tpu.memory_space<vmem>>, vector<4x256xbf16>
    tpu.vector_store %arg9[%c80_184, %c0_185], %164 {strides = array<i32>} : memref<128x256xbf16, #tpu.memory_space<vmem>>, vector<4x256xbf16>,
    %c0_186 = arith.constant 0 : index
    %c0_187 = arith.constant 0 : index
    %c483 = arith.constant 483 : index
    %166 = vector.load %arg1[%c0_186, %c0_187, %c483] : memref<1x4x1256xbf16, #tpu.memory_space<vmem>>, vector<1x4x256xbf16>
    %167 = vector.shape_cast %166 : vector<1x4x256xbf16> to vector<4x256xbf16>
    %c84_188 = arith.constant 84 : index
    %c0_189 = arith.constant 0 : index
    %168 = vector.load %arg9[%c84_188, %c0_189] : memref<128x256xbf16, #tpu.memory_space<vmem>>, vector<4x256xbf16>
    tpu.vector_store %arg9[%c84_188, %c0_189], %167 {strides = array<i32>} : memref<128x256xbf16, #tpu.memory_space<vmem>>, vector<4x256xbf16>,
    %c0_190 = arith.constant 0 : index
    %c0_191 = arith.constant 0 : index
    %c484 = arith.constant 484 : index
    %169 = vector.load %arg1[%c0_190, %c0_191, %c484] : memref<1x4x1256xbf16, #tpu.memory_space<vmem>>, vector<1x4x256xbf16>
    %170 = vector.shape_cast %169 : vector<1x4x256xbf16> to vector<4x256xbf16>
    %c88_192 = arith.constant 88 : index
    %c0_193 = arith.constant 0 : index
    %171 = vector.load %arg9[%c88_192, %c0_193] : memref<128x256xbf16, #tpu.memory_space<vmem>>, vector<4x256xbf16>
    tpu.vector_store %arg9[%c88_192, %c0_193], %170 {strides = array<i32>} : memref<128x256xbf16, #tpu.memory_space<vmem>>, vector<4x256xbf16>,
    %c0_194 = arith.constant 0 : index
    %c0_195 = arith.constant 0 : index
    %c485 = arith.constant 485 : index
    %172 = vector.load %arg1[%c0_194, %c0_195, %c485] : memref<1x4x1256xbf16, #tpu.memory_space<vmem>>, vector<1x4x256xbf16>
    %173 = vector.shape_cast %172 : vector<1x4x256xbf16> to vector<4x256xbf16>
    %c92_196 = arith.constant 92 : index
    %c0_197 = arith.constant 0 : index
    %174 = vector.load %arg9[%c92_196, %c0_197] : memref<128x256xbf16, #tpu.memory_space<vmem>>, vector<4x256xbf16>
    tpu.vector_store %arg9[%c92_196, %c0_197], %173 {strides = array<i32>} : memref<128x256xbf16, #tpu.memory_space<vmem>>, vector<4x256xbf16>,
    %c0_198 = arith.constant 0 : index
    %c0_199 = arith.constant 0 : index
    %c493 = arith.constant 493 : index
    %175 = vector.load %arg1[%c0_198, %c0_199, %c493] : memref<1x4x1256xbf16, #tpu.memory_space<vmem>>, vector<1x4x256xbf16>
    %176 = vector.shape_cast %175 : vector<1x4x256xbf16> to vector<4x256xbf16>
    %c96_200 = arith.constant 96 : index
    %c0_201 = arith.constant 0 : index
    %177 = vector.load %arg9[%c96_200, %c0_201] : memref<128x256xbf16, #tpu.memory_space<vmem>>, vector<4x256xbf16>
    tpu.vector_store %arg9[%c96_200, %c0_201], %176 {strides = array<i32>} : memref<128x256xbf16, #tpu.memory_space<vmem>>, vector<4x256xbf16>,
    %c0_202 = arith.constant 0 : index
    %c0_203 = arith.constant 0 : index
    %c494 = arith.constant 494 : index
    %178 = vector.load %arg1[%c0_202, %c0_203, %c494] : memref<1x4x1256xbf16, #tpu.memory_space<vmem>>, vector<1x4x256xbf16>
    %179 = vector.shape_cast %178 : vector<1x4x256xbf16> to vector<4x256xbf16>
    %c100_204 = arith.constant 100 : index
    %c0_205 = arith.constant 0 : index
    %180 = vector.load %arg9[%c100_204, %c0_205] : memref<128x256xbf16, #tpu.memory_space<vmem>>, vector<4x256xbf16>
    tpu.vector_store %arg9[%c100_204, %c0_205], %179 {strides = array<i32>} : memref<128x256xbf16, #tpu.memory_space<vmem>>, vector<4x256xbf16>,
    %c0_206 = arith.constant 0 : index
    %c0_207 = arith.constant 0 : index
    %c495 = arith.constant 495 : index
    %181 = vector.load %arg1[%c0_206, %c0_207, %c495] : memref<1x4x1256xbf16, #tpu.memory_space<vmem>>, vector<1x4x256xbf16>
    %182 = vector.shape_cast %181 : vector<1x4x256xbf16> to vector<4x256xbf16>
    %c104_208 = arith.constant 104 : index
    %c0_209 = arith.constant 0 : index
    %183 = vector.load %arg9[%c104_208, %c0_209] : memref<128x256xbf16, #tpu.memory_space<vmem>>, vector<4x256xbf16>
    tpu.vector_store %arg9[%c104_208, %c0_209], %182 {strides = array<i32>} : memref<128x256xbf16, #tpu.memory_space<vmem>>, vector<4x256xbf16>,
    %c0_210 = arith.constant 0 : index
    %c0_211 = arith.constant 0 : index
    %184 = vector.load %arg2[%c0_210, %c0_211] : memref<16x128xbf16, #tpu.memory_space<vmem>>, vector<16x128xbf16>
    %c0_212 = arith.constant 0 : index
    %c0_213 = arith.constant 0 : index
    %185 = vector.load %arg9[%c0_212, %c0_213] : memref<128x256xbf16, #tpu.memory_space<vmem>>, vector<128x256xbf16>
    %cst_214 = arith.constant dense<0.000000e+00> : vector<16x256xf32>
    %186 = tpu.matmul %184, %185, %cst_214 {dimension_numbers = #tpu.dot_dimension_numbers<[1], [0], [0], [1], [0, 0, 1, 1], [], []>} : vector<16x128xbf16>, vector<128x256xbf16>, vector<16x256xf32> -> vector<16x256xf32>
    %187 = vector.extract_strided_slice %186 {offsets = [0, 0], sizes = [8, 256], strides = [1, 1]} : vector<16x256xf32> to vector<8x256xf32>
    %c0_215 = arith.constant 0 : index
    %c256 = arith.constant 256 : index
    %188 = vector.load %arg11[%c0_215, %c256] : memref<8x1000xf32, #tpu.memory_space<vmem>>, vector<8x256xf32>
    tpu.vector_store %arg11[%c0_215, %c256], %187 {strides = array<i32>} : memref<8x1000xf32, #tpu.memory_space<vmem>>, vector<8x256xf32>,
    %189 = vector.extract_strided_slice %186 {offsets = [8, 0], sizes = [8, 256], strides = [1, 1]} : vector<16x256xf32> to vector<8x256xf32>
    %c0_216 = arith.constant 0 : index
    %c0_217 = arith.constant 0 : index
    %190 = vector.load %arg4[%c0_216, %c0_217] : memref<8x1xf32, #tpu.memory_space<vmem>>, vector<8x1xf32>
    %191 = vector.broadcast %190 : vector<8x1xf32> to vector<8x256xf32>
    %192 = arith.addf %189, %191 : vector<8x256xf32>
    %cst_218 = arith.constant 0.000000e+00 : f32
    %193 = vector.broadcast %cst_218 : f32 to vector<8x256xf32>
    %194 = arith.maximumf %192, %193 : vector<8x256xf32>
    %c0_219 = arith.constant 0 : index
    %c256_220 = arith.constant 256 : index
    %195 = vector.load %arg6[%c0_219, %c256_220] : memref<1x1000xf32, #tpu.memory_space<vmem>>, vector<1x256xf32>
    %196 = vector.broadcast %195 : vector<1x256xf32> to vector<8x256xf32>
    %197 = arith.mulf %194, %196 : vector<8x256xf32>
    %198 = arith.truncf %197 : vector<8x256xf32> to vector<8x256xbf16>
    %c0_221 = arith.constant 0 : index
    %c384_222 = arith.constant 384 : index
    %199 = vector.load %arg8[%c0_221, %c384_222] : memref<8x1256xbf16, #tpu.memory_space<vmem>>, vector<8x256xbf16>
    tpu.vector_store %arg8[%c0_221, %c384_222], %198 {strides = array<i32>} : memref<8x1256xbf16, #tpu.memory_space<vmem>>, vector<8x256xbf16>,
    %c0_223 = arith.constant 0 : index
    %c0_224 = arith.constant 0 : index
    %c529 = arith.constant 529 : index
    %200 = vector.load %arg1[%c0_223, %c0_224, %c529] : memref<1x4x1256xbf16, #tpu.memory_space<vmem>>, vector<1x4x256xbf16>
    %201 = vector.shape_cast %200 : vector<1x4x256xbf16> to vector<4x256xbf16>
    %c0_225 = arith.constant 0 : index
    %c0_226 = arith.constant 0 : index
    %202 = vector.load %arg9[%c0_225, %c0_226] : memref<128x256xbf16, #tpu.memory_space<vmem>>, vector<4x256xbf16>
    tpu.vector_store %arg9[%c0_225, %c0_226], %201 {strides = array<i32>} : memref<128x256xbf16, #tpu.memory_space<vmem>>, vector<4x256xbf16>,
    %c0_227 = arith.constant 0 : index
    %c0_228 = arith.constant 0 : index
    %c530 = arith.constant 530 : index
    %203 = vector.load %arg1[%c0_227, %c0_228, %c530] : memref<1x4x1256xbf16, #tpu.memory_space<vmem>>, vector<1x4x256xbf16>
    %204 = vector.shape_cast %203 : vector<1x4x256xbf16> to vector<4x256xbf16>
    %c4_229 = arith.constant 4 : index
    %c0_230 = arith.constant 0 : index
    %205 = vector.load %arg9[%c4_229, %c0_230] : memref<128x256xbf16, #tpu.memory_space<vmem>>, vector<4x256xbf16>
    tpu.vector_store %arg9[%c4_229, %c0_230], %204 {strides = array<i32>} : memref<128x256xbf16, #tpu.memory_space<vmem>>, vector<4x256xbf16>,
    %c0_231 = arith.constant 0 : index
    %c0_232 = arith.constant 0 : index
    %c531 = arith.constant 531 : index
    %206 = vector.load %arg1[%c0_231, %c0_232, %c531] : memref<1x4x1256xbf16, #tpu.memory_space<vmem>>, vector<1x4x256xbf16>
    %207 = vector.shape_cast %206 : vector<1x4x256xbf16> to vector<4x256xbf16>
    %c8_233 = arith.constant 8 : index
    %c0_234 = arith.constant 0 : index
    %208 = vector.load %arg9[%c8_233, %c0_234] : memref<128x256xbf16, #tpu.memory_space<vmem>>, vector<4x256xbf16>
    tpu.vector_store %arg9[%c8_233, %c0_234], %207 {strides = array<i32>} : memref<128x256xbf16, #tpu.memory_space<vmem>>, vector<4x256xbf16>,
    %c0_235 = arith.constant 0 : index
    %c0_236 = arith.constant 0 : index
    %c539 = arith.constant 539 : index
    %209 = vector.load %arg1[%c0_235, %c0_236, %c539] : memref<1x4x1256xbf16, #tpu.memory_space<vmem>>, vector<1x4x256xbf16>
    %210 = vector.shape_cast %209 : vector<1x4x256xbf16> to vector<4x256xbf16>
    %c12_237 = arith.constant 12 : index
    %c0_238 = arith.constant 0 : index
    %211 = vector.load %arg9[%c12_237, %c0_238] : memref<128x256xbf16, #tpu.memory_space<vmem>>, vector<4x256xbf16>
    tpu.vector_store %arg9[%c12_237, %c0_238], %210 {strides = array<i32>} : memref<128x256xbf16, #tpu.memory_space<vmem>>, vector<4x256xbf16>,
    %c0_239 = arith.constant 0 : index
    %c0_240 = arith.constant 0 : index
    %c540 = arith.constant 540 : index
    %212 = vector.load %arg1[%c0_239, %c0_240, %c540] : memref<1x4x1256xbf16, #tpu.memory_space<vmem>>, vector<1x4x256xbf16>
    %213 = vector.shape_cast %212 : vector<1x4x256xbf16> to vector<4x256xbf16>
    %c16_241 = arith.constant 16 : index
    %c0_242 = arith.constant 0 : index
    %214 = vector.load %arg9[%c16_241, %c0_242] : memref<128x256xbf16, #tpu.memory_space<vmem>>, vector<4x256xbf16>
    tpu.vector_store %arg9[%c16_241, %c0_242], %213 {strides = array<i32>} : memref<128x256xbf16, #tpu.memory_space<vmem>>, vector<4x256xbf16>,
    %c0_243 = arith.constant 0 : index
    %c0_244 = arith.constant 0 : index
    %c541 = arith.constant 541 : index
    %215 = vector.load %arg1[%c0_243, %c0_244, %c541] : memref<1x4x1256xbf16, #tpu.memory_space<vmem>>, vector<1x4x256xbf16>
    %216 = vector.shape_cast %215 : vector<1x4x256xbf16> to vector<4x256xbf16>
    %c20_245 = arith.constant 20 : index
    %c0_246 = arith.constant 0 : index
    %217 = vector.load %arg9[%c20_245, %c0_246] : memref<128x256xbf16, #tpu.memory_space<vmem>>, vector<4x256xbf16>
    tpu.vector_store %arg9[%c20_245, %c0_246], %216 {strides = array<i32>} : memref<128x256xbf16, #tpu.memory_space<vmem>>, vector<4x256xbf16>,
    %c0_247 = arith.constant 0 : index
    %c0_248 = arith.constant 0 : index
    %c549 = arith.constant 549 : index
    %218 = vector.load %arg1[%c0_247, %c0_248, %c549] : memref<1x4x1256xbf16, #tpu.memory_space<vmem>>, vector<1x4x256xbf16>
    %219 = vector.shape_cast %218 : vector<1x4x256xbf16> to vector<4x256xbf16>
    %c24_249 = arith.constant 24 : index
    %c0_250 = arith.constant 0 : index
    %220 = vector.load %arg9[%c24_249, %c0_250] : memref<128x256xbf16, #tpu.memory_space<vmem>>, vector<4x256xbf16>
    tpu.vector_store %arg9[%c24_249, %c0_250], %219 {strides = array<i32>} : memref<128x256xbf16, #tpu.memory_space<vmem>>, vector<4x256xbf16>,
    %c0_251 = arith.constant 0 : index
    %c0_252 = arith.constant 0 : index
    %c550 = arith.constant 550 : index
    %221 = vector.load %arg1[%c0_251, %c0_252, %c550] : memref<1x4x1256xbf16, #tpu.memory_space<vmem>>, vector<1x4x256xbf16>
    %222 = vector.shape_cast %221 : vector<1x4x256xbf16> to vector<4x256xbf16>
    %c28_253 = arith.constant 28 : index
    %c0_254 = arith.constant 0 : index
    %223 = vector.load %arg9[%c28_253, %c0_254] : memref<128x256xbf16, #tpu.memory_space<vmem>>, vector<4x256xbf16>
    tpu.vector_store %arg9[%c28_253, %c0_254], %222 {strides = array<i32>} : memref<128x256xbf16, #tpu.memory_space<vmem>>, vector<4x256xbf16>,
    %c0_255 = arith.constant 0 : index
    %c0_256 = arith.constant 0 : index
    %c551 = arith.constant 551 : index
    %224 = vector.load %arg1[%c0_255, %c0_256, %c551] : memref<1x4x1256xbf16, #tpu.memory_space<vmem>>, vector<1x4x256xbf16>
    %225 = vector.shape_cast %224 : vector<1x4x256xbf16> to vector<4x256xbf16>
    %c32_257 = arith.constant 32 : index
    %c0_258 = arith.constant 0 : index
    %226 = vector.load %arg9[%c32_257, %c0_258] : memref<128x256xbf16, #tpu.memory_space<vmem>>, vector<4x256xbf16>
    tpu.vector_store %arg9[%c32_257, %c0_258], %225 {strides = array<i32>} : memref<128x256xbf16, #tpu.memory_space<vmem>>, vector<4x256xbf16>,
    %c0_259 = arith.constant 0 : index
    %c0_260 = arith.constant 0 : index
    %c629 = arith.constant 629 : index
    %227 = vector.load %arg1[%c0_259, %c0_260, %c629] : memref<1x4x1256xbf16, #tpu.memory_space<vmem>>, vector<1x4x256xbf16>
    %228 = vector.shape_cast %227 : vector<1x4x256xbf16> to vector<4x256xbf16>
    %c36_261 = arith.constant 36 : index
    %c0_262 = arith.constant 0 : index
    %229 = vector.load %arg9[%c36_261, %c0_262] : memref<128x256xbf16, #tpu.memory_space<vmem>>, vector<4x256xbf16>
    tpu.vector_store %arg9[%c36_261, %c0_262], %228 {strides = array<i32>} : memref<128x256xbf16, #tpu.memory_space<vmem>>, vector<4x256xbf16>,
    %c0_263 = arith.constant 0 : index
    %c0_264 = arith.constant 0 : index
    %c630 = arith.constant 630 : index
    %230 = vector.load %arg1[%c0_263, %c0_264, %c630] : memref<1x4x1256xbf16, #tpu.memory_space<vmem>>, vector<1x4x256xbf16>
    %231 = vector.shape_cast %230 : vector<1x4x256xbf16> to vector<4x256xbf16>
    %c40_265 = arith.constant 40 : index
    %c0_266 = arith.constant 0 : index
    %232 = vector.load %arg9[%c40_265, %c0_266] : memref<128x256xbf16, #tpu.memory_space<vmem>>, vector<4x256xbf16>
    tpu.vector_store %arg9[%c40_265, %c0_266], %231 {strides = array<i32>} : memref<128x256xbf16, #tpu.memory_space<vmem>>, vector<4x256xbf16>,
    %c0_267 = arith.constant 0 : index
    %c0_268 = arith.constant 0 : index
    %c631 = arith.constant 631 : index
    %233 = vector.load %arg1[%c0_267, %c0_268, %c631] : memref<1x4x1256xbf16, #tpu.memory_space<vmem>>, vector<1x4x256xbf16>
    %234 = vector.shape_cast %233 : vector<1x4x256xbf16> to vector<4x256xbf16>
    %c44_269 = arith.constant 44 : index
    %c0_270 = arith.constant 0 : index
    %235 = vector.load %arg9[%c44_269, %c0_270] : memref<128x256xbf16, #tpu.memory_space<vmem>>, vector<4x256xbf16>
    tpu.vector_store %arg9[%c44_269, %c0_270], %234 {strides = array<i32>} : memref<128x256xbf16, #tpu.memory_space<vmem>>, vector<4x256xbf16>,
    %c0_271 = arith.constant 0 : index
    %c0_272 = arith.constant 0 : index
    %c639 = arith.constant 639 : index
    %236 = vector.load %arg1[%c0_271, %c0_272, %c639] : memref<1x4x1256xbf16, #tpu.memory_space<vmem>>, vector<1x4x256xbf16>
    %237 = vector.shape_cast %236 : vector<1x4x256xbf16> to vector<4x256xbf16>
    %c48_273 = arith.constant 48 : index
    %c0_274 = arith.constant 0 : index
    %238 = vector.load %arg9[%c48_273, %c0_274] : memref<128x256xbf16, #tpu.memory_space<vmem>>, vector<4x256xbf16>
    tpu.vector_store %arg9[%c48_273, %c0_274], %237 {strides = array<i32>} : memref<128x256xbf16, #tpu.memory_space<vmem>>, vector<4x256xbf16>,
    %c0_275 = arith.constant 0 : index
    %c0_276 = arith.constant 0 : index
    %c640 = arith.constant 640 : index
    %239 = vector.load %arg1[%c0_275, %c0_276, %c640] : memref<1x4x1256xbf16, #tpu.memory_space<vmem>>, vector<1x4x256xbf16>
    %240 = vector.shape_cast %239 : vector<1x4x256xbf16> to vector<4x256xbf16>
    %c52_277 = arith.constant 52 : index
    %c0_278 = arith.constant 0 : index
    %241 = vector.load %arg9[%c52_277, %c0_278] : memref<128x256xbf16, #tpu.memory_space<vmem>>, vector<4x256xbf16>
    tpu.vector_store %arg9[%c52_277, %c0_278], %240 {strides = array<i32>} : memref<128x256xbf16, #tpu.memory_space<vmem>>, vector<4x256xbf16>,
    %c0_279 = arith.constant 0 : index
    %c0_280 = arith.constant 0 : index
    %c641 = arith.constant 641 : index
    %242 = vector.load %arg1[%c0_279, %c0_280, %c641] : memref<1x4x1256xbf16, #tpu.memory_space<vmem>>, vector<1x4x256xbf16>
    %243 = vector.shape_cast %242 : vector<1x4x256xbf16> to vector<4x256xbf16>
    %c56_281 = arith.constant 56 : index
    %c0_282 = arith.constant 0 : index
    %244 = vector.load %arg9[%c56_281, %c0_282] : memref<128x256xbf16, #tpu.memory_space<vmem>>, vector<4x256xbf16>
    tpu.vector_store %arg9[%c56_281, %c0_282], %243 {strides = array<i32>} : memref<128x256xbf16, #tpu.memory_space<vmem>>, vector<4x256xbf16>,
    %c0_283 = arith.constant 0 : index
    %c0_284 = arith.constant 0 : index
    %c649 = arith.constant 649 : index
    %245 = vector.load %arg1[%c0_283, %c0_284, %c649] : memref<1x4x1256xbf16, #tpu.memory_space<vmem>>, vector<1x4x256xbf16>
    %246 = vector.shape_cast %245 : vector<1x4x256xbf16> to vector<4x256xbf16>
    %c60_285 = arith.constant 60 : index
    %c0_286 = arith.constant 0 : index
    %247 = vector.load %arg9[%c60_285, %c0_286] : memref<128x256xbf16, #tpu.memory_space<vmem>>, vector<4x256xbf16>
    tpu.vector_store %arg9[%c60_285, %c0_286], %246 {strides = array<i32>} : memref<128x256xbf16, #tpu.memory_space<vmem>>, vector<4x256xbf16>,
    %c0_287 = arith.constant 0 : index
    %c0_288 = arith.constant 0 : index
    %c650 = arith.constant 650 : index
    %248 = vector.load %arg1[%c0_287, %c0_288, %c650] : memref<1x4x1256xbf16, #tpu.memory_space<vmem>>, vector<1x4x256xbf16>
    %249 = vector.shape_cast %248 : vector<1x4x256xbf16> to vector<4x256xbf16>
    %c64_289 = arith.constant 64 : index
    %c0_290 = arith.constant 0 : index
    %250 = vector.load %arg9[%c64_289, %c0_290] : memref<128x256xbf16, #tpu.memory_space<vmem>>, vector<4x256xbf16>
    tpu.vector_store %arg9[%c64_289, %c0_290], %249 {strides = array<i32>} : memref<128x256xbf16, #tpu.memory_space<vmem>>, vector<4x256xbf16>,
    %c0_291 = arith.constant 0 : index
    %c0_292 = arith.constant 0 : index
    %c651 = arith.constant 651 : index
    %251 = vector.load %arg1[%c0_291, %c0_292, %c651] : memref<1x4x1256xbf16, #tpu.memory_space<vmem>>, vector<1x4x256xbf16>
    %252 = vector.shape_cast %251 : vector<1x4x256xbf16> to vector<4x256xbf16>
    %c68_293 = arith.constant 68 : index
    %c0_294 = arith.constant 0 : index
    %253 = vector.load %arg9[%c68_293, %c0_294] : memref<128x256xbf16, #tpu.memory_space<vmem>>, vector<4x256xbf16>
    tpu.vector_store %arg9[%c68_293, %c0_294], %252 {strides = array<i32>} : memref<128x256xbf16, #tpu.memory_space<vmem>>, vector<4x256xbf16>,
    %c0_295 = arith.constant 0 : index
    %c0_296 = arith.constant 0 : index
    %c729 = arith.constant 729 : index
    %254 = vector.load %arg1[%c0_295, %c0_296, %c729] : memref<1x4x1256xbf16, #tpu.memory_space<vmem>>, vector<1x4x256xbf16>
    %255 = vector.shape_cast %254 : vector<1x4x256xbf16> to vector<4x256xbf16>
    %c72_297 = arith.constant 72 : index
    %c0_298 = arith.constant 0 : index
    %256 = vector.load %arg9[%c72_297, %c0_298] : memref<128x256xbf16, #tpu.memory_space<vmem>>, vector<4x256xbf16>
    tpu.vector_store %arg9[%c72_297, %c0_298], %255 {strides = array<i32>} : memref<128x256xbf16, #tpu.memory_space<vmem>>, vector<4x256xbf16>,
    %c0_299 = arith.constant 0 : index
    %c0_300 = arith.constant 0 : index
    %c730 = arith.constant 730 : index
    %257 = vector.load %arg1[%c0_299, %c0_300, %c730] : memref<1x4x1256xbf16, #tpu.memory_space<vmem>>, vector<1x4x256xbf16>
    %258 = vector.shape_cast %257 : vector<1x4x256xbf16> to vector<4x256xbf16>
    %c76_301 = arith.constant 76 : index
    %c0_302 = arith.constant 0 : index
    %259 = vector.load %arg9[%c76_301, %c0_302] : memref<128x256xbf16, #tpu.memory_space<vmem>>, vector<4x256xbf16>
    tpu.vector_store %arg9[%c76_301, %c0_302], %258 {strides = array<i32>} : memref<128x256xbf16, #tpu.memory_space<vmem>>, vector<4x256xbf16>,
    %c0_303 = arith.constant 0 : index
    %c0_304 = arith.constant 0 : index
    %c731 = arith.constant 731 : index
    %260 = vector.load %arg1[%c0_303, %c0_304, %c731] : memref<1x4x1256xbf16, #tpu.memory_space<vmem>>, vector<1x4x256xbf16>
    %261 = vector.shape_cast %260 : vector<1x4x256xbf16> to vector<4x256xbf16>
    %c80_305 = arith.constant 80 : index
    %c0_306 = arith.constant 0 : index
    %262 = vector.load %arg9[%c80_305, %c0_306] : memref<128x256xbf16, #tpu.memory_space<vmem>>, vector<4x256xbf16>
    tpu.vector_store %arg9[%c80_305, %c0_306], %261 {strides = array<i32>} : memref<128x256xbf16, #tpu.memory_space<vmem>>, vector<4x256xbf16>,
    %c0_307 = arith.constant 0 : index
    %c0_308 = arith.constant 0 : index
    %c739 = arith.constant 739 : index
    %263 = vector.load %arg1[%c0_307, %c0_308, %c739] : memref<1x4x1256xbf16, #tpu.memory_space<vmem>>, vector<1x4x256xbf16>
    %264 = vector.shape_cast %263 : vector<1x4x256xbf16> to vector<4x256xbf16>
    %c84_309 = arith.constant 84 : index
    %c0_310 = arith.constant 0 : index
    %265 = vector.load %arg9[%c84_309, %c0_310] : memref<128x256xbf16, #tpu.memory_space<vmem>>, vector<4x256xbf16>
    tpu.vector_store %arg9[%c84_309, %c0_310], %264 {strides = array<i32>} : memref<128x256xbf16, #tpu.memory_space<vmem>>, vector<4x256xbf16>,
    %c0_311 = arith.constant 0 : index
    %c0_312 = arith.constant 0 : index
    %c740 = arith.constant 740 : index
    %266 = vector.load %arg1[%c0_311, %c0_312, %c740] : memref<1x4x1256xbf16, #tpu.memory_space<vmem>>, vector<1x4x256xbf16>
    %267 = vector.shape_cast %266 : vector<1x4x256xbf16> to vector<4x256xbf16>
    %c88_313 = arith.constant 88 : index
    %c0_314 = arith.constant 0 : index
    %268 = vector.load %arg9[%c88_313, %c0_314] : memref<128x256xbf16, #tpu.memory_space<vmem>>, vector<4x256xbf16>
    tpu.vector_store %arg9[%c88_313, %c0_314], %267 {strides = array<i32>} : memref<128x256xbf16, #tpu.memory_space<vmem>>, vector<4x256xbf16>,
    %c0_315 = arith.constant 0 : index
    %c0_316 = arith.constant 0 : index
    %c741 = arith.constant 741 : index
    %269 = vector.load %arg1[%c0_315, %c0_316, %c741] : memref<1x4x1256xbf16, #tpu.memory_space<vmem>>, vector<1x4x256xbf16>
    %270 = vector.shape_cast %269 : vector<1x4x256xbf16> to vector<4x256xbf16>
    %c92_317 = arith.constant 92 : index
    %c0_318 = arith.constant 0 : index
    %271 = vector.load %arg9[%c92_317, %c0_318] : memref<128x256xbf16, #tpu.memory_space<vmem>>, vector<4x256xbf16>
    tpu.vector_store %arg9[%c92_317, %c0_318], %270 {strides = array<i32>} : memref<128x256xbf16, #tpu.memory_space<vmem>>, vector<4x256xbf16>,
    %c0_319 = arith.constant 0 : index
    %c0_320 = arith.constant 0 : index
    %c749 = arith.constant 749 : index
    %272 = vector.load %arg1[%c0_319, %c0_320, %c749] : memref<1x4x1256xbf16, #tpu.memory_space<vmem>>, vector<1x4x256xbf16>
    %273 = vector.shape_cast %272 : vector<1x4x256xbf16> to vector<4x256xbf16>
    %c96_321 = arith.constant 96 : index
    %c0_322 = arith.constant 0 : index
    %274 = vector.load %arg9[%c96_321, %c0_322] : memref<128x256xbf16, #tpu.memory_space<vmem>>, vector<4x256xbf16>
    tpu.vector_store %arg9[%c96_321, %c0_322], %273 {strides = array<i32>} : memref<128x256xbf16, #tpu.memory_space<vmem>>, vector<4x256xbf16>,
    %c0_323 = arith.constant 0 : index
    %c0_324 = arith.constant 0 : index
    %c750 = arith.constant 750 : index
    %275 = vector.load %arg1[%c0_323, %c0_324, %c750] : memref<1x4x1256xbf16, #tpu.memory_space<vmem>>, vector<1x4x256xbf16>
    %276 = vector.shape_cast %275 : vector<1x4x256xbf16> to vector<4x256xbf16>
    %c100_325 = arith.constant 100 : index
    %c0_326 = arith.constant 0 : index
    %277 = vector.load %arg9[%c100_325, %c0_326] : memref<128x256xbf16, #tpu.memory_space<vmem>>, vector<4x256xbf16>
    tpu.vector_store %arg9[%c100_325, %c0_326], %276 {strides = array<i32>} : memref<128x256xbf16, #tpu.memory_space<vmem>>, vector<4x256xbf16>,
    %c0_327 = arith.constant 0 : index
    %c0_328 = arith.constant 0 : index
    %c751 = arith.constant 751 : index
    %278 = vector.load %arg1[%c0_327, %c0_328, %c751] : memref<1x4x1256xbf16, #tpu.memory_space<vmem>>, vector<1x4x256xbf16>
    %279 = vector.shape_cast %278 : vector<1x4x256xbf16> to vector<4x256xbf16>
    %c104_329 = arith.constant 104 : index
    %c0_330 = arith.constant 0 : index
    %280 = vector.load %arg9[%c104_329, %c0_330] : memref<128x256xbf16, #tpu.memory_space<vmem>>, vector<4x256xbf16>
    tpu.vector_store %arg9[%c104_329, %c0_330], %279 {strides = array<i32>} : memref<128x256xbf16, #tpu.memory_space<vmem>>, vector<4x256xbf16>,
    %c0_331 = arith.constant 0 : index
    %c0_332 = arith.constant 0 : index
    %281 = vector.load %arg2[%c0_331, %c0_332] : memref<16x128xbf16, #tpu.memory_space<vmem>>, vector<16x128xbf16>
    %c0_333 = arith.constant 0 : index
    %c0_334 = arith.constant 0 : index
    %282 = vector.load %arg9[%c0_333, %c0_334] : memref<128x256xbf16, #tpu.memory_space<vmem>>, vector<128x256xbf16>
    %cst_335 = arith.constant dense<0.000000e+00> : vector<16x256xf32>
    %283 = tpu.matmul %281, %282, %cst_335 {dimension_numbers = #tpu.dot_dimension_numbers<[1], [0], [0], [1], [0, 0, 1, 1], [], []>} : vector<16x128xbf16>, vector<128x256xbf16>, vector<16x256xf32> -> vector<16x256xf32>
    %284 = vector.extract_strided_slice %283 {offsets = [0, 0], sizes = [8, 256], strides = [1, 1]} : vector<16x256xf32> to vector<8x256xf32>
    %c0_336 = arith.constant 0 : index
    %c512 = arith.constant 512 : index
    %285 = vector.load %arg11[%c0_336, %c512] : memref<8x1000xf32, #tpu.memory_space<vmem>>, vector<8x256xf32>
    tpu.vector_store %arg11[%c0_336, %c512], %284 {strides = array<i32>} : memref<8x1000xf32, #tpu.memory_space<vmem>>, vector<8x256xf32>,
    %286 = vector.extract_strided_slice %283 {offsets = [8, 0], sizes = [8, 256], strides = [1, 1]} : vector<16x256xf32> to vector<8x256xf32>
    %c0_337 = arith.constant 0 : index
    %c0_338 = arith.constant 0 : index
    %287 = vector.load %arg4[%c0_337, %c0_338] : memref<8x1xf32, #tpu.memory_space<vmem>>, vector<8x1xf32>
    %288 = vector.broadcast %287 : vector<8x1xf32> to vector<8x256xf32>
    %289 = arith.addf %286, %288 : vector<8x256xf32>
    %cst_339 = arith.constant 0.000000e+00 : f32
    %290 = vector.broadcast %cst_339 : f32 to vector<8x256xf32>
    %291 = arith.maximumf %289, %290 : vector<8x256xf32>
    %c0_340 = arith.constant 0 : index
    %c512_341 = arith.constant 512 : index
    %292 = vector.load %arg6[%c0_340, %c512_341] : memref<1x1000xf32, #tpu.memory_space<vmem>>, vector<1x256xf32>
    %293 = vector.broadcast %292 : vector<1x256xf32> to vector<8x256xf32>
    %294 = arith.mulf %291, %293 : vector<8x256xf32>
    %295 = arith.truncf %294 : vector<8x256xf32> to vector<8x256xbf16>
    %c0_342 = arith.constant 0 : index
    %c640_343 = arith.constant 640 : index
    %296 = vector.load %arg8[%c0_342, %c640_343] : memref<8x1256xbf16, #tpu.memory_space<vmem>>, vector<8x256xbf16>
    tpu.vector_store %arg8[%c0_342, %c640_343], %295 {strides = array<i32>} : memref<8x1256xbf16, #tpu.memory_space<vmem>>, vector<8x256xbf16>,
    %c0_344 = arith.constant 0 : index
    %c0_345 = arith.constant 0 : index
    %c785 = arith.constant 785 : index
    %297 = vector.load %arg1[%c0_344, %c0_345, %c785] : memref<1x4x1256xbf16, #tpu.memory_space<vmem>>, vector<1x4x232xbf16>
    %298 = vector.shape_cast %297 : vector<1x4x232xbf16> to vector<4x232xbf16>
    %c0_346 = arith.constant 0 : index
    %c0_347 = arith.constant 0 : index
    %299 = vector.load %arg9[%c0_346, %c0_347] : memref<128x256xbf16, #tpu.memory_space<vmem>>, vector<4x232xbf16>
    tpu.vector_store %arg9[%c0_346, %c0_347], %298 {strides = array<i32>} : memref<128x256xbf16, #tpu.memory_space<vmem>>, vector<4x232xbf16>,
    %c0_348 = arith.constant 0 : index
    %c0_349 = arith.constant 0 : index
    %c786 = arith.constant 786 : index
    %300 = vector.load %arg1[%c0_348, %c0_349, %c786] : memref<1x4x1256xbf16, #tpu.memory_space<vmem>>, vector<1x4x232xbf16>
    %301 = vector.shape_cast %300 : vector<1x4x232xbf16> to vector<4x232xbf16>
    %c4_350 = arith.constant 4 : index
    %c0_351 = arith.constant 0 : index
    %302 = vector.load %arg9[%c4_350, %c0_351] : memref<128x256xbf16, #tpu.memory_space<vmem>>, vector<4x232xbf16>
    tpu.vector_store %arg9[%c4_350, %c0_351], %301 {strides = array<i32>} : memref<128x256xbf16, #tpu.memory_space<vmem>>, vector<4x232xbf16>,
    %c0_352 = arith.constant 0 : index
    %c0_353 = arith.constant 0 : index
    %c787 = arith.constant 787 : index
    %303 = vector.load %arg1[%c0_352, %c0_353, %c787] : memref<1x4x1256xbf16, #tpu.memory_space<vmem>>, vector<1x4x232xbf16>
    %304 = vector.shape_cast %303 : vector<1x4x232xbf16> to vector<4x232xbf16>
    %c8_354 = arith.constant 8 : index
    %c0_355 = arith.constant 0 : index
    %305 = vector.load %arg9[%c8_354, %c0_355] : memref<128x256xbf16, #tpu.memory_space<vmem>>, vector<4x232xbf16>
    tpu.vector_store %arg9[%c8_354, %c0_355], %304 {strides = array<i32>} : memref<128x256xbf16, #tpu.memory_space<vmem>>, vector<4x232xbf16>,
    %c0_356 = arith.constant 0 : index
    %c0_357 = arith.constant 0 : index
    %c795 = arith.constant 795 : index
    %306 = vector.load %arg1[%c0_356, %c0_357, %c795] : memref<1x4x1256xbf16, #tpu.memory_space<vmem>>, vector<1x4x232xbf16>
    %307 = vector.shape_cast %306 : vector<1x4x232xbf16> to vector<4x232xbf16>
    %c12_358 = arith.constant 12 : index
    %c0_359 = arith.constant 0 : index
    %308 = vector.load %arg9[%c12_358, %c0_359] : memref<128x256xbf16, #tpu.memory_space<vmem>>, vector<4x232xbf16>
    tpu.vector_store %arg9[%c12_358, %c0_359], %307 {strides = array<i32>} : memref<128x256xbf16, #tpu.memory_space<vmem>>, vector<4x232xbf16>,
    %c0_360 = arith.constant 0 : index
    %c0_361 = arith.constant 0 : index
    %c796 = arith.constant 796 : index
    %309 = vector.load %arg1[%c0_360, %c0_361, %c796] : memref<1x4x1256xbf16, #tpu.memory_space<vmem>>, vector<1x4x232xbf16>
    %310 = vector.shape_cast %309 : vector<1x4x232xbf16> to vector<4x232xbf16>
    %c16_362 = arith.constant 16 : index
    %c0_363 = arith.constant 0 : index
    %311 = vector.load %arg9[%c16_362, %c0_363] : memref<128x256xbf16, #tpu.memory_space<vmem>>, vector<4x232xbf16>
    tpu.vector_store %arg9[%c16_362, %c0_363], %310 {strides = array<i32>} : memref<128x256xbf16, #tpu.memory_space<vmem>>, vector<4x232xbf16>,
    %c0_364 = arith.constant 0 : index
    %c0_365 = arith.constant 0 : index
    %c797 = arith.constant 797 : index
    %312 = vector.load %arg1[%c0_364, %c0_365, %c797] : memref<1x4x1256xbf16, #tpu.memory_space<vmem>>, vector<1x4x232xbf16>
    %313 = vector.shape_cast %312 : vector<1x4x232xbf16> to vector<4x232xbf16>
    %c20_366 = arith.constant 20 : index
    %c0_367 = arith.constant 0 : index
    %314 = vector.load %arg9[%c20_366, %c0_367] : memref<128x256xbf16, #tpu.memory_space<vmem>>, vector<4x232xbf16>
    tpu.vector_store %arg9[%c20_366, %c0_367], %313 {strides = array<i32>} : memref<128x256xbf16, #tpu.memory_space<vmem>>, vector<4x232xbf16>,
    %c0_368 = arith.constant 0 : index
    %c0_369 = arith.constant 0 : index
    %c805 = arith.constant 805 : index
    %315 = vector.load %arg1[%c0_368, %c0_369, %c805] : memref<1x4x1256xbf16, #tpu.memory_space<vmem>>, vector<1x4x232xbf16>
    %316 = vector.shape_cast %315 : vector<1x4x232xbf16> to vector<4x232xbf16>
    %c24_370 = arith.constant 24 : index
    %c0_371 = arith.constant 0 : index
    %317 = vector.load %arg9[%c24_370, %c0_371] : memref<128x256xbf16, #tpu.memory_space<vmem>>, vector<4x232xbf16>
    tpu.vector_store %arg9[%c24_370, %c0_371], %316 {strides = array<i32>} : memref<128x256xbf16, #tpu.memory_space<vmem>>, vector<4x232xbf16>,
    %c0_372 = arith.constant 0 : index
    %c0_373 = arith.constant 0 : index
    %c806 = arith.constant 806 : index
    %318 = vector.load %arg1[%c0_372, %c0_373, %c806] : memref<1x4x1256xbf16, #tpu.memory_space<vmem>>, vector<1x4x232xbf16>
    %319 = vector.shape_cast %318 : vector<1x4x232xbf16> to vector<4x232xbf16>
    %c28_374 = arith.constant 28 : index
    %c0_375 = arith.constant 0 : index
    %320 = vector.load %arg9[%c28_374, %c0_375] : memref<128x256xbf16, #tpu.memory_space<vmem>>, vector<4x232xbf16>
    tpu.vector_store %arg9[%c28_374, %c0_375], %319 {strides = array<i32>} : memref<128x256xbf16, #tpu.memory_space<vmem>>, vector<4x232xbf16>,
    %c0_376 = arith.constant 0 : index
    %c0_377 = arith.constant 0 : index
    %c807 = arith.constant 807 : index
    %321 = vector.load %arg1[%c0_376, %c0_377, %c807] : memref<1x4x1256xbf16, #tpu.memory_space<vmem>>, vector<1x4x232xbf16>
    %322 = vector.shape_cast %321 : vector<1x4x232xbf16> to vector<4x232xbf16>
    %c32_378 = arith.constant 32 : index
    %c0_379 = arith.constant 0 : index
    %323 = vector.load %arg9[%c32_378, %c0_379] : memref<128x256xbf16, #tpu.memory_space<vmem>>, vector<4x232xbf16>
    tpu.vector_store %arg9[%c32_378, %c0_379], %322 {strides = array<i32>} : memref<128x256xbf16, #tpu.memory_space<vmem>>, vector<4x232xbf16>,
    %c0_380 = arith.constant 0 : index
    %c0_381 = arith.constant 0 : index
    %c885 = arith.constant 885 : index
    %324 = vector.load %arg1[%c0_380, %c0_381, %c885] : memref<1x4x1256xbf16, #tpu.memory_space<vmem>>, vector<1x4x232xbf16>
    %325 = vector.shape_cast %324 : vector<1x4x232xbf16> to vector<4x232xbf16>
    %c36_382 = arith.constant 36 : index
    %c0_383 = arith.constant 0 : index
    %326 = vector.load %arg9[%c36_382, %c0_383] : memref<128x256xbf16, #tpu.memory_space<vmem>>, vector<4x232xbf16>
    tpu.vector_store %arg9[%c36_382, %c0_383], %325 {strides = array<i32>} : memref<128x256xbf16, #tpu.memory_space<vmem>>, vector<4x232xbf16>,
    %c0_384 = arith.constant 0 : index
    %c0_385 = arith.constant 0 : index
    %c886 = arith.constant 886 : index
    %327 = vector.load %arg1[%c0_384, %c0_385, %c886] : memref<1x4x1256xbf16, #tpu.memory_space<vmem>>, vector<1x4x232xbf16>
    %328 = vector.shape_cast %327 : vector<1x4x232xbf16> to vector<4x232xbf16>
    %c40_386 = arith.constant 40 : index
    %c0_387 = arith.constant 0 : index
    %329 = vector.load %arg9[%c40_386, %c0_387] : memref<128x256xbf16, #tpu.memory_space<vmem>>, vector<4x232xbf16>
    tpu.vector_store %arg9[%c40_386, %c0_387], %328 {strides = array<i32>} : memref<128x256xbf16, #tpu.memory_space<vmem>>, vector<4x232xbf16>,
    %c0_388 = arith.constant 0 : index
    %c0_389 = arith.constant 0 : index
    %c887 = arith.constant 887 : index
    %330 = vector.load %arg1[%c0_388, %c0_389, %c887] : memref<1x4x1256xbf16, #tpu.memory_space<vmem>>, vector<1x4x232xbf16>
    %331 = vector.shape_cast %330 : vector<1x4x232xbf16> to vector<4x232xbf16>
    %c44_390 = arith.constant 44 : index
    %c0_391 = arith.constant 0 : index
    %332 = vector.load %arg9[%c44_390, %c0_391] : memref<128x256xbf16, #tpu.memory_space<vmem>>, vector<4x232xbf16>
    tpu.vector_store %arg9[%c44_390, %c0_391], %331 {strides = array<i32>} : memref<128x256xbf16, #tpu.memory_space<vmem>>, vector<4x232xbf16>,
    %c0_392 = arith.constant 0 : index
    %c0_393 = arith.constant 0 : index
    %c895 = arith.constant 895 : index
    %333 = vector.load %arg1[%c0_392, %c0_393, %c895] : memref<1x4x1256xbf16, #tpu.memory_space<vmem>>, vector<1x4x232xbf16>
    %334 = vector.shape_cast %333 : vector<1x4x232xbf16> to vector<4x232xbf16>
    %c48_394 = arith.constant 48 : index
    %c0_395 = arith.constant 0 : index
    %335 = vector.load %arg9[%c48_394, %c0_395] : memref<128x256xbf16, #tpu.memory_space<vmem>>, vector<4x232xbf16>
    tpu.vector_store %arg9[%c48_394, %c0_395], %334 {strides = array<i32>} : memref<128x256xbf16, #tpu.memory_space<vmem>>, vector<4x232xbf16>,
    %c0_396 = arith.constant 0 : index
    %c0_397 = arith.constant 0 : index
    %c896 = arith.constant 896 : index
    %336 = vector.load %arg1[%c0_396, %c0_397, %c896] : memref<1x4x1256xbf16, #tpu.memory_space<vmem>>, vector<1x4x232xbf16>
    %337 = vector.shape_cast %336 : vector<1x4x232xbf16> to vector<4x232xbf16>
    %c52_398 = arith.constant 52 : index
    %c0_399 = arith.constant 0 : index
    %338 = vector.load %arg9[%c52_398, %c0_399] : memref<128x256xbf16, #tpu.memory_space<vmem>>, vector<4x232xbf16>
    tpu.vector_store %arg9[%c52_398, %c0_399], %337 {strides = array<i32>} : memref<128x256xbf16, #tpu.memory_space<vmem>>, vector<4x232xbf16>,
    %c0_400 = arith.constant 0 : index
    %c0_401 = arith.constant 0 : index
    %c897 = arith.constant 897 : index
    %339 = vector.load %arg1[%c0_400, %c0_401, %c897] : memref<1x4x1256xbf16, #tpu.memory_space<vmem>>, vector<1x4x232xbf16>
    %340 = vector.shape_cast %339 : vector<1x4x232xbf16> to vector<4x232xbf16>
    %c56_402 = arith.constant 56 : index
    %c0_403 = arith.constant 0 : index
    %341 = vector.load %arg9[%c56_402, %c0_403] : memref<128x256xbf16, #tpu.memory_space<vmem>>, vector<4x232xbf16>
    tpu.vector_store %arg9[%c56_402, %c0_403], %340 {strides = array<i32>} : memref<128x256xbf16, #tpu.memory_space<vmem>>, vector<4x232xbf16>,
    %c0_404 = arith.constant 0 : index
    %c0_405 = arith.constant 0 : index
    %c905 = arith.constant 905 : index
    %342 = vector.load %arg1[%c0_404, %c0_405, %c905] : memref<1x4x1256xbf16, #tpu.memory_space<vmem>>, vector<1x4x232xbf16>
    %343 = vector.shape_cast %342 : vector<1x4x232xbf16> to vector<4x232xbf16>
    %c60_406 = arith.constant 60 : index
    %c0_407 = arith.constant 0 : index
    %344 = vector.load %arg9[%c60_406, %c0_407] : memref<128x256xbf16, #tpu.memory_space<vmem>>, vector<4x232xbf16>
    tpu.vector_store %arg9[%c60_406, %c0_407], %343 {strides = array<i32>} : memref<128x256xbf16, #tpu.memory_space<vmem>>, vector<4x232xbf16>,
    %c0_408 = arith.constant 0 : index
    %c0_409 = arith.constant 0 : index
    %c906 = arith.constant 906 : index
    %345 = vector.load %arg1[%c0_408, %c0_409, %c906] : memref<1x4x1256xbf16, #tpu.memory_space<vmem>>, vector<1x4x232xbf16>
    %346 = vector.shape_cast %345 : vector<1x4x232xbf16> to vector<4x232xbf16>
    %c64_410 = arith.constant 64 : index
    %c0_411 = arith.constant 0 : index
    %347 = vector.load %arg9[%c64_410, %c0_411] : memref<128x256xbf16, #tpu.memory_space<vmem>>, vector<4x232xbf16>
    tpu.vector_store %arg9[%c64_410, %c0_411], %346 {strides = array<i32>} : memref<128x256xbf16, #tpu.memory_space<vmem>>, vector<4x232xbf16>,
    %c0_412 = arith.constant 0 : index
    %c0_413 = arith.constant 0 : index
    %c907 = arith.constant 907 : index
    %348 = vector.load %arg1[%c0_412, %c0_413, %c907] : memref<1x4x1256xbf16, #tpu.memory_space<vmem>>, vector<1x4x232xbf16>
    %349 = vector.shape_cast %348 : vector<1x4x232xbf16> to vector<4x232xbf16>
    %c68_414 = arith.constant 68 : index
    %c0_415 = arith.constant 0 : index
    %350 = vector.load %arg9[%c68_414, %c0_415] : memref<128x256xbf16, #tpu.memory_space<vmem>>, vector<4x232xbf16>
    tpu.vector_store %arg9[%c68_414, %c0_415], %349 {strides = array<i32>} : memref<128x256xbf16, #tpu.memory_space<vmem>>, vector<4x232xbf16>,
    %c0_416 = arith.constant 0 : index
    %c0_417 = arith.constant 0 : index
    %c985 = arith.constant 985 : index
    %351 = vector.load %arg1[%c0_416, %c0_417, %c985] : memref<1x4x1256xbf16, #tpu.memory_space<vmem>>, vector<1x4x232xbf16>
    %352 = vector.shape_cast %351 : vector<1x4x232xbf16> to vector<4x232xbf16>
    %c72_418 = arith.constant 72 : index
    %c0_419 = arith.constant 0 : index
    %353 = vector.load %arg9[%c72_418, %c0_419] : memref<128x256xbf16, #tpu.memory_space<vmem>>, vector<4x232xbf16>
    tpu.vector_store %arg9[%c72_418, %c0_419], %352 {strides = array<i32>} : memref<128x256xbf16, #tpu.memory_space<vmem>>, vector<4x232xbf16>,
    %c0_420 = arith.constant 0 : index
    %c0_421 = arith.constant 0 : index
    %c986 = arith.constant 986 : index
    %354 = vector.load %arg1[%c0_420, %c0_421, %c986] : memref<1x4x1256xbf16, #tpu.memory_space<vmem>>, vector<1x4x232xbf16>
    %355 = vector.shape_cast %354 : vector<1x4x232xbf16> to vector<4x232xbf16>
    %c76_422 = arith.constant 76 : index
    %c0_423 = arith.constant 0 : index
    %356 = vector.load %arg9[%c76_422, %c0_423] : memref<128x256xbf16, #tpu.memory_space<vmem>>, vector<4x232xbf16>
    tpu.vector_store %arg9[%c76_422, %c0_423], %355 {strides = array<i32>} : memref<128x256xbf16, #tpu.memory_space<vmem>>, vector<4x232xbf16>,
    %c0_424 = arith.constant 0 : index
    %c0_425 = arith.constant 0 : index
    %c987 = arith.constant 987 : index
    %357 = vector.load %arg1[%c0_424, %c0_425, %c987] : memref<1x4x1256xbf16, #tpu.memory_space<vmem>>, vector<1x4x232xbf16>
    %358 = vector.shape_cast %357 : vector<1x4x232xbf16> to vector<4x232xbf16>
    %c80_426 = arith.constant 80 : index
    %c0_427 = arith.constant 0 : index
    %359 = vector.load %arg9[%c80_426, %c0_427] : memref<128x256xbf16, #tpu.memory_space<vmem>>, vector<4x232xbf16>
    tpu.vector_store %arg9[%c80_426, %c0_427], %358 {strides = array<i32>} : memref<128x256xbf16, #tpu.memory_space<vmem>>, vector<4x232xbf16>,
    %c0_428 = arith.constant 0 : index
    %c0_429 = arith.constant 0 : index
    %c995 = arith.constant 995 : index
    %360 = vector.load %arg1[%c0_428, %c0_429, %c995] : memref<1x4x1256xbf16, #tpu.memory_space<vmem>>, vector<1x4x232xbf16>
    %361 = vector.shape_cast %360 : vector<1x4x232xbf16> to vector<4x232xbf16>
    %c84_430 = arith.constant 84 : index
    %c0_431 = arith.constant 0 : index
    %362 = vector.load %arg9[%c84_430, %c0_431] : memref<128x256xbf16, #tpu.memory_space<vmem>>, vector<4x232xbf16>
    tpu.vector_store %arg9[%c84_430, %c0_431], %361 {strides = array<i32>} : memref<128x256xbf16, #tpu.memory_space<vmem>>, vector<4x232xbf16>,
    %c0_432 = arith.constant 0 : index
    %c0_433 = arith.constant 0 : index
    %c996 = arith.constant 996 : index
    %363 = vector.load %arg1[%c0_432, %c0_433, %c996] : memref<1x4x1256xbf16, #tpu.memory_space<vmem>>, vector<1x4x232xbf16>
    %364 = vector.shape_cast %363 : vector<1x4x232xbf16> to vector<4x232xbf16>
    %c88_434 = arith.constant 88 : index
    %c0_435 = arith.constant 0 : index
    %365 = vector.load %arg9[%c88_434, %c0_435] : memref<128x256xbf16, #tpu.memory_space<vmem>>, vector<4x232xbf16>
    tpu.vector_store %arg9[%c88_434, %c0_435], %364 {strides = array<i32>} : memref<128x256xbf16, #tpu.memory_space<vmem>>, vector<4x232xbf16>,
    %c0_436 = arith.constant 0 : index
    %c0_437 = arith.constant 0 : index
    %c997 = arith.constant 997 : index
    %366 = vector.load %arg1[%c0_436, %c0_437, %c997] : memref<1x4x1256xbf16, #tpu.memory_space<vmem>>, vector<1x4x232xbf16>
    %367 = vector.shape_cast %366 : vector<1x4x232xbf16> to vector<4x232xbf16>
    %c92_438 = arith.constant 92 : index
    %c0_439 = arith.constant 0 : index
    %368 = vector.load %arg9[%c92_438, %c0_439] : memref<128x256xbf16, #tpu.memory_space<vmem>>, vector<4x232xbf16>
    tpu.vector_store %arg9[%c92_438, %c0_439], %367 {strides = array<i32>} : memref<128x256xbf16, #tpu.memory_space<vmem>>, vector<4x232xbf16>,
    %c0_440 = arith.constant 0 : index
    %c0_441 = arith.constant 0 : index
    %c1005 = arith.constant 1005 : index
    %369 = vector.load %arg1[%c0_440, %c0_441, %c1005] : memref<1x4x1256xbf16, #tpu.memory_space<vmem>>, vector<1x4x232xbf16>
    %370 = vector.shape_cast %369 : vector<1x4x232xbf16> to vector<4x232xbf16>
    %c96_442 = arith.constant 96 : index
    %c0_443 = arith.constant 0 : index
    %371 = vector.load %arg9[%c96_442, %c0_443] : memref<128x256xbf16, #tpu.memory_space<vmem>>, vector<4x232xbf16>
    tpu.vector_store %arg9[%c96_442, %c0_443], %370 {strides = array<i32>} : memref<128x256xbf16, #tpu.memory_space<vmem>>, vector<4x232xbf16>,
    %c0_444 = arith.constant 0 : index
    %c0_445 = arith.constant 0 : index
    %c1006 = arith.constant 1006 : index
    %372 = vector.load %arg1[%c0_444, %c0_445, %c1006] : memref<1x4x1256xbf16, #tpu.memory_space<vmem>>, vector<1x4x232xbf16>
    %373 = vector.shape_cast %372 : vector<1x4x232xbf16> to vector<4x232xbf16>
    %c100_446 = arith.constant 100 : index
    %c0_447 = arith.constant 0 : index
    %374 = vector.load %arg9[%c100_446, %c0_447] : memref<128x256xbf16, #tpu.memory_space<vmem>>, vector<4x232xbf16>
    tpu.vector_store %arg9[%c100_446, %c0_447], %373 {strides = array<i32>} : memref<128x256xbf16, #tpu.memory_space<vmem>>, vector<4x232xbf16>,
    %c0_448 = arith.constant 0 : index
    %c0_449 = arith.constant 0 : index
    %c1007 = arith.constant 1007 : index
    %375 = vector.load %arg1[%c0_448, %c0_449, %c1007] : memref<1x4x1256xbf16, #tpu.memory_space<vmem>>, vector<1x4x232xbf16>
    %376 = vector.shape_cast %375 : vector<1x4x232xbf16> to vector<4x232xbf16>
    %c104_450 = arith.constant 104 : index
    %c0_451 = arith.constant 0 : index
    %377 = vector.load %arg9[%c104_450, %c0_451] : memref<128x256xbf16, #tpu.memory_space<vmem>>, vector<4x232xbf16>
    tpu.vector_store %arg9[%c104_450, %c0_451], %376 {strides = array<i32>} : memref<128x256xbf16, #tpu.memory_space<vmem>>, vector<4x232xbf16>,
    %c0_452 = arith.constant 0 : index
    %c0_453 = arith.constant 0 : index
    %378 = vector.load %arg2[%c0_452, %c0_453] : memref<16x128xbf16, #tpu.memory_space<vmem>>, vector<16x128xbf16>
    %c0_454 = arith.constant 0 : index
    %c0_455 = arith.constant 0 : index
    %379 = vector.load %arg9[%c0_454, %c0_455] : memref<128x256xbf16, #tpu.memory_space<vmem>>, vector<128x232xbf16>
    %cst_456 = arith.constant dense<0.000000e+00> : vector<16x232xf32>
    %380 = tpu.matmul %378, %379, %cst_456 {dimension_numbers = #tpu.dot_dimension_numbers<[1], [0], [0], [1], [0, 0, 1, 1], [], []>} : vector<16x128xbf16>, vector<128x232xbf16>, vector<16x232xf32> -> vector<16x232xf32>
    %381 = vector.extract_strided_slice %380 {offsets = [0, 0], sizes = [8, 232], strides = [1, 1]} : vector<16x232xf32> to vector<8x232xf32>
    %c0_457 = arith.constant 0 : index
    %c768 = arith.constant 768 : index
    %382 = vector.load %arg11[%c0_457, %c768] : memref<8x1000xf32, #tpu.memory_space<vmem>>, vector<8x232xf32>
    tpu.vector_store %arg11[%c0_457, %c768], %381 {strides = array<i32>} : memref<8x1000xf32, #tpu.memory_space<vmem>>, vector<8x232xf32>,
    %383 = vector.extract_strided_slice %380 {offsets = [8, 0], sizes = [8, 232], strides = [1, 1]} : vector<16x232xf32> to vector<8x232xf32>
    %c0_458 = arith.constant 0 : index
    %c0_459 = arith.constant 0 : index
    %384 = vector.load %arg4[%c0_458, %c0_459] : memref<8x1xf32, #tpu.memory_space<vmem>>, vector<8x1xf32>
    %385 = vector.broadcast %384 : vector<8x1xf32> to vector<8x232xf32>
    %386 = arith.addf %383, %385 : vector<8x232xf32>
    %cst_460 = arith.constant 0.000000e+00 : f32
    %387 = vector.broadcast %cst_460 : f32 to vector<8x232xf32>
    %388 = arith.maximumf %386, %387 : vector<8x232xf32>
    %c0_461 = arith.constant 0 : index
    %c768_462 = arith.constant 768 : index
    %389 = vector.load %arg6[%c0_461, %c768_462] : memref<1x1000xf32, #tpu.memory_space<vmem>>, vector<1x232xf32>
    %390 = vector.broadcast %389 : vector<1x232xf32> to vector<8x232xf32>
    %391 = arith.mulf %388, %390 : vector<8x232xf32>
    %392 = arith.truncf %391 : vector<8x232xf32> to vector<8x232xbf16>
    %c0_463 = arith.constant 0 : index
    %c896_464 = arith.constant 896 : index
    %393 = vector.load %arg8[%c0_463, %c896_464] : memref<8x1256xbf16, #tpu.memory_space<vmem>>, vector<8x232xbf16>
    tpu.vector_store %arg8[%c0_463, %c896_464], %392 {strides = array<i32>} : memref<8x1256xbf16, #tpu.memory_space<vmem>>, vector<8x232xbf16>,
    %c0_465 = arith.constant 0 : index
    %c17_466 = arith.constant 17 : index
    %394 = vector.load %arg8[%c0_465, %c17_466] : memref<8x1256xbf16, #tpu.memory_space<vmem>>, vector<8x256xbf16>
    %c0_467 = arith.constant 0 : index
    %c0_468 = arith.constant 0 : index
    %395 = vector.load %arg10[%c0_467, %c0_468] : memref<216x256xbf16, #tpu.memory_space<vmem>>, vector<8x256xbf16>
    tpu.vector_store %arg10[%c0_467, %c0_468], %394 {strides = array<i32>} : memref<216x256xbf16, #tpu.memory_space<vmem>>, vector<8x256xbf16>,
    %c0_469 = arith.constant 0 : index
    %c18_470 = arith.constant 18 : index
    %396 = vector.load %arg8[%c0_469, %c18_470] : memref<8x1256xbf16, #tpu.memory_space<vmem>>, vector<8x256xbf16>
    %c8_471 = arith.constant 8 : index
    %c0_472 = arith.constant 0 : index
    %397 = vector.load %arg10[%c8_471, %c0_472] : memref<216x256xbf16, #tpu.memory_space<vmem>>, vector<8x256xbf16>
    tpu.vector_store %arg10[%c8_471, %c0_472], %396 {strides = array<i32>} : memref<216x256xbf16, #tpu.memory_space<vmem>>, vector<8x256xbf16>,
    %c0_473 = arith.constant 0 : index
    %c19_474 = arith.constant 19 : index
    %398 = vector.load %arg8[%c0_473, %c19_474] : memref<8x1256xbf16, #tpu.memory_space<vmem>>, vector<8x256xbf16>
    %c16_475 = arith.constant 16 : index
    %c0_476 = arith.constant 0 : index
    %399 = vector.load %arg10[%c16_475, %c0_476] : memref<216x256xbf16, #tpu.memory_space<vmem>>, vector<8x256xbf16>
    tpu.vector_store %arg10[%c16_475, %c0_476], %398 {strides = array<i32>} : memref<216x256xbf16, #tpu.memory_space<vmem>>, vector<8x256xbf16>,
    %c0_477 = arith.constant 0 : index
    %c27_478 = arith.constant 27 : index
    %400 = vector.load %arg8[%c0_477, %c27_478] : memref<8x1256xbf16, #tpu.memory_space<vmem>>, vector<8x256xbf16>
    %c24_479 = arith.constant 24 : index
    %c0_480 = arith.constant 0 : index
    %401 = vector.load %arg10[%c24_479, %c0_480] : memref<216x256xbf16, #tpu.memory_space<vmem>>, vector<8x256xbf16>
    tpu.vector_store %arg10[%c24_479, %c0_480], %400 {strides = array<i32>} : memref<216x256xbf16, #tpu.memory_space<vmem>>, vector<8x256xbf16>,
    %c0_481 = arith.constant 0 : index
    %c28_482 = arith.constant 28 : index
    %402 = vector.load %arg8[%c0_481, %c28_482] : memref<8x1256xbf16, #tpu.memory_space<vmem>>, vector<8x256xbf16>
    %c32_483 = arith.constant 32 : index
    %c0_484 = arith.constant 0 : index
    %403 = vector.load %arg10[%c32_483, %c0_484] : memref<216x256xbf16, #tpu.memory_space<vmem>>, vector<8x256xbf16>
    tpu.vector_store %arg10[%c32_483, %c0_484], %402 {strides = array<i32>} : memref<216x256xbf16, #tpu.memory_space<vmem>>, vector<8x256xbf16>,
    %c0_485 = arith.constant 0 : index
    %c29_486 = arith.constant 29 : index
    %404 = vector.load %arg8[%c0_485, %c29_486] : memref<8x1256xbf16, #tpu.memory_space<vmem>>, vector<8x256xbf16>
    %c40_487 = arith.constant 40 : index
    %c0_488 = arith.constant 0 : index
    %405 = vector.load %arg10[%c40_487, %c0_488] : memref<216x256xbf16, #tpu.memory_space<vmem>>, vector<8x256xbf16>
    tpu.vector_store %arg10[%c40_487, %c0_488], %404 {strides = array<i32>} : memref<216x256xbf16, #tpu.memory_space<vmem>>, vector<8x256xbf16>,
    %c0_489 = arith.constant 0 : index
    %c37_490 = arith.constant 37 : index
    %406 = vector.load %arg8[%c0_489, %c37_490] : memref<8x1256xbf16, #tpu.memory_space<vmem>>, vector<8x256xbf16>
    %c48_491 = arith.constant 48 : index
    %c0_492 = arith.constant 0 : index
    %407 = vector.load %arg10[%c48_491, %c0_492] : memref<216x256xbf16, #tpu.memory_space<vmem>>, vector<8x256xbf16>
    tpu.vector_store %arg10[%c48_491, %c0_492], %406 {strides = array<i32>} : memref<216x256xbf16, #tpu.memory_space<vmem>>, vector<8x256xbf16>,
    %c0_493 = arith.constant 0 : index
    %c38_494 = arith.constant 38 : index
    %408 = vector.load %arg8[%c0_493, %c38_494] : memref<8x1256xbf16, #tpu.memory_space<vmem>>, vector<8x256xbf16>
    %c56_495 = arith.constant 56 : index
    %c0_496 = arith.constant 0 : index
    %409 = vector.load %arg10[%c56_495, %c0_496] : memref<216x256xbf16, #tpu.memory_space<vmem>>, vector<8x256xbf16>
    tpu.vector_store %arg10[%c56_495, %c0_496], %408 {strides = array<i32>} : memref<216x256xbf16, #tpu.memory_space<vmem>>, vector<8x256xbf16>,
    %c0_497 = arith.constant 0 : index
    %c39_498 = arith.constant 39 : index
    %410 = vector.load %arg8[%c0_497, %c39_498] : memref<8x1256xbf16, #tpu.memory_space<vmem>>, vector<8x256xbf16>
    %c64_499 = arith.constant 64 : index
    %c0_500 = arith.constant 0 : index
    %411 = vector.load %arg10[%c64_499, %c0_500] : memref<216x256xbf16, #tpu.memory_space<vmem>>, vector<8x256xbf16>
    tpu.vector_store %arg10[%c64_499, %c0_500], %410 {strides = array<i32>} : memref<216x256xbf16, #tpu.memory_space<vmem>>, vector<8x256xbf16>,
    %c0_501 = arith.constant 0 : index
    %c117_502 = arith.constant 117 : index
    %412 = vector.load %arg8[%c0_501, %c117_502] : memref<8x1256xbf16, #tpu.memory_space<vmem>>, vector<8x256xbf16>
    %c72_503 = arith.constant 72 : index
    %c0_504 = arith.constant 0 : index
    %413 = vector.load %arg10[%c72_503, %c0_504] : memref<216x256xbf16, #tpu.memory_space<vmem>>, vector<8x256xbf16>
    tpu.vector_store %arg10[%c72_503, %c0_504], %412 {strides = array<i32>} : memref<216x256xbf16, #tpu.memory_space<vmem>>, vector<8x256xbf16>,
    %c0_505 = arith.constant 0 : index
    %c118_506 = arith.constant 118 : index
    %414 = vector.load %arg8[%c0_505, %c118_506] : memref<8x1256xbf16, #tpu.memory_space<vmem>>, vector<8x256xbf16>
    %c80_507 = arith.constant 80 : index
    %c0_508 = arith.constant 0 : index
    %415 = vector.load %arg10[%c80_507, %c0_508] : memref<216x256xbf16, #tpu.memory_space<vmem>>, vector<8x256xbf16>
    tpu.vector_store %arg10[%c80_507, %c0_508], %414 {strides = array<i32>} : memref<216x256xbf16, #tpu.memory_space<vmem>>, vector<8x256xbf16>,
    %c0_509 = arith.constant 0 : index
    %c119_510 = arith.constant 119 : index
    %416 = vector.load %arg8[%c0_509, %c119_510] : memref<8x1256xbf16, #tpu.memory_space<vmem>>, vector<8x256xbf16>
    %c88_511 = arith.constant 88 : index
    %c0_512 = arith.constant 0 : index
    %417 = vector.load %arg10[%c88_511, %c0_512] : memref<216x256xbf16, #tpu.memory_space<vmem>>, vector<8x256xbf16>
    tpu.vector_store %arg10[%c88_511, %c0_512], %416 {strides = array<i32>} : memref<216x256xbf16, #tpu.memory_space<vmem>>, vector<8x256xbf16>,
    %c0_513 = arith.constant 0 : index
    %c127_514 = arith.constant 127 : index
    %418 = vector.load %arg8[%c0_513, %c127_514] : memref<8x1256xbf16, #tpu.memory_space<vmem>>, vector<8x256xbf16>
    %c96_515 = arith.constant 96 : index
    %c0_516 = arith.constant 0 : index
    %419 = vector.load %arg10[%c96_515, %c0_516] : memref<216x256xbf16, #tpu.memory_space<vmem>>, vector<8x256xbf16>
    tpu.vector_store %arg10[%c96_515, %c0_516], %418 {strides = array<i32>} : memref<216x256xbf16, #tpu.memory_space<vmem>>, vector<8x256xbf16>,
    %c0_517 = arith.constant 0 : index
    %c128_518 = arith.constant 128 : index
    %420 = vector.load %arg8[%c0_517, %c128_518] : memref<8x1256xbf16, #tpu.memory_space<vmem>>, vector<8x256xbf16>
    %c104_519 = arith.constant 104 : index
    %c0_520 = arith.constant 0 : index
    %421 = vector.load %arg10[%c104_519, %c0_520] : memref<216x256xbf16, #tpu.memory_space<vmem>>, vector<8x256xbf16>
    tpu.vector_store %arg10[%c104_519, %c0_520], %420 {strides = array<i32>} : memref<216x256xbf16, #tpu.memory_space<vmem>>, vector<8x256xbf16>,
    %c0_521 = arith.constant 0 : index
    %c129_522 = arith.constant 129 : index
    %422 = vector.load %arg8[%c0_521, %c129_522] : memref<8x1256xbf16, #tpu.memory_space<vmem>>, vector<8x256xbf16>
    %c112 = arith.constant 112 : index
    %c0_523 = arith.constant 0 : index
    %423 = vector.load %arg10[%c112, %c0_523] : memref<216x256xbf16, #tpu.memory_space<vmem>>, vector<8x256xbf16>
    tpu.vector_store %arg10[%c112, %c0_523], %422 {strides = array<i32>} : memref<216x256xbf16, #tpu.memory_space<vmem>>, vector<8x256xbf16>,
    %c0_524 = arith.constant 0 : index
    %c137_525 = arith.constant 137 : index
    %424 = vector.load %arg8[%c0_524, %c137_525] : memref<8x1256xbf16, #tpu.memory_space<vmem>>, vector<8x256xbf16>
    %c120 = arith.constant 120 : index
    %c0_526 = arith.constant 0 : index
    %425 = vector.load %arg10[%c120, %c0_526] : memref<216x256xbf16, #tpu.memory_space<vmem>>, vector<8x256xbf16>
    tpu.vector_store %arg10[%c120, %c0_526], %424 {strides = array<i32>} : memref<216x256xbf16, #tpu.memory_space<vmem>>, vector<8x256xbf16>,
    %c0_527 = arith.constant 0 : index
    %c138_528 = arith.constant 138 : index
    %426 = vector.load %arg8[%c0_527, %c138_528] : memref<8x1256xbf16, #tpu.memory_space<vmem>>, vector<8x256xbf16>
    %c128_529 = arith.constant 128 : index
    %c0_530 = arith.constant 0 : index
    %427 = vector.load %arg10[%c128_529, %c0_530] : memref<216x256xbf16, #tpu.memory_space<vmem>>, vector<8x256xbf16>
    tpu.vector_store %arg10[%c128_529, %c0_530], %426 {strides = array<i32>} : memref<216x256xbf16, #tpu.memory_space<vmem>>, vector<8x256xbf16>,
    %c0_531 = arith.constant 0 : index
    %c139_532 = arith.constant 139 : index
    %428 = vector.load %arg8[%c0_531, %c139_532] : memref<8x1256xbf16, #tpu.memory_space<vmem>>, vector<8x256xbf16>
    %c136 = arith.constant 136 : index
    %c0_533 = arith.constant 0 : index
    %429 = vector.load %arg10[%c136, %c0_533] : memref<216x256xbf16, #tpu.memory_space<vmem>>, vector<8x256xbf16>
    tpu.vector_store %arg10[%c136, %c0_533], %428 {strides = array<i32>} : memref<216x256xbf16, #tpu.memory_space<vmem>>, vector<8x256xbf16>,
    %c0_534 = arith.constant 0 : index
    %c217_535 = arith.constant 217 : index
    %430 = vector.load %arg8[%c0_534, %c217_535] : memref<8x1256xbf16, #tpu.memory_space<vmem>>, vector<8x256xbf16>
    %c144 = arith.constant 144 : index
    %c0_536 = arith.constant 0 : index
    %431 = vector.load %arg10[%c144, %c0_536] : memref<216x256xbf16, #tpu.memory_space<vmem>>, vector<8x256xbf16>
    tpu.vector_store %arg10[%c144, %c0_536], %430 {strides = array<i32>} : memref<216x256xbf16, #tpu.memory_space<vmem>>, vector<8x256xbf16>,
    %c0_537 = arith.constant 0 : index
    %c218_538 = arith.constant 218 : index
    %432 = vector.load %arg8[%c0_537, %c218_538] : memref<8x1256xbf16, #tpu.memory_space<vmem>>, vector<8x256xbf16>
    %c152 = arith.constant 152 : index
    %c0_539 = arith.constant 0 : index
    %433 = vector.load %arg10[%c152, %c0_539] : memref<216x256xbf16, #tpu.memory_space<vmem>>, vector<8x256xbf16>
    tpu.vector_store %arg10[%c152, %c0_539], %432 {strides = array<i32>} : memref<216x256xbf16, #tpu.memory_space<vmem>>, vector<8x256xbf16>,
    %c0_540 = arith.constant 0 : index
    %c219_541 = arith.constant 219 : index
    %434 = vector.load %arg8[%c0_540, %c219_541] : memref<8x1256xbf16, #tpu.memory_space<vmem>>, vector<8x256xbf16>
    %c160 = arith.constant 160 : index
    %c0_542 = arith.constant 0 : index
    %435 = vector.load %arg10[%c160, %c0_542] : memref<216x256xbf16, #tpu.memory_space<vmem>>, vector<8x256xbf16>
    tpu.vector_store %arg10[%c160, %c0_542], %434 {strides = array<i32>} : memref<216x256xbf16, #tpu.memory_space<vmem>>, vector<8x256xbf16>,
    %c0_543 = arith.constant 0 : index
    %c227_544 = arith.constant 227 : index
    %436 = vector.load %arg8[%c0_543, %c227_544] : memref<8x1256xbf16, #tpu.memory_space<vmem>>, vector<8x256xbf16>
    %c168 = arith.constant 168 : index
    %c0_545 = arith.constant 0 : index
    %437 = vector.load %arg10[%c168, %c0_545] : memref<216x256xbf16, #tpu.memory_space<vmem>>, vector<8x256xbf16>
    tpu.vector_store %arg10[%c168, %c0_545], %436 {strides = array<i32>} : memref<216x256xbf16, #tpu.memory_space<vmem>>, vector<8x256xbf16>,
    %c0_546 = arith.constant 0 : index
    %c228_547 = arith.constant 228 : index
    %438 = vector.load %arg8[%c0_546, %c228_547] : memref<8x1256xbf16, #tpu.memory_space<vmem>>, vector<8x256xbf16>
    %c176 = arith.constant 176 : index
    %c0_548 = arith.constant 0 : index
    %439 = vector.load %arg10[%c176, %c0_548] : memref<216x256xbf16, #tpu.memory_space<vmem>>, vector<8x256xbf16>
    tpu.vector_store %arg10[%c176, %c0_548], %438 {strides = array<i32>} : memref<216x256xbf16, #tpu.memory_space<vmem>>, vector<8x256xbf16>,
    %c0_549 = arith.constant 0 : index
    %c229_550 = arith.constant 229 : index
    %440 = vector.load %arg8[%c0_549, %c229_550] : memref<8x1256xbf16, #tpu.memory_space<vmem>>, vector<8x256xbf16>
    %c184 = arith.constant 184 : index
    %c0_551 = arith.constant 0 : index
    %441 = vector.load %arg10[%c184, %c0_551] : memref<216x256xbf16, #tpu.memory_space<vmem>>, vector<8x256xbf16>
    tpu.vector_store %arg10[%c184, %c0_551], %440 {strides = array<i32>} : memref<216x256xbf16, #tpu.memory_space<vmem>>, vector<8x256xbf16>,
    %c0_552 = arith.constant 0 : index
    %c237_553 = arith.constant 237 : index
    %442 = vector.load %arg8[%c0_552, %c237_553] : memref<8x1256xbf16, #tpu.memory_space<vmem>>, vector<8x256xbf16>
    %c192 = arith.constant 192 : index
    %c0_554 = arith.constant 0 : index
    %443 = vector.load %arg10[%c192, %c0_554] : memref<216x256xbf16, #tpu.memory_space<vmem>>, vector<8x256xbf16>
    tpu.vector_store %arg10[%c192, %c0_554], %442 {strides = array<i32>} : memref<216x256xbf16, #tpu.memory_space<vmem>>, vector<8x256xbf16>,
    %c0_555 = arith.constant 0 : index
    %c238_556 = arith.constant 238 : index
    %444 = vector.load %arg8[%c0_555, %c238_556] : memref<8x1256xbf16, #tpu.memory_space<vmem>>, vector<8x256xbf16>
    %c200 = arith.constant 200 : index
    %c0_557 = arith.constant 0 : index
    %445 = vector.load %arg10[%c200, %c0_557] : memref<216x256xbf16, #tpu.memory_space<vmem>>, vector<8x256xbf16>
    tpu.vector_store %arg10[%c200, %c0_557], %444 {strides = array<i32>} : memref<216x256xbf16, #tpu.memory_space<vmem>>, vector<8x256xbf16>,
    %c0_558 = arith.constant 0 : index
    %c239_559 = arith.constant 239 : index
    %446 = vector.load %arg8[%c0_558, %c239_559] : memref<8x1256xbf16, #tpu.memory_space<vmem>>, vector<8x256xbf16>
    %c208 = arith.constant 208 : index
    %c0_560 = arith.constant 0 : index
    %447 = vector.load %arg10[%c208, %c0_560] : memref<216x256xbf16, #tpu.memory_space<vmem>>, vector<8x256xbf16>
    tpu.vector_store %arg10[%c208, %c0_560], %446 {strides = array<i32>} : memref<216x256xbf16, #tpu.memory_space<vmem>>, vector<8x256xbf16>,
    %c0_561 = arith.constant 0 : index
    %c0_562 = arith.constant 0 : index
    %448 = vector.load %arg3[%c0_561, %c0_562] : memref<8x216xbf16, #tpu.memory_space<vmem>>, vector<8x216xbf16>
    %c0_563 = arith.constant 0 : index
    %c0_564 = arith.constant 0 : index
    %449 = vector.load %arg10[%c0_563, %c0_564] : memref<216x256xbf16, #tpu.memory_space<vmem>>, vector<216x256xbf16>
    %cst_565 = arith.constant dense<0.000000e+00> : vector<8x256xf32>
    %450 = tpu.matmul %448, %449, %cst_565 {dimension_numbers = #tpu.dot_dimension_numbers<[1], [0], [0], [1], [0, 0, 1, 1], [], []>} : vector<8x216xbf16>, vector<216x256xbf16>, vector<8x256xf32> -> vector<8x256xf32>
    %c0_566 = arith.constant 0 : index
    %c0_567 = arith.constant 0 : index
    %451 = vector.load %arg5[%c0_566, %c0_567] : memref<8x1xf32, #tpu.memory_space<vmem>>, vector<8x1xf32>
    %452 = vector.broadcast %451 : vector<8x1xf32> to vector<8x256xf32>
    %453 = arith.addf %450, %452 : vector<8x256xf32>
    %c0_568 = arith.constant 0 : index
    %c0_569 = arith.constant 0 : index
    %454 = vector.load %arg11[%c0_568, %c0_569] : memref<8x1000xf32, #tpu.memory_space<vmem>>, vector<8x256xf32>
    %455 = arith.addf %453, %454 : vector<8x256xf32>
    %cst_570 = arith.constant 0.000000e+00 : f32
    %456 = vector.broadcast %cst_570 : f32 to vector<8x256xf32>
    %457 = arith.maximumf %455, %456 : vector<8x256xf32>
    %c0_571 = arith.constant 0 : index
    %c0_572 = arith.constant 0 : index
    %c0_573 = arith.constant 0 : index
    %458 = vector.load %arg7[%c0_571, %c0_572, %c0_573] : memref<1x8x1000xf32, #tpu.memory_space<vmem>>, vector<1x8x256xf32>
    %459 = vector.shape_cast %458 : vector<1x8x256xf32> to vector<8x256xf32>
    %460 = vector.shape_cast %457 : vector<8x256xf32> to vector<1x8x256xf32>
    tpu.vector_store %arg7[%c0_571, %c0_572, %c0_573], %460 {strides = array<i32>} : memref<1x8x1000xf32, #tpu.memory_space<vmem>>, vector<1x8x256xf32>,
    %c0_574 = arith.constant 0 : index
    %c273_575 = arith.constant 273 : index
    %461 = vector.load %arg8[%c0_574, %c273_575] : memref<8x1256xbf16, #tpu.memory_space<vmem>>, vector<8x256xbf16>
    %c0_576 = arith.constant 0 : index
    %c0_577 = arith.constant 0 : index
    %462 = vector.load %arg10[%c0_576, %c0_577] : memref<216x256xbf16, #tpu.memory_space<vmem>>, vector<8x256xbf16>
    tpu.vector_store %arg10[%c0_576, %c0_577], %461 {strides = array<i32>} : memref<216x256xbf16, #tpu.memory_space<vmem>>, vector<8x256xbf16>,
    %c0_578 = arith.constant 0 : index
    %c274_579 = arith.constant 274 : index
    %463 = vector.load %arg8[%c0_578, %c274_579] : memref<8x1256xbf16, #tpu.memory_space<vmem>>, vector<8x256xbf16>
    %c8_580 = arith.constant 8 : index
    %c0_581 = arith.constant 0 : index
    %464 = vector.load %arg10[%c8_580, %c0_581] : memref<216x256xbf16, #tpu.memory_space<vmem>>, vector<8x256xbf16>
    tpu.vector_store %arg10[%c8_580, %c0_581], %463 {strides = array<i32>} : memref<216x256xbf16, #tpu.memory_space<vmem>>, vector<8x256xbf16>,
    %c0_582 = arith.constant 0 : index
    %c275_583 = arith.constant 275 : index
    %465 = vector.load %arg8[%c0_582, %c275_583] : memref<8x1256xbf16, #tpu.memory_space<vmem>>, vector<8x256xbf16>
    %c16_584 = arith.constant 16 : index
    %c0_585 = arith.constant 0 : index
    %466 = vector.load %arg10[%c16_584, %c0_585] : memref<216x256xbf16, #tpu.memory_space<vmem>>, vector<8x256xbf16>
    tpu.vector_store %arg10[%c16_584, %c0_585], %465 {strides = array<i32>} : memref<216x256xbf16, #tpu.memory_space<vmem>>, vector<8x256xbf16>,
    %c0_586 = arith.constant 0 : index
    %c283_587 = arith.constant 283 : index
    %467 = vector.load %arg8[%c0_586, %c283_587] : memref<8x1256xbf16, #tpu.memory_space<vmem>>, vector<8x256xbf16>
    %c24_588 = arith.constant 24 : index
    %c0_589 = arith.constant 0 : index
    %468 = vector.load %arg10[%c24_588, %c0_589] : memref<216x256xbf16, #tpu.memory_space<vmem>>, vector<8x256xbf16>
    tpu.vector_store %arg10[%c24_588, %c0_589], %467 {strides = array<i32>} : memref<216x256xbf16, #tpu.memory_space<vmem>>, vector<8x256xbf16>,
    %c0_590 = arith.constant 0 : index
    %c284_591 = arith.constant 284 : index
    %469 = vector.load %arg8[%c0_590, %c284_591] : memref<8x1256xbf16, #tpu.memory_space<vmem>>, vector<8x256xbf16>
    %c32_592 = arith.constant 32 : index
    %c0_593 = arith.constant 0 : index
    %470 = vector.load %arg10[%c32_592, %c0_593] : memref<216x256xbf16, #tpu.memory_space<vmem>>, vector<8x256xbf16>
    tpu.vector_store %arg10[%c32_592, %c0_593], %469 {strides = array<i32>} : memref<216x256xbf16, #tpu.memory_space<vmem>>, vector<8x256xbf16>,
    %c0_594 = arith.constant 0 : index
    %c285_595 = arith.constant 285 : index
    %471 = vector.load %arg8[%c0_594, %c285_595] : memref<8x1256xbf16, #tpu.memory_space<vmem>>, vector<8x256xbf16>
    %c40_596 = arith.constant 40 : index
    %c0_597 = arith.constant 0 : index
    %472 = vector.load %arg10[%c40_596, %c0_597] : memref<216x256xbf16, #tpu.memory_space<vmem>>, vector<8x256xbf16>
    tpu.vector_store %arg10[%c40_596, %c0_597], %471 {strides = array<i32>} : memref<216x256xbf16, #tpu.memory_space<vmem>>, vector<8x256xbf16>,
    %c0_598 = arith.constant 0 : index
    %c293_599 = arith.constant 293 : index
    %473 = vector.load %arg8[%c0_598, %c293_599] : memref<8x1256xbf16, #tpu.memory_space<vmem>>, vector<8x256xbf16>
    %c48_600 = arith.constant 48 : index
    %c0_601 = arith.constant 0 : index
    %474 = vector.load %arg10[%c48_600, %c0_601] : memref<216x256xbf16, #tpu.memory_space<vmem>>, vector<8x256xbf16>
    tpu.vector_store %arg10[%c48_600, %c0_601], %473 {strides = array<i32>} : memref<216x256xbf16, #tpu.memory_space<vmem>>, vector<8x256xbf16>,
    %c0_602 = arith.constant 0 : index
    %c294_603 = arith.constant 294 : index
    %475 = vector.load %arg8[%c0_602, %c294_603] : memref<8x1256xbf16, #tpu.memory_space<vmem>>, vector<8x256xbf16>
    %c56_604 = arith.constant 56 : index
    %c0_605 = arith.constant 0 : index
    %476 = vector.load %arg10[%c56_604, %c0_605] : memref<216x256xbf16, #tpu.memory_space<vmem>>, vector<8x256xbf16>
    tpu.vector_store %arg10[%c56_604, %c0_605], %475 {strides = array<i32>} : memref<216x256xbf16, #tpu.memory_space<vmem>>, vector<8x256xbf16>,
    %c0_606 = arith.constant 0 : index
    %c295_607 = arith.constant 295 : index
    %477 = vector.load %arg8[%c0_606, %c295_607] : memref<8x1256xbf16, #tpu.memory_space<vmem>>, vector<8x256xbf16>
    %c64_608 = arith.constant 64 : index
    %c0_609 = arith.constant 0 : index
    %478 = vector.load %arg10[%c64_608, %c0_609] : memref<216x256xbf16, #tpu.memory_space<vmem>>, vector<8x256xbf16>
    tpu.vector_store %arg10[%c64_608, %c0_609], %477 {strides = array<i32>} : memref<216x256xbf16, #tpu.memory_space<vmem>>, vector<8x256xbf16>,
    %c0_610 = arith.constant 0 : index
    %c373_611 = arith.constant 373 : index
    %479 = vector.load %arg8[%c0_610, %c373_611] : memref<8x1256xbf16, #tpu.memory_space<vmem>>, vector<8x256xbf16>
    %c72_612 = arith.constant 72 : index
    %c0_613 = arith.constant 0 : index
    %480 = vector.load %arg10[%c72_612, %c0_613] : memref<216x256xbf16, #tpu.memory_space<vmem>>, vector<8x256xbf16>
    tpu.vector_store %arg10[%c72_612, %c0_613], %479 {strides = array<i32>} : memref<216x256xbf16, #tpu.memory_space<vmem>>, vector<8x256xbf16>,
    %c0_614 = arith.constant 0 : index
    %c374_615 = arith.constant 374 : index
    %481 = vector.load %arg8[%c0_614, %c374_615] : memref<8x1256xbf16, #tpu.memory_space<vmem>>, vector<8x256xbf16>
    %c80_616 = arith.constant 80 : index
    %c0_617 = arith.constant 0 : index
    %482 = vector.load %arg10[%c80_616, %c0_617] : memref<216x256xbf16, #tpu.memory_space<vmem>>, vector<8x256xbf16>
    tpu.vector_store %arg10[%c80_616, %c0_617], %481 {strides = array<i32>} : memref<216x256xbf16, #tpu.memory_space<vmem>>, vector<8x256xbf16>,
    %c0_618 = arith.constant 0 : index
    %c375_619 = arith.constant 375 : index
    %483 = vector.load %arg8[%c0_618, %c375_619] : memref<8x1256xbf16, #tpu.memory_space<vmem>>, vector<8x256xbf16>
    %c88_620 = arith.constant 88 : index
    %c0_621 = arith.constant 0 : index
    %484 = vector.load %arg10[%c88_620, %c0_621] : memref<216x256xbf16, #tpu.memory_space<vmem>>, vector<8x256xbf16>
    tpu.vector_store %arg10[%c88_620, %c0_621], %483 {strides = array<i32>} : memref<216x256xbf16, #tpu.memory_space<vmem>>, vector<8x256xbf16>,
    %c0_622 = arith.constant 0 : index
    %c383_623 = arith.constant 383 : index
    %485 = vector.load %arg8[%c0_622, %c383_623] : memref<8x1256xbf16, #tpu.memory_space<vmem>>, vector<8x256xbf16>
    %c96_624 = arith.constant 96 : index
    %c0_625 = arith.constant 0 : index
    %486 = vector.load %arg10[%c96_624, %c0_625] : memref<216x256xbf16, #tpu.memory_space<vmem>>, vector<8x256xbf16>
    tpu.vector_store %arg10[%c96_624, %c0_625], %485 {strides = array<i32>} : memref<216x256xbf16, #tpu.memory_space<vmem>>, vector<8x256xbf16>,
    %c0_626 = arith.constant 0 : index
    %c384_627 = arith.constant 384 : index
    %487 = vector.load %arg8[%c0_626, %c384_627] : memref<8x1256xbf16, #tpu.memory_space<vmem>>, vector<8x256xbf16>
    %c104_628 = arith.constant 104 : index
    %c0_629 = arith.constant 0 : index
    %488 = vector.load %arg10[%c104_628, %c0_629] : memref<216x256xbf16, #tpu.memory_space<vmem>>, vector<8x256xbf16>
    tpu.vector_store %arg10[%c104_628, %c0_629], %487 {strides = array<i32>} : memref<216x256xbf16, #tpu.memory_space<vmem>>, vector<8x256xbf16>,
    %c0_630 = arith.constant 0 : index
    %c385_631 = arith.constant 385 : index
    %489 = vector.load %arg8[%c0_630, %c385_631] : memref<8x1256xbf16, #tpu.memory_space<vmem>>, vector<8x256xbf16>
    %c112_632 = arith.constant 112 : index
    %c0_633 = arith.constant 0 : index
    %490 = vector.load %arg10[%c112_632, %c0_633] : memref<216x256xbf16, #tpu.memory_space<vmem>>, vector<8x256xbf16>
    tpu.vector_store %arg10[%c112_632, %c0_633], %489 {strides = array<i32>} : memref<216x256xbf16, #tpu.memory_space<vmem>>, vector<8x256xbf16>,
    %c0_634 = arith.constant 0 : index
    %c393_635 = arith.constant 393 : index
    %491 = vector.load %arg8[%c0_634, %c393_635] : memref<8x1256xbf16, #tpu.memory_space<vmem>>, vector<8x256xbf16>
    %c120_636 = arith.constant 120 : index
    %c0_637 = arith.constant 0 : index
    %492 = vector.load %arg10[%c120_636, %c0_637] : memref<216x256xbf16, #tpu.memory_space<vmem>>, vector<8x256xbf16>
    tpu.vector_store %arg10[%c120_636, %c0_637], %491 {strides = array<i32>} : memref<216x256xbf16, #tpu.memory_space<vmem>>, vector<8x256xbf16>,
    %c0_638 = arith.constant 0 : index
    %c394_639 = arith.constant 394 : index
    %493 = vector.load %arg8[%c0_638, %c394_639] : memref<8x1256xbf16, #tpu.memory_space<vmem>>, vector<8x256xbf16>
    %c128_640 = arith.constant 128 : index
    %c0_641 = arith.constant 0 : index
    %494 = vector.load %arg10[%c128_640, %c0_641] : memref<216x256xbf16, #tpu.memory_space<vmem>>, vector<8x256xbf16>
    tpu.vector_store %arg10[%c128_640, %c0_641], %493 {strides = array<i32>} : memref<216x256xbf16, #tpu.memory_space<vmem>>, vector<8x256xbf16>,
    %c0_642 = arith.constant 0 : index
    %c395_643 = arith.constant 395 : index
    %495 = vector.load %arg8[%c0_642, %c395_643] : memref<8x1256xbf16, #tpu.memory_space<vmem>>, vector<8x256xbf16>
    %c136_644 = arith.constant 136 : index
    %c0_645 = arith.constant 0 : index
    %496 = vector.load %arg10[%c136_644, %c0_645] : memref<216x256xbf16, #tpu.memory_space<vmem>>, vector<8x256xbf16>
    tpu.vector_store %arg10[%c136_644, %c0_645], %495 {strides = array<i32>} : memref<216x256xbf16, #tpu.memory_space<vmem>>, vector<8x256xbf16>,
    %c0_646 = arith.constant 0 : index
    %c473_647 = arith.constant 473 : index
    %497 = vector.load %arg8[%c0_646, %c473_647] : memref<8x1256xbf16, #tpu.memory_space<vmem>>, vector<8x256xbf16>
    %c144_648 = arith.constant 144 : index
    %c0_649 = arith.constant 0 : index
    %498 = vector.load %arg10[%c144_648, %c0_649] : memref<216x256xbf16, #tpu.memory_space<vmem>>, vector<8x256xbf16>
    tpu.vector_store %arg10[%c144_648, %c0_649], %497 {strides = array<i32>} : memref<216x256xbf16, #tpu.memory_space<vmem>>, vector<8x256xbf16>,
    %c0_650 = arith.constant 0 : index
    %c474_651 = arith.constant 474 : index
    %499 = vector.load %arg8[%c0_650, %c474_651] : memref<8x1256xbf16, #tpu.memory_space<vmem>>, vector<8x256xbf16>
    %c152_652 = arith.constant 152 : index
    %c0_653 = arith.constant 0 : index
    %500 = vector.load %arg10[%c152_652, %c0_653] : memref<216x256xbf16, #tpu.memory_space<vmem>>, vector<8x256xbf16>
    tpu.vector_store %arg10[%c152_652, %c0_653], %499 {strides = array<i32>} : memref<216x256xbf16, #tpu.memory_space<vmem>>, vector<8x256xbf16>,
    %c0_654 = arith.constant 0 : index
    %c475_655 = arith.constant 475 : index
    %501 = vector.load %arg8[%c0_654, %c475_655] : memref<8x1256xbf16, #tpu.memory_space<vmem>>, vector<8x256xbf16>
    %c160_656 = arith.constant 160 : index
    %c0_657 = arith.constant 0 : index
    %502 = vector.load %arg10[%c160_656, %c0_657] : memref<216x256xbf16, #tpu.memory_space<vmem>>, vector<8x256xbf16>
    tpu.vector_store %arg10[%c160_656, %c0_657], %501 {strides = array<i32>} : memref<216x256xbf16, #tpu.memory_space<vmem>>, vector<8x256xbf16>,
    %c0_658 = arith.constant 0 : index
    %c483_659 = arith.constant 483 : index
    %503 = vector.load %arg8[%c0_658, %c483_659] : memref<8x1256xbf16, #tpu.memory_space<vmem>>, vector<8x256xbf16>
    %c168_660 = arith.constant 168 : index
    %c0_661 = arith.constant 0 : index
    %504 = vector.load %arg10[%c168_660, %c0_661] : memref<216x256xbf16, #tpu.memory_space<vmem>>, vector<8x256xbf16>
    tpu.vector_store %arg10[%c168_660, %c0_661], %503 {strides = array<i32>} : memref<216x256xbf16, #tpu.memory_space<vmem>>, vector<8x256xbf16>,
    %c0_662 = arith.constant 0 : index
    %c484_663 = arith.constant 484 : index
    %505 = vector.load %arg8[%c0_662, %c484_663] : memref<8x1256xbf16, #tpu.memory_space<vmem>>, vector<8x256xbf16>
    %c176_664 = arith.constant 176 : index
    %c0_665 = arith.constant 0 : index
    %506 = vector.load %arg10[%c176_664, %c0_665] : memref<216x256xbf16, #tpu.memory_space<vmem>>, vector<8x256xbf16>
    tpu.vector_store %arg10[%c176_664, %c0_665], %505 {strides = array<i32>} : memref<216x256xbf16, #tpu.memory_space<vmem>>, vector<8x256xbf16>,
    %c0_666 = arith.constant 0 : index
    %c485_667 = arith.constant 485 : index
    %507 = vector.load %arg8[%c0_666, %c485_667] : memref<8x1256xbf16, #tpu.memory_space<vmem>>, vector<8x256xbf16>
    %c184_668 = arith.constant 184 : index
    %c0_669 = arith.constant 0 : index
    %508 = vector.load %arg10[%c184_668, %c0_669] : memref<216x256xbf16, #tpu.memory_space<vmem>>, vector<8x256xbf16>
    tpu.vector_store %arg10[%c184_668, %c0_669], %507 {strides = array<i32>} : memref<216x256xbf16, #tpu.memory_space<vmem>>, vector<8x256xbf16>,
    %c0_670 = arith.constant 0 : index
    %c493_671 = arith.constant 493 : index
    %509 = vector.load %arg8[%c0_670, %c493_671] : memref<8x1256xbf16, #tpu.memory_space<vmem>>, vector<8x256xbf16>
    %c192_672 = arith.constant 192 : index
    %c0_673 = arith.constant 0 : index
    %510 = vector.load %arg10[%c192_672, %c0_673] : memref<216x256xbf16, #tpu.memory_space<vmem>>, vector<8x256xbf16>
    tpu.vector_store %arg10[%c192_672, %c0_673], %509 {strides = array<i32>} : memref<216x256xbf16, #tpu.memory_space<vmem>>, vector<8x256xbf16>,
    %c0_674 = arith.constant 0 : index
    %c494_675 = arith.constant 494 : index
    %511 = vector.load %arg8[%c0_674, %c494_675] : memref<8x1256xbf16, #tpu.memory_space<vmem>>, vector<8x256xbf16>
    %c200_676 = arith.constant 200 : index
    %c0_677 = arith.constant 0 : index
    %512 = vector.load %arg10[%c200_676, %c0_677] : memref<216x256xbf16, #tpu.memory_space<vmem>>, vector<8x256xbf16>
    tpu.vector_store %arg10[%c200_676, %c0_677], %511 {strides = array<i32>} : memref<216x256xbf16, #tpu.memory_space<vmem>>, vector<8x256xbf16>,
    %c0_678 = arith.constant 0 : index
    %c495_679 = arith.constant 495 : index
    %513 = vector.load %arg8[%c0_678, %c495_679] : memref<8x1256xbf16, #tpu.memory_space<vmem>>, vector<8x256xbf16>
    %c208_680 = arith.constant 208 : index
    %c0_681 = arith.constant 0 : index
    %514 = vector.load %arg10[%c208_680, %c0_681] : memref<216x256xbf16, #tpu.memory_space<vmem>>, vector<8x256xbf16>
    tpu.vector_store %arg10[%c208_680, %c0_681], %513 {strides = array<i32>} : memref<216x256xbf16, #tpu.memory_space<vmem>>, vector<8x256xbf16>,
    %c0_682 = arith.constant 0 : index
    %c0_683 = arith.constant 0 : index
    %515 = vector.load %arg3[%c0_682, %c0_683] : memref<8x216xbf16, #tpu.memory_space<vmem>>, vector<8x216xbf16>
    %c0_684 = arith.constant 0 : index
    %c0_685 = arith.constant 0 : index
    %516 = vector.load %arg10[%c0_684, %c0_685] : memref<216x256xbf16, #tpu.memory_space<vmem>>, vector<216x256xbf16>
    %cst_686 = arith.constant dense<0.000000e+00> : vector<8x256xf32>
    %517 = tpu.matmul %515, %516, %cst_686 {dimension_numbers = #tpu.dot_dimension_numbers<[1], [0], [0], [1], [0, 0, 1, 1], [], []>} : vector<8x216xbf16>, vector<216x256xbf16>, vector<8x256xf32> -> vector<8x256xf32>
    %c0_687 = arith.constant 0 : index
    %c0_688 = arith.constant 0 : index
    %518 = vector.load %arg5[%c0_687, %c0_688] : memref<8x1xf32, #tpu.memory_space<vmem>>, vector<8x1xf32>
    %519 = vector.broadcast %518 : vector<8x1xf32> to vector<8x256xf32>
    %520 = arith.addf %517, %519 : vector<8x256xf32>
    %c0_689 = arith.constant 0 : index
    %c256_690 = arith.constant 256 : index
    %521 = vector.load %arg11[%c0_689, %c256_690] : memref<8x1000xf32, #tpu.memory_space<vmem>>, vector<8x256xf32>
    %522 = arith.addf %520, %521 : vector<8x256xf32>
    %cst_691 = arith.constant 0.000000e+00 : f32
    %523 = vector.broadcast %cst_691 : f32 to vector<8x256xf32>
    %524 = arith.maximumf %522, %523 : vector<8x256xf32>
    %c0_692 = arith.constant 0 : index
    %c0_693 = arith.constant 0 : index
    %c256_694 = arith.constant 256 : index
    %525 = vector.load %arg7[%c0_692, %c0_693, %c256_694] : memref<1x8x1000xf32, #tpu.memory_space<vmem>>, vector<1x8x256xf32>
    %526 = vector.shape_cast %525 : vector<1x8x256xf32> to vector<8x256xf32>
    %527 = vector.shape_cast %524 : vector<8x256xf32> to vector<1x8x256xf32>
    tpu.vector_store %arg7[%c0_692, %c0_693, %c256_694], %527 {strides = array<i32>} : memref<1x8x1000xf32, #tpu.memory_space<vmem>>, vector<1x8x256xf32>,
    %c0_695 = arith.constant 0 : index
    %c529_696 = arith.constant 529 : index
    %528 = vector.load %arg8[%c0_695, %c529_696] : memref<8x1256xbf16, #tpu.memory_space<vmem>>, vector<8x256xbf16>
    %c0_697 = arith.constant 0 : index
    %c0_698 = arith.constant 0 : index
    %529 = vector.load %arg10[%c0_697, %c0_698] : memref<216x256xbf16, #tpu.memory_space<vmem>>, vector<8x256xbf16>
    tpu.vector_store %arg10[%c0_697, %c0_698], %528 {strides = array<i32>} : memref<216x256xbf16, #tpu.memory_space<vmem>>, vector<8x256xbf16>,
    %c0_699 = arith.constant 0 : index
    %c530_700 = arith.constant 530 : index
    %530 = vector.load %arg8[%c0_699, %c530_700] : memref<8x1256xbf16, #tpu.memory_space<vmem>>, vector<8x256xbf16>
    %c8_701 = arith.constant 8 : index
    %c0_702 = arith.constant 0 : index
    %531 = vector.load %arg10[%c8_701, %c0_702] : memref<216x256xbf16, #tpu.memory_space<vmem>>, vector<8x256xbf16>
    tpu.vector_store %arg10[%c8_701, %c0_702], %530 {strides = array<i32>} : memref<216x256xbf16, #tpu.memory_space<vmem>>, vector<8x256xbf16>,
    %c0_703 = arith.constant 0 : index
    %c531_704 = arith.constant 531 : index
    %532 = vector.load %arg8[%c0_703, %c531_704] : memref<8x1256xbf16, #tpu.memory_space<vmem>>, vector<8x256xbf16>
    %c16_705 = arith.constant 16 : index
    %c0_706 = arith.constant 0 : index
    %533 = vector.load %arg10[%c16_705, %c0_706] : memref<216x256xbf16, #tpu.memory_space<vmem>>, vector<8x256xbf16>
    tpu.vector_store %arg10[%c16_705, %c0_706], %532 {strides = array<i32>} : memref<216x256xbf16, #tpu.memory_space<vmem>>, vector<8x256xbf16>,
    %c0_707 = arith.constant 0 : index
    %c539_708 = arith.constant 539 : index
    %534 = vector.load %arg8[%c0_707, %c539_708] : memref<8x1256xbf16, #tpu.memory_space<vmem>>, vector<8x256xbf16>
    %c24_709 = arith.constant 24 : index
    %c0_710 = arith.constant 0 : index
    %535 = vector.load %arg10[%c24_709, %c0_710] : memref<216x256xbf16, #tpu.memory_space<vmem>>, vector<8x256xbf16>
    tpu.vector_store %arg10[%c24_709, %c0_710], %534 {strides = array<i32>} : memref<216x256xbf16, #tpu.memory_space<vmem>>, vector<8x256xbf16>,
    %c0_711 = arith.constant 0 : index
    %c540_712 = arith.constant 540 : index
    %536 = vector.load %arg8[%c0_711, %c540_712] : memref<8x1256xbf16, #tpu.memory_space<vmem>>, vector<8x256xbf16>
    %c32_713 = arith.constant 32 : index
    %c0_714 = arith.constant 0 : index
    %537 = vector.load %arg10[%c32_713, %c0_714] : memref<216x256xbf16, #tpu.memory_space<vmem>>, vector<8x256xbf16>
    tpu.vector_store %arg10[%c32_713, %c0_714], %536 {strides = array<i32>} : memref<216x256xbf16, #tpu.memory_space<vmem>>, vector<8x256xbf16>,
    %c0_715 = arith.constant 0 : index
    %c541_716 = arith.constant 541 : index
    %538 = vector.load %arg8[%c0_715, %c541_716] : memref<8x1256xbf16, #tpu.memory_space<vmem>>, vector<8x256xbf16>
    %c40_717 = arith.constant 40 : index
    %c0_718 = arith.constant 0 : index
    %539 = vector.load %arg10[%c40_717, %c0_718] : memref<216x256xbf16, #tpu.memory_space<vmem>>, vector<8x256xbf16>
    tpu.vector_store %arg10[%c40_717, %c0_718], %538 {strides = array<i32>} : memref<216x256xbf16, #tpu.memory_space<vmem>>, vector<8x256xbf16>,
    %c0_719 = arith.constant 0 : index
    %c549_720 = arith.constant 549 : index
    %540 = vector.load %arg8[%c0_719, %c549_720] : memref<8x1256xbf16, #tpu.memory_space<vmem>>, vector<8x256xbf16>
    %c48_721 = arith.constant 48 : index
    %c0_722 = arith.constant 0 : index
    %541 = vector.load %arg10[%c48_721, %c0_722] : memref<216x256xbf16, #tpu.memory_space<vmem>>, vector<8x256xbf16>
    tpu.vector_store %arg10[%c48_721, %c0_722], %540 {strides = array<i32>} : memref<216x256xbf16, #tpu.memory_space<vmem>>, vector<8x256xbf16>,
    %c0_723 = arith.constant 0 : index
    %c550_724 = arith.constant 550 : index
    %542 = vector.load %arg8[%c0_723, %c550_724] : memref<8x1256xbf16, #tpu.memory_space<vmem>>, vector<8x256xbf16>
    %c56_725 = arith.constant 56 : index
    %c0_726 = arith.constant 0 : index
    %543 = vector.load %arg10[%c56_725, %c0_726] : memref<216x256xbf16, #tpu.memory_space<vmem>>, vector<8x256xbf16>
    tpu.vector_store %arg10[%c56_725, %c0_726], %542 {strides = array<i32>} : memref<216x256xbf16, #tpu.memory_space<vmem>>, vector<8x256xbf16>,
    %c0_727 = arith.constant 0 : index
    %c551_728 = arith.constant 551 : index
    %544 = vector.load %arg8[%c0_727, %c551_728] : memref<8x1256xbf16, #tpu.memory_space<vmem>>, vector<8x256xbf16>
    %c64_729 = arith.constant 64 : index
    %c0_730 = arith.constant 0 : index
    %545 = vector.load %arg10[%c64_729, %c0_730] : memref<216x256xbf16, #tpu.memory_space<vmem>>, vector<8x256xbf16>
    tpu.vector_store %arg10[%c64_729, %c0_730], %544 {strides = array<i32>} : memref<216x256xbf16, #tpu.memory_space<vmem>>, vector<8x256xbf16>,
    %c0_731 = arith.constant 0 : index
    %c629_732 = arith.constant 629 : index
    %546 = vector.load %arg8[%c0_731, %c629_732] : memref<8x1256xbf16, #tpu.memory_space<vmem>>, vector<8x256xbf16>
    %c72_733 = arith.constant 72 : index
    %c0_734 = arith.constant 0 : index
    %547 = vector.load %arg10[%c72_733, %c0_734] : memref<216x256xbf16, #tpu.memory_space<vmem>>, vector<8x256xbf16>
    tpu.vector_store %arg10[%c72_733, %c0_734], %546 {strides = array<i32>} : memref<216x256xbf16, #tpu.memory_space<vmem>>, vector<8x256xbf16>,
    %c0_735 = arith.constant 0 : index
    %c630_736 = arith.constant 630 : index
    %548 = vector.load %arg8[%c0_735, %c630_736] : memref<8x1256xbf16, #tpu.memory_space<vmem>>, vector<8x256xbf16>
    %c80_737 = arith.constant 80 : index
    %c0_738 = arith.constant 0 : index
    %549 = vector.load %arg10[%c80_737, %c0_738] : memref<216x256xbf16, #tpu.memory_space<vmem>>, vector<8x256xbf16>
    tpu.vector_store %arg10[%c80_737, %c0_738], %548 {strides = array<i32>} : memref<216x256xbf16, #tpu.memory_space<vmem>>, vector<8x256xbf16>,
    %c0_739 = arith.constant 0 : index
    %c631_740 = arith.constant 631 : index
    %550 = vector.load %arg8[%c0_739, %c631_740] : memref<8x1256xbf16, #tpu.memory_space<vmem>>, vector<8x256xbf16>
    %c88_741 = arith.constant 88 : index
    %c0_742 = arith.constant 0 : index
    %551 = vector.load %arg10[%c88_741, %c0_742] : memref<216x256xbf16, #tpu.memory_space<vmem>>, vector<8x256xbf16>
    tpu.vector_store %arg10[%c88_741, %c0_742], %550 {strides = array<i32>} : memref<216x256xbf16, #tpu.memory_space<vmem>>, vector<8x256xbf16>,
    %c0_743 = arith.constant 0 : index
    %c639_744 = arith.constant 639 : index
    %552 = vector.load %arg8[%c0_743, %c639_744] : memref<8x1256xbf16, #tpu.memory_space<vmem>>, vector<8x256xbf16>
    %c96_745 = arith.constant 96 : index
    %c0_746 = arith.constant 0 : index
    %553 = vector.load %arg10[%c96_745, %c0_746] : memref<216x256xbf16, #tpu.memory_space<vmem>>, vector<8x256xbf16>
    tpu.vector_store %arg10[%c96_745, %c0_746], %552 {strides = array<i32>} : memref<216x256xbf16, #tpu.memory_space<vmem>>, vector<8x256xbf16>,
    %c0_747 = arith.constant 0 : index
    %c640_748 = arith.constant 640 : index
    %554 = vector.load %arg8[%c0_747, %c640_748] : memref<8x1256xbf16, #tpu.memory_space<vmem>>, vector<8x256xbf16>
    %c104_749 = arith.constant 104 : index
    %c0_750 = arith.constant 0 : index
    %555 = vector.load %arg10[%c104_749, %c0_750] : memref<216x256xbf16, #tpu.memory_space<vmem>>, vector<8x256xbf16>
    tpu.vector_store %arg10[%c104_749, %c0_750], %554 {strides = array<i32>} : memref<216x256xbf16, #tpu.memory_space<vmem>>, vector<8x256xbf16>,
    %c0_751 = arith.constant 0 : index
    %c641_752 = arith.constant 641 : index
    %556 = vector.load %arg8[%c0_751, %c641_752] : memref<8x1256xbf16, #tpu.memory_space<vmem>>, vector<8x256xbf16>
    %c112_753 = arith.constant 112 : index
    %c0_754 = arith.constant 0 : index
    %557 = vector.load %arg10[%c112_753, %c0_754] : memref<216x256xbf16, #tpu.memory_space<vmem>>, vector<8x256xbf16>
    tpu.vector_store %arg10[%c112_753, %c0_754], %556 {strides = array<i32>} : memref<216x256xbf16, #tpu.memory_space<vmem>>, vector<8x256xbf16>,
    %c0_755 = arith.constant 0 : index
    %c649_756 = arith.constant 649 : index
    %558 = vector.load %arg8[%c0_755, %c649_756] : memref<8x1256xbf16, #tpu.memory_space<vmem>>, vector<8x256xbf16>
    %c120_757 = arith.constant 120 : index
    %c0_758 = arith.constant 0 : index
    %559 = vector.load %arg10[%c120_757, %c0_758] : memref<216x256xbf16, #tpu.memory_space<vmem>>, vector<8x256xbf16>
    tpu.vector_store %arg10[%c120_757, %c0_758], %558 {strides = array<i32>} : memref<216x256xbf16, #tpu.memory_space<vmem>>, vector<8x256xbf16>,
    %c0_759 = arith.constant 0 : index
    %c650_760 = arith.constant 650 : index
    %560 = vector.load %arg8[%c0_759, %c650_760] : memref<8x1256xbf16, #tpu.memory_space<vmem>>, vector<8x256xbf16>
    %c128_761 = arith.constant 128 : index
    %c0_762 = arith.constant 0 : index
    %561 = vector.load %arg10[%c128_761, %c0_762] : memref<216x256xbf16, #tpu.memory_space<vmem>>, vector<8x256xbf16>
    tpu.vector_store %arg10[%c128_761, %c0_762], %560 {strides = array<i32>} : memref<216x256xbf16, #tpu.memory_space<vmem>>, vector<8x256xbf16>,
    %c0_763 = arith.constant 0 : index
    %c651_764 = arith.constant 651 : index
    %562 = vector.load %arg8[%c0_763, %c651_764] : memref<8x1256xbf16, #tpu.memory_space<vmem>>, vector<8x256xbf16>
    %c136_765 = arith.constant 136 : index
    %c0_766 = arith.constant 0 : index
    %563 = vector.load %arg10[%c136_765, %c0_766] : memref<216x256xbf16, #tpu.memory_space<vmem>>, vector<8x256xbf16>
    tpu.vector_store %arg10[%c136_765, %c0_766], %562 {strides = array<i32>} : memref<216x256xbf16, #tpu.memory_space<vmem>>, vector<8x256xbf16>,
    %c0_767 = arith.constant 0 : index
    %c729_768 = arith.constant 729 : index
    %564 = vector.load %arg8[%c0_767, %c729_768] : memref<8x1256xbf16, #tpu.memory_space<vmem>>, vector<8x256xbf16>
    %c144_769 = arith.constant 144 : index
    %c0_770 = arith.constant 0 : index
    %565 = vector.load %arg10[%c144_769, %c0_770] : memref<216x256xbf16, #tpu.memory_space<vmem>>, vector<8x256xbf16>
    tpu.vector_store %arg10[%c144_769, %c0_770], %564 {strides = array<i32>} : memref<216x256xbf16, #tpu.memory_space<vmem>>, vector<8x256xbf16>,
    %c0_771 = arith.constant 0 : index
    %c730_772 = arith.constant 730 : index
    %566 = vector.load %arg8[%c0_771, %c730_772] : memref<8x1256xbf16, #tpu.memory_space<vmem>>, vector<8x256xbf16>
    %c152_773 = arith.constant 152 : index
    %c0_774 = arith.constant 0 : index
    %567 = vector.load %arg10[%c152_773, %c0_774] : memref<216x256xbf16, #tpu.memory_space<vmem>>, vector<8x256xbf16>
    tpu.vector_store %arg10[%c152_773, %c0_774], %566 {strides = array<i32>} : memref<216x256xbf16, #tpu.memory_space<vmem>>, vector<8x256xbf16>,
    %c0_775 = arith.constant 0 : index
    %c731_776 = arith.constant 731 : index
    %568 = vector.load %arg8[%c0_775, %c731_776] : memref<8x1256xbf16, #tpu.memory_space<vmem>>, vector<8x256xbf16>
    %c160_777 = arith.constant 160 : index
    %c0_778 = arith.constant 0 : index
    %569 = vector.load %arg10[%c160_777, %c0_778] : memref<216x256xbf16, #tpu.memory_space<vmem>>, vector<8x256xbf16>
    tpu.vector_store %arg10[%c160_777, %c0_778], %568 {strides = array<i32>} : memref<216x256xbf16, #tpu.memory_space<vmem>>, vector<8x256xbf16>,
    %c0_779 = arith.constant 0 : index
    %c739_780 = arith.constant 739 : index
    %570 = vector.load %arg8[%c0_779, %c739_780] : memref<8x1256xbf16, #tpu.memory_space<vmem>>, vector<8x256xbf16>
    %c168_781 = arith.constant 168 : index
    %c0_782 = arith.constant 0 : index
    %571 = vector.load %arg10[%c168_781, %c0_782] : memref<216x256xbf16, #tpu.memory_space<vmem>>, vector<8x256xbf16>
    tpu.vector_store %arg10[%c168_781, %c0_782], %570 {strides = array<i32>} : memref<216x256xbf16, #tpu.memory_space<vmem>>, vector<8x256xbf16>,
    %c0_783 = arith.constant 0 : index
    %c740_784 = arith.constant 740 : index
    %572 = vector.load %arg8[%c0_783, %c740_784] : memref<8x1256xbf16, #tpu.memory_space<vmem>>, vector<8x256xbf16>
    %c176_785 = arith.constant 176 : index
    %c0_786 = arith.constant 0 : index
    %573 = vector.load %arg10[%c176_785, %c0_786] : memref<216x256xbf16, #tpu.memory_space<vmem>>, vector<8x256xbf16>
    tpu.vector_store %arg10[%c176_785, %c0_786], %572 {strides = array<i32>} : memref<216x256xbf16, #tpu.memory_space<vmem>>, vector<8x256xbf16>,
    %c0_787 = arith.constant 0 : index
    %c741_788 = arith.constant 741 : index
    %574 = vector.load %arg8[%c0_787, %c741_788] : memref<8x1256xbf16, #tpu.memory_space<vmem>>, vector<8x256xbf16>
    %c184_789 = arith.constant 184 : index
    %c0_790 = arith.constant 0 : index
    %575 = vector.load %arg10[%c184_789, %c0_790] : memref<216x256xbf16, #tpu.memory_space<vmem>>, vector<8x256xbf16>
    tpu.vector_store %arg10[%c184_789, %c0_790], %574 {strides = array<i32>} : memref<216x256xbf16, #tpu.memory_space<vmem>>, vector<8x256xbf16>,
    %c0_791 = arith.constant 0 : index
    %c749_792 = arith.constant 749 : index
    %576 = vector.load %arg8[%c0_791, %c749_792] : memref<8x1256xbf16, #tpu.memory_space<vmem>>, vector<8x256xbf16>
    %c192_793 = arith.constant 192 : index
    %c0_794 = arith.constant 0 : index
    %577 = vector.load %arg10[%c192_793, %c0_794] : memref<216x256xbf16, #tpu.memory_space<vmem>>, vector<8x256xbf16>
    tpu.vector_store %arg10[%c192_793, %c0_794], %576 {strides = array<i32>} : memref<216x256xbf16, #tpu.memory_space<vmem>>, vector<8x256xbf16>,
    %c0_795 = arith.constant 0 : index
    %c750_796 = arith.constant 750 : index
    %578 = vector.load %arg8[%c0_795, %c750_796] : memref<8x1256xbf16, #tpu.memory_space<vmem>>, vector<8x256xbf16>
    %c200_797 = arith.constant 200 : index
    %c0_798 = arith.constant 0 : index
    %579 = vector.load %arg10[%c200_797, %c0_798] : memref<216x256xbf16, #tpu.memory_space<vmem>>, vector<8x256xbf16>
    tpu.vector_store %arg10[%c200_797, %c0_798], %578 {strides = array<i32>} : memref<216x256xbf16, #tpu.memory_space<vmem>>, vector<8x256xbf16>,
    %c0_799 = arith.constant 0 : index
    %c751_800 = arith.constant 751 : index
    %580 = vector.load %arg8[%c0_799, %c751_800] : memref<8x1256xbf16, #tpu.memory_space<vmem>>, vector<8x256xbf16>
    %c208_801 = arith.constant 208 : index
    %c0_802 = arith.constant 0 : index
    %581 = vector.load %arg10[%c208_801, %c0_802] : memref<216x256xbf16, #tpu.memory_space<vmem>>, vector<8x256xbf16>
    tpu.vector_store %arg10[%c208_801, %c0_802], %580 {strides = array<i32>} : memref<216x256xbf16, #tpu.memory_space<vmem>>, vector<8x256xbf16>,
    %c0_803 = arith.constant 0 : index
    %c0_804 = arith.constant 0 : index
    %582 = vector.load %arg3[%c0_803, %c0_804] : memref<8x216xbf16, #tpu.memory_space<vmem>>, vector<8x216xbf16>
    %c0_805 = arith.constant 0 : index
    %c0_806 = arith.constant 0 : index
    %583 = vector.load %arg10[%c0_805, %c0_806] : memref<216x256xbf16, #tpu.memory_space<vmem>>, vector<216x256xbf16>
    %cst_807 = arith.constant dense<0.000000e+00> : vector<8x256xf32>
    %584 = tpu.matmul %582, %583, %cst_807 {dimension_numbers = #tpu.dot_dimension_numbers<[1], [0], [0], [1], [0, 0, 1, 1], [], []>} : vector<8x216xbf16>, vector<216x256xbf16>, vector<8x256xf32> -> vector<8x256xf32>
    %c0_808 = arith.constant 0 : index
    %c0_809 = arith.constant 0 : index
    %585 = vector.load %arg5[%c0_808, %c0_809] : memref<8x1xf32, #tpu.memory_space<vmem>>, vector<8x1xf32>
    %586 = vector.broadcast %585 : vector<8x1xf32> to vector<8x256xf32>
    %587 = arith.addf %584, %586 : vector<8x256xf32>
    %c0_810 = arith.constant 0 : index
    %c512_811 = arith.constant 512 : index
    %588 = vector.load %arg11[%c0_810, %c512_811] : memref<8x1000xf32, #tpu.memory_space<vmem>>, vector<8x256xf32>
    %589 = arith.addf %587, %588 : vector<8x256xf32>
    %cst_812 = arith.constant 0.000000e+00 : f32
    %590 = vector.broadcast %cst_812 : f32 to vector<8x256xf32>
    %591 = arith.maximumf %589, %590 : vector<8x256xf32>
    %c0_813 = arith.constant 0 : index
    %c0_814 = arith.constant 0 : index
    %c512_815 = arith.constant 512 : index
    %592 = vector.load %arg7[%c0_813, %c0_814, %c512_815] : memref<1x8x1000xf32, #tpu.memory_space<vmem>>, vector<1x8x256xf32>
    %593 = vector.shape_cast %592 : vector<1x8x256xf32> to vector<8x256xf32>
    %594 = vector.shape_cast %591 : vector<8x256xf32> to vector<1x8x256xf32>
    tpu.vector_store %arg7[%c0_813, %c0_814, %c512_815], %594 {strides = array<i32>} : memref<1x8x1000xf32, #tpu.memory_space<vmem>>, vector<1x8x256xf32>,
    %c0_816 = arith.constant 0 : index
    %c785_817 = arith.constant 785 : index
    %595 = vector.load %arg8[%c0_816, %c785_817] : memref<8x1256xbf16, #tpu.memory_space<vmem>>, vector<8x232xbf16>
    %c0_818 = arith.constant 0 : index
    %c0_819 = arith.constant 0 : index
    %596 = vector.load %arg10[%c0_818, %c0_819] : memref<216x256xbf16, #tpu.memory_space<vmem>>, vector<8x232xbf16>
    tpu.vector_store %arg10[%c0_818, %c0_819], %595 {strides = array<i32>} : memref<216x256xbf16, #tpu.memory_space<vmem>>, vector<8x232xbf16>,
    %c0_820 = arith.constant 0 : index
    %c786_821 = arith.constant 786 : index
    %597 = vector.load %arg8[%c0_820, %c786_821] : memref<8x1256xbf16, #tpu.memory_space<vmem>>, vector<8x232xbf16>
    %c8_822 = arith.constant 8 : index
    %c0_823 = arith.constant 0 : index
    %598 = vector.load %arg10[%c8_822, %c0_823] : memref<216x256xbf16, #tpu.memory_space<vmem>>, vector<8x232xbf16>
    tpu.vector_store %arg10[%c8_822, %c0_823], %597 {strides = array<i32>} : memref<216x256xbf16, #tpu.memory_space<vmem>>, vector<8x232xbf16>,
    %c0_824 = arith.constant 0 : index
    %c787_825 = arith.constant 787 : index
    %599 = vector.load %arg8[%c0_824, %c787_825] : memref<8x1256xbf16, #tpu.memory_space<vmem>>, vector<8x232xbf16>
    %c16_826 = arith.constant 16 : index
    %c0_827 = arith.constant 0 : index
    %600 = vector.load %arg10[%c16_826, %c0_827] : memref<216x256xbf16, #tpu.memory_space<vmem>>, vector<8x232xbf16>
    tpu.vector_store %arg10[%c16_826, %c0_827], %599 {strides = array<i32>} : memref<216x256xbf16, #tpu.memory_space<vmem>>, vector<8x232xbf16>,
    %c0_828 = arith.constant 0 : index
    %c795_829 = arith.constant 795 : index
    %601 = vector.load %arg8[%c0_828, %c795_829] : memref<8x1256xbf16, #tpu.memory_space<vmem>>, vector<8x232xbf16>
    %c24_830 = arith.constant 24 : index
    %c0_831 = arith.constant 0 : index
    %602 = vector.load %arg10[%c24_830, %c0_831] : memref<216x256xbf16, #tpu.memory_space<vmem>>, vector<8x232xbf16>
    tpu.vector_store %arg10[%c24_830, %c0_831], %601 {strides = array<i32>} : memref<216x256xbf16, #tpu.memory_space<vmem>>, vector<8x232xbf16>,
    %c0_832 = arith.constant 0 : index
    %c796_833 = arith.constant 796 : index
    %603 = vector.load %arg8[%c0_832, %c796_833] : memref<8x1256xbf16, #tpu.memory_space<vmem>>, vector<8x232xbf16>
    %c32_834 = arith.constant 32 : index
    %c0_835 = arith.constant 0 : index
    %604 = vector.load %arg10[%c32_834, %c0_835] : memref<216x256xbf16, #tpu.memory_space<vmem>>, vector<8x232xbf16>
    tpu.vector_store %arg10[%c32_834, %c0_835], %603 {strides = array<i32>} : memref<216x256xbf16, #tpu.memory_space<vmem>>, vector<8x232xbf16>,
    %c0_836 = arith.constant 0 : index
    %c797_837 = arith.constant 797 : index
    %605 = vector.load %arg8[%c0_836, %c797_837] : memref<8x1256xbf16, #tpu.memory_space<vmem>>, vector<8x232xbf16>
    %c40_838 = arith.constant 40 : index
    %c0_839 = arith.constant 0 : index
    %606 = vector.load %arg10[%c40_838, %c0_839] : memref<216x256xbf16, #tpu.memory_space<vmem>>, vector<8x232xbf16>
    tpu.vector_store %arg10[%c40_838, %c0_839], %605 {strides = array<i32>} : memref<216x256xbf16, #tpu.memory_space<vmem>>, vector<8x232xbf16>,
    %c0_840 = arith.constant 0 : index
    %c805_841 = arith.constant 805 : index
    %607 = vector.load %arg8[%c0_840, %c805_841] : memref<8x1256xbf16, #tpu.memory_space<vmem>>, vector<8x232xbf16>
    %c48_842 = arith.constant 48 : index
    %c0_843 = arith.constant 0 : index
    %608 = vector.load %arg10[%c48_842, %c0_843] : memref<216x256xbf16, #tpu.memory_space<vmem>>, vector<8x232xbf16>
    tpu.vector_store %arg10[%c48_842, %c0_843], %607 {strides = array<i32>} : memref<216x256xbf16, #tpu.memory_space<vmem>>, vector<8x232xbf16>,
    %c0_844 = arith.constant 0 : index
    %c806_845 = arith.constant 806 : index
    %609 = vector.load %arg8[%c0_844, %c806_845] : memref<8x1256xbf16, #tpu.memory_space<vmem>>, vector<8x232xbf16>
    %c56_846 = arith.constant 56 : index
    %c0_847 = arith.constant 0 : index
    %610 = vector.load %arg10[%c56_846, %c0_847] : memref<216x256xbf16, #tpu.memory_space<vmem>>, vector<8x232xbf16>
    tpu.vector_store %arg10[%c56_846, %c0_847], %609 {strides = array<i32>} : memref<216x256xbf16, #tpu.memory_space<vmem>>, vector<8x232xbf16>,
    %c0_848 = arith.constant 0 : index
    %c807_849 = arith.constant 807 : index
    %611 = vector.load %arg8[%c0_848, %c807_849] : memref<8x1256xbf16, #tpu.memory_space<vmem>>, vector<8x232xbf16>
    %c64_850 = arith.constant 64 : index
    %c0_851 = arith.constant 0 : index
    %612 = vector.load %arg10[%c64_850, %c0_851] : memref<216x256xbf16, #tpu.memory_space<vmem>>, vector<8x232xbf16>
    tpu.vector_store %arg10[%c64_850, %c0_851], %611 {strides = array<i32>} : memref<216x256xbf16, #tpu.memory_space<vmem>>, vector<8x232xbf16>,
    %c0_852 = arith.constant 0 : index
    %c885_853 = arith.constant 885 : index
    %613 = vector.load %arg8[%c0_852, %c885_853] : memref<8x1256xbf16, #tpu.memory_space<vmem>>, vector<8x232xbf16>
    %c72_854 = arith.constant 72 : index
    %c0_855 = arith.constant 0 : index
    %614 = vector.load %arg10[%c72_854, %c0_855] : memref<216x256xbf16, #tpu.memory_space<vmem>>, vector<8x232xbf16>
    tpu.vector_store %arg10[%c72_854, %c0_855], %613 {strides = array<i32>} : memref<216x256xbf16, #tpu.memory_space<vmem>>, vector<8x232xbf16>,
    %c0_856 = arith.constant 0 : index
    %c886_857 = arith.constant 886 : index
    %615 = vector.load %arg8[%c0_856, %c886_857] : memref<8x1256xbf16, #tpu.memory_space<vmem>>, vector<8x232xbf16>
    %c80_858 = arith.constant 80 : index
    %c0_859 = arith.constant 0 : index
    %616 = vector.load %arg10[%c80_858, %c0_859] : memref<216x256xbf16, #tpu.memory_space<vmem>>, vector<8x232xbf16>
    tpu.vector_store %arg10[%c80_858, %c0_859], %615 {strides = array<i32>} : memref<216x256xbf16, #tpu.memory_space<vmem>>, vector<8x232xbf16>,
    %c0_860 = arith.constant 0 : index
    %c887_861 = arith.constant 887 : index
    %617 = vector.load %arg8[%c0_860, %c887_861] : memref<8x1256xbf16, #tpu.memory_space<vmem>>, vector<8x232xbf16>
    %c88_862 = arith.constant 88 : index
    %c0_863 = arith.constant 0 : index
    %618 = vector.load %arg10[%c88_862, %c0_863] : memref<216x256xbf16, #tpu.memory_space<vmem>>, vector<8x232xbf16>
    tpu.vector_store %arg10[%c88_862, %c0_863], %617 {strides = array<i32>} : memref<216x256xbf16, #tpu.memory_space<vmem>>, vector<8x232xbf16>,
    %c0_864 = arith.constant 0 : index
    %c895_865 = arith.constant 895 : index
    %619 = vector.load %arg8[%c0_864, %c895_865] : memref<8x1256xbf16, #tpu.memory_space<vmem>>, vector<8x232xbf16>
    %c96_866 = arith.constant 96 : index
    %c0_867 = arith.constant 0 : index
    %620 = vector.load %arg10[%c96_866, %c0_867] : memref<216x256xbf16, #tpu.memory_space<vmem>>, vector<8x232xbf16>
    tpu.vector_store %arg10[%c96_866, %c0_867], %619 {strides = array<i32>} : memref<216x256xbf16, #tpu.memory_space<vmem>>, vector<8x232xbf16>,
    %c0_868 = arith.constant 0 : index
    %c896_869 = arith.constant 896 : index
    %621 = vector.load %arg8[%c0_868, %c896_869] : memref<8x1256xbf16, #tpu.memory_space<vmem>>, vector<8x232xbf16>
    %c104_870 = arith.constant 104 : index
    %c0_871 = arith.constant 0 : index
    %622 = vector.load %arg10[%c104_870, %c0_871] : memref<216x256xbf16, #tpu.memory_space<vmem>>, vector<8x232xbf16>
    tpu.vector_store %arg10[%c104_870, %c0_871], %621 {strides = array<i32>} : memref<216x256xbf16, #tpu.memory_space<vmem>>, vector<8x232xbf16>,
    %c0_872 = arith.constant 0 : index
    %c897_873 = arith.constant 897 : index
    %623 = vector.load %arg8[%c0_872, %c897_873] : memref<8x1256xbf16, #tpu.memory_space<vmem>>, vector<8x232xbf16>
    %c112_874 = arith.constant 112 : index
    %c0_875 = arith.constant 0 : index
    %624 = vector.load %arg10[%c112_874, %c0_875] : memref<216x256xbf16, #tpu.memory_space<vmem>>, vector<8x232xbf16>
    tpu.vector_store %arg10[%c112_874, %c0_875], %623 {strides = array<i32>} : memref<216x256xbf16, #tpu.memory_space<vmem>>, vector<8x232xbf16>,
    %c0_876 = arith.constant 0 : index
    %c905_877 = arith.constant 905 : index
    %625 = vector.load %arg8[%c0_876, %c905_877] : memref<8x1256xbf16, #tpu.memory_space<vmem>>, vector<8x232xbf16>
    %c120_878 = arith.constant 120 : index
    %c0_879 = arith.constant 0 : index
    %626 = vector.load %arg10[%c120_878, %c0_879] : memref<216x256xbf16, #tpu.memory_space<vmem>>, vector<8x232xbf16>
    tpu.vector_store %arg10[%c120_878, %c0_879], %625 {strides = array<i32>} : memref<216x256xbf16, #tpu.memory_space<vmem>>, vector<8x232xbf16>,
    %c0_880 = arith.constant 0 : index
    %c906_881 = arith.constant 906 : index
    %627 = vector.load %arg8[%c0_880, %c906_881] : memref<8x1256xbf16, #tpu.memory_space<vmem>>, vector<8x232xbf16>
    %c128_882 = arith.constant 128 : index
    %c0_883 = arith.constant 0 : index
    %628 = vector.load %arg10[%c128_882, %c0_883] : memref<216x256xbf16, #tpu.memory_space<vmem>>, vector<8x232xbf16>
    tpu.vector_store %arg10[%c128_882, %c0_883], %627 {strides = array<i32>} : memref<216x256xbf16, #tpu.memory_space<vmem>>, vector<8x232xbf16>,
    %c0_884 = arith.constant 0 : index
    %c907_885 = arith.constant 907 : index
    %629 = vector.load %arg8[%c0_884, %c907_885] : memref<8x1256xbf16, #tpu.memory_space<vmem>>, vector<8x232xbf16>
    %c136_886 = arith.constant 136 : index
    %c0_887 = arith.constant 0 : index
    %630 = vector.load %arg10[%c136_886, %c0_887] : memref<216x256xbf16, #tpu.memory_space<vmem>>, vector<8x232xbf16>
    tpu.vector_store %arg10[%c136_886, %c0_887], %629 {strides = array<i32>} : memref<216x256xbf16, #tpu.memory_space<vmem>>, vector<8x232xbf16>,
    %c0_888 = arith.constant 0 : index
    %c985_889 = arith.constant 985 : index
    %631 = vector.load %arg8[%c0_888, %c985_889] : memref<8x1256xbf16, #tpu.memory_space<vmem>>, vector<8x232xbf16>
    %c144_890 = arith.constant 144 : index
    %c0_891 = arith.constant 0 : index
    %632 = vector.load %arg10[%c144_890, %c0_891] : memref<216x256xbf16, #tpu.memory_space<vmem>>, vector<8x232xbf16>
    tpu.vector_store %arg10[%c144_890, %c0_891], %631 {strides = array<i32>} : memref<216x256xbf16, #tpu.memory_space<vmem>>, vector<8x232xbf16>,
    %c0_892 = arith.constant 0 : index
    %c986_893 = arith.constant 986 : index
    %633 = vector.load %arg8[%c0_892, %c986_893] : memref<8x1256xbf16, #tpu.memory_space<vmem>>, vector<8x232xbf16>
    %c152_894 = arith.constant 152 : index
    %c0_895 = arith.constant 0 : index
    %634 = vector.load %arg10[%c152_894, %c0_895] : memref<216x256xbf16, #tpu.memory_space<vmem>>, vector<8x232xbf16>
    tpu.vector_store %arg10[%c152_894, %c0_895], %633 {strides = array<i32>} : memref<216x256xbf16, #tpu.memory_space<vmem>>, vector<8x232xbf16>,
    %c0_896 = arith.constant 0 : index
    %c987_897 = arith.constant 987 : index
    %635 = vector.load %arg8[%c0_896, %c987_897] : memref<8x1256xbf16, #tpu.memory_space<vmem>>, vector<8x232xbf16>
    %c160_898 = arith.constant 160 : index
    %c0_899 = arith.constant 0 : index
    %636 = vector.load %arg10[%c160_898, %c0_899] : memref<216x256xbf16, #tpu.memory_space<vmem>>, vector<8x232xbf16>
    tpu.vector_store %arg10[%c160_898, %c0_899], %635 {strides = array<i32>} : memref<216x256xbf16, #tpu.memory_space<vmem>>, vector<8x232xbf16>,
    %c0_900 = arith.constant 0 : index
    %c995_901 = arith.constant 995 : index
    %637 = vector.load %arg8[%c0_900, %c995_901] : memref<8x1256xbf16, #tpu.memory_space<vmem>>, vector<8x232xbf16>
    %c168_902 = arith.constant 168 : index
    %c0_903 = arith.constant 0 : index
    %638 = vector.load %arg10[%c168_902, %c0_903] : memref<216x256xbf16, #tpu.memory_space<vmem>>, vector<8x232xbf16>
    tpu.vector_store %arg10[%c168_902, %c0_903], %637 {strides = array<i32>} : memref<216x256xbf16, #tpu.memory_space<vmem>>, vector<8x232xbf16>,
    %c0_904 = arith.constant 0 : index
    %c996_905 = arith.constant 996 : index
    %639 = vector.load %arg8[%c0_904, %c996_905] : memref<8x1256xbf16, #tpu.memory_space<vmem>>, vector<8x232xbf16>
    %c176_906 = arith.constant 176 : index
    %c0_907 = arith.constant 0 : index
    %640 = vector.load %arg10[%c176_906, %c0_907] : memref<216x256xbf16, #tpu.memory_space<vmem>>, vector<8x232xbf16>
    tpu.vector_store %arg10[%c176_906, %c0_907], %639 {strides = array<i32>} : memref<216x256xbf16, #tpu.memory_space<vmem>>, vector<8x232xbf16>,
    %c0_908 = arith.constant 0 : index
    %c997_909 = arith.constant 997 : index
    %641 = vector.load %arg8[%c0_908, %c997_909] : memref<8x1256xbf16, #tpu.memory_space<vmem>>, vector<8x232xbf16>
    %c184_910 = arith.constant 184 : index
    %c0_911 = arith.constant 0 : index
    %642 = vector.load %arg10[%c184_910, %c0_911] : memref<216x256xbf16, #tpu.memory_space<vmem>>, vector<8x232xbf16>
    tpu.vector_store %arg10[%c184_910, %c0_911], %641 {strides = array<i32>} : memref<216x256xbf16, #tpu.memory_space<vmem>>, vector<8x232xbf16>,
    %c0_912 = arith.constant 0 : index
    %c1005_913 = arith.constant 1005 : index
    %643 = vector.load %arg8[%c0_912, %c1005_913] : memref<8x1256xbf16, #tpu.memory_space<vmem>>, vector<8x232xbf16>
    %c192_914 = arith.constant 192 : index
    %c0_915 = arith.constant 0 : index
    %644 = vector.load %arg10[%c192_914, %c0_915] : memref<216x256xbf16, #tpu.memory_space<vmem>>, vector<8x232xbf16>
    tpu.vector_store %arg10[%c192_914, %c0_915], %643 {strides = array<i32>} : memref<216x256xbf16, #tpu.memory_space<vmem>>, vector<8x232xbf16>,
    %c0_916 = arith.constant 0 : index
    %c1006_917 = arith.constant 1006 : index
    %645 = vector.load %arg8[%c0_916, %c1006_917] : memref<8x1256xbf16, #tpu.memory_space<vmem>>, vector<8x232xbf16>
    %c200_918 = arith.constant 200 : index
    %c0_919 = arith.constant 0 : index
    %646 = vector.load %arg10[%c200_918, %c0_919] : memref<216x256xbf16, #tpu.memory_space<vmem>>, vector<8x232xbf16>
    tpu.vector_store %arg10[%c200_918, %c0_919], %645 {strides = array<i32>} : memref<216x256xbf16, #tpu.memory_space<vmem>>, vector<8x232xbf16>,
    %c0_920 = arith.constant 0 : index
    %c1007_921 = arith.constant 1007 : index
    %647 = vector.load %arg8[%c0_920, %c1007_921] : memref<8x1256xbf16, #tpu.memory_space<vmem>>, vector<8x232xbf16>
    %c208_922 = arith.constant 208 : index
    %c0_923 = arith.constant 0 : index
    %648 = vector.load %arg10[%c208_922, %c0_923] : memref<216x256xbf16, #tpu.memory_space<vmem>>, vector<8x232xbf16>
    tpu.vector_store %arg10[%c208_922, %c0_923], %647 {strides = array<i32>} : memref<216x256xbf16, #tpu.memory_space<vmem>>, vector<8x232xbf16>,
    %c0_924 = arith.constant 0 : index
    %c0_925 = arith.constant 0 : index
    %649 = vector.load %arg3[%c0_924, %c0_925] : memref<8x216xbf16, #tpu.memory_space<vmem>>, vector<8x216xbf16>
    %c0_926 = arith.constant 0 : index
    %c0_927 = arith.constant 0 : index
    %650 = vector.load %arg10[%c0_926, %c0_927] : memref<216x256xbf16, #tpu.memory_space<vmem>>, vector<216x232xbf16>
    %cst_928 = arith.constant dense<0.000000e+00> : vector<8x232xf32>
    %651 = tpu.matmul %649, %650, %cst_928 {dimension_numbers = #tpu.dot_dimension_numbers<[1], [0], [0], [1], [0, 0, 1, 1], [], []>} : vector<8x216xbf16>, vector<216x232xbf16>, vector<8x232xf32> -> vector<8x232xf32>
    %c0_929 = arith.constant 0 : index
    %c0_930 = arith.constant 0 : index
    %652 = vector.load %arg5[%c0_929, %c0_930] : memref<8x1xf32, #tpu.memory_space<vmem>>, vector<8x1xf32>
    %653 = vector.broadcast %652 : vector<8x1xf32> to vector<8x232xf32>
    %654 = arith.addf %651, %653 : vector<8x232xf32>
    %c0_931 = arith.constant 0 : index
    %c768_932 = arith.constant 768 : index
    %655 = vector.load %arg11[%c0_931, %c768_932] : memref<8x1000xf32, #tpu.memory_space<vmem>>, vector<8x232xf32>
    %656 = arith.addf %654, %655 : vector<8x232xf32>
    %cst_933 = arith.constant 0.000000e+00 : f32
    %657 = vector.broadcast %cst_933 : f32 to vector<8x232xf32>
    %658 = arith.maximumf %656, %657 : vector<8x232xf32>
    %c0_934 = arith.constant 0 : index
    %c0_935 = arith.constant 0 : index
    %c768_936 = arith.constant 768 : index
    %659 = vector.load %arg7[%c0_934, %c0_935, %c768_936] : memref<1x8x1000xf32, #tpu.memory_space<vmem>>, vector<1x8x232xf32>
    %660 = vector.shape_cast %659 : vector<1x8x232xf32> to vector<8x232xf32>
    %661 = vector.shape_cast %658 : vector<8x232xf32> to vector<1x8x232xf32>
    tpu.vector_store %arg7[%c0_934, %c0_935, %c768_936], %661 {strides = array<i32>} : memref<1x8x1000xf32, #tpu.memory_space<vmem>>, vector<1x8x232xf32>,
    return
  }
  func.func @transform_0(%arg0: i32) -> (i32, i32, i32) {
    %c0_i32 = arith.constant 0 : i32
    %c0_i32_0 = arith.constant 0 : i32
    %c0_i32_1 = arith.constant 0 : i32
    return %arg0, %c0_i32, %c0_i32_0 : i32, i32, i32
  }
  func.func @transform_1(%arg0: i32) -> (i32, i32) {
    %c0_i32 = arith.constant 0 : i32
    %c0_i32_0 = arith.constant 0 : i32
    %c0_i32_1 = arith.constant 0 : i32
    return %c0_i32, %c0_i32_0 : i32, i32
  }
  func.func @transform_2(%arg0: i32) -> (i32, i32) {
    %c0_i32 = arith.constant 0 : i32
    %c0_i32_0 = arith.constant 0 : i32
    %c0_i32_1 = arith.constant 0 : i32
    return %c0_i32, %c0_i32_0 : i32, i32
  }
  func.func @transform_3(%arg0: i32) -> (i32, i32) {
    %c0_i32 = arith.constant 0 : i32
    %c0_i32_0 = arith.constant 0 : i32
    %c0_i32_1 = arith.constant 0 : i32
    return %c0_i32, %c0_i32_0 : i32, i32
  }
  func.func @transform_4(%arg0: i32) -> (i32, i32) {
    %c0_i32 = arith.constant 0 : i32
    %c0_i32_0 = arith.constant 0 : i32
    %c0_i32_1 = arith.constant 0 : i32
    return %c0_i32, %c0_i32_0 : i32, i32
  }
  func.func @transform_5(%arg0: i32) -> (i32, i32) {
    %c0_i32 = arith.constant 0 : i32
    %c0_i32_0 = arith.constant 0 : i32
    %c0_i32_1 = arith.constant 0 : i32
    return %c0_i32, %c0_i32_0 : i32, i32
  }
  func.func @transform_6(%arg0: i32) -> (i32, i32, i32) {
    %c0_i32 = arith.constant 0 : i32
    %c0_i32_0 = arith.constant 0 : i32
    %c0_i32_1 = arith.constant 0 : i32
    return %arg0, %c0_i32, %c0_i32_0 : i32, i32, i32
  }
}

</mosaic_0001>

<llo_original>
// kernel: basic_block_forward.1
$region0: #{basic_block_forward.1}
  #allocation0 [shape = 'u32[]', space=smem, size = 0x4, offset = 0x4, fixed_abs, tag = 'smem constant byte address 0x4 - core index']
  #allocation1 [shape = 'u32[144,128]{1,0:T(1,128)}', space=vmem, size = 0x12000, scoped, tag = 'internal scratch']
  #allocation2 [shape = 'bf16[8,1256]{1,0:T(8,128)(2,1)}', space=vmem, size = 0x5000, scoped, tag = 'scratch operand']
  #allocation3 [shape = 'bf16[128,256]{1,0:T(16,128)(2,1)}', space=vmem, size = 0x10000, scoped, tag = 'scratch operand']
  #allocation4 [shape = 'bf16[216,256]{1,0:T(8,128)(2,1)}', space=vmem, size = 0x1b000, scoped, tag = 'scratch operand']
  #allocation5 [shape = 'f32[8,1000]{1,0:T(8,128)}', space=vmem, size = 0x8000, scoped, tag = 'scratch operand']
  %s0 = inlined_call_operand.vmem [shape: bf16[2,4,1256], index: 0, kind: input, shape index: {}]
  %s1 = inlined_call_operand.vmem [shape: bf16[16,128], index: 1, kind: input, shape index: {}]
  %s2 = inlined_call_operand.vmem [shape: bf16[8,216], index: 2, kind: input, shape index: {}]
  %s3 = inlined_call_operand.vmem [shape: f32[8,1], index: 3, kind: input, shape index: {}]
  %s4 = inlined_call_operand.vmem [shape: f32[8,1], index: 4, kind: input, shape index: {}]
  %s5 = inlined_call_operand.vmem [shape: f32[1,1000], index: 5, kind: input, shape index: {}]
  %s6 = inlined_call_operand.vmem [shape: f32[2,8,1000], index: 6, kind: output, shape index: {}]
  %s7 = sld [smem:[#allocation0]]
  $region57: #{basic_block_forward.1} parent=0
    _
  %s9 = ssub.s32 1, %s7
  %s10 = scalar_select 0, %s9, %s7
  loop: start=0, step=1, limit=4
  $region2: #{basic_block_forward.1} parent=0 // loop_pre_header
    _
  $region3: #{basic_block_forward.1} parent=0 // loop_header
    %s12 = sphi 0, %s16
    %p13 = scmp.ge.s32.totalorder %s12, 4
    %s22 = sphi 0, %s24
    %s25 = sphi 0, %s22
    %s26 = sphi 0, %s25
    %s42 = sphi 0, %s26
    %s46 = sphi 0, %s46
    %s48 = sphi 0, %s46
    %s49 = sphi 0, %s48
    %s63 = sphi 0, %s49
    %s67 = sphi 0, %s67
    %s69 = sphi 0, %s67
    %s70 = sphi 0, %s69
    %s84 = sphi 0, %s70
    %s88 = sphi 0, %s88
    %s90 = sphi 0, %s88
    %s91 = sphi 0, %s90
    %s105 = sphi 0, %s91
    %s109 = sphi 0, %s109
    %s111 = sphi 0, %s109
    %s112 = sphi 0, %s111
    %s126 = sphi 0, %s112
    %s130 = sphi 0, %s130
    %s132 = sphi 0, %s130
    %s133 = sphi 0, %s132
    %s147 = sphi 0, %s133
    %s153 = sphi 0, %s155
    %s156 = sphi 0, %s153
    %s157 = sphi 0, %s156
    %s173 = sphi 0, %s157
  $region4: #{basic_block_forward.1} parent=0 // loop_header_branch
    %15 = sbr.rel (%p13) target = $region8
  $region5: #{basic_block_forward.1} parent=0 // loop_body
    %s17 = ssub.s32 %s12, 1
    %s18 = ssub.s32 %s12, 2
    %s19 = sadd.s32 %s12, 1
    %s20 = ssub.s32 %s12, %s19
    %p21 = scmp.eq.s32.totalorder %s20, 0
    %s23 = sadd.s32 %s22, 1
    %s24 = scalar_select %p21, %s22, %s23
    %p27 = pneg %p21
    %p28 = scmp.eq.s32.totalorder %s12, 1
    %p29 = por %p27, %p28
    %p30 = scmp.ne.s32.totalorder %s22, %s25
    %p31 = scmp.eq.s32.totalorder %s12, 0
    %p32 = por %p30, %p31
    %p33 = scmp.ne.s32.totalorder %s22, %s25
    %p34 = scmp.eq.s32.totalorder %s17, 1
    %p35 = por %p33, %p34
    %p36 = scmp.ne.s32.totalorder %s25, %s26
    %p37 = scmp.eq.s32.totalorder %s17, 0
    %p38 = por %p36, %p37
    %p39 = scmp.ne.s32.totalorder %s25, %s26
    %p40 = scmp.eq.s32.totalorder %s18, 1
    %p41 = por %p39, %p40
    %p43 = scmp.ne.s32.totalorder %s26, %s42
    %p44 = scmp.eq.s32.totalorder %s18, 0
    %p45 = por %p43, %p44
    %s47 = sadd.s32 %s46, 1
    %p50 = scmp.eq.s32.totalorder %s12, 1
    %p51 = scmp.ne.s32.totalorder %s46, %s48
    %p52 = scmp.eq.s32.totalorder %s12, 0
    %p53 = por %p51, %p52
    %p54 = scmp.ne.s32.totalorder %s46, %s48
    %p55 = scmp.eq.s32.totalorder %s17, 1
    %p56 = por %p54, %p55
    %p57 = scmp.ne.s32.totalorder %s48, %s49
    %p58 = scmp.eq.s32.totalorder %s17, 0
    %p59 = por %p57, %p58
    %p60 = scmp.ne.s32.totalorder %s48, %s49
    %p61 = scmp.eq.s32.totalorder %s18, 1
    %p62 = por %p60, %p61
    %p64 = scmp.ne.s32.totalorder %s49, %s63
    %p65 = scmp.eq.s32.totalorder %s18, 0
    %p66 = por %p64, %p65
    %s68 = sadd.s32 %s67, 1
    %p71 = scmp.eq.s32.totalorder %s12, 1
    %p72 = scmp.ne.s32.totalorder %s67, %s69
    %p73 = scmp.eq.s32.totalorder %s12, 0
    %p74 = por %p72, %p73
    %p75 = scmp.ne.s32.totalorder %s67, %s69
    %p76 = scmp.eq.s32.totalorder %s17, 1
    %p77 = por %p75, %p76
    %p78 = scmp.ne.s32.totalorder %s69, %s70
    %p79 = scmp.eq.s32.totalorder %s17, 0
    %p80 = por %p78, %p79
    %p81 = scmp.ne.s32.totalorder %s69, %s70
    %p82 = scmp.eq.s32.totalorder %s18, 1
    %p83 = por %p81, %p82
    %p85 = scmp.ne.s32.totalorder %s70, %s84
    %p86 = scmp.eq.s32.totalorder %s18, 0
    %p87 = por %p85, %p86
    %s89 = sadd.s32 %s88, 1
    %p92 = scmp.eq.s32.totalorder %s12, 1
    %p93 = scmp.ne.s32.totalorder %s88, %s90
    %p94 = scmp.eq.s32.totalorder %s12, 0
    %p95 = por %p93, %p94
    %p96 = scmp.ne.s32.totalorder %s88, %s90
    %p97 = scmp.eq.s32.totalorder %s17, 1
    %p98 = por %p96, %p97
    %p99 = scmp.ne.s32.totalorder %s90, %s91
    %p100 = scmp.eq.s32.totalorder %s17, 0
    %p101 = por %p99, %p100
    %p102 = scmp.ne.s32.totalorder %s90, %s91
    %p103 = scmp.eq.s32.totalorder %s18, 1
    %p104 = por %p102, %p103
    %p106 = scmp.ne.s32.totalorder %s91, %s105
    %p107 = scmp.eq.s32.totalorder %s18, 0
    %p108 = por %p106, %p107
    %s110 = sadd.s32 %s109, 1
    %p113 = scmp.eq.s32.totalorder %s12, 1
    %p114 = scmp.ne.s32.totalorder %s109, %s111
    %p115 = scmp.eq.s32.totalorder %s12, 0
    %p116 = por %p114, %p115
    %p117 = scmp.ne.s32.totalorder %s109, %s111
    %p118 = scmp.eq.s32.totalorder %s17, 1
    %p119 = por %p117, %p118
    %p120 = scmp.ne.s32.totalorder %s111, %s112
    %p121 = scmp.eq.s32.totalorder %s17, 0
    %p122 = por %p120, %p121
    %p123 = scmp.ne.s32.totalorder %s111, %s112
    %p124 = scmp.eq.s32.totalorder %s18, 1
    %p125 = por %p123, %p124
    %p127 = scmp.ne.s32.totalorder %s112, %s126
    %p128 = scmp.eq.s32.totalorder %s18, 0
    %p129 = por %p127, %p128
    %s131 = sadd.s32 %s130, 1
    %p134 = scmp.eq.s32.totalorder %s12, 1
    %p135 = scmp.ne.s32.totalorder %s130, %s132
    %p136 = scmp.eq.s32.totalorder %s12, 0
    %p137 = por %p135, %p136
    %p138 = scmp.ne.s32.totalorder %s130, %s132
    %p139 = scmp.eq.s32.totalorder %s17, 1
    %p140 = por %p138, %p139
    %p141 = scmp.ne.s32.totalorder %s132, %s133
    %p142 = scmp.eq.s32.totalorder %s17, 0
    %p143 = por %p141, %p142
    %p144 = scmp.ne.s32.totalorder %s132, %s133
    %p145 = scmp.eq.s32.totalorder %s18, 1
    %p146 = por %p144, %p145
    %p148 = scmp.ne.s32.totalorder %s133, %s147
    %p149 = scmp.eq.s32.totalorder %s18, 0
    %p150 = por %p148, %p149
    %s151 = ssub.s32 %s12, %s19
    %p152 = scmp.eq.s32.totalorder %s151, 0
    %s154 = sadd.s32 %s153, 1
    %s155 = scalar_select %p152, %s153, %s154
    %p158 = pneg %p152
    %p159 = scmp.eq.s32.totalorder %s12, 1
    %p160 = por %p158, %p159
    %p161 = scmp.ne.s32.totalorder %s153, %s156
    %p162 = scmp.eq.s32.totalorder %s12, 0
    %p163 = por %p161, %p162
    %p164 = scmp.ne.s32.totalorder %s153, %s156
    %p165 = scmp.eq.s32.totalorder %s17, 1
    %p166 = por %p164, %p165
    %p167 = scmp.ne.s32.totalorder %s156, %s157
    %p168 = scmp.eq.s32.totalorder %s17, 0
    %p169 = por %p167, %p168
    %p170 = scmp.ne.s32.totalorder %s156, %s157
    %p171 = scmp.eq.s32.totalorder %s18, 1
    %p172 = por %p170, %p171
    %p174 = scmp.ne.s32.totalorder %s157, %s173
    %p175 = scmp.eq.s32.totalorder %s18, 0
    %p176 = por %p174, %p175
    %p177 = scmp.le.s32.totalorder 1, %s12
    %p178 = scmp.lt.s32.totalorder %s12, 3
    %p179 = pnand %p177, %p178
    %p180 = pneg %p179
    // Predicated region
    $region9: #{basic_block_forward.1} parent=5 // pred_check
      _
    $region10: #{basic_block_forward.1} parent=5 // pred_check_branch
      %182 = sbr.rel (%p179) target = $region12
    $region11: #{basic_block_forward.1} parent=5 // pred_region
      %s183 = ssub.s32 %s12, 1
      // Predicated region
      $region13: #{basic_block_forward.1} parent=11 // pred_check
        %p184 = pneg %p59
      $region14: #{basic_block_forward.1} parent=11 // pred_check_branch
        %186 = sbr.rel (%p184) target = $region16
      $region15: #{basic_block_forward.1} parent=11 // pred_region
        _
      $region16: #{basic_block_forward.1} parent=11 // pred_fallthru
        _
      // Predicated region
      $region17: #{basic_block_forward.1} parent=11 // pred_check
        %p187 = pneg %p80
      $region18: #{basic_block_forward.1} parent=11 // pred_check_branch
        %189 = sbr.rel (%p187) target = $region20
      $region19: #{basic_block_forward.1} parent=11 // pred_region
        _
      $region20: #{basic_block_forward.1} parent=11 // pred_fallthru
        _
      // Predicated region
      $region21: #{basic_block_forward.1} parent=11 // pred_check
        %p190 = pneg %p101
      $region22: #{basic_block_forward.1} parent=11 // pred_check_branch
        %192 = sbr.rel (%p190) target = $region24
      $region23: #{basic_block_forward.1} parent=11 // pred_region
        _
      $region24: #{basic_block_forward.1} parent=11 // pred_fallthru
        _
      // Predicated region
      $region25: #{basic_block_forward.1} parent=11 // pred_check
        %p193 = pneg %p122
      $region26: #{basic_block_forward.1} parent=11 // pred_check_branch
        %195 = sbr.rel (%p193) target = $region28
      $region27: #{basic_block_forward.1} parent=11 // pred_region
        _
      $region28: #{basic_block_forward.1} parent=11 // pred_fallthru
        _
      // Predicated region
      $region29: #{basic_block_forward.1} parent=11 // pred_check
        %p196 = pneg %p143
      $region30: #{basic_block_forward.1} parent=11 // pred_check_branch
        %198 = sbr.rel (%p196) target = $region32
      $region31: #{basic_block_forward.1} parent=11 // pred_region
        _
      $region32: #{basic_block_forward.1} parent=11 // pred_fallthru
        _
    $region12: #{basic_block_forward.1} parent=5 // pred_fallthru
      _
    %p199 = scmp.lt.s32.totalorder %s12, 2
    // Predicated region
    $region33: #{basic_block_forward.1} parent=5 // pred_check
      %p200 = pneg %p199
    $region34: #{basic_block_forward.1} parent=5 // pred_check_branch
      %202 = sbr.rel (%p200) target = $region36
    $region35: #{basic_block_forward.1} parent=5 // pred_region
      // Predicated region
      $region37: #{basic_block_forward.1} parent=35 // pred_check
        %p203 = pneg %p32
      $region38: #{basic_block_forward.1} parent=35 // pred_check_branch
        %205 = sbr.rel (%p203) target = $region40
      $region39: #{basic_block_forward.1} parent=35 // pred_region
        %p206 = scmp.lt.s32.totalorder %s12, 1
        %s207 = scalar_select %p206, %s12, 1
        %s208 = smul.addr %s207, 10
        %s209 = smul.addr %s208, 2
        %s210 = scalar_lea.vmem %s0, %s209
      $region40: #{basic_block_forward.1} parent=35 // pred_fallthru
        _
    $region36: #{basic_block_forward.1} parent=5 // pred_fallthru
      _
    %p211 = scmp.le.s32.totalorder 1, %s12
    %p212 = scmp.lt.s32.totalorder %s12, 3
    %p213 = pnand %p211, %p212
    %p214 = pneg %p213
    // Predicated region
    $region41: #{basic_block_forward.1} parent=5 // pred_check
      _
    $region42: #{basic_block_forward.1} parent=5 // pred_check_branch
      %216 = sbr.rel (%p213) target = $region44
    $region43: #{basic_block_forward.1} parent=5 // pred_region
      %s217 = ssub.s32 %s12, 1
      %p218 = scmp.lt.s32.totalorder %s17, 1
      %s219 = scalar_select %p218, %s17, 1
      %s220 = smul.addr %s219, 10
      %s221 = smul.addr %s220, 2
      %s222 = scalar_lea.vmem %s0, %s221
      %p223 = pneg %p38
      %p224 = pneg %p35
      %p225 = pneg %p59
      %p226 = pneg %p56
      %p227 = pneg %p80
      %p228 = pneg %p77
      %p229 = pneg %p101
      %p230 = pneg %p98
      %p231 = pneg %p122
      %p232 = pneg %p119
      %p233 = pneg %p143
      %p234 = pneg %p140
      %p235 = pneg %p169
      %p236 = pneg %p166
      %p237 = scmp.lt.s32.totalorder %s17, 1
      %s238 = scalar_select %p237, %s17, 1
      %s239 = smul.addr %s238, 8
      %s240 = smul.addr %s239, 8
      %s241 = scalar_lea.vmem %s6, %s240
      %p242 = scmp.lt.s32.totalorder %s17, 1
      %s243 = scalar_select %p242, %s17, 1
      %s244 = smul.addr %s243, 10
      %s245 = smul.addr %s244, 2
      %s246 = scalar_lea.vmem %s0, %s245
      %p247 = scmp.lt.s32.totalorder %s17, 1
      %s248 = scalar_select %p247, %s17, 1
      %s249 = smul.addr %s248, 8
      %s250 = smul.addr %s249, 8
      %s251 = scalar_lea.vmem %s6, %s250
      %253 = vst [vmem:[#allocation3 + $0x60] sm:$0xc0] 0
      %254 = vst [vmem:[#allocation3 + $0x68] sm:$0xc0] 0
      %255 = vst [vmem:[#allocation3 + $0x70] sm:$0xff] 0
      %256 = vst [vmem:[#allocation3 + $0x78] sm:$0xff] 0
      %257 = vst [vmem:[#allocation2] sm:$0xf] 0
      %vm258 = vcmask 1044288
      %vm259 = vcmask 850948
      %vm260 = vmor %vm259, %vm258
      %261 = vst.msk [vmem:[#allocation2 + $0x20] sm:$0xff] %vm260, 0
      %v262 = vld [vmem:[%s246] sm:$0x3f]
      %v264 = vcombine.high %v262, %v262
      %v266 = vunpack.c.l.s4 1983009808
      %v267 = vunpack.c.0.s8 %v266
      %v268 = vlaneseq
      %v269 = vshrl.u32 %v268, 7
      %v270 = vsub.s32 %v267, %v269
      %v271 = vrot.slane %v262, %v270
      %v273 = vunpack.c.l.s4 1983009808
      %v274 = vunpack.c.0.s8 %v273
      %v275 = vlaneseq
      %v276 = vshrl.u32 %v275, 7
      %v277 = vsub.s32 %v274, %v276
      %v278 = vrot.slane %v264, %v277
      %v279 = vcombine.high %v271, %v271
      %280 = vrot.lane.b32.xlu0 %v271, 111
      %v281 = vpop.permute.xlu0 %280
      %282 = vrot.lane.b32.xlu0 %v279, 111
      %v283 = vpop.permute.xlu0 %282
      %284 = vrot.lane.b32.xlu0 %v278, 111
      %v285 = vpop.permute.xlu0 %284
      %vm286 = vcmask 908288
      %v287 = vsel %vm286, %v281, %v283
      %v288 = vsel %vm286, %v283, %v285
      %291 = vst [vmem:[#allocation3] sm:$0x3] %v287
      %292 = vst [vmem:[#allocation3 + $0x8] sm:$0x3] %v288
      %v293 = vld [vmem:[%s246] sm:$0x3f]
      %v295 = vcombine.low %v293, %v293
      %v297 = vunpack.c.l.s4 1983009808
      %v298 = vunpack.c.0.s8 %v297
      %v299 = vlaneseq
      %v300 = vshrl.u32 %v299, 7
      %v301 = vsub.s32 %v298, %v300
      %v302 = vrot.slane %v295, %v301
      %v304 = vunpack.c.l.s4 1983009808
      %v305 = vunpack.c.0.s8 %v304
      %v306 = vlaneseq
      %v307 = vshrl.u32 %v306, 7
      %v308 = vsub.s32 %v305, %v307
      %v309 = vrot.slane %v293, %v308
      %v310 = vcombine.high %v302, %v302
      %311 = vrot.lane.b32.xlu0 %v302, 110
      %v312 = vpop.permute.xlu0 %311
      %313 = vrot.lane.b32.xlu0 %v310, 110
      %v314 = vpop.permute.xlu0 %313
      %315 = vrot.lane.b32.xlu0 %v309, 110
      %v316 = vpop.permute.xlu0 %315
      %vm317 = vcmask 900096
      %v318 = vsel %vm317, %v312, %v314
      %v319 = vsel %vm317, %v314, %v316
      %322 = vst [vmem:[#allocation3] sm:$0xc] %v318
      %323 = vst [vmem:[#allocation3 + $0x8] sm:$0xc] %v319
      %v324 = vld [vmem:[%s246] sm:$0x3f]
      %v326 = vcombine.high %v324, %v324
      %v328 = vunpack.c.l.s4 1983009808
      %v329 = vunpack.c.0.s8 %v328
      %v330 = vlaneseq
      %v331 = vshrl.u32 %v330, 7
      %v332 = vsub.s32 %v329, %v331
      %v333 = vrot.slane %v324, %v332
      %v335 = vunpack.c.l.s4 1983009808
      %v336 = vunpack.c.0.s8 %v335
      %v337 = vlaneseq
      %v338 = vshrl.u32 %v337, 7
      %v339 = vsub.s32 %v336, %v338
      %v340 = vrot.slane %v326, %v339
      %v341 = vcombine.low %v333, %v333
      %v342 = vcombine.low %v340, %v340
      %343 = vrot.lane.b32.xlu0 %v341, 109
      %v344 = vpop.permute.xlu0 %343
      %345 = vrot.lane.b32.xlu0 %v333, 109
      %v346 = vpop.permute.xlu0 %345
      %347 = vrot.lane.b32.xlu0 %v342, 109
      %v348 = vpop.permute.xlu0 %347
      %vm349 = vcmask 891904
      %v350 = vsel %vm349, %v344, %v346
      %v351 = vsel %vm349, %v346, %v348
      %354 = vst [vmem:[#allocation3] sm:$0x30] %v350
      %355 = vst [vmem:[#allocation3 + $0x8] sm:$0x30] %v351
      %v356 = vld [vmem:[%s246] sm:$0x3f]
      %v358 = vcombine.low %v356, %v356
      %v360 = vunpack.c.l.s4 1983009808
      %v361 = vunpack.c.0.s8 %v360
      %v362 = vlaneseq
      %v363 = vshrl.u32 %v362, 7
      %v364 = vsub.s32 %v361, %v363
      %v365 = vrot.slane %v358, %v364
      %v367 = vunpack.c.l.s4 1983009808
      %v368 = vunpack.c.0.s8 %v367
      %v369 = vlaneseq
      %v370 = vshrl.u32 %v369, 7
      %v371 = vsub.s32 %v368, %v370
      %v372 = vrot.slane %v356, %v371
      %v373 = vcombine.low %v365, %v365
      %v374 = vcombine.low %v372, %v372
      %375 = vrot.lane.b32.xlu0 %v373, 101
      %v376 = vpop.permute.xlu0 %375
      %377 = vrot.lane.b32.xlu0 %v365, 101
      %v378 = vpop.permute.xlu0 %377
      %379 = vrot.lane.b32.xlu0 %v374, 101
      %v380 = vpop.permute.xlu0 %379
      %vm381 = vcmask 826368
      %v382 = vsel %vm381, %v376, %v378
      %v383 = vsel %vm381, %v378, %v380
      %386 = vst [vmem:[#allocation3] sm:$0xc0] %v382
      %387 = vst [vmem:[#allocation3 + $0x8] sm:$0xc0] %v383
      %v388 = vld [vmem:[%s246] sm:$0x3f]
      %v390 = vcombine.high %v388, %v388
      %v392 = vunpack.c.l.s4 1983009808
      %v393 = vunpack.c.0.s8 %v392
      %v394 = vlaneseq
      %v395 = vshrl.u32 %v394, 7
      %v396 = vsub.s32 %v393, %v395
      %v397 = vrot.slane %v388, %v396
      %v399 = vunpack.c.l.s4 1983009808
      %v400 = vunpack.c.0.s8 %v399
      %v401 = vlaneseq
      %v402 = vshrl.u32 %v401, 7
      %v403 = vsub.s32 %v400, %v402
      %v404 = vrot.slane %v390, %v403
      %v405 = vcombine.high %v397, %v397
      %406 = vrot.lane.b32.xlu0 %v397, 100
      %v407 = vpop.permute.xlu0 %406
      %408 = vrot.lane.b32.xlu0 %v405, 100
      %v409 = vpop.permute.xlu0 %408
      %410 = vrot.lane.b32.xlu0 %v404, 100
      %v411 = vpop.permute.xlu0 %410
      %vm412 = vcmask 818176
      %v413 = vsel %vm412, %v407, %v409
      %v414 = vsel %vm412, %v409, %v411
      %417 = vst [vmem:[#allocation3 + $0x10] sm:$0x3] %v413
      %418 = vst [vmem:[#allocation3 + $0x18] sm:$0x3] %v414
      %v419 = vld [vmem:[%s246] sm:$0x3f]
      %v421 = vcombine.low %v419, %v419
      %v423 = vunpack.c.l.s4 1983009808
      %v424 = vunpack.c.0.s8 %v423
      %v425 = vlaneseq
      %v426 = vshrl.u32 %v425, 7
      %v427 = vsub.s32 %v424, %v426
      %v428 = vrot.slane %v421, %v427
      %v430 = vunpack.c.l.s4 1983009808
      %v431 = vunpack.c.0.s8 %v430
      %v432 = vlaneseq
      %v433 = vshrl.u32 %v432, 7
      %v434 = vsub.s32 %v431, %v433
      %v435 = vrot.slane %v419, %v434
      %v436 = vcombine.high %v428, %v428
      %437 = vrot.lane.b32.xlu0 %v428, 99
      %v438 = vpop.permute.xlu0 %437
      %439 = vrot.lane.b32.xlu0 %v436, 99
      %v440 = vpop.permute.xlu0 %439
      %441 = vrot.lane.b32.xlu0 %v435, 99
      %v442 = vpop.permute.xlu0 %441
      %vm443 = vcmask 809984
      %v444 = vsel %vm443, %v438, %v440
      %v445 = vsel %vm443, %v440, %v442
      %448 = vst [vmem:[#allocation3 + $0x10] sm:$0xc] %v444
      %449 = vst [vmem:[#allocation3 + $0x18] sm:$0xc] %v445
      %v450 = vld [vmem:[%s246] sm:$0x3f]
      %v452 = vcombine.high %v450, %v450
      %v454 = vunpack.c.l.s4 1983009808
      %v455 = vunpack.c.0.s8 %v454
      %v456 = vlaneseq
      %v457 = vshrl.u32 %v456, 7
      %v458 = vsub.s32 %v455, %v457
      %v459 = vrot.slane %v450, %v458
      %v461 = vunpack.c.l.s4 1983009808
      %v462 = vunpack.c.0.s8 %v461
      %v463 = vlaneseq
      %v464 = vshrl.u32 %v463, 7
      %v465 = vsub.s32 %v462, %v464
      %v466 = vrot.slane %v452, %v465
      %v467 = vcombine.low %v459, %v459
      %v468 = vcombine.low %v466, %v466
      %469 = vrot.lane.b32.xlu0 %v467, 91
      %v470 = vpop.permute.xlu0 %469
      %471 = vrot.lane.b32.xlu0 %v459, 91
      %v472 = vpop.permute.xlu0 %471
      %473 = vrot.lane.b32.xlu0 %v468, 91
      %v474 = vpop.permute.xlu0 %473
      %vm475 = vcmask 744448
      %v476 = vsel %vm475, %v470, %v472
      %v477 = vsel %vm475, %v472, %v474
      %480 = vst [vmem:[#allocation3 + $0x10] sm:$0x30] %v476
      %481 = vst [vmem:[#allocation3 + $0x18] sm:$0x30] %v477
      %v482 = vld [vmem:[%s246] sm:$0x3f]
      %v484 = vcombine.low %v482, %v482
      %v486 = vunpack.c.l.s4 1983009808
      %v487 = vunpack.c.0.s8 %v486
      %v488 = vlaneseq
      %v489 = vshrl.u32 %v488, 7
      %v490 = vsub.s32 %v487, %v489
      %v491 = vrot.slane %v484, %v490
      %v493 = vunpack.c.l.s4 1983009808
      %v494 = vunpack.c.0.s8 %v493
      %v495 = vlaneseq
      %v496 = vshrl.u32 %v495, 7
      %v497 = vsub.s32 %v494, %v496
      %v498 = vrot.slane %v482, %v497
      %v499 = vcombine.low %v491, %v491
      %v500 = vcombine.low %v498, %v498
      %501 = vrot.lane.b32.xlu0 %v499, 90
      %v502 = vpop.permute.xlu0 %501
      %503 = vrot.lane.b32.xlu0 %v491, 90
      %v504 = vpop.permute.xlu0 %503
      %505 = vrot.lane.b32.xlu0 %v500, 90
      %v506 = vpop.permute.xlu0 %505
      %vm507 = vcmask 736256
      %v508 = vsel %vm507, %v502, %v504
      %v509 = vsel %vm507, %v504, %v506
      %512 = vst [vmem:[#allocation3 + $0x10] sm:$0xc0] %v508
      %513 = vst [vmem:[#allocation3 + $0x18] sm:$0xc0] %v509
      %v514 = vld [vmem:[%s246] sm:$0x3f]
      %v516 = vcombine.high %v514, %v514
      %v518 = vunpack.c.l.s4 1983009808
      %v519 = vunpack.c.0.s8 %v518
      %v520 = vlaneseq
      %v521 = vshrl.u32 %v520, 7
      %v522 = vsub.s32 %v519, %v521
      %v523 = vrot.slane %v514, %v522
      %v525 = vunpack.c.l.s4 1983009808
      %v526 = vunpack.c.0.s8 %v525
      %v527 = vlaneseq
      %v528 = vshrl.u32 %v527, 7
      %v529 = vsub.s32 %v526, %v528
      %v530 = vrot.slane %v516, %v529
      %v531 = vcombine.high %v523, %v523
      %532 = vrot.lane.b32.xlu0 %v523, 89
      %v533 = vpop.permute.xlu0 %532
      %534 = vrot.lane.b32.xlu0 %v531, 89
      %v535 = vpop.permute.xlu0 %534
      %536 = vrot.lane.b32.xlu0 %v530, 89
      %v537 = vpop.permute.xlu0 %536
      %vm538 = vcmask 728064
      %v539 = vsel %vm538, %v533, %v535
      %v540 = vsel %vm538, %v535, %v537
      %543 = vst [vmem:[#allocation3 + $0x20] sm:$0x3] %v539
      %544 = vst [vmem:[#allocation3 + $0x28] sm:$0x3] %v540
      %v545 = vld [vmem:[%s246] sm:$0x3f]
      %v547 = vcombine.low %v545, %v545
      %v549 = vunpack.c.l.s4 1983009808
      %v550 = vunpack.c.0.s8 %v549
      %v551 = vlaneseq
      %v552 = vshrl.u32 %v551, 7
      %v553 = vsub.s32 %v550, %v552
      %v554 = vrot.slane %v547, %v553
      %v556 = vunpack.c.l.s4 1983009808
      %v557 = vunpack.c.0.s8 %v556
      %v558 = vlaneseq
      %v559 = vshrl.u32 %v558, 7
      %v560 = vsub.s32 %v557, %v559
      %v561 = vrot.slane %v545, %v560
      %v562 = vcombine.high %v554, %v554
      %563 = vrot.lane.b32.xlu0 %v554, 11
      %v564 = vpop.permute.xlu0 %563
      %565 = vrot.lane.b32.xlu0 %v562, 11
      %v566 = vpop.permute.xlu0 %565
      %567 = vrot.lane.b32.xlu0 %v561, 11
      %v568 = vpop.permute.xlu0 %567
      %vm569 = vcmask 89088
      %v570 = vsel %vm569, %v564, %v566
      %v571 = vsel %vm569, %v566, %v568
      %574 = vst [vmem:[#allocation3 + $0x20] sm:$0xc] %v570
      %575 = vst [vmem:[#allocation3 + $0x28] sm:$0xc] %v571
      %v576 = vld [vmem:[%s246] sm:$0x3f]
      %v578 = vcombine.high %v576, %v576
      %v580 = vunpack.c.l.s4 1983009808
      %v581 = vunpack.c.0.s8 %v580
      %v582 = vlaneseq
      %v583 = vshrl.u32 %v582, 7
      %v584 = vsub.s32 %v581, %v583
      %v585 = vrot.slane %v576, %v584
      %v587 = vunpack.c.l.s4 1983009808
      %v588 = vunpack.c.0.s8 %v587
      %v589 = vlaneseq
      %v590 = vshrl.u32 %v589, 7
      %v591 = vsub.s32 %v588, %v590
      %v592 = vrot.slane %v578, %v591
      %v593 = vcombine.low %v585, %v585
      %v594 = vcombine.low %v592, %v592
      %595 = vrot.lane.b32.xlu0 %v593, 10
      %v596 = vpop.permute.xlu0 %595
      %597 = vrot.lane.b32.xlu0 %v585, 10
      %v598 = vpop.permute.xlu0 %597
      %599 = vrot.lane.b32.xlu0 %v594, 10
      %v600 = vpop.permute.xlu0 %599
      %vm601 = vcmask 80896
      %v602 = vsel %vm601, %v596, %v598
      %v603 = vsel %vm601, %v598, %v600
      %606 = vst [vmem:[#allocation3 + $0x20] sm:$0x30] %v602
      %607 = vst [vmem:[#allocation3 + $0x28] sm:$0x30] %v603
      %v608 = vld [vmem:[%s246] sm:$0x3f]
      %v610 = vcombine.low %v608, %v608
      %v612 = vunpack.c.l.s4 1983009808
      %v613 = vunpack.c.0.s8 %v612
      %v614 = vlaneseq
      %v615 = vshrl.u32 %v614, 7
      %v616 = vsub.s32 %v613, %v615
      %v617 = vrot.slane %v610, %v616
      %v619 = vunpack.c.l.s4 1983009808
      %v620 = vunpack.c.0.s8 %v619
      %v621 = vlaneseq
      %v622 = vshrl.u32 %v621, 7
      %v623 = vsub.s32 %v620, %v622
      %v624 = vrot.slane %v608, %v623
      %v625 = vcombine.low %v617, %v617
      %v626 = vcombine.low %v624, %v624
      %627 = vrot.lane.b32.xlu0 %v625, 9
      %v628 = vpop.permute.xlu0 %627
      %629 = vrot.lane.b32.xlu0 %v617, 9
      %v630 = vpop.permute.xlu0 %629
      %631 = vrot.lane.b32.xlu0 %v626, 9
      %v632 = vpop.permute.xlu0 %631
      %vm633 = vcmask 72704
      %v634 = vsel %vm633, %v628, %v630
      %v635 = vsel %vm633, %v630, %v632
      %638 = vst [vmem:[#allocation3 + $0x20] sm:$0xc0] %v634
      %639 = vst [vmem:[#allocation3 + $0x28] sm:$0xc0] %v635
      %v640 = vld [vmem:[%s246] sm:$0x3f]
      %v642 = vcombine.high %v640, %v640
      %v644 = vunpack.c.l.s4 1983009808
      %v645 = vunpack.c.0.s8 %v644
      %v646 = vlaneseq
      %v647 = vshrl.u32 %v646, 7
      %v648 = vsub.s32 %v645, %v647
      %v649 = vrot.slane %v640, %v648
      %v651 = vunpack.c.l.s4 1983009808
      %v652 = vunpack.c.0.s8 %v651
      %v653 = vlaneseq
      %v654 = vshrl.u32 %v653, 7
      %v655 = vsub.s32 %v652, %v654
      %v656 = vrot.slane %v642, %v655
      %v657 = vcombine.high %v649, %v649
      %658 = vrot.lane.b32.xlu0 %v649, 1
      %v659 = vpop.permute.xlu0 %658
      %660 = vrot.lane.b32.xlu0 %v657, 1
      %v661 = vpop.permute.xlu0 %660
      %662 = vrot.lane.b32.xlu0 %v656, 1
      %v663 = vpop.permute.xlu0 %662
      %vm664 = vcmask 7168
      %v665 = vsel %vm664, %v659, %v661
      %v666 = vsel %vm664, %v661, %v663
      %669 = vst [vmem:[#allocation3 + $0x30] sm:$0x3] %v665
      %670 = vst [vmem:[#allocation3 + $0x38] sm:$0x3] %v666
      %v671 = vld [vmem:[%s246 + $0x2] sm:$0xf]
      %v673 = vcombine.low %v671, %v671
      %v675 = vunpack.c.l.s4 1983009808
      %v676 = vunpack.c.0.s8 %v675
      %v677 = vlaneseq
      %v678 = vshrl.u32 %v677, 7
      %v679 = vsub.s32 %v676, %v678
      %v680 = vrot.slane %v673, %v679
      %v681 = vcombine.high %v680, %v680
      %684 = vst [vmem:[#allocation3 + $0x30] sm:$0xc] %v680
      %685 = vst [vmem:[#allocation3 + $0x38] sm:$0xc] %v681
      %v686 = vld [vmem:[%s246 + $0x2] sm:$0x3f]
      %v688 = vcombine.high %v686, %v686
      %v690 = vunpack.c.l.s4 1983009808
      %v691 = vunpack.c.0.s8 %v690
      %v692 = vlaneseq
      %v693 = vshrl.u32 %v692, 7
      %v694 = vsub.s32 %v691, %v693
      %v695 = vrot.slane %v686, %v694
      %v697 = vunpack.c.l.s4 1983009808
      %v698 = vunpack.c.0.s8 %v697
      %v699 = vlaneseq
      %v700 = vshrl.u32 %v699, 7
      %v701 = vsub.s32 %v698, %v700
      %v702 = vrot.slane %v688, %v701
      %v703 = vcombine.low %v695, %v695
      %v704 = vcombine.low %v702, %v702
      %705 = vrot.lane.b32.xlu0 %v703, 127
      %v706 = vpop.permute.xlu0 %705
      %707 = vrot.lane.b32.xlu0 %v695, 127
      %v708 = vpop.permute.xlu0 %707
      %709 = vrot.lane.b32.xlu0 %v704, 127
      %v710 = vpop.permute.xlu0 %709
      %vm711 = vcmask 1039360
      %v712 = vsel %vm711, %v706, %v708
      %v713 = vsel %vm711, %v708, %v710
      %716 = vst [vmem:[#allocation3 + $0x30] sm:$0x30] %v712
      %717 = vst [vmem:[#allocation3 + $0x38] sm:$0x30] %v713
      %v718 = vld [vmem:[%s246 + $0x2] sm:$0x3f]
      %v720 = vcombine.low %v718, %v718
      %v722 = vunpack.c.l.s4 1983009808
      %v723 = vunpack.c.0.s8 %v722
      %v724 = vlaneseq
      %v725 = vshrl.u32 %v724, 7
      %v726 = vsub.s32 %v723, %v725
      %v727 = vrot.slane %v720, %v726
      %v729 = vunpack.c.l.s4 1983009808
      %v730 = vunpack.c.0.s8 %v729
      %v731 = vlaneseq
      %v732 = vshrl.u32 %v731, 7
      %v733 = vsub.s32 %v730, %v732
      %v734 = vrot.slane %v718, %v733
      %v735 = vcombine.low %v727, %v727
      %v736 = vcombine.low %v734, %v734
      %737 = vrot.lane.b32.xlu0 %v735, 119
      %v738 = vpop.permute.xlu0 %737
      %739 = vrot.lane.b32.xlu0 %v727, 119
      %v740 = vpop.permute.xlu0 %739
      %741 = vrot.lane.b32.xlu0 %v736, 119
      %v742 = vpop.permute.xlu0 %741
      %vm743 = vcmask 973824
      %v744 = vsel %vm743, %v738, %v740
      %v745 = vsel %vm743, %v740, %v742
      %748 = vst [vmem:[#allocation3 + $0x30] sm:$0xc0] %v744
      %749 = vst [vmem:[#allocation3 + $0x38] sm:$0xc0] %v745
      %v750 = vld [vmem:[%s246 + $0x2] sm:$0x3f]
      %v752 = vcombine.high %v750, %v750
      %v754 = vunpack.c.l.s4 1983009808
      %v755 = vunpack.c.0.s8 %v754
      %v756 = vlaneseq
      %v757 = vshrl.u32 %v756, 7
      %v758 = vsub.s32 %v755, %v757
      %v759 = vrot.slane %v750, %v758
      %v761 = vunpack.c.l.s4 1983009808
      %v762 = vunpack.c.0.s8 %v761
      %v763 = vlaneseq
      %v764 = vshrl.u32 %v763, 7
      %v765 = vsub.s32 %v762, %v764
      %v766 = vrot.slane %v752, %v765
      %v767 = vcombine.high %v759, %v759
      %768 = vrot.lane.b32.xlu0 %v759, 118
      %v769 = vpop.permute.xlu0 %768
      %770 = vrot.lane.b32.xlu0 %v767, 118
      %v771 = vpop.permute.xlu0 %770
      %772 = vrot.lane.b32.xlu0 %v766, 118
      %v773 = vpop.permute.xlu0 %772
      %vm774 = vcmask 965632
      %v775 = vsel %vm774, %v769, %v771
      %v776 = vsel %vm774, %v771, %v773
      %779 = vst [vmem:[#allocation3 + $0x40] sm:$0x3] %v775
      %780 = vst [vmem:[#allocation3 + $0x48] sm:$0x3] %v776
      %v781 = vld [vmem:[%s246 + $0x2] sm:$0x3f]
      %v783 = vcombine.low %v781, %v781
      %v785 = vunpack.c.l.s4 1983009808
      %v786 = vunpack.c.0.s8 %v785
      %v787 = vlaneseq
      %v788 = vshrl.u32 %v787, 7
      %v789 = vsub.s32 %v786, %v788
      %v790 = vrot.slane %v783, %v789
      %v792 = vunpack.c.l.s4 1983009808
      %v793 = vunpack.c.0.s8 %v792
      %v794 = vlaneseq
      %v795 = vshrl.u32 %v794, 7
      %v796 = vsub.s32 %v793, %v795
      %v797 = vrot.slane %v781, %v796
      %v798 = vcombine.high %v790, %v790
      %799 = vrot.lane.b32.xlu0 %v790, 117
      %v800 = vpop.permute.xlu0 %799
      %801 = vrot.lane.b32.xlu0 %v798, 117
      %v802 = vpop.permute.xlu0 %801
      %803 = vrot.lane.b32.xlu0 %v797, 117
      %v804 = vpop.permute.xlu0 %803
      %vm805 = vcmask 957440
      %v806 = vsel %vm805, %v800, %v802
      %v807 = vsel %vm805, %v802, %v804
      %810 = vst [vmem:[#allocation3 + $0x40] sm:$0xc] %v806
      %811 = vst [vmem:[#allocation3 + $0x48] sm:$0xc] %v807
      %v812 = vld [vmem:[%s246 + $0x2] sm:$0x3f]
      %v814 = vcombine.high %v812, %v812
      %v816 = vunpack.c.l.s4 1983009808
      %v817 = vunpack.c.0.s8 %v816
      %v818 = vlaneseq
      %v819 = vshrl.u32 %v818, 7
      %v820 = vsub.s32 %v817, %v819
      %v821 = vrot.slane %v812, %v820
      %v823 = vunpack.c.l.s4 1983009808
      %v824 = vunpack.c.0.s8 %v823
      %v825 = vlaneseq
      %v826 = vshrl.u32 %v825, 7
      %v827 = vsub.s32 %v824, %v826
      %v828 = vrot.slane %v814, %v827
      %v829 = vcombine.low %v821, %v821
      %v830 = vcombine.low %v828, %v828
      %831 = vrot.lane.b32.xlu0 %v829, 39
      %v832 = vpop.permute.xlu0 %831
      %833 = vrot.lane.b32.xlu0 %v821, 39
      %v834 = vpop.permute.xlu0 %833
      %835 = vrot.lane.b32.xlu0 %v830, 39
      %v836 = vpop.permute.xlu0 %835
      %vm837 = vcmask 318464
      %v838 = vsel %vm837, %v832, %v834
      %v839 = vsel %vm837, %v834, %v836
      %842 = vst [vmem:[#allocation3 + $0x40] sm:$0x30] %v838
      %843 = vst [vmem:[#allocation3 + $0x48] sm:$0x30] %v839
      %v844 = vld [vmem:[%s246 + $0x2] sm:$0x3f]
      %v846 = vcombine.low %v844, %v844
      %v848 = vunpack.c.l.s4 1983009808
      %v849 = vunpack.c.0.s8 %v848
      %v850 = vlaneseq
      %v851 = vshrl.u32 %v850, 7
      %v852 = vsub.s32 %v849, %v851
      %v853 = vrot.slane %v846, %v852
      %v855 = vunpack.c.l.s4 1983009808
      %v856 = vunpack.c.0.s8 %v855
      %v857 = vlaneseq
      %v858 = vshrl.u32 %v857, 7
      %v859 = vsub.s32 %v856, %v858
      %v860 = vrot.slane %v844, %v859
      %v861 = vcombine.low %v853, %v853
      %v862 = vcombine.low %v860, %v860
      %863 = vrot.lane.b32.xlu0 %v861, 38
      %v864 = vpop.permute.xlu0 %863
      %865 = vrot.lane.b32.xlu0 %v853, 38
      %v866 = vpop.permute.xlu0 %865
      %867 = vrot.lane.b32.xlu0 %v862, 38
      %v868 = vpop.permute.xlu0 %867
      %vm869 = vcmask 310272
      %v870 = vsel %vm869, %v864, %v866
      %v871 = vsel %vm869, %v866, %v868
      %874 = vst [vmem:[#allocation3 + $0x40] sm:$0xc0] %v870
      %875 = vst [vmem:[#allocation3 + $0x48] sm:$0xc0] %v871
      %v876 = vld [vmem:[%s246 + $0x2] sm:$0x3f]
      %v878 = vcombine.high %v876, %v876
      %v880 = vunpack.c.l.s4 1983009808
      %v881 = vunpack.c.0.s8 %v880
      %v882 = vlaneseq
      %v883 = vshrl.u32 %v882, 7
      %v884 = vsub.s32 %v881, %v883
      %v885 = vrot.slane %v876, %v884
      %v887 = vunpack.c.l.s4 1983009808
      %v888 = vunpack.c.0.s8 %v887
      %v889 = vlaneseq
      %v890 = vshrl.u32 %v889, 7
      %v891 = vsub.s32 %v888, %v890
      %v892 = vrot.slane %v878, %v891
      %v893 = vcombine.high %v885, %v885
      %894 = vrot.lane.b32.xlu0 %v885, 37
      %v895 = vpop.permute.xlu0 %894
      %896 = vrot.lane.b32.xlu0 %v893, 37
      %v897 = vpop.permute.xlu0 %896
      %898 = vrot.lane.b32.xlu0 %v892, 37
      %v899 = vpop.permute.xlu0 %898
      %vm900 = vcmask 302080
      %v901 = vsel %vm900, %v895, %v897
      %v902 = vsel %vm900, %v897, %v899
      %905 = vst [vmem:[#allocation3 + $0x50] sm:$0x3] %v901
      %906 = vst [vmem:[#allocation3 + $0x58] sm:$0x3] %v902
      %v907 = vld [vmem:[%s246 + $0x2] sm:$0x3f]
      %v909 = vcombine.low %v907, %v907
      %v911 = vunpack.c.l.s4 1983009808
      %v912 = vunpack.c.0.s8 %v911
      %v913 = vlaneseq
      %v914 = vshrl.u32 %v913, 7
      %v915 = vsub.s32 %v912, %v914
      %v916 = vrot.slane %v909, %v915
      %v918 = vunpack.c.l.s4 1983009808
      %v919 = vunpack.c.0.s8 %v918
      %v920 = vlaneseq
      %v921 = vshrl.u32 %v920, 7
      %v922 = vsub.s32 %v919, %v921
      %v923 = vrot.slane %v907, %v922
      %v924 = vcombine.high %v916, %v916
      %925 = vrot.lane.b32.xlu0 %v916, 29
      %v926 = vpop.permute.xlu0 %925
      %927 = vrot.lane.b32.xlu0 %v924, 29
      %v928 = vpop.permute.xlu0 %927
      %929 = vrot.lane.b32.xlu0 %v923, 29
      %v930 = vpop.permute.xlu0 %929
      %vm931 = vcmask 236544
      %v932 = vsel %vm931, %v926, %v928
      %v933 = vsel %vm931, %v928, %v930
      %936 = vst [vmem:[#allocation3 + $0x50] sm:$0xc] %v932
      %937 = vst [vmem:[#allocation3 + $0x58] sm:$0xc] %v933
      %v938 = vld [vmem:[%s246 + $0x2] sm:$0x3f]
      %v940 = vcombine.high %v938, %v938
      %v942 = vunpack.c.l.s4 1983009808
      %v943 = vunpack.c.0.s8 %v942
      %v944 = vlaneseq
      %v945 = vshrl.u32 %v944, 7
      %v946 = vsub.s32 %v943, %v945
      %v947 = vrot.slane %v938, %v946
      %v949 = vunpack.c.l.s4 1983009808
      %v950 = vunpack.c.0.s8 %v949
      %v951 = vlaneseq
      %v952 = vshrl.u32 %v951, 7
      %v953 = vsub.s32 %v950, %v952
      %v954 = vrot.slane %v940, %v953
      %v955 = vcombine.low %v947, %v947
      %v956 = vcombine.low %v954, %v954
      %957 = vrot.lane.b32.xlu0 %v955, 28
      %v958 = vpop.permute.xlu0 %957
      %959 = vrot.lane.b32.xlu0 %v947, 28
      %v960 = vpop.permute.xlu0 %959
      %961 = vrot.lane.b32.xlu0 %v956, 28
      %v962 = vpop.permute.xlu0 %961
      %vm963 = vcmask 228352
      %v964 = vsel %vm963, %v958, %v960
      %v965 = vsel %vm963, %v960, %v962
      %968 = vst [vmem:[#allocation3 + $0x50] sm:$0x30] %v964
      %969 = vst [vmem:[#allocation3 + $0x58] sm:$0x30] %v965
      %v970 = vld [vmem:[%s246 + $0x2] sm:$0x3f]
      %v972 = vcombine.low %v970, %v970
      %v974 = vunpack.c.l.s4 1983009808
      %v975 = vunpack.c.0.s8 %v974
      %v976 = vlaneseq
      %v977 = vshrl.u32 %v976, 7
      %v978 = vsub.s32 %v975, %v977
      %v979 = vrot.slane %v972, %v978
      %v981 = vunpack.c.l.s4 1983009808
      %v982 = vunpack.c.0.s8 %v981
      %v983 = vlaneseq
      %v984 = vshrl.u32 %v983, 7
      %v985 = vsub.s32 %v982, %v984
      %v986 = vrot.slane %v970, %v985
      %v987 = vcombine.low %v979, %v979
      %v988 = vcombine.low %v986, %v986
      %989 = vrot.lane.b32.xlu0 %v987, 27
      %v990 = vpop.permute.xlu0 %989
      %991 = vrot.lane.b32.xlu0 %v979, 27
      %v992 = vpop.permute.xlu0 %991
      %993 = vrot.lane.b32.xlu0 %v988, 27
      %v994 = vpop.permute.xlu0 %993
      %vm995 = vcmask 220160
      %v996 = vsel %vm995, %v990, %v992
      %v997 = vsel %vm995, %v992, %v994
      %1000 = vst [vmem:[#allocation3 + $0x50] sm:$0xc0] %v996
      %1001 = vst [vmem:[#allocation3 + $0x58] sm:$0xc0] %v997
      %v1002 = vld [vmem:[%s246 + $0x2] sm:$0x3f]
      %v1004 = vcombine.high %v1002, %v1002
      %v1006 = vunpack.c.l.s4 1983009808
      %v1007 = vunpack.c.0.s8 %v1006
      %v1008 = vlaneseq
      %v1009 = vshrl.u32 %v1008, 7
      %v1010 = vsub.s32 %v1007, %v1009
      %v1011 = vrot.slane %v1002, %v1010
      %v1013 = vunpack.c.l.s4 1983009808
      %v1014 = vunpack.c.0.s8 %v1013
      %v1015 = vlaneseq
      %v1016 = vshrl.u32 %v1015, 7
      %v1017 = vsub.s32 %v1014, %v1016
      %v1018 = vrot.slane %v1004, %v1017
      %v1019 = vcombine.high %v1011, %v1011
      %1020 = vrot.lane.b32.xlu0 %v1011, 19
      %v1021 = vpop.permute.xlu0 %1020
      %1022 = vrot.lane.b32.xlu0 %v1019, 19
      %v1023 = vpop.permute.xlu0 %1022
      %1024 = vrot.lane.b32.xlu0 %v1018, 19
      %v1025 = vpop.permute.xlu0 %1024
      %vm1026 = vcmask 154624
      %v1027 = vsel %vm1026, %v1021, %v1023
      %v1028 = vsel %vm1026, %v1023, %v1025
      %1031 = vst [vmem:[#allocation3 + $0x60] sm:$0x3] %v1027
      %1032 = vst [vmem:[#allocation3 + $0x68] sm:$0x3] %v1028
      %v1033 = vld [vmem:[%s246 + $0x2] sm:$0x3f]
      %v1035 = vcombine.low %v1033, %v1033
      %v1037 = vunpack.c.l.s4 1983009808
      %v1038 = vunpack.c.0.s8 %v1037
      %v1039 = vlaneseq
      %v1040 = vshrl.u32 %v1039, 7
      %v1041 = vsub.s32 %v1038, %v1040
      %v1042 = vrot.slane %v1035, %v1041
      %v1044 = vunpack.c.l.s4 1983009808
      %v1045 = vunpack.c.0.s8 %v1044
      %v1046 = vlaneseq
      %v1047 = vshrl.u32 %v1046, 7
      %v1048 = vsub.s32 %v1045, %v1047
      %v1049 = vrot.slane %v1033, %v1048
      %v1050 = vcombine.high %v1042, %v1042
      %1051 = vrot.lane.b32.xlu0 %v1042, 18
      %v1052 = vpop.permute.xlu0 %1051
      %1053 = vrot.lane.b32.xlu0 %v1050, 18
      %v1054 = vpop.permute.xlu0 %1053
      %1055 = vrot.lane.b32.xlu0 %v1049, 18
      %v1056 = vpop.permute.xlu0 %1055
      %vm1057 = vcmask 146432
      %v1058 = vsel %vm1057, %v1052, %v1054
      %v1059 = vsel %vm1057, %v1054, %v1056
      %1062 = vst [vmem:[#allocation3 + $0x60] sm:$0xc] %v1058
      %1063 = vst [vmem:[#allocation3 + $0x68] sm:$0xc] %v1059
      %v1064 = vld [vmem:[%s246 + $0x2] sm:$0x3f]
      %v1066 = vcombine.high %v1064, %v1064
      %v1068 = vunpack.c.l.s4 1983009808
      %v1069 = vunpack.c.0.s8 %v1068
      %v1070 = vlaneseq
      %v1071 = vshrl.u32 %v1070, 7
      %v1072 = vsub.s32 %v1069, %v1071
      %v1073 = vrot.slane %v1064, %v1072
      %v1075 = vunpack.c.l.s4 1983009808
      %v1076 = vunpack.c.0.s8 %v1075
      %v1077 = vlaneseq
      %v1078 = vshrl.u32 %v1077, 7
      %v1079 = vsub.s32 %v1076, %v1078
      %v1080 = vrot.slane %v1066, %v1079
      %v1081 = vcombine.low %v1073, %v1073
      %v1082 = vcombine.low %v1080, %v1080
      %1083 = vrot.lane.b32.xlu0 %v1081, 17
      %v1084 = vpop.permute.xlu0 %1083
      %1085 = vrot.lane.b32.xlu0 %v1073, 17
      %v1086 = vpop.permute.xlu0 %1085
      %1087 = vrot.lane.b32.xlu0 %v1082, 17
      %v1088 = vpop.permute.xlu0 %1087
      %vm1089 = vcmask 138240
      %v1090 = vsel %vm1089, %v1084, %v1086
      %v1091 = vsel %vm1089, %v1086, %v1088
      %1094 = vst [vmem:[#allocation3 + $0x60] sm:$0x30] %v1090
      %1095 = vst [vmem:[#allocation3 + $0x68] sm:$0x30] %v1091
      %v1096 = vld [vmem:[%s1] sm:$0xf]
      %v1097 = vld [vmem:[%s1 + $0x4] sm:$0xf]
      %v1098 = vld [vmem:[#allocation3] sm:$0xff]
      %v1099 = vld [vmem:[#allocation3 + $0x8] sm:$0xff]
      %v1100 = vld [vmem:[#allocation3 + $0x10] sm:$0xff]
      %v1101 = vld [vmem:[#allocation3 + $0x18] sm:$0xff]
      %v1102 = vld [vmem:[#allocation3 + $0x20] sm:$0xff]
      %v1103 = vld [vmem:[#allocation3 + $0x28] sm:$0xff]
      %v1104 = vld [vmem:[#allocation3 + $0x30] sm:$0xff]
      %v1105 = vld [vmem:[#allocation3 + $0x38] sm:$0xff]
      %v1106 = vld [vmem:[#allocation3 + $0x40] sm:$0xff]
      %v1107 = vld [vmem:[#allocation3 + $0x48] sm:$0xff]
      %v1108 = vld [vmem:[#allocation3 + $0x50] sm:$0xff]
      %v1109 = vld [vmem:[#allocation3 + $0x58] sm:$0xff]
      %v1110 = vld [vmem:[#allocation3 + $0x60] sm:$0xff]
      %v1111 = vld [vmem:[#allocation3 + $0x68] sm:$0xff]
      %v1112 = vld [vmem:[#allocation3 + $0x70] sm:$0xff]
      %v1113 = vld [vmem:[#allocation3 + $0x78] sm:$0xff]
      %v1116 = vunpack.c.l.b16 %v1096
      %v1117 = vunpack.c.l.b16 %v1097
      %v1118 = vpack.c.b16 %v1117, %v1116
      %1120 = vmatprep.subr.bf16.mxu0 %v1099
      %1121 = vmatpush1.bf16.msra.mxu0 %v1098
      %1122 = vmatprep.subr.bf16.mxu0 %v1101
      %1123 = vmatpush1.bf16.msra.mxu0 %v1100
      %1124 = vmatprep.subr.bf16.mxu0 %v1103
      %1125 = vmatpush1.bf16.msra.mxu0 %v1102
      %1126 = vmatprep.subr.bf16.mxu0 %v1105
      %1127 = vmatpush1.bf16.msra.mxu0 %v1104
      %1128 = vmatprep.subr.bf16.mxu0 %v1107
      %1129 = vmatpush1.bf16.msra.mxu0 %v1106
      %1130 = vmatprep.subr.bf16.mxu0 %v1109
      %1131 = vmatpush1.bf16.msra.mxu0 %v1108
      %1132 = vmatprep.subr.bf16.mxu0 %v1111
      %1133 = vmatpush1.bf16.msra.mxu0 %v1110
      %1134 = vmatprep.subr.bf16.mxu0 %v1113
      %1135 = vmatpush1.bf16.msra.mxu0 %v1112
      %1136 = vmatprep.subr.bf16.mxu0 0
      %1137 = vmatpush1.bf16.msra.mxu0 0
      %1138 = vmatprep.subr.bf16.mxu0 0
      %1139 = vmatpush1.bf16.msra.mxu0 0
      %1140 = vmatprep.subr.bf16.mxu0 0
      %1141 = vmatpush1.bf16.msra.mxu0 0
      %1142 = vmatprep.subr.bf16.mxu0 0
      %1143 = vmatpush1.bf16.msra.mxu0 0
      %1144 = vmatprep.subr.bf16.mxu0 0
      %1145 = vmatpush1.bf16.msra.mxu0 0
      %1146 = vmatprep.subr.bf16.mxu0 0
      %1147 = vmatpush1.bf16.msra.mxu0 0
      %1148 = vmatprep.subr.bf16.mxu0 0
      %1149 = vmatpush1.bf16.msra.mxu0 0
      %1150 = vmatprep.subr.bf16.mxu0 0
      %1151 = vmatpush1.bf16.msra.mxu0 0
      %1152 = vmatprep.mubr.bf16.mxu0 0
      %1153 = vmatmul.mubr.bf16.gmra.mrb[0].mxu0 %v1118
      %v1154 = vpop.f32.mrb[0].mxu0
      %v1155 = vadd.f32 0.0, %v1154
      %v1156 = vpop.f32.mrb[0].mxu0
      %v1157 = vadd.f32 0.0, %v1156
      %v1158 = vpop.f32.mrb[0].mxu0
      %v1159 = vadd.f32 0.0, %v1158
      %v1160 = vpop.f32.mrb[0].mxu0
      %v1161 = vadd.f32 0.0, %v1160
      %1162 = vdwg.mxu0
      %1163 = vst [vmem:[#allocation5] sm:$0xff] %v1155
      %1164 = vst [vmem:[#allocation5 + $0x8] sm:$0xff] %v1157
      %v1165 = vld [vmem:[%s3] sm:$0xff]
      %1167 = vset.pattern.permute.xlu0 0
      %1168 = vperm.xlu0 %1167, %v1165
      %v1169 = vpop.permute.xlu0 %1168
      %v1171 = vadd.f32 %v1159, %v1169
      %v1172 = vadd.f32 %v1161, %v1169
      %v1173 = vmax.f32 %v1171, 0.0
      %v1174 = vmax.f32 %v1172, 0.0
      %v1175 = vld [vmem:[%s5] sm:$0x3]
      %v1177 = vlaneseq
      %v1178 = vshrl.u32 %v1177, 7
      %v1179 = vsub.s32 0, %v1178
      %v1180 = vrot.slane %v1175, %v1179
      %v1181 = vlaneseq
      %v1182 = vshrl.u32 %v1181, 7
      %v1183 = vsub.s32 1, %v1182
      %v1184 = vrot.slane %v1175, %v1183
      %v1187 = vmul.f32 %v1173, %v1180
      %v1188 = vmul.f32 %v1174, %v1184
      %v1189 = vpack.c.bf16 %v1187, %v1187
      %v1190 = vpack.c.bf16 %v1188, %v1188
      %v1193 = vunpack.c.l.b16 %v1189
      %v1194 = vunpack.c.l.b16 %v1190
      %v1195 = vpack.c.b16 %v1194, %v1193
      %1197 = vst [vmem:[#allocation2 + $0x4] sm:$0xff] %v1195
      %v1198 = vld [vmem:[%s246 + $0x4] sm:$0x3f]
      %v1200 = vcombine.high %v1198, %v1198
      %v1202 = vunpack.c.l.s4 1983009808
      %v1203 = vunpack.c.0.s8 %v1202
      %v1204 = vlaneseq
      %v1205 = vshrl.u32 %v1204, 7
      %v1206 = vsub.s32 %v1203, %v1205
      %v1207 = vrot.slane %v1198, %v1206
      %v1209 = vunpack.c.l.s4 1983009808
      %v1210 = vunpack.c.0.s8 %v1209
      %v1211 = vlaneseq
      %v1212 = vshrl.u32 %v1211, 7
      %v1213 = vsub.s32 %v1210, %v1212
      %v1214 = vrot.slane %v1200, %v1213
      %v1215 = vcombine.high %v1207, %v1207
      %1216 = vrot.lane.b32.xlu0 %v1207, 111
      %v1217 = vpop.permute.xlu0 %1216
      %1218 = vrot.lane.b32.xlu0 %v1215, 111
      %v1219 = vpop.permute.xlu0 %1218
      %1220 = vrot.lane.b32.xlu0 %v1214, 111
      %v1221 = vpop.permute.xlu0 %1220
      %v1222 = vsel %vm286, %v1217, %v1219
      %v1223 = vsel %vm286, %v1219, %v1221
      %1226 = vst [vmem:[#allocation3] sm:$0x3] %v1222
      %1227 = vst [vmem:[#allocation3 + $0x8] sm:$0x3] %v1223
      %v1228 = vld [vmem:[%s246 + $0x4] sm:$0x3f]
      %v1230 = vcombine.low %v1228, %v1228
      %v1232 = vunpack.c.l.s4 1983009808
      %v1233 = vunpack.c.0.s8 %v1232
      %v1234 = vlaneseq
      %v1235 = vshrl.u32 %v1234, 7
      %v1236 = vsub.s32 %v1233, %v1235
      %v1237 = vrot.slane %v1230, %v1236
      %v1239 = vunpack.c.l.s4 1983009808
      %v1240 = vunpack.c.0.s8 %v1239
      %v1241 = vlaneseq
      %v1242 = vshrl.u32 %v1241, 7
      %v1243 = vsub.s32 %v1240, %v1242
      %v1244 = vrot.slane %v1228, %v1243
      %v1245 = vcombine.high %v1237, %v1237
      %1246 = vrot.lane.b32.xlu0 %v1237, 110
      %v1247 = vpop.permute.xlu0 %1246
      %1248 = vrot.lane.b32.xlu0 %v1245, 110
      %v1249 = vpop.permute.xlu0 %1248
      %1250 = vrot.lane.b32.xlu0 %v1244, 110
      %v1251 = vpop.permute.xlu0 %1250
      %v1252 = vsel %vm317, %v1247, %v1249
      %v1253 = vsel %vm317, %v1249, %v1251
      %1256 = vst [vmem:[#allocation3] sm:$0xc] %v1252
      %1257 = vst [vmem:[#allocation3 + $0x8] sm:$0xc] %v1253
      %v1258 = vld [vmem:[%s246 + $0x4] sm:$0x3f]
      %v1260 = vcombine.high %v1258, %v1258
      %v1262 = vunpack.c.l.s4 1983009808
      %v1263 = vunpack.c.0.s8 %v1262
      %v1264 = vlaneseq
      %v1265 = vshrl.u32 %v1264, 7
      %v1266 = vsub.s32 %v1263, %v1265
      %v1267 = vrot.slane %v1258, %v1266
      %v1269 = vunpack.c.l.s4 1983009808
      %v1270 = vunpack.c.0.s8 %v1269
      %v1271 = vlaneseq
      %v1272 = vshrl.u32 %v1271, 7
      %v1273 = vsub.s32 %v1270, %v1272
      %v1274 = vrot.slane %v1260, %v1273
      %v1275 = vcombine.low %v1267, %v1267
      %v1276 = vcombine.low %v1274, %v1274
      %1277 = vrot.lane.b32.xlu0 %v1275, 109
      %v1278 = vpop.permute.xlu0 %1277
      %1279 = vrot.lane.b32.xlu0 %v1267, 109
      %v1280 = vpop.permute.xlu0 %1279
      %1281 = vrot.lane.b32.xlu0 %v1276, 109
      %v1282 = vpop.permute.xlu0 %1281
      %v1283 = vsel %vm349, %v1278, %v1280
      %v1284 = vsel %vm349, %v1280, %v1282
      %1287 = vst [vmem:[#allocation3] sm:$0x30] %v1283
      %1288 = vst [vmem:[#allocation3 + $0x8] sm:$0x30] %v1284
      %v1289 = vld [vmem:[%s246 + $0x4] sm:$0x3f]
      %v1291 = vcombine.low %v1289, %v1289
      %v1293 = vunpack.c.l.s4 1983009808
      %v1294 = vunpack.c.0.s8 %v1293
      %v1295 = vlaneseq
      %v1296 = vshrl.u32 %v1295, 7
      %v1297 = vsub.s32 %v1294, %v1296
      %v1298 = vrot.slane %v1291, %v1297
      %v1300 = vunpack.c.l.s4 1983009808
      %v1301 = vunpack.c.0.s8 %v1300
      %v1302 = vlaneseq
      %v1303 = vshrl.u32 %v1302, 7
      %v1304 = vsub.s32 %v1301, %v1303
      %v1305 = vrot.slane %v1289, %v1304
      %v1306 = vcombine.low %v1298, %v1298
      %v1307 = vcombine.low %v1305, %v1305
      %1308 = vrot.lane.b32.xlu0 %v1306, 101
      %v1309 = vpop.permute.xlu0 %1308
      %1310 = vrot.lane.b32.xlu0 %v1298, 101
      %v1311 = vpop.permute.xlu0 %1310
      %1312 = vrot.lane.b32.xlu0 %v1307, 101
      %v1313 = vpop.permute.xlu0 %1312
      %v1314 = vsel %vm381, %v1309, %v1311
      %v1315 = vsel %vm381, %v1311, %v1313
      %1318 = vst [vmem:[#allocation3] sm:$0xc0] %v1314
      %1319 = vst [vmem:[#allocation3 + $0x8] sm:$0xc0] %v1315
      %v1320 = vld [vmem:[%s246 + $0x4] sm:$0x3f]
      %v1322 = vcombine.high %v1320, %v1320
      %v1324 = vunpack.c.l.s4 1983009808
      %v1325 = vunpack.c.0.s8 %v1324
      %v1326 = vlaneseq
      %v1327 = vshrl.u32 %v1326, 7
      %v1328 = vsub.s32 %v1325, %v1327
      %v1329 = vrot.slane %v1320, %v1328
      %v1331 = vunpack.c.l.s4 1983009808
      %v1332 = vunpack.c.0.s8 %v1331
      %v1333 = vlaneseq
      %v1334 = vshrl.u32 %v1333, 7
      %v1335 = vsub.s32 %v1332, %v1334
      %v1336 = vrot.slane %v1322, %v1335
      %v1337 = vcombine.high %v1329, %v1329
      %1338 = vrot.lane.b32.xlu0 %v1329, 100
      %v1339 = vpop.permute.xlu0 %1338
      %1340 = vrot.lane.b32.xlu0 %v1337, 100
      %v1341 = vpop.permute.xlu0 %1340
      %1342 = vrot.lane.b32.xlu0 %v1336, 100
      %v1343 = vpop.permute.xlu0 %1342
      %v1344 = vsel %vm412, %v1339, %v1341
      %v1345 = vsel %vm412, %v1341, %v1343
      %1348 = vst [vmem:[#allocation3 + $0x10] sm:$0x3] %v1344
      %1349 = vst [vmem:[#allocation3 + $0x18] sm:$0x3] %v1345
      %v1350 = vld [vmem:[%s246 + $0x4] sm:$0x3f]
      %v1352 = vcombine.low %v1350, %v1350
      %v1354 = vunpack.c.l.s4 1983009808
      %v1355 = vunpack.c.0.s8 %v1354
      %v1356 = vlaneseq
      %v1357 = vshrl.u32 %v1356, 7
      %v1358 = vsub.s32 %v1355, %v1357
      %v1359 = vrot.slane %v1352, %v1358
      %v1361 = vunpack.c.l.s4 1983009808
      %v1362 = vunpack.c.0.s8 %v1361
      %v1363 = vlaneseq
      %v1364 = vshrl.u32 %v1363, 7
      %v1365 = vsub.s32 %v1362, %v1364
      %v1366 = vrot.slane %v1350, %v1365
      %v1367 = vcombine.high %v1359, %v1359
      %1368 = vrot.lane.b32.xlu0 %v1359, 99
      %v1369 = vpop.permute.xlu0 %1368
      %1370 = vrot.lane.b32.xlu0 %v1367, 99
      %v1371 = vpop.permute.xlu0 %1370
      %1372 = vrot.lane.b32.xlu0 %v1366, 99
      %v1373 = vpop.permute.xlu0 %1372
      %v1374 = vsel %vm443, %v1369, %v1371
      %v1375 = vsel %vm443, %v1371, %v1373
      %1378 = vst [vmem:[#allocation3 + $0x10] sm:$0xc] %v1374
      %1379 = vst [vmem:[#allocation3 + $0x18] sm:$0xc] %v1375
      %v1380 = vld [vmem:[%s246 + $0x4] sm:$0x3f]
      %v1382 = vcombine.high %v1380, %v1380
      %v1384 = vunpack.c.l.s4 1983009808
      %v1385 = vunpack.c.0.s8 %v1384
      %v1386 = vlaneseq
      %v1387 = vshrl.u32 %v1386, 7
      %v1388 = vsub.s32 %v1385, %v1387
      %v1389 = vrot.slane %v1380, %v1388
      %v1391 = vunpack.c.l.s4 1983009808
      %v1392 = vunpack.c.0.s8 %v1391
      %v1393 = vlaneseq
      %v1394 = vshrl.u32 %v1393, 7
      %v1395 = vsub.s32 %v1392, %v1394
      %v1396 = vrot.slane %v1382, %v1395
      %v1397 = vcombine.low %v1389, %v1389
      %v1398 = vcombine.low %v1396, %v1396
      %1399 = vrot.lane.b32.xlu0 %v1397, 91
      %v1400 = vpop.permute.xlu0 %1399
      %1401 = vrot.lane.b32.xlu0 %v1389, 91
      %v1402 = vpop.permute.xlu0 %1401
      %1403 = vrot.lane.b32.xlu0 %v1398, 91
      %v1404 = vpop.permute.xlu0 %1403
      %v1405 = vsel %vm475, %v1400, %v1402
      %v1406 = vsel %vm475, %v1402, %v1404
      %1409 = vst [vmem:[#allocation3 + $0x10] sm:$0x30] %v1405
      %1410 = vst [vmem:[#allocation3 + $0x18] sm:$0x30] %v1406
      %v1411 = vld [vmem:[%s246 + $0x4] sm:$0x3f]
      %v1413 = vcombine.low %v1411, %v1411
      %v1415 = vunpack.c.l.s4 1983009808
      %v1416 = vunpack.c.0.s8 %v1415
      %v1417 = vlaneseq
      %v1418 = vshrl.u32 %v1417, 7
      %v1419 = vsub.s32 %v1416, %v1418
      %v1420 = vrot.slane %v1413, %v1419
      %v1422 = vunpack.c.l.s4 1983009808
      %v1423 = vunpack.c.0.s8 %v1422
      %v1424 = vlaneseq
      %v1425 = vshrl.u32 %v1424, 7
      %v1426 = vsub.s32 %v1423, %v1425
      %v1427 = vrot.slane %v1411, %v1426
      %v1428 = vcombine.low %v1420, %v1420
      %v1429 = vcombine.low %v1427, %v1427
      %1430 = vrot.lane.b32.xlu0 %v1428, 90
      %v1431 = vpop.permute.xlu0 %1430
      %1432 = vrot.lane.b32.xlu0 %v1420, 90
      %v1433 = vpop.permute.xlu0 %1432
      %1434 = vrot.lane.b32.xlu0 %v1429, 90
      %v1435 = vpop.permute.xlu0 %1434
      %v1436 = vsel %vm507, %v1431, %v1433
      %v1437 = vsel %vm507, %v1433, %v1435
      %1440 = vst [vmem:[#allocation3 + $0x10] sm:$0xc0] %v1436
      %1441 = vst [vmem:[#allocation3 + $0x18] sm:$0xc0] %v1437
      %v1442 = vld [vmem:[%s246 + $0x4] sm:$0x3f]
      %v1444 = vcombine.high %v1442, %v1442
      %v1446 = vunpack.c.l.s4 1983009808
      %v1447 = vunpack.c.0.s8 %v1446
      %v1448 = vlaneseq
      %v1449 = vshrl.u32 %v1448, 7
      %v1450 = vsub.s32 %v1447, %v1449
      %v1451 = vrot.slane %v1442, %v1450
      %v1453 = vunpack.c.l.s4 1983009808
      %v1454 = vunpack.c.0.s8 %v1453
      %v1455 = vlaneseq
      %v1456 = vshrl.u32 %v1455, 7
      %v1457 = vsub.s32 %v1454, %v1456
      %v1458 = vrot.slane %v1444, %v1457
      %v1459 = vcombine.high %v1451, %v1451
      %1460 = vrot.lane.b32.xlu0 %v1451, 89
      %v1461 = vpop.permute.xlu0 %1460
      %1462 = vrot.lane.b32.xlu0 %v1459, 89
      %v1463 = vpop.permute.xlu0 %1462
      %1464 = vrot.lane.b32.xlu0 %v1458, 89
      %v1465 = vpop.permute.xlu0 %1464
      %v1466 = vsel %vm538, %v1461, %v1463
      %v1467 = vsel %vm538, %v1463, %v1465
      %1470 = vst [vmem:[#allocation3 + $0x20] sm:$0x3] %v1466
      %1471 = vst [vmem:[#allocation3 + $0x28] sm:$0x3] %v1467
      %v1472 = vld [vmem:[%s246 + $0x4] sm:$0x3f]
      %v1474 = vcombine.low %v1472, %v1472
      %v1476 = vunpack.c.l.s4 1983009808
      %v1477 = vunpack.c.0.s8 %v1476
      %v1478 = vlaneseq
      %v1479 = vshrl.u32 %v1478, 7
      %v1480 = vsub.s32 %v1477, %v1479
      %v1481 = vrot.slane %v1474, %v1480
      %v1483 = vunpack.c.l.s4 1983009808
      %v1484 = vunpack.c.0.s8 %v1483
      %v1485 = vlaneseq
      %v1486 = vshrl.u32 %v1485, 7
      %v1487 = vsub.s32 %v1484, %v1486
      %v1488 = vrot.slane %v1472, %v1487
      %v1489 = vcombine.high %v1481, %v1481
      %1490 = vrot.lane.b32.xlu0 %v1481, 11
      %v1491 = vpop.permute.xlu0 %1490
      %1492 = vrot.lane.b32.xlu0 %v1489, 11
      %v1493 = vpop.permute.xlu0 %1492
      %1494 = vrot.lane.b32.xlu0 %v1488, 11
      %v1495 = vpop.permute.xlu0 %1494
      %v1496 = vsel %vm569, %v1491, %v1493
      %v1497 = vsel %vm569, %v1493, %v1495
      %1500 = vst [vmem:[#allocation3 + $0x20] sm:$0xc] %v1496
      %1501 = vst [vmem:[#allocation3 + $0x28] sm:$0xc] %v1497
      %v1502 = vld [vmem:[%s246 + $0x4] sm:$0x3f]
      %v1504 = vcombine.high %v1502, %v1502
      %v1506 = vunpack.c.l.s4 1983009808
      %v1507 = vunpack.c.0.s8 %v1506
      %v1508 = vlaneseq
      %v1509 = vshrl.u32 %v1508, 7
      %v1510 = vsub.s32 %v1507, %v1509
      %v1511 = vrot.slane %v1502, %v1510
      %v1513 = vunpack.c.l.s4 1983009808
      %v1514 = vunpack.c.0.s8 %v1513
      %v1515 = vlaneseq
      %v1516 = vshrl.u32 %v1515, 7
      %v1517 = vsub.s32 %v1514, %v1516
      %v1518 = vrot.slane %v1504, %v1517
      %v1519 = vcombine.low %v1511, %v1511
      %v1520 = vcombine.low %v1518, %v1518
      %1521 = vrot.lane.b32.xlu0 %v1519, 10
      %v1522 = vpop.permute.xlu0 %1521
      %1523 = vrot.lane.b32.xlu0 %v1511, 10
      %v1524 = vpop.permute.xlu0 %1523
      %1525 = vrot.lane.b32.xlu0 %v1520, 10
      %v1526 = vpop.permute.xlu0 %1525
      %v1527 = vsel %vm601, %v1522, %v1524
      %v1528 = vsel %vm601, %v1524, %v1526
      %1531 = vst [vmem:[#allocation3 + $0x20] sm:$0x30] %v1527
      %1532 = vst [vmem:[#allocation3 + $0x28] sm:$0x30] %v1528
      %v1533 = vld [vmem:[%s246 + $0x4] sm:$0x3f]
      %v1535 = vcombine.low %v1533, %v1533
      %v1537 = vunpack.c.l.s4 1983009808
      %v1538 = vunpack.c.0.s8 %v1537
      %v1539 = vlaneseq
      %v1540 = vshrl.u32 %v1539, 7
      %v1541 = vsub.s32 %v1538, %v1540
      %v1542 = vrot.slane %v1535, %v1541
      %v1544 = vunpack.c.l.s4 1983009808
      %v1545 = vunpack.c.0.s8 %v1544
      %v1546 = vlaneseq
      %v1547 = vshrl.u32 %v1546, 7
      %v1548 = vsub.s32 %v1545, %v1547
      %v1549 = vrot.slane %v1533, %v1548
      %v1550 = vcombine.low %v1542, %v1542
      %v1551 = vcombine.low %v1549, %v1549
      %1552 = vrot.lane.b32.xlu0 %v1550, 9
      %v1553 = vpop.permute.xlu0 %1552
      %1554 = vrot.lane.b32.xlu0 %v1542, 9
      %v1555 = vpop.permute.xlu0 %1554
      %1556 = vrot.lane.b32.xlu0 %v1551, 9
      %v1557 = vpop.permute.xlu0 %1556
      %v1558 = vsel %vm633, %v1553, %v1555
      %v1559 = vsel %vm633, %v1555, %v1557
      %1562 = vst [vmem:[#allocation3 + $0x20] sm:$0xc0] %v1558
      %1563 = vst [vmem:[#allocation3 + $0x28] sm:$0xc0] %v1559
      %v1564 = vld [vmem:[%s246 + $0x4] sm:$0x3f]
      %v1566 = vcombine.high %v1564, %v1564
      %v1568 = vunpack.c.l.s4 1983009808
      %v1569 = vunpack.c.0.s8 %v1568
      %v1570 = vlaneseq
      %v1571 = vshrl.u32 %v1570, 7
      %v1572 = vsub.s32 %v1569, %v1571
      %v1573 = vrot.slane %v1564, %v1572
      %v1575 = vunpack.c.l.s4 1983009808
      %v1576 = vunpack.c.0.s8 %v1575
      %v1577 = vlaneseq
      %v1578 = vshrl.u32 %v1577, 7
      %v1579 = vsub.s32 %v1576, %v1578
      %v1580 = vrot.slane %v1566, %v1579
      %v1581 = vcombine.high %v1573, %v1573
      %1582 = vrot.lane.b32.xlu0 %v1573, 1
      %v1583 = vpop.permute.xlu0 %1582
      %1584 = vrot.lane.b32.xlu0 %v1581, 1
      %v1585 = vpop.permute.xlu0 %1584
      %1586 = vrot.lane.b32.xlu0 %v1580, 1
      %v1587 = vpop.permute.xlu0 %1586
      %v1588 = vsel %vm664, %v1583, %v1585
      %v1589 = vsel %vm664, %v1585, %v1587
      %1592 = vst [vmem:[#allocation3 + $0x30] sm:$0x3] %v1588
      %1593 = vst [vmem:[#allocation3 + $0x38] sm:$0x3] %v1589
      %v1594 = vld [vmem:[%s246 + $0x6] sm:$0xf]
      %v1596 = vcombine.low %v1594, %v1594
      %v1598 = vunpack.c.l.s4 1983009808
      %v1599 = vunpack.c.0.s8 %v1598
      %v1600 = vlaneseq
      %v1601 = vshrl.u32 %v1600, 7
      %v1602 = vsub.s32 %v1599, %v1601
      %v1603 = vrot.slane %v1596, %v1602
      %v1604 = vcombine.high %v1603, %v1603
      %1607 = vst [vmem:[#allocation3 + $0x30] sm:$0xc] %v1603
      %1608 = vst [vmem:[#allocation3 + $0x38] sm:$0xc] %v1604
      %v1609 = vld [vmem:[%s246 + $0x6] sm:$0x3f]
      %v1611 = vcombine.high %v1609, %v1609
      %v1613 = vunpack.c.l.s4 1983009808
      %v1614 = vunpack.c.0.s8 %v1613
      %v1615 = vlaneseq
      %v1616 = vshrl.u32 %v1615, 7
      %v1617 = vsub.s32 %v1614, %v1616
      %v1618 = vrot.slane %v1609, %v1617
      %v1620 = vunpack.c.l.s4 1983009808
      %v1621 = vunpack.c.0.s8 %v1620
      %v1622 = vlaneseq
      %v1623 = vshrl.u32 %v1622, 7
      %v1624 = vsub.s32 %v1621, %v1623
      %v1625 = vrot.slane %v1611, %v1624
      %v1626 = vcombine.low %v1618, %v1618
      %v1627 = vcombine.low %v1625, %v1625
      %1628 = vrot.lane.b32.xlu0 %v1626, 127
      %v1629 = vpop.permute.xlu0 %1628
      %1630 = vrot.lane.b32.xlu0 %v1618, 127
      %v1631 = vpop.permute.xlu0 %1630
      %1632 = vrot.lane.b32.xlu0 %v1627, 127
      %v1633 = vpop.permute.xlu0 %1632
      %v1634 = vsel %vm711, %v1629, %v1631
      %v1635 = vsel %vm711, %v1631, %v1633
      %1638 = vst [vmem:[#allocation3 + $0x30] sm:$0x30] %v1634
      %1639 = vst [vmem:[#allocation3 + $0x38] sm:$0x30] %v1635
      %v1640 = vld [vmem:[%s246 + $0x6] sm:$0x3f]
      %v1642 = vcombine.low %v1640, %v1640
      %v1644 = vunpack.c.l.s4 1983009808
      %v1645 = vunpack.c.0.s8 %v1644
      %v1646 = vlaneseq
      %v1647 = vshrl.u32 %v1646, 7
      %v1648 = vsub.s32 %v1645, %v1647
      %v1649 = vrot.slane %v1642, %v1648
      %v1651 = vunpack.c.l.s4 1983009808
      %v1652 = vunpack.c.0.s8 %v1651
      %v1653 = vlaneseq
      %v1654 = vshrl.u32 %v1653, 7
      %v1655 = vsub.s32 %v1652, %v1654
      %v1656 = vrot.slane %v1640, %v1655
      %v1657 = vcombine.low %v1649, %v1649
      %v1658 = vcombine.low %v1656, %v1656
      %1659 = vrot.lane.b32.xlu0 %v1657, 119
      %v1660 = vpop.permute.xlu0 %1659
      %1661 = vrot.lane.b32.xlu0 %v1649, 119
      %v1662 = vpop.permute.xlu0 %1661
      %1663 = vrot.lane.b32.xlu0 %v1658, 119
      %v1664 = vpop.permute.xlu0 %1663
      %v1665 = vsel %vm743, %v1660, %v1662
      %v1666 = vsel %vm743, %v1662, %v1664
      %1669 = vst [vmem:[#allocation3 + $0x30] sm:$0xc0] %v1665
      %1670 = vst [vmem:[#allocation3 + $0x38] sm:$0xc0] %v1666
      %v1671 = vld [vmem:[%s246 + $0x6] sm:$0x3f]
      %v1673 = vcombine.high %v1671, %v1671
      %v1675 = vunpack.c.l.s4 1983009808
      %v1676 = vunpack.c.0.s8 %v1675
      %v1677 = vlaneseq
      %v1678 = vshrl.u32 %v1677, 7
      %v1679 = vsub.s32 %v1676, %v1678
      %v1680 = vrot.slane %v1671, %v1679
      %v1682 = vunpack.c.l.s4 1983009808
      %v1683 = vunpack.c.0.s8 %v1682
      %v1684 = vlaneseq
      %v1685 = vshrl.u32 %v1684, 7
      %v1686 = vsub.s32 %v1683, %v1685
      %v1687 = vrot.slane %v1673, %v1686
      %v1688 = vcombine.high %v1680, %v1680
      %1689 = vrot.lane.b32.xlu0 %v1680, 118
      %v1690 = vpop.permute.xlu0 %1689
      %1691 = vrot.lane.b32.xlu0 %v1688, 118
      %v1692 = vpop.permute.xlu0 %1691
      %1693 = vrot.lane.b32.xlu0 %v1687, 118
      %v1694 = vpop.permute.xlu0 %1693
      %v1695 = vsel %vm774, %v1690, %v1692
      %v1696 = vsel %vm774, %v1692, %v1694
      %1699 = vst [vmem:[#allocation3 + $0x40] sm:$0x3] %v1695
      %1700 = vst [vmem:[#allocation3 + $0x48] sm:$0x3] %v1696
      %v1701 = vld [vmem:[%s246 + $0x6] sm:$0x3f]
      %v1703 = vcombine.low %v1701, %v1701
      %v1705 = vunpack.c.l.s4 1983009808
      %v1706 = vunpack.c.0.s8 %v1705
      %v1707 = vlaneseq
      %v1708 = vshrl.u32 %v1707, 7
      %v1709 = vsub.s32 %v1706, %v1708
      %v1710 = vrot.slane %v1703, %v1709
      %v1712 = vunpack.c.l.s4 1983009808
      %v1713 = vunpack.c.0.s8 %v1712
      %v1714 = vlaneseq
      %v1715 = vshrl.u32 %v1714, 7
      %v1716 = vsub.s32 %v1713, %v1715
      %v1717 = vrot.slane %v1701, %v1716
      %v1718 = vcombine.high %v1710, %v1710
      %1719 = vrot.lane.b32.xlu0 %v1710, 117
      %v1720 = vpop.permute.xlu0 %1719
      %1721 = vrot.lane.b32.xlu0 %v1718, 117
      %v1722 = vpop.permute.xlu0 %1721
      %1723 = vrot.lane.b32.xlu0 %v1717, 117
      %v1724 = vpop.permute.xlu0 %1723
      %v1725 = vsel %vm805, %v1720, %v1722
      %v1726 = vsel %vm805, %v1722, %v1724
      %1729 = vst [vmem:[#allocation3 + $0x40] sm:$0xc] %v1725
      %1730 = vst [vmem:[#allocation3 + $0x48] sm:$0xc] %v1726
      %v1731 = vld [vmem:[%s246 + $0x6] sm:$0x3f]
      %v1733 = vcombine.high %v1731, %v1731
      %v1735 = vunpack.c.l.s4 1983009808
      %v1736 = vunpack.c.0.s8 %v1735
      %v1737 = vlaneseq
      %v1738 = vshrl.u32 %v1737, 7
      %v1739 = vsub.s32 %v1736, %v1738
      %v1740 = vrot.slane %v1731, %v1739
      %v1742 = vunpack.c.l.s4 1983009808
      %v1743 = vunpack.c.0.s8 %v1742
      %v1744 = vlaneseq
      %v1745 = vshrl.u32 %v1744, 7
      %v1746 = vsub.s32 %v1743, %v1745
      %v1747 = vrot.slane %v1733, %v1746
      %v1748 = vcombine.low %v1740, %v1740
      %v1749 = vcombine.low %v1747, %v1747
      %1750 = vrot.lane.b32.xlu0 %v1748, 39
      %v1751 = vpop.permute.xlu0 %1750
      %1752 = vrot.lane.b32.xlu0 %v1740, 39
      %v1753 = vpop.permute.xlu0 %1752
      %1754 = vrot.lane.b32.xlu0 %v1749, 39
      %v1755 = vpop.permute.xlu0 %1754
      %v1756 = vsel %vm837, %v1751, %v1753
      %v1757 = vsel %vm837, %v1753, %v1755
      %1760 = vst [vmem:[#allocation3 + $0x40] sm:$0x30] %v1756
      %1761 = vst [vmem:[#allocation3 + $0x48] sm:$0x30] %v1757
      %v1762 = vld [vmem:[%s246 + $0x6] sm:$0x3f]
      %v1764 = vcombine.low %v1762, %v1762
      %v1766 = vunpack.c.l.s4 1983009808
      %v1767 = vunpack.c.0.s8 %v1766
      %v1768 = vlaneseq
      %v1769 = vshrl.u32 %v1768, 7
      %v1770 = vsub.s32 %v1767, %v1769
      %v1771 = vrot.slane %v1764, %v1770
      %v1773 = vunpack.c.l.s4 1983009808
      %v1774 = vunpack.c.0.s8 %v1773
      %v1775 = vlaneseq
      %v1776 = vshrl.u32 %v1775, 7
      %v1777 = vsub.s32 %v1774, %v1776
      %v1778 = vrot.slane %v1762, %v1777
      %v1779 = vcombine.low %v1771, %v1771
      %v1780 = vcombine.low %v1778, %v1778
      %1781 = vrot.lane.b32.xlu0 %v1779, 38
      %v1782 = vpop.permute.xlu0 %1781
      %1783 = vrot.lane.b32.xlu0 %v1771, 38
      %v1784 = vpop.permute.xlu0 %1783
      %1785 = vrot.lane.b32.xlu0 %v1780, 38
      %v1786 = vpop.permute.xlu0 %1785
      %v1787 = vsel %vm869, %v1782, %v1784
      %v1788 = vsel %vm869, %v1784, %v1786
      %1791 = vst [vmem:[#allocation3 + $0x40] sm:$0xc0] %v1787
      %1792 = vst [vmem:[#allocation3 + $0x48] sm:$0xc0] %v1788
      %v1793 = vld [vmem:[%s246 + $0x6] sm:$0x3f]
      %v1795 = vcombine.high %v1793, %v1793
      %v1797 = vunpack.c.l.s4 1983009808
      %v1798 = vunpack.c.0.s8 %v1797
      %v1799 = vlaneseq
      %v1800 = vshrl.u32 %v1799, 7
      %v1801 = vsub.s32 %v1798, %v1800
      %v1802 = vrot.slane %v1793, %v1801
      %v1804 = vunpack.c.l.s4 1983009808
      %v1805 = vunpack.c.0.s8 %v1804
      %v1806 = vlaneseq
      %v1807 = vshrl.u32 %v1806, 7
      %v1808 = vsub.s32 %v1805, %v1807
      %v1809 = vrot.slane %v1795, %v1808
      %v1810 = vcombine.high %v1802, %v1802
      %1811 = vrot.lane.b32.xlu0 %v1802, 37
      %v1812 = vpop.permute.xlu0 %1811
      %1813 = vrot.lane.b32.xlu0 %v1810, 37
      %v1814 = vpop.permute.xlu0 %1813
      %1815 = vrot.lane.b32.xlu0 %v1809, 37
      %v1816 = vpop.permute.xlu0 %1815
      %v1817 = vsel %vm900, %v1812, %v1814
      %v1818 = vsel %vm900, %v1814, %v1816
      %1821 = vst [vmem:[#allocation3 + $0x50] sm:$0x3] %v1817
      %1822 = vst [vmem:[#allocation3 + $0x58] sm:$0x3] %v1818
      %v1823 = vld [vmem:[%s246 + $0x6] sm:$0x3f]
      %v1825 = vcombine.low %v1823, %v1823
      %v1827 = vunpack.c.l.s4 1983009808
      %v1828 = vunpack.c.0.s8 %v1827
      %v1829 = vlaneseq
      %v1830 = vshrl.u32 %v1829, 7
      %v1831 = vsub.s32 %v1828, %v1830
      %v1832 = vrot.slane %v1825, %v1831
      %v1834 = vunpack.c.l.s4 1983009808
      %v1835 = vunpack.c.0.s8 %v1834
      %v1836 = vlaneseq
      %v1837 = vshrl.u32 %v1836, 7
      %v1838 = vsub.s32 %v1835, %v1837
      %v1839 = vrot.slane %v1823, %v1838
      %v1840 = vcombine.high %v1832, %v1832
      %1841 = vrot.lane.b32.xlu0 %v1832, 29
      %v1842 = vpop.permute.xlu0 %1841
      %1843 = vrot.lane.b32.xlu0 %v1840, 29
      %v1844 = vpop.permute.xlu0 %1843
      %1845 = vrot.lane.b32.xlu0 %v1839, 29
      %v1846 = vpop.permute.xlu0 %1845
      %v1847 = vsel %vm931, %v1842, %v1844
      %v1848 = vsel %vm931, %v1844, %v1846
      %1851 = vst [vmem:[#allocation3 + $0x50] sm:$0xc] %v1847
      %1852 = vst [vmem:[#allocation3 + $0x58] sm:$0xc] %v1848
      %v1853 = vld [vmem:[%s246 + $0x6] sm:$0x3f]
      %v1855 = vcombine.high %v1853, %v1853
      %v1857 = vunpack.c.l.s4 1983009808
      %v1858 = vunpack.c.0.s8 %v1857
      %v1859 = vlaneseq
      %v1860 = vshrl.u32 %v1859, 7
      %v1861 = vsub.s32 %v1858, %v1860
      %v1862 = vrot.slane %v1853, %v1861
      %v1864 = vunpack.c.l.s4 1983009808
      %v1865 = vunpack.c.0.s8 %v1864
      %v1866 = vlaneseq
      %v1867 = vshrl.u32 %v1866, 7
      %v1868 = vsub.s32 %v1865, %v1867
      %v1869 = vrot.slane %v1855, %v1868
      %v1870 = vcombine.low %v1862, %v1862
      %v1871 = vcombine.low %v1869, %v1869
      %1872 = vrot.lane.b32.xlu0 %v1870, 28
      %v1873 = vpop.permute.xlu0 %1872
      %1874 = vrot.lane.b32.xlu0 %v1862, 28
      %v1875 = vpop.permute.xlu0 %1874
      %1876 = vrot.lane.b32.xlu0 %v1871, 28
      %v1877 = vpop.permute.xlu0 %1876
      %v1878 = vsel %vm963, %v1873, %v1875
      %v1879 = vsel %vm963, %v1875, %v1877
      %1882 = vst [vmem:[#allocation3 + $0x50] sm:$0x30] %v1878
      %1883 = vst [vmem:[#allocation3 + $0x58] sm:$0x30] %v1879
      %v1884 = vld [vmem:[%s246 + $0x6] sm:$0x3f]
      %v1886 = vcombine.low %v1884, %v1884
      %v1888 = vunpack.c.l.s4 1983009808
      %v1889 = vunpack.c.0.s8 %v1888
      %v1890 = vlaneseq
      %v1891 = vshrl.u32 %v1890, 7
      %v1892 = vsub.s32 %v1889, %v1891
      %v1893 = vrot.slane %v1886, %v1892
      %v1895 = vunpack.c.l.s4 1983009808
      %v1896 = vunpack.c.0.s8 %v1895
      %v1897 = vlaneseq
      %v1898 = vshrl.u32 %v1897, 7
      %v1899 = vsub.s32 %v1896, %v1898
      %v1900 = vrot.slane %v1884, %v1899
      %v1901 = vcombine.low %v1893, %v1893
      %v1902 = vcombine.low %v1900, %v1900
      %1903 = vrot.lane.b32.xlu0 %v1901, 27
      %v1904 = vpop.permute.xlu0 %1903
      %1905 = vrot.lane.b32.xlu0 %v1893, 27
      %v1906 = vpop.permute.xlu0 %1905
      %1907 = vrot.lane.b32.xlu0 %v1902, 27
      %v1908 = vpop.permute.xlu0 %1907
      %v1909 = vsel %vm995, %v1904, %v1906
      %v1910 = vsel %vm995, %v1906, %v1908
      %1913 = vst [vmem:[#allocation3 + $0x50] sm:$0xc0] %v1909
      %1914 = vst [vmem:[#allocation3 + $0x58] sm:$0xc0] %v1910
      %v1915 = vld [vmem:[%s246 + $0x6] sm:$0x3f]
      %v1917 = vcombine.high %v1915, %v1915
      %v1919 = vunpack.c.l.s4 1983009808
      %v1920 = vunpack.c.0.s8 %v1919
      %v1921 = vlaneseq
      %v1922 = vshrl.u32 %v1921, 7
      %v1923 = vsub.s32 %v1920, %v1922
      %v1924 = vrot.slane %v1915, %v1923
      %v1926 = vunpack.c.l.s4 1983009808
      %v1927 = vunpack.c.0.s8 %v1926
      %v1928 = vlaneseq
      %v1929 = vshrl.u32 %v1928, 7
      %v1930 = vsub.s32 %v1927, %v1929
      %v1931 = vrot.slane %v1917, %v1930
      %v1932 = vcombine.high %v1924, %v1924
      %1933 = vrot.lane.b32.xlu0 %v1924, 19
      %v1934 = vpop.permute.xlu0 %1933
      %1935 = vrot.lane.b32.xlu0 %v1932, 19
      %v1936 = vpop.permute.xlu0 %1935
      %1937 = vrot.lane.b32.xlu0 %v1931, 19
      %v1938 = vpop.permute.xlu0 %1937
      %v1939 = vsel %vm1026, %v1934, %v1936
      %v1940 = vsel %vm1026, %v1936, %v1938
      %1943 = vst [vmem:[#allocation3 + $0x60] sm:$0x3] %v1939
      %1944 = vst [vmem:[#allocation3 + $0x68] sm:$0x3] %v1940
      %v1945 = vld [vmem:[%s246 + $0x6] sm:$0x3f]
      %v1947 = vcombine.low %v1945, %v1945
      %v1949 = vunpack.c.l.s4 1983009808
      %v1950 = vunpack.c.0.s8 %v1949
      %v1951 = vlaneseq
      %v1952 = vshrl.u32 %v1951, 7
      %v1953 = vsub.s32 %v1950, %v1952
      %v1954 = vrot.slane %v1947, %v1953
      %v1956 = vunpack.c.l.s4 1983009808
      %v1957 = vunpack.c.0.s8 %v1956
      %v1958 = vlaneseq
      %v1959 = vshrl.u32 %v1958, 7
      %v1960 = vsub.s32 %v1957, %v1959
      %v1961 = vrot.slane %v1945, %v1960
      %v1962 = vcombine.high %v1954, %v1954
      %1963 = vrot.lane.b32.xlu0 %v1954, 18
      %v1964 = vpop.permute.xlu0 %1963
      %1965 = vrot.lane.b32.xlu0 %v1962, 18
      %v1966 = vpop.permute.xlu0 %1965
      %1967 = vrot.lane.b32.xlu0 %v1961, 18
      %v1968 = vpop.permute.xlu0 %1967
      %v1969 = vsel %vm1057, %v1964, %v1966
      %v1970 = vsel %vm1057, %v1966, %v1968
      %1973 = vst [vmem:[#allocation3 + $0x60] sm:$0xc] %v1969
      %1974 = vst [vmem:[#allocation3 + $0x68] sm:$0xc] %v1970
      %v1975 = vld [vmem:[%s246 + $0x6] sm:$0x3f]
      %v1977 = vcombine.high %v1975, %v1975
      %v1979 = vunpack.c.l.s4 1983009808
      %v1980 = vunpack.c.0.s8 %v1979
      %v1981 = vlaneseq
      %v1982 = vshrl.u32 %v1981, 7
      %v1983 = vsub.s32 %v1980, %v1982
      %v1984 = vrot.slane %v1975, %v1983
      %v1986 = vunpack.c.l.s4 1983009808
      %v1987 = vunpack.c.0.s8 %v1986
      %v1988 = vlaneseq
      %v1989 = vshrl.u32 %v1988, 7
      %v1990 = vsub.s32 %v1987, %v1989
      %v1991 = vrot.slane %v1977, %v1990
      %v1992 = vcombine.low %v1984, %v1984
      %v1993 = vcombine.low %v1991, %v1991
      %1994 = vrot.lane.b32.xlu0 %v1992, 17
      %v1995 = vpop.permute.xlu0 %1994
      %1996 = vrot.lane.b32.xlu0 %v1984, 17
      %v1997 = vpop.permute.xlu0 %1996
      %1998 = vrot.lane.b32.xlu0 %v1993, 17
      %v1999 = vpop.permute.xlu0 %1998
      %v2000 = vsel %vm1089, %v1995, %v1997
      %v2001 = vsel %vm1089, %v1997, %v1999
      %2004 = vst [vmem:[#allocation3 + $0x60] sm:$0x30] %v2000
      %2005 = vst [vmem:[#allocation3 + $0x68] sm:$0x30] %v2001
      %v2006 = vld [vmem:[%s1] sm:$0xf]
      %v2007 = vld [vmem:[%s1 + $0x4] sm:$0xf]
      %v2008 = vld [vmem:[#allocation3] sm:$0xff]
      %v2009 = vld [vmem:[#allocation3 + $0x8] sm:$0xff]
      %v2010 = vld [vmem:[#allocation3 + $0x10] sm:$0xff]
      %v2011 = vld [vmem:[#allocation3 + $0x18] sm:$0xff]
      %v2012 = vld [vmem:[#allocation3 + $0x20] sm:$0xff]
      %v2013 = vld [vmem:[#allocation3 + $0x28] sm:$0xff]
      %v2014 = vld [vmem:[#allocation3 + $0x30] sm:$0xff]
      %v2015 = vld [vmem:[#allocation3 + $0x38] sm:$0xff]
      %v2016 = vld [vmem:[#allocation3 + $0x40] sm:$0xff]
      %v2017 = vld [vmem:[#allocation3 + $0x48] sm:$0xff]
      %v2018 = vld [vmem:[#allocation3 + $0x50] sm:$0xff]
      %v2019 = vld [vmem:[#allocation3 + $0x58] sm:$0xff]
      %v2020 = vld [vmem:[#allocation3 + $0x60] sm:$0xff]
      %v2021 = vld [vmem:[#allocation3 + $0x68] sm:$0xff]
      %v2022 = vld [vmem:[#allocation3 + $0x70] sm:$0xff]
      %v2023 = vld [vmem:[#allocation3 + $0x78] sm:$0xff]
      %v2026 = vunpack.c.l.b16 %v2006
      %v2027 = vunpack.c.l.b16 %v2007
      %v2028 = vpack.c.b16 %v2027, %v2026
      %2030 = vmatprep.subr.bf16.mxu0 %v2009
      %2031 = vmatpush1.bf16.msra.mxu0 %v2008
      %2032 = vmatprep.subr.bf16.mxu0 %v2011
      %2033 = vmatpush1.bf16.msra.mxu0 %v2010
      %2034 = vmatprep.subr.bf16.mxu0 %v2013
      %2035 = vmatpush1.bf16.msra.mxu0 %v2012
      %2036 = vmatprep.subr.bf16.mxu0 %v2015
      %2037 = vmatpush1.bf16.msra.mxu0 %v2014
      %2038 = vmatprep.subr.bf16.mxu0 %v2017
      %2039 = vmatpush1.bf16.msra.mxu0 %v2016
      %2040 = vmatprep.subr.bf16.mxu0 %v2019
      %2041 = vmatpush1.bf16.msra.mxu0 %v2018
      %2042 = vmatprep.subr.bf16.mxu0 %v2021
      %2043 = vmatpush1.bf16.msra.mxu0 %v2020
      %2044 = vmatprep.subr.bf16.mxu0 %v2023
      %2045 = vmatpush1.bf16.msra.mxu0 %v2022
      %2046 = vmatprep.subr.bf16.mxu0 0
      %2047 = vmatpush1.bf16.msra.mxu0 0
      %2048 = vmatprep.subr.bf16.mxu0 0
      %2049 = vmatpush1.bf16.msra.mxu0 0
      %2050 = vmatprep.subr.bf16.mxu0 0
      %2051 = vmatpush1.bf16.msra.mxu0 0
      %2052 = vmatprep.subr.bf16.mxu0 0
      %2053 = vmatpush1.bf16.msra.mxu0 0
      %2054 = vmatprep.subr.bf16.mxu0 0
      %2055 = vmatpush1.bf16.msra.mxu0 0
      %2056 = vmatprep.subr.bf16.mxu0 0
      %2057 = vmatpush1.bf16.msra.mxu0 0
      %2058 = vmatprep.subr.bf16.mxu0 0
      %2059 = vmatpush1.bf16.msra.mxu0 0
      %2060 = vmatprep.subr.bf16.mxu0 0
      %2061 = vmatpush1.bf16.msra.mxu0 0
      %2062 = vmatprep.mubr.bf16.mxu0 0
      %2063 = vmatmul.mubr.bf16.gmra.mrb[0].mxu0 %v2028
      %v2064 = vpop.f32.mrb[0].mxu0
      %v2065 = vadd.f32 0.0, %v2064
      %v2066 = vpop.f32.mrb[0].mxu0
      %v2067 = vadd.f32 0.0, %v2066
      %v2068 = vpop.f32.mrb[0].mxu0
      %v2069 = vadd.f32 0.0, %v2068
      %v2070 = vpop.f32.mrb[0].mxu0
      %v2071 = vadd.f32 0.0, %v2070
      %2072 = vdwg.mxu0
      %2073 = vst [vmem:[#allocation5 + $0x10] sm:$0xff] %v2065
      %2074 = vst [vmem:[#allocation5 + $0x18] sm:$0xff] %v2067
      %v2075 = vld [vmem:[%s3] sm:$0xff]
      %2077 = vset.pattern.permute.xlu0 0
      %2078 = vperm.xlu0 %2077, %v2075
      %v2079 = vpop.permute.xlu0 %2078
      %v2081 = vadd.f32 %v2069, %v2079
      %v2082 = vadd.f32 %v2071, %v2079
      %v2083 = vmax.f32 %v2081, 0.0
      %v2084 = vmax.f32 %v2082, 0.0
      %v2085 = vld [vmem:[%s5 + $0x2] sm:$0x3]
      %v2087 = vlaneseq
      %v2088 = vshrl.u32 %v2087, 7
      %v2089 = vsub.s32 0, %v2088
      %v2090 = vrot.slane %v2085, %v2089
      %v2091 = vlaneseq
      %v2092 = vshrl.u32 %v2091, 7
      %v2093 = vsub.s32 1, %v2092
      %v2094 = vrot.slane %v2085, %v2093
      %v2097 = vmul.f32 %v2083, %v2090
      %v2098 = vmul.f32 %v2084, %v2094
      %v2099 = vpack.c.bf16 %v2097, %v2097
      %v2100 = vpack.c.bf16 %v2098, %v2098
      %v2103 = vunpack.c.l.b16 %v2099
      %v2104 = vunpack.c.l.b16 %v2100
      %v2105 = vpack.c.b16 %v2104, %v2103
      %2107 = vst [vmem:[#allocation2 + $0xc] sm:$0xff] %v2105
      %v2108 = vld [vmem:[%s246 + $0x8] sm:$0x3f]
      %v2110 = vcombine.high %v2108, %v2108
      %v2112 = vunpack.c.l.s4 1983009808
      %v2113 = vunpack.c.0.s8 %v2112
      %v2114 = vlaneseq
      %v2115 = vshrl.u32 %v2114, 7
      %v2116 = vsub.s32 %v2113, %v2115
      %v2117 = vrot.slane %v2108, %v2116
      %v2119 = vunpack.c.l.s4 1983009808
      %v2120 = vunpack.c.0.s8 %v2119
      %v2121 = vlaneseq
      %v2122 = vshrl.u32 %v2121, 7
      %v2123 = vsub.s32 %v2120, %v2122
      %v2124 = vrot.slane %v2110, %v2123
      %v2125 = vcombine.high %v2117, %v2117
      %2126 = vrot.lane.b32.xlu0 %v2117, 111
      %v2127 = vpop.permute.xlu0 %2126
      %2128 = vrot.lane.b32.xlu0 %v2125, 111
      %v2129 = vpop.permute.xlu0 %2128
      %2130 = vrot.lane.b32.xlu0 %v2124, 111
      %v2131 = vpop.permute.xlu0 %2130
      %v2132 = vsel %vm286, %v2127, %v2129
      %v2133 = vsel %vm286, %v2129, %v2131
      %2136 = vst [vmem:[#allocation3] sm:$0x3] %v2132
      %2137 = vst [vmem:[#allocation3 + $0x8] sm:$0x3] %v2133
      %v2138 = vld [vmem:[%s246 + $0x8] sm:$0x3f]
      %v2140 = vcombine.low %v2138, %v2138
      %v2142 = vunpack.c.l.s4 1983009808
      %v2143 = vunpack.c.0.s8 %v2142
      %v2144 = vlaneseq
      %v2145 = vshrl.u32 %v2144, 7
      %v2146 = vsub.s32 %v2143, %v2145
      %v2147 = vrot.slane %v2140, %v2146
      %v2149 = vunpack.c.l.s4 1983009808
      %v2150 = vunpack.c.0.s8 %v2149
      %v2151 = vlaneseq
      %v2152 = vshrl.u32 %v2151, 7
      %v2153 = vsub.s32 %v2150, %v2152
      %v2154 = vrot.slane %v2138, %v2153
      %v2155 = vcombine.high %v2147, %v2147
      %2156 = vrot.lane.b32.xlu0 %v2147, 110
      %v2157 = vpop.permute.xlu0 %2156
      %2158 = vrot.lane.b32.xlu0 %v2155, 110
      %v2159 = vpop.permute.xlu0 %2158
      %2160 = vrot.lane.b32.xlu0 %v2154, 110
      %v2161 = vpop.permute.xlu0 %2160
      %v2162 = vsel %vm317, %v2157, %v2159
      %v2163 = vsel %vm317, %v2159, %v2161
      %2166 = vst [vmem:[#allocation3] sm:$0xc] %v2162
      %2167 = vst [vmem:[#allocation3 + $0x8] sm:$0xc] %v2163
      %v2168 = vld [vmem:[%s246 + $0x8] sm:$0x3f]
      %v2170 = vcombine.high %v2168, %v2168
      %v2172 = vunpack.c.l.s4 1983009808
      %v2173 = vunpack.c.0.s8 %v2172
      %v2174 = vlaneseq
      %v2175 = vshrl.u32 %v2174, 7
      %v2176 = vsub.s32 %v2173, %v2175
      %v2177 = vrot.slane %v2168, %v2176
      %v2179 = vunpack.c.l.s4 1983009808
      %v2180 = vunpack.c.0.s8 %v2179
      %v2181 = vlaneseq
      %v2182 = vshrl.u32 %v2181, 7
      %v2183 = vsub.s32 %v2180, %v2182
      %v2184 = vrot.slane %v2170, %v2183
      %v2185 = vcombine.low %v2177, %v2177
      %v2186 = vcombine.low %v2184, %v2184
      %2187 = vrot.lane.b32.xlu0 %v2185, 109
      %v2188 = vpop.permute.xlu0 %2187
      %2189 = vrot.lane.b32.xlu0 %v2177, 109
      %v2190 = vpop.permute.xlu0 %2189
      %2191 = vrot.lane.b32.xlu0 %v2186, 109
      %v2192 = vpop.permute.xlu0 %2191
      %v2193 = vsel %vm349, %v2188, %v2190
      %v2194 = vsel %vm349, %v2190, %v2192
      %2197 = vst [vmem:[#allocation3] sm:$0x30] %v2193
      %2198 = vst [vmem:[#allocation3 + $0x8] sm:$0x30] %v2194
      %v2199 = vld [vmem:[%s246 + $0x8] sm:$0x3f]
      %v2201 = vcombine.low %v2199, %v2199
      %v2203 = vunpack.c.l.s4 1983009808
      %v2204 = vunpack.c.0.s8 %v2203
      %v2205 = vlaneseq
      %v2206 = vshrl.u32 %v2205, 7
      %v2207 = vsub.s32 %v2204, %v2206
      %v2208 = vrot.slane %v2201, %v2207
      %v2210 = vunpack.c.l.s4 1983009808
      %v2211 = vunpack.c.0.s8 %v2210
      %v2212 = vlaneseq
      %v2213 = vshrl.u32 %v2212, 7
      %v2214 = vsub.s32 %v2211, %v2213
      %v2215 = vrot.slane %v2199, %v2214
      %v2216 = vcombine.low %v2208, %v2208
      %v2217 = vcombine.low %v2215, %v2215
      %2218 = vrot.lane.b32.xlu0 %v2216, 101
      %v2219 = vpop.permute.xlu0 %2218
      %2220 = vrot.lane.b32.xlu0 %v2208, 101
      %v2221 = vpop.permute.xlu0 %2220
      %2222 = vrot.lane.b32.xlu0 %v2217, 101
      %v2223 = vpop.permute.xlu0 %2222
      %v2224 = vsel %vm381, %v2219, %v2221
      %v2225 = vsel %vm381, %v2221, %v2223
      %2228 = vst [vmem:[#allocation3] sm:$0xc0] %v2224
      %2229 = vst [vmem:[#allocation3 + $0x8] sm:$0xc0] %v2225
      %v2230 = vld [vmem:[%s246 + $0x8] sm:$0x3f]
      %v2232 = vcombine.high %v2230, %v2230
      %v2234 = vunpack.c.l.s4 1983009808
      %v2235 = vunpack.c.0.s8 %v2234
      %v2236 = vlaneseq
      %v2237 = vshrl.u32 %v2236, 7
      %v2238 = vsub.s32 %v2235, %v2237
      %v2239 = vrot.slane %v2230, %v2238
      %v2241 = vunpack.c.l.s4 1983009808
      %v2242 = vunpack.c.0.s8 %v2241
      %v2243 = vlaneseq
      %v2244 = vshrl.u32 %v2243, 7
      %v2245 = vsub.s32 %v2242, %v2244
      %v2246 = vrot.slane %v2232, %v2245
      %v2247 = vcombine.high %v2239, %v2239
      %2248 = vrot.lane.b32.xlu0 %v2239, 100
      %v2249 = vpop.permute.xlu0 %2248
      %2250 = vrot.lane.b32.xlu0 %v2247, 100
      %v2251 = vpop.permute.xlu0 %2250
      %2252 = vrot.lane.b32.xlu0 %v2246, 100
      %v2253 = vpop.permute.xlu0 %2252
      %v2254 = vsel %vm412, %v2249, %v2251
      %v2255 = vsel %vm412, %v2251, %v2253
      %2258 = vst [vmem:[#allocation3 + $0x10] sm:$0x3] %v2254
      %2259 = vst [vmem:[#allocation3 + $0x18] sm:$0x3] %v2255
      %v2260 = vld [vmem:[%s246 + $0x8] sm:$0x3f]
      %v2262 = vcombine.low %v2260, %v2260
      %v2264 = vunpack.c.l.s4 1983009808
      %v2265 = vunpack.c.0.s8 %v2264
      %v2266 = vlaneseq
      %v2267 = vshrl.u32 %v2266, 7
      %v2268 = vsub.s32 %v2265, %v2267
      %v2269 = vrot.slane %v2262, %v2268
      %v2271 = vunpack.c.l.s4 1983009808
      %v2272 = vunpack.c.0.s8 %v2271
      %v2273 = vlaneseq
      %v2274 = vshrl.u32 %v2273, 7
      %v2275 = vsub.s32 %v2272, %v2274
      %v2276 = vrot.slane %v2260, %v2275
      %v2277 = vcombine.high %v2269, %v2269
      %2278 = vrot.lane.b32.xlu0 %v2269, 99
      %v2279 = vpop.permute.xlu0 %2278
      %2280 = vrot.lane.b32.xlu0 %v2277, 99
      %v2281 = vpop.permute.xlu0 %2280
      %2282 = vrot.lane.b32.xlu0 %v2276, 99
      %v2283 = vpop.permute.xlu0 %2282
      %v2284 = vsel %vm443, %v2279, %v2281
      %v2285 = vsel %vm443, %v2281, %v2283
      %2288 = vst [vmem:[#allocation3 + $0x10] sm:$0xc] %v2284
      %2289 = vst [vmem:[#allocation3 + $0x18] sm:$0xc] %v2285
      %v2290 = vld [vmem:[%s246 + $0x8] sm:$0x3f]
      %v2292 = vcombine.high %v2290, %v2290
      %v2294 = vunpack.c.l.s4 1983009808
      %v2295 = vunpack.c.0.s8 %v2294
      %v2296 = vlaneseq
      %v2297 = vshrl.u32 %v2296, 7
      %v2298 = vsub.s32 %v2295, %v2297
      %v2299 = vrot.slane %v2290, %v2298
      %v2301 = vunpack.c.l.s4 1983009808
      %v2302 = vunpack.c.0.s8 %v2301
      %v2303 = vlaneseq
      %v2304 = vshrl.u32 %v2303, 7
      %v2305 = vsub.s32 %v2302, %v2304
      %v2306 = vrot.slane %v2292, %v2305
      %v2307 = vcombine.low %v2299, %v2299
      %v2308 = vcombine.low %v2306, %v2306
      %2309 = vrot.lane.b32.xlu0 %v2307, 91
      %v2310 = vpop.permute.xlu0 %2309
      %2311 = vrot.lane.b32.xlu0 %v2299, 91
      %v2312 = vpop.permute.xlu0 %2311
      %2313 = vrot.lane.b32.xlu0 %v2308, 91
      %v2314 = vpop.permute.xlu0 %2313
      %v2315 = vsel %vm475, %v2310, %v2312
      %v2316 = vsel %vm475, %v2312, %v2314
      %2319 = vst [vmem:[#allocation3 + $0x10] sm:$0x30] %v2315
      %2320 = vst [vmem:[#allocation3 + $0x18] sm:$0x30] %v2316
      %v2321 = vld [vmem:[%s246 + $0x8] sm:$0x3f]
      %v2323 = vcombine.low %v2321, %v2321
      %v2325 = vunpack.c.l.s4 1983009808
      %v2326 = vunpack.c.0.s8 %v2325
      %v2327 = vlaneseq
      %v2328 = vshrl.u32 %v2327, 7
      %v2329 = vsub.s32 %v2326, %v2328
      %v2330 = vrot.slane %v2323, %v2329
      %v2332 = vunpack.c.l.s4 1983009808
      %v2333 = vunpack.c.0.s8 %v2332
      %v2334 = vlaneseq
      %v2335 = vshrl.u32 %v2334, 7
      %v2336 = vsub.s32 %v2333, %v2335
      %v2337 = vrot.slane %v2321, %v2336
      %v2338 = vcombine.low %v2330, %v2330
      %v2339 = vcombine.low %v2337, %v2337
      %2340 = vrot.lane.b32.xlu0 %v2338, 90
      %v2341 = vpop.permute.xlu0 %2340
      %2342 = vrot.lane.b32.xlu0 %v2330, 90
      %v2343 = vpop.permute.xlu0 %2342
      %2344 = vrot.lane.b32.xlu0 %v2339, 90
      %v2345 = vpop.permute.xlu0 %2344
      %v2346 = vsel %vm507, %v2341, %v2343
      %v2347 = vsel %vm507, %v2343, %v2345
      %2350 = vst [vmem:[#allocation3 + $0x10] sm:$0xc0] %v2346
      %2351 = vst [vmem:[#allocation3 + $0x18] sm:$0xc0] %v2347
      %v2352 = vld [vmem:[%s246 + $0x8] sm:$0x3f]
      %v2354 = vcombine.high %v2352, %v2352
      %v2356 = vunpack.c.l.s4 1983009808
      %v2357 = vunpack.c.0.s8 %v2356
      %v2358 = vlaneseq
      %v2359 = vshrl.u32 %v2358, 7
      %v2360 = vsub.s32 %v2357, %v2359
      %v2361 = vrot.slane %v2352, %v2360
      %v2363 = vunpack.c.l.s4 1983009808
      %v2364 = vunpack.c.0.s8 %v2363
      %v2365 = vlaneseq
      %v2366 = vshrl.u32 %v2365, 7
      %v2367 = vsub.s32 %v2364, %v2366
      %v2368 = vrot.slane %v2354, %v2367
      %v2369 = vcombine.high %v2361, %v2361
      %2370 = vrot.lane.b32.xlu0 %v2361, 89
      %v2371 = vpop.permute.xlu0 %2370
      %2372 = vrot.lane.b32.xlu0 %v2369, 89
      %v2373 = vpop.permute.xlu0 %2372
      %2374 = vrot.lane.b32.xlu0 %v2368, 89
      %v2375 = vpop.permute.xlu0 %2374
      %v2376 = vsel %vm538, %v2371, %v2373
      %v2377 = vsel %vm538, %v2373, %v2375
      %2380 = vst [vmem:[#allocation3 + $0x20] sm:$0x3] %v2376
      %2381 = vst [vmem:[#allocation3 + $0x28] sm:$0x3] %v2377
      %v2382 = vld [vmem:[%s246 + $0x8] sm:$0x3f]
      %v2384 = vcombine.low %v2382, %v2382
      %v2386 = vunpack.c.l.s4 1983009808
      %v2387 = vunpack.c.0.s8 %v2386
      %v2388 = vlaneseq
      %v2389 = vshrl.u32 %v2388, 7
      %v2390 = vsub.s32 %v2387, %v2389
      %v2391 = vrot.slane %v2384, %v2390
      %v2393 = vunpack.c.l.s4 1983009808
      %v2394 = vunpack.c.0.s8 %v2393
      %v2395 = vlaneseq
      %v2396 = vshrl.u32 %v2395, 7
      %v2397 = vsub.s32 %v2394, %v2396
      %v2398 = vrot.slane %v2382, %v2397
      %v2399 = vcombine.high %v2391, %v2391
      %2400 = vrot.lane.b32.xlu0 %v2391, 11
      %v2401 = vpop.permute.xlu0 %2400
      %2402 = vrot.lane.b32.xlu0 %v2399, 11
      %v2403 = vpop.permute.xlu0 %2402
      %2404 = vrot.lane.b32.xlu0 %v2398, 11
      %v2405 = vpop.permute.xlu0 %2404
      %v2406 = vsel %vm569, %v2401, %v2403
      %v2407 = vsel %vm569, %v2403, %v2405
      %2410 = vst [vmem:[#allocation3 + $0x20] sm:$0xc] %v2406
      %2411 = vst [vmem:[#allocation3 + $0x28] sm:$0xc] %v2407
      %v2412 = vld [vmem:[%s246 + $0x8] sm:$0x3f]
      %v2414 = vcombine.high %v2412, %v2412
      %v2416 = vunpack.c.l.s4 1983009808
      %v2417 = vunpack.c.0.s8 %v2416
      %v2418 = vlaneseq
      %v2419 = vshrl.u32 %v2418, 7
      %v2420 = vsub.s32 %v2417, %v2419
      %v2421 = vrot.slane %v2412, %v2420
      %v2423 = vunpack.c.l.s4 1983009808
      %v2424 = vunpack.c.0.s8 %v2423
      %v2425 = vlaneseq
      %v2426 = vshrl.u32 %v2425, 7
      %v2427 = vsub.s32 %v2424, %v2426
      %v2428 = vrot.slane %v2414, %v2427
      %v2429 = vcombine.low %v2421, %v2421
      %v2430 = vcombine.low %v2428, %v2428
      %2431 = vrot.lane.b32.xlu0 %v2429, 10
      %v2432 = vpop.permute.xlu0 %2431
      %2433 = vrot.lane.b32.xlu0 %v2421, 10
      %v2434 = vpop.permute.xlu0 %2433
      %2435 = vrot.lane.b32.xlu0 %v2430, 10
      %v2436 = vpop.permute.xlu0 %2435
      %v2437 = vsel %vm601, %v2432, %v2434
      %v2438 = vsel %vm601, %v2434, %v2436
      %2441 = vst [vmem:[#allocation3 + $0x20] sm:$0x30] %v2437
      %2442 = vst [vmem:[#allocation3 + $0x28] sm:$0x30] %v2438
      %v2443 = vld [vmem:[%s246 + $0x8] sm:$0x3f]
      %v2445 = vcombine.low %v2443, %v2443
      %v2447 = vunpack.c.l.s4 1983009808
      %v2448 = vunpack.c.0.s8 %v2447
      %v2449 = vlaneseq
      %v2450 = vshrl.u32 %v2449, 7
      %v2451 = vsub.s32 %v2448, %v2450
      %v2452 = vrot.slane %v2445, %v2451
      %v2454 = vunpack.c.l.s4 1983009808
      %v2455 = vunpack.c.0.s8 %v2454
      %v2456 = vlaneseq
      %v2457 = vshrl.u32 %v2456, 7
      %v2458 = vsub.s32 %v2455, %v2457
      %v2459 = vrot.slane %v2443, %v2458
      %v2460 = vcombine.low %v2452, %v2452
      %v2461 = vcombine.low %v2459, %v2459
      %2462 = vrot.lane.b32.xlu0 %v2460, 9
      %v2463 = vpop.permute.xlu0 %2462
      %2464 = vrot.lane.b32.xlu0 %v2452, 9
      %v2465 = vpop.permute.xlu0 %2464
      %2466 = vrot.lane.b32.xlu0 %v2461, 9
      %v2467 = vpop.permute.xlu0 %2466
      %v2468 = vsel %vm633, %v2463, %v2465
      %v2469 = vsel %vm633, %v2465, %v2467
      %2472 = vst [vmem:[#allocation3 + $0x20] sm:$0xc0] %v2468
      %2473 = vst [vmem:[#allocation3 + $0x28] sm:$0xc0] %v2469
      %v2474 = vld [vmem:[%s246 + $0x8] sm:$0x3f]
      %v2476 = vcombine.high %v2474, %v2474
      %v2478 = vunpack.c.l.s4 1983009808
      %v2479 = vunpack.c.0.s8 %v2478
      %v2480 = vlaneseq
      %v2481 = vshrl.u32 %v2480, 7
      %v2482 = vsub.s32 %v2479, %v2481
      %v2483 = vrot.slane %v2474, %v2482
      %v2485 = vunpack.c.l.s4 1983009808
      %v2486 = vunpack.c.0.s8 %v2485
      %v2487 = vlaneseq
      %v2488 = vshrl.u32 %v2487, 7
      %v2489 = vsub.s32 %v2486, %v2488
      %v2490 = vrot.slane %v2476, %v2489
      %v2491 = vcombine.high %v2483, %v2483
      %2492 = vrot.lane.b32.xlu0 %v2483, 1
      %v2493 = vpop.permute.xlu0 %2492
      %2494 = vrot.lane.b32.xlu0 %v2491, 1
      %v2495 = vpop.permute.xlu0 %2494
      %2496 = vrot.lane.b32.xlu0 %v2490, 1
      %v2497 = vpop.permute.xlu0 %2496
      %v2498 = vsel %vm664, %v2493, %v2495
      %v2499 = vsel %vm664, %v2495, %v2497
      %2502 = vst [vmem:[#allocation3 + $0x30] sm:$0x3] %v2498
      %2503 = vst [vmem:[#allocation3 + $0x38] sm:$0x3] %v2499
      %v2504 = vld [vmem:[%s246 + $0xa] sm:$0xf]
      %v2506 = vcombine.low %v2504, %v2504
      %v2508 = vunpack.c.l.s4 1983009808
      %v2509 = vunpack.c.0.s8 %v2508
      %v2510 = vlaneseq
      %v2511 = vshrl.u32 %v2510, 7
      %v2512 = vsub.s32 %v2509, %v2511
      %v2513 = vrot.slane %v2506, %v2512
      %v2514 = vcombine.high %v2513, %v2513
      %2517 = vst [vmem:[#allocation3 + $0x30] sm:$0xc] %v2513
      %2518 = vst [vmem:[#allocation3 + $0x38] sm:$0xc] %v2514
      %v2519 = vld [vmem:[%s246 + $0xa] sm:$0x3f]
      %v2521 = vcombine.high %v2519, %v2519
      %v2523 = vunpack.c.l.s4 1983009808
      %v2524 = vunpack.c.0.s8 %v2523
      %v2525 = vlaneseq
      %v2526 = vshrl.u32 %v2525, 7
      %v2527 = vsub.s32 %v2524, %v2526
      %v2528 = vrot.slane %v2519, %v2527
      %v2530 = vunpack.c.l.s4 1983009808
      %v2531 = vunpack.c.0.s8 %v2530
      %v2532 = vlaneseq
      %v2533 = vshrl.u32 %v2532, 7
      %v2534 = vsub.s32 %v2531, %v2533
      %v2535 = vrot.slane %v2521, %v2534
      %v2536 = vcombine.low %v2528, %v2528
      %v2537 = vcombine.low %v2535, %v2535
      %2538 = vrot.lane.b32.xlu0 %v2536, 127
      %v2539 = vpop.permute.xlu0 %2538
      %2540 = vrot.lane.b32.xlu0 %v2528, 127
      %v2541 = vpop.permute.xlu0 %2540
      %2542 = vrot.lane.b32.xlu0 %v2537, 127
      %v2543 = vpop.permute.xlu0 %2542
      %v2544 = vsel %vm711, %v2539, %v2541
      %v2545 = vsel %vm711, %v2541, %v2543
      %2548 = vst [vmem:[#allocation3 + $0x30] sm:$0x30] %v2544
      %2549 = vst [vmem:[#allocation3 + $0x38] sm:$0x30] %v2545
      %v2550 = vld [vmem:[%s246 + $0xa] sm:$0x3f]
      %v2552 = vcombine.low %v2550, %v2550
      %v2554 = vunpack.c.l.s4 1983009808
      %v2555 = vunpack.c.0.s8 %v2554
      %v2556 = vlaneseq
      %v2557 = vshrl.u32 %v2556, 7
      %v2558 = vsub.s32 %v2555, %v2557
      %v2559 = vrot.slane %v2552, %v2558
      %v2561 = vunpack.c.l.s4 1983009808
      %v2562 = vunpack.c.0.s8 %v2561
      %v2563 = vlaneseq
      %v2564 = vshrl.u32 %v2563, 7
      %v2565 = vsub.s32 %v2562, %v2564
      %v2566 = vrot.slane %v2550, %v2565
      %v2567 = vcombine.low %v2559, %v2559
      %v2568 = vcombine.low %v2566, %v2566
      %2569 = vrot.lane.b32.xlu0 %v2567, 119
      %v2570 = vpop.permute.xlu0 %2569
      %2571 = vrot.lane.b32.xlu0 %v2559, 119
      %v2572 = vpop.permute.xlu0 %2571
      %2573 = vrot.lane.b32.xlu0 %v2568, 119
      %v2574 = vpop.permute.xlu0 %2573
      %v2575 = vsel %vm743, %v2570, %v2572
      %v2576 = vsel %vm743, %v2572, %v2574
      %2579 = vst [vmem:[#allocation3 + $0x30] sm:$0xc0] %v2575
      %2580 = vst [vmem:[#allocation3 + $0x38] sm:$0xc0] %v2576
      %v2581 = vld [vmem:[%s246 + $0xa] sm:$0x3f]
      %v2583 = vcombine.high %v2581, %v2581
      %v2585 = vunpack.c.l.s4 1983009808
      %v2586 = vunpack.c.0.s8 %v2585
      %v2587 = vlaneseq
      %v2588 = vshrl.u32 %v2587, 7
      %v2589 = vsub.s32 %v2586, %v2588
      %v2590 = vrot.slane %v2581, %v2589
      %v2592 = vunpack.c.l.s4 1983009808
      %v2593 = vunpack.c.0.s8 %v2592
      %v2594 = vlaneseq
      %v2595 = vshrl.u32 %v2594, 7
      %v2596 = vsub.s32 %v2593, %v2595
      %v2597 = vrot.slane %v2583, %v2596
      %v2598 = vcombine.high %v2590, %v2590
      %2599 = vrot.lane.b32.xlu0 %v2590, 118
      %v2600 = vpop.permute.xlu0 %2599
      %2601 = vrot.lane.b32.xlu0 %v2598, 118
      %v2602 = vpop.permute.xlu0 %2601
      %2603 = vrot.lane.b32.xlu0 %v2597, 118
      %v2604 = vpop.permute.xlu0 %2603
      %v2605 = vsel %vm774, %v2600, %v2602
      %v2606 = vsel %vm774, %v2602, %v2604
      %2609 = vst [vmem:[#allocation3 + $0x40] sm:$0x3] %v2605
      %2610 = vst [vmem:[#allocation3 + $0x48] sm:$0x3] %v2606
      %v2611 = vld [vmem:[%s246 + $0xa] sm:$0x3f]
      %v2613 = vcombine.low %v2611, %v2611
      %v2615 = vunpack.c.l.s4 1983009808
      %v2616 = vunpack.c.0.s8 %v2615
      %v2617 = vlaneseq
      %v2618 = vshrl.u32 %v2617, 7
      %v2619 = vsub.s32 %v2616, %v2618
      %v2620 = vrot.slane %v2613, %v2619
      %v2622 = vunpack.c.l.s4 1983009808
      %v2623 = vunpack.c.0.s8 %v2622
      %v2624 = vlaneseq
      %v2625 = vshrl.u32 %v2624, 7
      %v2626 = vsub.s32 %v2623, %v2625
      %v2627 = vrot.slane %v2611, %v2626
      %v2628 = vcombine.high %v2620, %v2620
      %2629 = vrot.lane.b32.xlu0 %v2620, 117
      %v2630 = vpop.permute.xlu0 %2629
      %2631 = vrot.lane.b32.xlu0 %v2628, 117
      %v2632 = vpop.permute.xlu0 %2631
      %2633 = vrot.lane.b32.xlu0 %v2627, 117
      %v2634 = vpop.permute.xlu0 %2633
      %v2635 = vsel %vm805, %v2630, %v2632
      %v2636 = vsel %vm805, %v2632, %v2634
      %2639 = vst [vmem:[#allocation3 + $0x40] sm:$0xc] %v2635
      %2640 = vst [vmem:[#allocation3 + $0x48] sm:$0xc] %v2636
      %v2641 = vld [vmem:[%s246 + $0xa] sm:$0x3f]
      %v2643 = vcombine.high %v2641, %v2641
      %v2645 = vunpack.c.l.s4 1983009808
      %v2646 = vunpack.c.0.s8 %v2645
      %v2647 = vlaneseq
      %v2648 = vshrl.u32 %v2647, 7
      %v2649 = vsub.s32 %v2646, %v2648
      %v2650 = vrot.slane %v2641, %v2649
      %v2652 = vunpack.c.l.s4 1983009808
      %v2653 = vunpack.c.0.s8 %v2652
      %v2654 = vlaneseq
      %v2655 = vshrl.u32 %v2654, 7
      %v2656 = vsub.s32 %v2653, %v2655
      %v2657 = vrot.slane %v2643, %v2656
      %v2658 = vcombine.low %v2650, %v2650
      %v2659 = vcombine.low %v2657, %v2657
      %2660 = vrot.lane.b32.xlu0 %v2658, 39
      %v2661 = vpop.permute.xlu0 %2660
      %2662 = vrot.lane.b32.xlu0 %v2650, 39
      %v2663 = vpop.permute.xlu0 %2662
      %2664 = vrot.lane.b32.xlu0 %v2659, 39
      %v2665 = vpop.permute.xlu0 %2664
      %v2666 = vsel %vm837, %v2661, %v2663
      %v2667 = vsel %vm837, %v2663, %v2665
      %2670 = vst [vmem:[#allocation3 + $0x40] sm:$0x30] %v2666
      %2671 = vst [vmem:[#allocation3 + $0x48] sm:$0x30] %v2667
      %v2672 = vld [vmem:[%s246 + $0xa] sm:$0x3f]
      %v2674 = vcombine.low %v2672, %v2672
      %v2676 = vunpack.c.l.s4 1983009808
      %v2677 = vunpack.c.0.s8 %v2676
      %v2678 = vlaneseq
      %v2679 = vshrl.u32 %v2678, 7
      %v2680 = vsub.s32 %v2677, %v2679
      %v2681 = vrot.slane %v2674, %v2680
      %v2683 = vunpack.c.l.s4 1983009808
      %v2684 = vunpack.c.0.s8 %v2683
      %v2685 = vlaneseq
      %v2686 = vshrl.u32 %v2685, 7
      %v2687 = vsub.s32 %v2684, %v2686
      %v2688 = vrot.slane %v2672, %v2687
      %v2689 = vcombine.low %v2681, %v2681
      %v2690 = vcombine.low %v2688, %v2688
      %2691 = vrot.lane.b32.xlu0 %v2689, 38
      %v2692 = vpop.permute.xlu0 %2691
      %2693 = vrot.lane.b32.xlu0 %v2681, 38
      %v2694 = vpop.permute.xlu0 %2693
      %2695 = vrot.lane.b32.xlu0 %v2690, 38
      %v2696 = vpop.permute.xlu0 %2695
      %v2697 = vsel %vm869, %v2692, %v2694
      %v2698 = vsel %vm869, %v2694, %v2696
      %2701 = vst [vmem:[#allocation3 + $0x40] sm:$0xc0] %v2697
      %2702 = vst [vmem:[#allocation3 + $0x48] sm:$0xc0] %v2698
      %v2703 = vld [vmem:[%s246 + $0xa] sm:$0x3f]
      %v2705 = vcombine.high %v2703, %v2703
      %v2707 = vunpack.c.l.s4 1983009808
      %v2708 = vunpack.c.0.s8 %v2707
      %v2709 = vlaneseq
      %v2710 = vshrl.u32 %v2709, 7
      %v2711 = vsub.s32 %v2708, %v2710
      %v2712 = vrot.slane %v2703, %v2711
      %v2714 = vunpack.c.l.s4 1983009808
      %v2715 = vunpack.c.0.s8 %v2714
      %v2716 = vlaneseq
      %v2717 = vshrl.u32 %v2716, 7
      %v2718 = vsub.s32 %v2715, %v2717
      %v2719 = vrot.slane %v2705, %v2718
      %v2720 = vcombine.high %v2712, %v2712
      %2721 = vrot.lane.b32.xlu0 %v2712, 37
      %v2722 = vpop.permute.xlu0 %2721
      %2723 = vrot.lane.b32.xlu0 %v2720, 37
      %v2724 = vpop.permute.xlu0 %2723
      %2725 = vrot.lane.b32.xlu0 %v2719, 37
      %v2726 = vpop.permute.xlu0 %2725
      %v2727 = vsel %vm900, %v2722, %v2724
      %v2728 = vsel %vm900, %v2724, %v2726
      %2731 = vst [vmem:[#allocation3 + $0x50] sm:$0x3] %v2727
      %2732 = vst [vmem:[#allocation3 + $0x58] sm:$0x3] %v2728
      %v2733 = vld [vmem:[%s246 + $0xa] sm:$0x3f]
      %v2735 = vcombine.low %v2733, %v2733
      %v2737 = vunpack.c.l.s4 1983009808
      %v2738 = vunpack.c.0.s8 %v2737
      %v2739 = vlaneseq
      %v2740 = vshrl.u32 %v2739, 7
      %v2741 = vsub.s32 %v2738, %v2740
      %v2742 = vrot.slane %v2735, %v2741
      %v2744 = vunpack.c.l.s4 1983009808
      %v2745 = vunpack.c.0.s8 %v2744
      %v2746 = vlaneseq
      %v2747 = vshrl.u32 %v2746, 7
      %v2748 = vsub.s32 %v2745, %v2747
      %v2749 = vrot.slane %v2733, %v2748
      %v2750 = vcombine.high %v2742, %v2742
      %2751 = vrot.lane.b32.xlu0 %v2742, 29
      %v2752 = vpop.permute.xlu0 %2751
      %2753 = vrot.lane.b32.xlu0 %v2750, 29
      %v2754 = vpop.permute.xlu0 %2753
      %2755 = vrot.lane.b32.xlu0 %v2749, 29
      %v2756 = vpop.permute.xlu0 %2755
      %v2757 = vsel %vm931, %v2752, %v2754
      %v2758 = vsel %vm931, %v2754, %v2756
      %2761 = vst [vmem:[#allocation3 + $0x50] sm:$0xc] %v2757
      %2762 = vst [vmem:[#allocation3 + $0x58] sm:$0xc] %v2758
      %v2763 = vld [vmem:[%s246 + $0xa] sm:$0x3f]
      %v2765 = vcombine.high %v2763, %v2763
      %v2767 = vunpack.c.l.s4 1983009808
      %v2768 = vunpack.c.0.s8 %v2767
      %v2769 = vlaneseq
      %v2770 = vshrl.u32 %v2769, 7
      %v2771 = vsub.s32 %v2768, %v2770
      %v2772 = vrot.slane %v2763, %v2771
      %v2774 = vunpack.c.l.s4 1983009808
      %v2775 = vunpack.c.0.s8 %v2774
      %v2776 = vlaneseq
      %v2777 = vshrl.u32 %v2776, 7
      %v2778 = vsub.s32 %v2775, %v2777
      %v2779 = vrot.slane %v2765, %v2778
      %v2780 = vcombine.low %v2772, %v2772
      %v2781 = vcombine.low %v2779, %v2779
      %2782 = vrot.lane.b32.xlu0 %v2780, 28
      %v2783 = vpop.permute.xlu0 %2782
      %2784 = vrot.lane.b32.xlu0 %v2772, 28
      %v2785 = vpop.permute.xlu0 %2784
      %2786 = vrot.lane.b32.xlu0 %v2781, 28
      %v2787 = vpop.permute.xlu0 %2786
      %v2788 = vsel %vm963, %v2783, %v2785
      %v2789 = vsel %vm963, %v2785, %v2787
      %2792 = vst [vmem:[#allocation3 + $0x50] sm:$0x30] %v2788
      %2793 = vst [vmem:[#allocation3 + $0x58] sm:$0x30] %v2789
      %v2794 = vld [vmem:[%s246 + $0xa] sm:$0x3f]
      %v2796 = vcombine.low %v2794, %v2794
      %v2798 = vunpack.c.l.s4 1983009808
      %v2799 = vunpack.c.0.s8 %v2798
      %v2800 = vlaneseq
      %v2801 = vshrl.u32 %v2800, 7
      %v2802 = vsub.s32 %v2799, %v2801
      %v2803 = vrot.slane %v2796, %v2802
      %v2805 = vunpack.c.l.s4 1983009808
      %v2806 = vunpack.c.0.s8 %v2805
      %v2807 = vlaneseq
      %v2808 = vshrl.u32 %v2807, 7
      %v2809 = vsub.s32 %v2806, %v2808
      %v2810 = vrot.slane %v2794, %v2809
      %v2811 = vcombine.low %v2803, %v2803
      %v2812 = vcombine.low %v2810, %v2810
      %2813 = vrot.lane.b32.xlu0 %v2811, 27
      %v2814 = vpop.permute.xlu0 %2813
      %2815 = vrot.lane.b32.xlu0 %v2803, 27
      %v2816 = vpop.permute.xlu0 %2815
      %2817 = vrot.lane.b32.xlu0 %v2812, 27
      %v2818 = vpop.permute.xlu0 %2817
      %v2819 = vsel %vm995, %v2814, %v2816
      %v2820 = vsel %vm995, %v2816, %v2818
      %2823 = vst [vmem:[#allocation3 + $0x50] sm:$0xc0] %v2819
      %2824 = vst [vmem:[#allocation3 + $0x58] sm:$0xc0] %v2820
      %v2825 = vld [vmem:[%s246 + $0xa] sm:$0x3f]
      %v2827 = vcombine.high %v2825, %v2825
      %v2829 = vunpack.c.l.s4 1983009808
      %v2830 = vunpack.c.0.s8 %v2829
      %v2831 = vlaneseq
      %v2832 = vshrl.u32 %v2831, 7
      %v2833 = vsub.s32 %v2830, %v2832
      %v2834 = vrot.slane %v2825, %v2833
      %v2836 = vunpack.c.l.s4 1983009808
      %v2837 = vunpack.c.0.s8 %v2836
      %v2838 = vlaneseq
      %v2839 = vshrl.u32 %v2838, 7
      %v2840 = vsub.s32 %v2837, %v2839
      %v2841 = vrot.slane %v2827, %v2840
      %v2842 = vcombine.high %v2834, %v2834
      %2843 = vrot.lane.b32.xlu0 %v2834, 19
      %v2844 = vpop.permute.xlu0 %2843
      %2845 = vrot.lane.b32.xlu0 %v2842, 19
      %v2846 = vpop.permute.xlu0 %2845
      %2847 = vrot.lane.b32.xlu0 %v2841, 19
      %v2848 = vpop.permute.xlu0 %2847
      %v2849 = vsel %vm1026, %v2844, %v2846
      %v2850 = vsel %vm1026, %v2846, %v2848
      %2853 = vst [vmem:[#allocation3 + $0x60] sm:$0x3] %v2849
      %2854 = vst [vmem:[#allocation3 + $0x68] sm:$0x3] %v2850
      %v2855 = vld [vmem:[%s246 + $0xa] sm:$0x3f]
      %v2857 = vcombine.low %v2855, %v2855
      %v2859 = vunpack.c.l.s4 1983009808
      %v2860 = vunpack.c.0.s8 %v2859
      %v2861 = vlaneseq
      %v2862 = vshrl.u32 %v2861, 7
      %v2863 = vsub.s32 %v2860, %v2862
      %v2864 = vrot.slane %v2857, %v2863
      %v2866 = vunpack.c.l.s4 1983009808
      %v2867 = vunpack.c.0.s8 %v2866
      %v2868 = vlaneseq
      %v2869 = vshrl.u32 %v2868, 7
      %v2870 = vsub.s32 %v2867, %v2869
      %v2871 = vrot.slane %v2855, %v2870
      %v2872 = vcombine.high %v2864, %v2864
      %2873 = vrot.lane.b32.xlu0 %v2864, 18
      %v2874 = vpop.permute.xlu0 %2873
      %2875 = vrot.lane.b32.xlu0 %v2872, 18
      %v2876 = vpop.permute.xlu0 %2875
      %2877 = vrot.lane.b32.xlu0 %v2871, 18
      %v2878 = vpop.permute.xlu0 %2877
      %v2879 = vsel %vm1057, %v2874, %v2876
      %v2880 = vsel %vm1057, %v2876, %v2878
      %2883 = vst [vmem:[#allocation3 + $0x60] sm:$0xc] %v2879
      %2884 = vst [vmem:[#allocation3 + $0x68] sm:$0xc] %v2880
      %v2885 = vld [vmem:[%s246 + $0xa] sm:$0x3f]
      %v2887 = vcombine.high %v2885, %v2885
      %v2889 = vunpack.c.l.s4 1983009808
      %v2890 = vunpack.c.0.s8 %v2889
      %v2891 = vlaneseq
      %v2892 = vshrl.u32 %v2891, 7
      %v2893 = vsub.s32 %v2890, %v2892
      %v2894 = vrot.slane %v2885, %v2893
      %v2896 = vunpack.c.l.s4 1983009808
      %v2897 = vunpack.c.0.s8 %v2896
      %v2898 = vlaneseq
      %v2899 = vshrl.u32 %v2898, 7
      %v2900 = vsub.s32 %v2897, %v2899
      %v2901 = vrot.slane %v2887, %v2900
      %v2902 = vcombine.low %v2894, %v2894
      %v2903 = vcombine.low %v2901, %v2901
      %2904 = vrot.lane.b32.xlu0 %v2902, 17
      %v2905 = vpop.permute.xlu0 %2904
      %2906 = vrot.lane.b32.xlu0 %v2894, 17
      %v2907 = vpop.permute.xlu0 %2906
      %2908 = vrot.lane.b32.xlu0 %v2903, 17
      %v2909 = vpop.permute.xlu0 %2908
      %v2910 = vsel %vm1089, %v2905, %v2907
      %v2911 = vsel %vm1089, %v2907, %v2909
      %2914 = vst [vmem:[#allocation3 + $0x60] sm:$0x30] %v2910
      %2915 = vst [vmem:[#allocation3 + $0x68] sm:$0x30] %v2911
      %v2916 = vld [vmem:[%s1] sm:$0xf]
      %v2917 = vld [vmem:[%s1 + $0x4] sm:$0xf]
      %v2918 = vld [vmem:[#allocation3] sm:$0xff]
      %v2919 = vld [vmem:[#allocation3 + $0x8] sm:$0xff]
      %v2920 = vld [vmem:[#allocation3 + $0x10] sm:$0xff]
      %v2921 = vld [vmem:[#allocation3 + $0x18] sm:$0xff]
      %v2922 = vld [vmem:[#allocation3 + $0x20] sm:$0xff]
      %v2923 = vld [vmem:[#allocation3 + $0x28] sm:$0xff]
      %v2924 = vld [vmem:[#allocation3 + $0x30] sm:$0xff]
      %v2925 = vld [vmem:[#allocation3 + $0x38] sm:$0xff]
      %v2926 = vld [vmem:[#allocation3 + $0x40] sm:$0xff]
      %v2927 = vld [vmem:[#allocation3 + $0x48] sm:$0xff]
      %v2928 = vld [vmem:[#allocation3 + $0x50] sm:$0xff]
      %v2929 = vld [vmem:[#allocation3 + $0x58] sm:$0xff]
      %v2930 = vld [vmem:[#allocation3 + $0x60] sm:$0xff]
      %v2931 = vld [vmem:[#allocation3 + $0x68] sm:$0xff]
      %v2932 = vld [vmem:[#allocation3 + $0x70] sm:$0xff]
      %v2933 = vld [vmem:[#allocation3 + $0x78] sm:$0xff]
      %v2936 = vunpack.c.l.b16 %v2916
      %v2937 = vunpack.c.l.b16 %v2917
      %v2938 = vpack.c.b16 %v2937, %v2936
      %2940 = vmatprep.subr.bf16.mxu0 %v2919
      %2941 = vmatpush1.bf16.msra.mxu0 %v2918
      %2942 = vmatprep.subr.bf16.mxu0 %v2921
      %2943 = vmatpush1.bf16.msra.mxu0 %v2920
      %2944 = vmatprep.subr.bf16.mxu0 %v2923
      %2945 = vmatpush1.bf16.msra.mxu0 %v2922
      %2946 = vmatprep.subr.bf16.mxu0 %v2925
      %2947 = vmatpush1.bf16.msra.mxu0 %v2924
      %2948 = vmatprep.subr.bf16.mxu0 %v2927
      %2949 = vmatpush1.bf16.msra.mxu0 %v2926
      %2950 = vmatprep.subr.bf16.mxu0 %v2929
      %2951 = vmatpush1.bf16.msra.mxu0 %v2928
      %2952 = vmatprep.subr.bf16.mxu0 %v2931
      %2953 = vmatpush1.bf16.msra.mxu0 %v2930
      %2954 = vmatprep.subr.bf16.mxu0 %v2933
      %2955 = vmatpush1.bf16.msra.mxu0 %v2932
      %2956 = vmatprep.subr.bf16.mxu0 0
      %2957 = vmatpush1.bf16.msra.mxu0 0
      %2958 = vmatprep.subr.bf16.mxu0 0
      %2959 = vmatpush1.bf16.msra.mxu0 0
      %2960 = vmatprep.subr.bf16.mxu0 0
      %2961 = vmatpush1.bf16.msra.mxu0 0
      %2962 = vmatprep.subr.bf16.mxu0 0
      %2963 = vmatpush1.bf16.msra.mxu0 0
      %2964 = vmatprep.subr.bf16.mxu0 0
      %2965 = vmatpush1.bf16.msra.mxu0 0
      %2966 = vmatprep.subr.bf16.mxu0 0
      %2967 = vmatpush1.bf16.msra.mxu0 0
      %2968 = vmatprep.subr.bf16.mxu0 0
      %2969 = vmatpush1.bf16.msra.mxu0 0
      %2970 = vmatprep.subr.bf16.mxu0 0
      %2971 = vmatpush1.bf16.msra.mxu0 0
      %2972 = vmatprep.mubr.bf16.mxu0 0
      %2973 = vmatmul.mubr.bf16.gmra.mrb[0].mxu0 %v2938
      %v2974 = vpop.f32.mrb[0].mxu0
      %v2975 = vadd.f32 0.0, %v2974
      %v2976 = vpop.f32.mrb[0].mxu0
      %v2977 = vadd.f32 0.0, %v2976
      %v2978 = vpop.f32.mrb[0].mxu0
      %v2979 = vadd.f32 0.0, %v2978
      %v2980 = vpop.f32.mrb[0].mxu0
      %v2981 = vadd.f32 0.0, %v2980
      %2982 = vdwg.mxu0
      %2983 = vst [vmem:[#allocation5 + $0x20] sm:$0xff] %v2975
      %2984 = vst [vmem:[#allocation5 + $0x28] sm:$0xff] %v2977
      %v2985 = vld [vmem:[%s3] sm:$0xff]
      %2987 = vset.pattern.permute.xlu0 0
      %2988 = vperm.xlu0 %2987, %v2985
      %v2989 = vpop.permute.xlu0 %2988
      %v2991 = vadd.f32 %v2979, %v2989
      %v2992 = vadd.f32 %v2981, %v2989
      %v2993 = vmax.f32 %v2991, 0.0
      %v2994 = vmax.f32 %v2992, 0.0
      %v2995 = vld [vmem:[%s5 + $0x4] sm:$0x3]
      %v2997 = vlaneseq
      %v2998 = vshrl.u32 %v2997, 7
      %v2999 = vsub.s32 0, %v2998
      %v3000 = vrot.slane %v2995, %v2999
      %v3001 = vlaneseq
      %v3002 = vshrl.u32 %v3001, 7
      %v3003 = vsub.s32 1, %v3002
      %v3004 = vrot.slane %v2995, %v3003
      %v3007 = vmul.f32 %v2993, %v3000
      %v3008 = vmul.f32 %v2994, %v3004
      %v3009 = vpack.c.bf16 %v3007, %v3007
      %v3010 = vpack.c.bf16 %v3008, %v3008
      %v3013 = vunpack.c.l.b16 %v3009
      %v3014 = vunpack.c.l.b16 %v3010
      %v3015 = vpack.c.b16 %v3014, %v3013
      %3017 = vst [vmem:[#allocation2 + $0x14] sm:$0xff] %v3015
      %v3018 = vld [vmem:[%s246 + $0xc] sm:$0xf]
      %v3021 = vunpack.c.l.s4 1983009808
      %v3022 = vunpack.c.0.s8 %v3021
      %v3023 = vlaneseq
      %v3024 = vshrl.u32 %v3023, 7
      %v3025 = vsub.s32 %v3022, %v3024
      %v3026 = vrot.slane %v3018, %v3025
      %v3027 = vcombine.high %v3026, %v3026
      %3028 = vrot.lane.b32.xlu0 %v3026, 111
      %v3029 = vpop.permute.xlu0 %3028
      %3030 = vrot.lane.b32.xlu0 %v3027, 111
      %v3031 = vpop.permute.xlu0 %3030
      %v3032 = vsel %vm286, %v3029, %v3031
      %3035 = vst [vmem:[#allocation3] sm:$0x3] %v3032
      %vm3036 = vcmask 844800
      %3037 = vst.msk [vmem:[#allocation3 + $0x8] sm:$0x3] %vm3036, %v3031
      %v3038 = vld [vmem:[%s246 + $0xc] sm:$0xf]
      %v3040 = vcombine.low %v3038, %v3038
      %v3042 = vunpack.c.l.s4 1983009808
      %v3043 = vunpack.c.0.s8 %v3042
      %v3044 = vlaneseq
      %v3045 = vshrl.u32 %v3044, 7
      %v3046 = vsub.s32 %v3043, %v3045
      %v3047 = vrot.slane %v3040, %v3046
      %v3048 = vcombine.high %v3047, %v3047
      %3049 = vrot.lane.b32.xlu0 %v3047, 110
      %v3050 = vpop.permute.xlu0 %3049
      %3051 = vrot.lane.b32.xlu0 %v3048, 110
      %v3052 = vpop.permute.xlu0 %3051
      %v3053 = vsel %vm317, %v3050, %v3052
      %3056 = vst [vmem:[#allocation3] sm:$0xc] %v3053
      %vm3057 = vcmask 846850
      %3058 = vst.msk [vmem:[#allocation3 + $0x8] sm:$0xc] %vm3057, %v3052
      %v3059 = vld [vmem:[%s246 + $0xc] sm:$0xf]
      %v3062 = vunpack.c.l.s4 1983009808
      %v3063 = vunpack.c.0.s8 %v3062
      %v3064 = vlaneseq
      %v3065 = vshrl.u32 %v3064, 7
      %v3066 = vsub.s32 %v3063, %v3065
      %v3067 = vrot.slane %v3059, %v3066
      %v3068 = vcombine.low %v3067, %v3067
      %3069 = vrot.lane.b32.xlu0 %v3068, 109
      %v3070 = vpop.permute.xlu0 %3069
      %3071 = vrot.lane.b32.xlu0 %v3067, 109
      %v3072 = vpop.permute.xlu0 %3071
      %v3073 = vsel %vm349, %v3070, %v3072
      %3076 = vst [vmem:[#allocation3] sm:$0x30] %v3073
      %vm3077 = vcmask 848900
      %3078 = vst.msk [vmem:[#allocation3 + $0x8] sm:$0x30] %vm3077, %v3072
      %v3079 = vld [vmem:[%s246 + $0xc] sm:$0x3f]
      %v3081 = vcombine.low %v3079, %v3079
      %v3083 = vunpack.c.l.s4 1983009808
      %v3084 = vunpack.c.0.s8 %v3083
      %v3085 = vlaneseq
      %v3086 = vshrl.u32 %v3085, 7
      %v3087 = vsub.s32 %v3084, %v3086
      %v3088 = vrot.slane %v3081, %v3087
      %v3090 = vunpack.c.l.s4 1983009808
      %v3091 = vunpack.c.0.s8 %v3090
      %v3092 = vlaneseq
      %v3093 = vshrl.u32 %v3092, 7
      %v3094 = vsub.s32 %v3091, %v3093
      %v3095 = vrot.slane %v3079, %v3094
      %v3096 = vcombine.low %v3088, %v3088
      %v3097 = vcombine.low %v3095, %v3095
      %3098 = vrot.lane.b32.xlu0 %v3096, 101
      %v3099 = vpop.permute.xlu0 %3098
      %3100 = vrot.lane.b32.xlu0 %v3088, 101
      %v3101 = vpop.permute.xlu0 %3100
      %3102 = vrot.lane.b32.xlu0 %v3097, 101
      %v3103 = vpop.permute.xlu0 %3102
      %v3104 = vsel %vm381, %v3099, %v3101
      %v3105 = vsel %vm381, %v3101, %v3103
      %3108 = vst [vmem:[#allocation3] sm:$0xc0] %v3104
      %vm3109 = vcmask 850950
      %3110 = vst.msk [vmem:[#allocation3 + $0x8] sm:$0xc0] %vm3109, %v3105
      %v3111 = vld [vmem:[%s246 + $0xc] sm:$0x3f]
      %v3113 = vcombine.high %v3111, %v3111
      %v3115 = vunpack.c.l.s4 1983009808
      %v3116 = vunpack.c.0.s8 %v3115
      %v3117 = vlaneseq
      %v3118 = vshrl.u32 %v3117, 7
      %v3119 = vsub.s32 %v3116, %v3118
      %v3120 = vrot.slane %v3111, %v3119
      %v3122 = vunpack.c.l.s4 1983009808
      %v3123 = vunpack.c.0.s8 %v3122
      %v3124 = vlaneseq
      %v3125 = vshrl.u32 %v3124, 7
      %v3126 = vsub.s32 %v3123, %v3125
      %v3127 = vrot.slane %v3113, %v3126
      %v3128 = vcombine.high %v3120, %v3120
      %3129 = vrot.lane.b32.xlu0 %v3120, 100
      %v3130 = vpop.permute.xlu0 %3129
      %3131 = vrot.lane.b32.xlu0 %v3128, 100
      %v3132 = vpop.permute.xlu0 %3131
      %3133 = vrot.lane.b32.xlu0 %v3127, 100
      %v3134 = vpop.permute.xlu0 %3133
      %v3135 = vsel %vm412, %v3130, %v3132
      %v3136 = vsel %vm412, %v3132, %v3134
      %3139 = vst [vmem:[#allocation3 + $0x10] sm:$0x3] %v3135
      %3140 = vst.msk [vmem:[#allocation3 + $0x18] sm:$0x3] %vm3036, %v3136
      %v3141 = vld [vmem:[%s246 + $0xc] sm:$0x3f]
      %v3143 = vcombine.low %v3141, %v3141
      %v3145 = vunpack.c.l.s4 1983009808
      %v3146 = vunpack.c.0.s8 %v3145
      %v3147 = vlaneseq
      %v3148 = vshrl.u32 %v3147, 7
      %v3149 = vsub.s32 %v3146, %v3148
      %v3150 = vrot.slane %v3143, %v3149
      %v3152 = vunpack.c.l.s4 1983009808
      %v3153 = vunpack.c.0.s8 %v3152
      %v3154 = vlaneseq
      %v3155 = vshrl.u32 %v3154, 7
      %v3156 = vsub.s32 %v3153, %v3155
      %v3157 = vrot.slane %v3141, %v3156
      %v3158 = vcombine.high %v3150, %v3150
      %3159 = vrot.lane.b32.xlu0 %v3150, 99
      %v3160 = vpop.permute.xlu0 %3159
      %3161 = vrot.lane.b32.xlu0 %v3158, 99
      %v3162 = vpop.permute.xlu0 %3161
      %3163 = vrot.lane.b32.xlu0 %v3157, 99
      %v3164 = vpop.permute.xlu0 %3163
      %v3165 = vsel %vm443, %v3160, %v3162
      %v3166 = vsel %vm443, %v3162, %v3164
      %3169 = vst [vmem:[#allocation3 + $0x10] sm:$0xc] %v3165
      %3170 = vst.msk [vmem:[#allocation3 + $0x18] sm:$0xc] %vm3057, %v3166
      %v3171 = vld [vmem:[%s246 + $0xc] sm:$0x3f]
      %v3173 = vcombine.high %v3171, %v3171
      %v3175 = vunpack.c.l.s4 1983009808
      %v3176 = vunpack.c.0.s8 %v3175
      %v3177 = vlaneseq
      %v3178 = vshrl.u32 %v3177, 7
      %v3179 = vsub.s32 %v3176, %v3178
      %v3180 = vrot.slane %v3171, %v3179
      %v3182 = vunpack.c.l.s4 1983009808
      %v3183 = vunpack.c.0.s8 %v3182
      %v3184 = vlaneseq
      %v3185 = vshrl.u32 %v3184, 7
      %v3186 = vsub.s32 %v3183, %v3185
      %v3187 = vrot.slane %v3173, %v3186
      %v3188 = vcombine.low %v3180, %v3180
      %v3189 = vcombine.low %v3187, %v3187
      %3190 = vrot.lane.b32.xlu0 %v3188, 91
      %v3191 = vpop.permute.xlu0 %3190
      %3192 = vrot.lane.b32.xlu0 %v3180, 91
      %v3193 = vpop.permute.xlu0 %3192
      %3194 = vrot.lane.b32.xlu0 %v3189, 91
      %v3195 = vpop.permute.xlu0 %3194
      %v3196 = vsel %vm475, %v3191, %v3193
      %v3197 = vsel %vm475, %v3193, %v3195
      %3200 = vst [vmem:[#allocation3 + $0x10] sm:$0x30] %v3196
      %3201 = vst.msk [vmem:[#allocation3 + $0x18] sm:$0x30] %vm3077, %v3197
      %v3202 = vld [vmem:[%s246 + $0xc] sm:$0x3f]
      %v3204 = vcombine.low %v3202, %v3202
      %v3206 = vunpack.c.l.s4 1983009808
      %v3207 = vunpack.c.0.s8 %v3206
      %v3208 = vlaneseq
      %v3209 = vshrl.u32 %v3208, 7
      %v3210 = vsub.s32 %v3207, %v3209
      %v3211 = vrot.slane %v3204, %v3210
      %v3213 = vunpack.c.l.s4 1983009808
      %v3214 = vunpack.c.0.s8 %v3213
      %v3215 = vlaneseq
      %v3216 = vshrl.u32 %v3215, 7
      %v3217 = vsub.s32 %v3214, %v3216
      %v3218 = vrot.slane %v3202, %v3217
      %v3219 = vcombine.low %v3211, %v3211
      %v3220 = vcombine.low %v3218, %v3218
      %3221 = vrot.lane.b32.xlu0 %v3219, 90
      %v3222 = vpop.permute.xlu0 %3221
      %3223 = vrot.lane.b32.xlu0 %v3211, 90
      %v3224 = vpop.permute.xlu0 %3223
      %3225 = vrot.lane.b32.xlu0 %v3220, 90
      %v3226 = vpop.permute.xlu0 %3225
      %v3227 = vsel %vm507, %v3222, %v3224
      %v3228 = vsel %vm507, %v3224, %v3226
      %3231 = vst [vmem:[#allocation3 + $0x10] sm:$0xc0] %v3227
      %3232 = vst.msk [vmem:[#allocation3 + $0x18] sm:$0xc0] %vm3109, %v3228
      %v3233 = vld [vmem:[%s246 + $0xc] sm:$0x3f]
      %v3235 = vcombine.high %v3233, %v3233
      %v3237 = vunpack.c.l.s4 1983009808
      %v3238 = vunpack.c.0.s8 %v3237
      %v3239 = vlaneseq
      %v3240 = vshrl.u32 %v3239, 7
      %v3241 = vsub.s32 %v3238, %v3240
      %v3242 = vrot.slane %v3233, %v3241
      %v3244 = vunpack.c.l.s4 1983009808
      %v3245 = vunpack.c.0.s8 %v3244
      %v3246 = vlaneseq
      %v3247 = vshrl.u32 %v3246, 7
      %v3248 = vsub.s32 %v3245, %v3247
      %v3249 = vrot.slane %v3235, %v3248
      %v3250 = vcombine.high %v3242, %v3242
      %3251 = vrot.lane.b32.xlu0 %v3242, 89
      %v3252 = vpop.permute.xlu0 %3251
      %3253 = vrot.lane.b32.xlu0 %v3250, 89
      %v3254 = vpop.permute.xlu0 %3253
      %3255 = vrot.lane.b32.xlu0 %v3249, 89
      %v3256 = vpop.permute.xlu0 %3255
      %v3257 = vsel %vm538, %v3252, %v3254
      %v3258 = vsel %vm538, %v3254, %v3256
      %3261 = vst [vmem:[#allocation3 + $0x20] sm:$0x3] %v3257
      %3262 = vst.msk [vmem:[#allocation3 + $0x28] sm:$0x3] %vm3036, %v3258
      %v3263 = vld [vmem:[%s246 + $0xc] sm:$0x3f]
      %v3265 = vcombine.low %v3263, %v3263
      %v3267 = vunpack.c.l.s4 1983009808
      %v3268 = vunpack.c.0.s8 %v3267
      %v3269 = vlaneseq
      %v3270 = vshrl.u32 %v3269, 7
      %v3271 = vsub.s32 %v3268, %v3270
      %v3272 = vrot.slane %v3265, %v3271
      %v3274 = vunpack.c.l.s4 1983009808
      %v3275 = vunpack.c.0.s8 %v3274
      %v3276 = vlaneseq
      %v3277 = vshrl.u32 %v3276, 7
      %v3278 = vsub.s32 %v3275, %v3277
      %v3279 = vrot.slane %v3263, %v3278
      %v3280 = vcombine.high %v3272, %v3272
      %3281 = vrot.lane.b32.xlu0 %v3272, 11
      %v3282 = vpop.permute.xlu0 %3281
      %3283 = vrot.lane.b32.xlu0 %v3280, 11
      %v3284 = vpop.permute.xlu0 %3283
      %3285 = vrot.lane.b32.xlu0 %v3279, 11
      %v3286 = vpop.permute.xlu0 %3285
      %v3287 = vsel %vm569, %v3282, %v3284
      %v3288 = vsel %vm569, %v3284, %v3286
      %3291 = vst [vmem:[#allocation3 + $0x20] sm:$0xc] %v3287
      %3292 = vst.msk [vmem:[#allocation3 + $0x28] sm:$0xc] %vm3057, %v3288
      %v3293 = vld [vmem:[%s246 + $0xc] sm:$0x3f]
      %v3295 = vcombine.high %v3293, %v3293
      %v3297 = vunpack.c.l.s4 1983009808
      %v3298 = vunpack.c.0.s8 %v3297
      %v3299 = vlaneseq
      %v3300 = vshrl.u32 %v3299, 7
      %v3301 = vsub.s32 %v3298, %v3300
      %v3302 = vrot.slane %v3293, %v3301
      %v3304 = vunpack.c.l.s4 1983009808
      %v3305 = vunpack.c.0.s8 %v3304
      %v3306 = vlaneseq
      %v3307 = vshrl.u32 %v3306, 7
      %v3308 = vsub.s32 %v3305, %v3307
      %v3309 = vrot.slane %v3295, %v3308
      %v3310 = vcombine.low %v3302, %v3302
      %v3311 = vcombine.low %v3309, %v3309
      %3312 = vrot.lane.b32.xlu0 %v3310, 10
      %v3313 = vpop.permute.xlu0 %3312
      %3314 = vrot.lane.b32.xlu0 %v3302, 10
      %v3315 = vpop.permute.xlu0 %3314
      %3316 = vrot.lane.b32.xlu0 %v3311, 10
      %v3317 = vpop.permute.xlu0 %3316
      %v3318 = vsel %vm601, %v3313, %v3315
      %v3319 = vsel %vm601, %v3315, %v3317
      %3322 = vst [vmem:[#allocation3 + $0x20] sm:$0x30] %v3318
      %3323 = vst.msk [vmem:[#allocation3 + $0x28] sm:$0x30] %vm3077, %v3319
      %v3324 = vld [vmem:[%s246 + $0xc] sm:$0x3f]
      %v3326 = vcombine.low %v3324, %v3324
      %v3328 = vunpack.c.l.s4 1983009808
      %v3329 = vunpack.c.0.s8 %v3328
      %v3330 = vlaneseq
      %v3331 = vshrl.u32 %v3330, 7
      %v3332 = vsub.s32 %v3329, %v3331
      %v3333 = vrot.slane %v3326, %v3332
      %v3335 = vunpack.c.l.s4 1983009808
      %v3336 = vunpack.c.0.s8 %v3335
      %v3337 = vlaneseq
      %v3338 = vshrl.u32 %v3337, 7
      %v3339 = vsub.s32 %v3336, %v3338
      %v3340 = vrot.slane %v3324, %v3339
      %v3341 = vcombine.low %v3333, %v3333
      %v3342 = vcombine.low %v3340, %v3340
      %3343 = vrot.lane.b32.xlu0 %v3341, 9
      %v3344 = vpop.permute.xlu0 %3343
      %3345 = vrot.lane.b32.xlu0 %v3333, 9
      %v3346 = vpop.permute.xlu0 %3345
      %3347 = vrot.lane.b32.xlu0 %v3342, 9
      %v3348 = vpop.permute.xlu0 %3347
      %v3349 = vsel %vm633, %v3344, %v3346
      %v3350 = vsel %vm633, %v3346, %v3348
      %3353 = vst [vmem:[#allocation3 + $0x20] sm:$0xc0] %v3349
      %3354 = vst.msk [vmem:[#allocation3 + $0x28] sm:$0xc0] %vm3109, %v3350
      %v3355 = vld [vmem:[%s246 + $0xc] sm:$0x3f]
      %v3357 = vcombine.high %v3355, %v3355
      %v3359 = vunpack.c.l.s4 1983009808
      %v3360 = vunpack.c.0.s8 %v3359
      %v3361 = vlaneseq
      %v3362 = vshrl.u32 %v3361, 7
      %v3363 = vsub.s32 %v3360, %v3362
      %v3364 = vrot.slane %v3355, %v3363
      %v3366 = vunpack.c.l.s4 1983009808
      %v3367 = vunpack.c.0.s8 %v3366
      %v3368 = vlaneseq
      %v3369 = vshrl.u32 %v3368, 7
      %v3370 = vsub.s32 %v3367, %v3369
      %v3371 = vrot.slane %v3357, %v3370
      %v3372 = vcombine.high %v3364, %v3364
      %3373 = vrot.lane.b32.xlu0 %v3364, 1
      %v3374 = vpop.permute.xlu0 %3373
      %3375 = vrot.lane.b32.xlu0 %v3372, 1
      %v3376 = vpop.permute.xlu0 %3375
      %3377 = vrot.lane.b32.xlu0 %v3371, 1
      %v3378 = vpop.permute.xlu0 %3377
      %v3379 = vsel %vm664, %v3374, %v3376
      %v3380 = vsel %vm664, %v3376, %v3378
      %3383 = vst [vmem:[#allocation3 + $0x30] sm:$0x3] %v3379
      %3384 = vst.msk [vmem:[#allocation3 + $0x38] sm:$0x3] %vm3036, %v3380
      %v3385 = vld [vmem:[%s246 + $0xe] sm:$0xf]
      %v3387 = vcombine.low %v3385, %v3385
      %v3389 = vunpack.c.l.s4 1983009808
      %v3390 = vunpack.c.0.s8 %v3389
      %v3391 = vlaneseq
      %v3392 = vshrl.u32 %v3391, 7
      %v3393 = vsub.s32 %v3390, %v3392
      %v3394 = vrot.slane %v3387, %v3393
      %v3395 = vcombine.high %v3394, %v3394
      %3398 = vst [vmem:[#allocation3 + $0x30] sm:$0xc] %v3394
      %3399 = vst.msk [vmem:[#allocation3 + $0x38] sm:$0xc] %vm3057, %v3395
      %v3400 = vld [vmem:[%s246 + $0xe] sm:$0xf]
      %v3403 = vunpack.c.l.s4 1983009808
      %v3404 = vunpack.c.0.s8 %v3403
      %v3405 = vlaneseq
      %v3406 = vshrl.u32 %v3405, 7
      %v3407 = vsub.s32 %v3404, %v3406
      %v3408 = vrot.slane %v3400, %v3407
      %v3409 = vcombine.low %v3408, %v3408
      %3410 = vrot.lane.b32.xlu0 %v3409, 127
      %v3411 = vpop.permute.xlu0 %3410
      %3412 = vrot.lane.b32.xlu0 %v3408, 127
      %v3413 = vpop.permute.xlu0 %3412
      %v3414 = vsel %vm711, %v3411, %v3413
      %3417 = vst [vmem:[#allocation3 + $0x30] sm:$0x30] %v3414
      %3418 = vst.msk [vmem:[#allocation3 + $0x38] sm:$0x30] %vm3077, %v3413
      %v3419 = vld [vmem:[%s246 + $0xe] sm:$0xf]
      %v3421 = vcombine.low %v3419, %v3419
      %v3423 = vunpack.c.l.s4 1983009808
      %v3424 = vunpack.c.0.s8 %v3423
      %v3425 = vlaneseq
      %v3426 = vshrl.u32 %v3425, 7
      %v3427 = vsub.s32 %v3424, %v3426
      %v3428 = vrot.slane %v3421, %v3427
      %v3429 = vcombine.low %v3428, %v3428
      %3430 = vrot.lane.b32.xlu0 %v3429, 119
      %v3431 = vpop.permute.xlu0 %3430
      %3432 = vrot.lane.b32.xlu0 %v3428, 119
      %v3433 = vpop.permute.xlu0 %3432
      %v3434 = vsel %vm743, %v3431, %v3433
      %3437 = vst [vmem:[#allocation3 + $0x30] sm:$0xc0] %v3434
      %3438 = vst.msk [vmem:[#allocation3 + $0x38] sm:$0xc0] %vm3109, %v3433
      %v3439 = vld [vmem:[%s246 + $0xe] sm:$0xf]
      %v3442 = vunpack.c.l.s4 1983009808
      %v3443 = vunpack.c.0.s8 %v3442
      %v3444 = vlaneseq
      %v3445 = vshrl.u32 %v3444, 7
      %v3446 = vsub.s32 %v3443, %v3445
      %v3447 = vrot.slane %v3439, %v3446
      %v3448 = vcombine.high %v3447, %v3447
      %3449 = vrot.lane.b32.xlu0 %v3447, 118
      %v3450 = vpop.permute.xlu0 %3449
      %3451 = vrot.lane.b32.xlu0 %v3448, 118
      %v3452 = vpop.permute.xlu0 %3451
      %v3453 = vsel %vm774, %v3450, %v3452
      %3456 = vst [vmem:[#allocation3 + $0x40] sm:$0x3] %v3453
      %3457 = vst.msk [vmem:[#allocation3 + $0x48] sm:$0x3] %vm3036, %v3452
      %v3458 = vld [vmem:[%s246 + $0xe] sm:$0xf]
      %v3460 = vcombine.low %v3458, %v3458
      %v3462 = vunpack.c.l.s4 1983009808
      %v3463 = vunpack.c.0.s8 %v3462
      %v3464 = vlaneseq
      %v3465 = vshrl.u32 %v3464, 7
      %v3466 = vsub.s32 %v3463, %v3465
      %v3467 = vrot.slane %v3460, %v3466
      %v3468 = vcombine.high %v3467, %v3467
      %3469 = vrot.lane.b32.xlu0 %v3467, 117
      %v3470 = vpop.permute.xlu0 %3469
      %3471 = vrot.lane.b32.xlu0 %v3468, 117
      %v3472 = vpop.permute.xlu0 %3471
      %v3473 = vsel %vm805, %v3470, %v3472
      %3476 = vst [vmem:[#allocation3 + $0x40] sm:$0xc] %v3473
      %3477 = vst.msk [vmem:[#allocation3 + $0x48] sm:$0xc] %vm3057, %v3472
      %v3478 = vld [vmem:[%s246 + $0xe] sm:$0x3f]
      %v3480 = vcombine.high %v3478, %v3478
      %v3482 = vunpack.c.l.s4 1983009808
      %v3483 = vunpack.c.0.s8 %v3482
      %v3484 = vlaneseq
      %v3485 = vshrl.u32 %v3484, 7
      %v3486 = vsub.s32 %v3483, %v3485
      %v3487 = vrot.slane %v3478, %v3486
      %v3489 = vunpack.c.l.s4 1983009808
      %v3490 = vunpack.c.0.s8 %v3489
      %v3491 = vlaneseq
      %v3492 = vshrl.u32 %v3491, 7
      %v3493 = vsub.s32 %v3490, %v3492
      %v3494 = vrot.slane %v3480, %v3493
      %v3495 = vcombine.low %v3487, %v3487
      %v3496 = vcombine.low %v3494, %v3494
      %3497 = vrot.lane.b32.xlu0 %v3495, 39
      %v3498 = vpop.permute.xlu0 %3497
      %3499 = vrot.lane.b32.xlu0 %v3487, 39
      %v3500 = vpop.permute.xlu0 %3499
      %3501 = vrot.lane.b32.xlu0 %v3496, 39
      %v3502 = vpop.permute.xlu0 %3501
      %v3503 = vsel %vm837, %v3498, %v3500
      %v3504 = vsel %vm837, %v3500, %v3502
      %3507 = vst [vmem:[#allocation3 + $0x40] sm:$0x30] %v3503
      %3508 = vst.msk [vmem:[#allocation3 + $0x48] sm:$0x30] %vm3077, %v3504
      %v3509 = vld [vmem:[%s246 + $0xe] sm:$0x3f]
      %v3511 = vcombine.low %v3509, %v3509
      %v3513 = vunpack.c.l.s4 1983009808
      %v3514 = vunpack.c.0.s8 %v3513
      %v3515 = vlaneseq
      %v3516 = vshrl.u32 %v3515, 7
      %v3517 = vsub.s32 %v3514, %v3516
      %v3518 = vrot.slane %v3511, %v3517
      %v3520 = vunpack.c.l.s4 1983009808
      %v3521 = vunpack.c.0.s8 %v3520
      %v3522 = vlaneseq
      %v3523 = vshrl.u32 %v3522, 7
      %v3524 = vsub.s32 %v3521, %v3523
      %v3525 = vrot.slane %v3509, %v3524
      %v3526 = vcombine.low %v3518, %v3518
      %v3527 = vcombine.low %v3525, %v3525
      %3528 = vrot.lane.b32.xlu0 %v3526, 38
      %v3529 = vpop.permute.xlu0 %3528
      %3530 = vrot.lane.b32.xlu0 %v3518, 38
      %v3531 = vpop.permute.xlu0 %3530
      %3532 = vrot.lane.b32.xlu0 %v3527, 38
      %v3533 = vpop.permute.xlu0 %3532
      %v3534 = vsel %vm869, %v3529, %v3531
      %v3535 = vsel %vm869, %v3531, %v3533
      %3538 = vst [vmem:[#allocation3 + $0x40] sm:$0xc0] %v3534
      %3539 = vst.msk [vmem:[#allocation3 + $0x48] sm:$0xc0] %vm3109, %v3535
      %v3540 = vld [vmem:[%s246 + $0xe] sm:$0x3f]
      %v3542 = vcombine.high %v3540, %v3540
      %v3544 = vunpack.c.l.s4 1983009808
      %v3545 = vunpack.c.0.s8 %v3544
      %v3546 = vlaneseq
      %v3547 = vshrl.u32 %v3546, 7
      %v3548 = vsub.s32 %v3545, %v3547
      %v3549 = vrot.slane %v3540, %v3548
      %v3551 = vunpack.c.l.s4 1983009808
      %v3552 = vunpack.c.0.s8 %v3551
      %v3553 = vlaneseq
      %v3554 = vshrl.u32 %v3553, 7
      %v3555 = vsub.s32 %v3552, %v3554
      %v3556 = vrot.slane %v3542, %v3555
      %v3557 = vcombine.high %v3549, %v3549
      %3558 = vrot.lane.b32.xlu0 %v3549, 37
      %v3559 = vpop.permute.xlu0 %3558
      %3560 = vrot.lane.b32.xlu0 %v3557, 37
      %v3561 = vpop.permute.xlu0 %3560
      %3562 = vrot.lane.b32.xlu0 %v3556, 37
      %v3563 = vpop.permute.xlu0 %3562
      %v3564 = vsel %vm900, %v3559, %v3561
      %v3565 = vsel %vm900, %v3561, %v3563
      %3568 = vst [vmem:[#allocation3 + $0x50] sm:$0x3] %v3564
      %3569 = vst.msk [vmem:[#allocation3 + $0x58] sm:$0x3] %vm3036, %v3565
      %v3570 = vld [vmem:[%s246 + $0xe] sm:$0x3f]
      %v3572 = vcombine.low %v3570, %v3570
      %v3574 = vunpack.c.l.s4 1983009808
      %v3575 = vunpack.c.0.s8 %v3574
      %v3576 = vlaneseq
      %v3577 = vshrl.u32 %v3576, 7
      %v3578 = vsub.s32 %v3575, %v3577
      %v3579 = vrot.slane %v3572, %v3578
      %v3581 = vunpack.c.l.s4 1983009808
      %v3582 = vunpack.c.0.s8 %v3581
      %v3583 = vlaneseq
      %v3584 = vshrl.u32 %v3583, 7
      %v3585 = vsub.s32 %v3582, %v3584
      %v3586 = vrot.slane %v3570, %v3585
      %v3587 = vcombine.high %v3579, %v3579
      %3588 = vrot.lane.b32.xlu0 %v3579, 29
      %v3589 = vpop.permute.xlu0 %3588
      %3590 = vrot.lane.b32.xlu0 %v3587, 29
      %v3591 = vpop.permute.xlu0 %3590
      %3592 = vrot.lane.b32.xlu0 %v3586, 29
      %v3593 = vpop.permute.xlu0 %3592
      %v3594 = vsel %vm931, %v3589, %v3591
      %v3595 = vsel %vm931, %v3591, %v3593
      %3598 = vst [vmem:[#allocation3 + $0x50] sm:$0xc] %v3594
      %3599 = vst.msk [vmem:[#allocation3 + $0x58] sm:$0xc] %vm3057, %v3595
      %v3600 = vld [vmem:[%s246 + $0xe] sm:$0x3f]
      %v3602 = vcombine.high %v3600, %v3600
      %v3604 = vunpack.c.l.s4 1983009808
      %v3605 = vunpack.c.0.s8 %v3604
      %v3606 = vlaneseq
      %v3607 = vshrl.u32 %v3606, 7
      %v3608 = vsub.s32 %v3605, %v3607
      %v3609 = vrot.slane %v3600, %v3608
      %v3611 = vunpack.c.l.s4 1983009808
      %v3612 = vunpack.c.0.s8 %v3611
      %v3613 = vlaneseq
      %v3614 = vshrl.u32 %v3613, 7
      %v3615 = vsub.s32 %v3612, %v3614
      %v3616 = vrot.slane %v3602, %v3615
      %v3617 = vcombine.low %v3609, %v3609
      %v3618 = vcombine.low %v3616, %v3616
      %3619 = vrot.lane.b32.xlu0 %v3617, 28
      %v3620 = vpop.permute.xlu0 %3619
      %3621 = vrot.lane.b32.xlu0 %v3609, 28
      %v3622 = vpop.permute.xlu0 %3621
      %3623 = vrot.lane.b32.xlu0 %v3618, 28
      %v3624 = vpop.permute.xlu0 %3623
      %v3625 = vsel %vm963, %v3620, %v3622
      %v3626 = vsel %vm963, %v3622, %v3624
      %3629 = vst [vmem:[#allocation3 + $0x50] sm:$0x30] %v3625
      %3630 = vst.msk [vmem:[#allocation3 + $0x58] sm:$0x30] %vm3077, %v3626
      %v3631 = vld [vmem:[%s246 + $0xe] sm:$0x3f]
      %v3633 = vcombine.low %v3631, %v3631
      %v3635 = vunpack.c.l.s4 1983009808
      %v3636 = vunpack.c.0.s8 %v3635
      %v3637 = vlaneseq
      %v3638 = vshrl.u32 %v3637, 7
      %v3639 = vsub.s32 %v3636, %v3638
      %v3640 = vrot.slane %v3633, %v3639
      %v3642 = vunpack.c.l.s4 1983009808
      %v3643 = vunpack.c.0.s8 %v3642
      %v3644 = vlaneseq
      %v3645 = vshrl.u32 %v3644, 7
      %v3646 = vsub.s32 %v3643, %v3645
      %v3647 = vrot.slane %v3631, %v3646
      %v3648 = vcombine.low %v3640, %v3640
      %v3649 = vcombine.low %v3647, %v3647
      %3650 = vrot.lane.b32.xlu0 %v3648, 27
      %v3651 = vpop.permute.xlu0 %3650
      %3652 = vrot.lane.b32.xlu0 %v3640, 27
      %v3653 = vpop.permute.xlu0 %3652
      %3654 = vrot.lane.b32.xlu0 %v3649, 27
      %v3655 = vpop.permute.xlu0 %3654
      %v3656 = vsel %vm995, %v3651, %v3653
      %v3657 = vsel %vm995, %v3653, %v3655
      %3660 = vst [vmem:[#allocation3 + $0x50] sm:$0xc0] %v3656
      %3661 = vst.msk [vmem:[#allocation3 + $0x58] sm:$0xc0] %vm3109, %v3657
      %v3662 = vld [vmem:[%s246 + $0xe] sm:$0x3f]
      %v3664 = vcombine.high %v3662, %v3662
      %v3666 = vunpack.c.l.s4 1983009808
      %v3667 = vunpack.c.0.s8 %v3666
      %v3668 = vlaneseq
      %v3669 = vshrl.u32 %v3668, 7
      %v3670 = vsub.s32 %v3667, %v3669
      %v3671 = vrot.slane %v3662, %v3670
      %v3673 = vunpack.c.l.s4 1983009808
      %v3674 = vunpack.c.0.s8 %v3673
      %v3675 = vlaneseq
      %v3676 = vshrl.u32 %v3675, 7
      %v3677 = vsub.s32 %v3674, %v3676
      %v3678 = vrot.slane %v3664, %v3677
      %v3679 = vcombine.high %v3671, %v3671
      %3680 = vrot.lane.b32.xlu0 %v3671, 19
      %v3681 = vpop.permute.xlu0 %3680
      %3682 = vrot.lane.b32.xlu0 %v3679, 19
      %v3683 = vpop.permute.xlu0 %3682
      %3684 = vrot.lane.b32.xlu0 %v3678, 19
      %v3685 = vpop.permute.xlu0 %3684
      %v3686 = vsel %vm1026, %v3681, %v3683
      %v3687 = vsel %vm1026, %v3683, %v3685
      %3690 = vst [vmem:[#allocation3 + $0x60] sm:$0x3] %v3686
      %3691 = vst.msk [vmem:[#allocation3 + $0x68] sm:$0x3] %vm3036, %v3687
      %v3692 = vld [vmem:[%s246 + $0xe] sm:$0x3f]
      %v3694 = vcombine.low %v3692, %v3692
      %v3696 = vunpack.c.l.s4 1983009808
      %v3697 = vunpack.c.0.s8 %v3696
      %v3698 = vlaneseq
      %v3699 = vshrl.u32 %v3698, 7
      %v3700 = vsub.s32 %v3697, %v3699
      %v3701 = vrot.slane %v3694, %v3700
      %v3703 = vunpack.c.l.s4 1983009808
      %v3704 = vunpack.c.0.s8 %v3703
      %v3705 = vlaneseq
      %v3706 = vshrl.u32 %v3705, 7
      %v3707 = vsub.s32 %v3704, %v3706
      %v3708 = vrot.slane %v3692, %v3707
      %v3709 = vcombine.high %v3701, %v3701
      %3710 = vrot.lane.b32.xlu0 %v3701, 18
      %v3711 = vpop.permute.xlu0 %3710
      %3712 = vrot.lane.b32.xlu0 %v3709, 18
      %v3713 = vpop.permute.xlu0 %3712
      %3714 = vrot.lane.b32.xlu0 %v3708, 18
      %v3715 = vpop.permute.xlu0 %3714
      %v3716 = vsel %vm1057, %v3711, %v3713
      %v3717 = vsel %vm1057, %v3713, %v3715
      %3720 = vst [vmem:[#allocation3 + $0x60] sm:$0xc] %v3716
      %3721 = vst.msk [vmem:[#allocation3 + $0x68] sm:$0xc] %vm3057, %v3717
      %v3722 = vld [vmem:[%s246 + $0xe] sm:$0x3f]
      %v3724 = vcombine.high %v3722, %v3722
      %v3726 = vunpack.c.l.s4 1983009808
      %v3727 = vunpack.c.0.s8 %v3726
      %v3728 = vlaneseq
      %v3729 = vshrl.u32 %v3728, 7
      %v3730 = vsub.s32 %v3727, %v3729
      %v3731 = vrot.slane %v3722, %v3730
      %v3733 = vunpack.c.l.s4 1983009808
      %v3734 = vunpack.c.0.s8 %v3733
      %v3735 = vlaneseq
      %v3736 = vshrl.u32 %v3735, 7
      %v3737 = vsub.s32 %v3734, %v3736
      %v3738 = vrot.slane %v3724, %v3737
      %v3739 = vcombine.low %v3731, %v3731
      %v3740 = vcombine.low %v3738, %v3738
      %3741 = vrot.lane.b32.xlu0 %v3739, 17
      %v3742 = vpop.permute.xlu0 %3741
      %3743 = vrot.lane.b32.xlu0 %v3731, 17
      %v3744 = vpop.permute.xlu0 %3743
      %3745 = vrot.lane.b32.xlu0 %v3740, 17
      %v3746 = vpop.permute.xlu0 %3745
      %v3747 = vsel %vm1089, %v3742, %v3744
      %v3748 = vsel %vm1089, %v3744, %v3746
      %3751 = vst [vmem:[#allocation3 + $0x60] sm:$0x30] %v3747
      %3752 = vst.msk [vmem:[#allocation3 + $0x68] sm:$0x30] %vm3077, %v3748
      %v3753 = vld [vmem:[%s1] sm:$0xf]
      %v3754 = vld [vmem:[%s1 + $0x4] sm:$0xf]
      %v3755 = vld [vmem:[#allocation3] sm:$0xff]
      %v3756 = vld [vmem:[#allocation3 + $0x8] sm:$0xff]
      %v3757 = vld [vmem:[#allocation3 + $0x10] sm:$0xff]
      %v3758 = vld [vmem:[#allocation3 + $0x18] sm:$0xff]
      %v3759 = vld [vmem:[#allocation3 + $0x20] sm:$0xff]
      %v3760 = vld [vmem:[#allocation3 + $0x28] sm:$0xff]
      %v3761 = vld [vmem:[#allocation3 + $0x30] sm:$0xff]
      %v3762 = vld [vmem:[#allocation3 + $0x38] sm:$0xff]
      %v3763 = vld [vmem:[#allocation3 + $0x40] sm:$0xff]
      %v3764 = vld [vmem:[#allocation3 + $0x48] sm:$0xff]
      %v3765 = vld [vmem:[#allocation3 + $0x50] sm:$0xff]
      %v3766 = vld [vmem:[#allocation3 + $0x58] sm:$0xff]
      %v3767 = vld [vmem:[#allocation3 + $0x60] sm:$0xff]
      %v3768 = vld [vmem:[#allocation3 + $0x68] sm:$0xff]
      %v3769 = vld [vmem:[#allocation3 + $0x70] sm:$0xff]
      %v3770 = vld [vmem:[#allocation3 + $0x78] sm:$0xff]
      %v3773 = vunpack.c.l.b16 %v3753
      %v3774 = vunpack.c.l.b16 %v3754
      %v3775 = vpack.c.b16 %v3774, %v3773
      %3777 = vmatprep.subr.bf16.mxu0 %v3756
      %3778 = vmatpush1.bf16.msra.mxu0 %v3755
      %3779 = vmatprep.subr.bf16.mxu0 %v3758
      %3780 = vmatpush1.bf16.msra.mxu0 %v3757
      %3781 = vmatprep.subr.bf16.mxu0 %v3760
      %3782 = vmatpush1.bf16.msra.mxu0 %v3759
      %3783 = vmatprep.subr.bf16.mxu0 %v3762
      %3784 = vmatpush1.bf16.msra.mxu0 %v3761
      %3785 = vmatprep.subr.bf16.mxu0 %v3764
      %3786 = vmatpush1.bf16.msra.mxu0 %v3763
      %3787 = vmatprep.subr.bf16.mxu0 %v3766
      %3788 = vmatpush1.bf16.msra.mxu0 %v3765
      %3789 = vmatprep.subr.bf16.mxu0 %v3768
      %3790 = vmatpush1.bf16.msra.mxu0 %v3767
      %3791 = vmatprep.subr.bf16.mxu0 %v3770
      %3792 = vmatpush1.bf16.msra.mxu0 %v3769
      %3793 = vmatprep.subr.bf16.mxu0 0
      %3794 = vmatpush1.bf16.msra.mxu0 0
      %3795 = vmatprep.subr.bf16.mxu0 0
      %3796 = vmatpush1.bf16.msra.mxu0 0
      %3797 = vmatprep.subr.bf16.mxu0 0
      %3798 = vmatpush1.bf16.msra.mxu0 0
      %3799 = vmatprep.subr.bf16.mxu0 0
      %3800 = vmatpush1.bf16.msra.mxu0 0
      %3801 = vmatprep.subr.bf16.mxu0 0
      %3802 = vmatpush1.bf16.msra.mxu0 0
      %3803 = vmatprep.subr.bf16.mxu0 0
      %3804 = vmatpush1.bf16.msra.mxu0 0
      %3805 = vmatprep.subr.bf16.mxu0 0
      %3806 = vmatpush1.bf16.msra.mxu0 0
      %3807 = vmatprep.subr.bf16.mxu0 0
      %3808 = vmatpush1.bf16.msra.mxu0 0
      %3809 = vmatprep.mubr.bf16.mxu0 0
      %3810 = vmatmul.mubr.bf16.gmra.mrb[0].mxu0 %v3775
      %v3811 = vpop.f32.mrb[0].mxu0
      %v3812 = vadd.f32 0.0, %v3811
      %v3813 = vpop.f32.mrb[0].mxu0
      %v3814 = vadd.f32 0.0, %v3813
      %v3815 = vpop.f32.mrb[0].mxu0
      %v3816 = vadd.f32 0.0, %v3815
      %v3817 = vpop.f32.mrb[0].mxu0
      %v3818 = vadd.f32 0.0, %v3817
      %3819 = vdwg.mxu0
      %3820 = vst [vmem:[#allocation5 + $0x30] sm:$0xff] %v3812
      %vm3821 = vcmask 850944
      %3822 = vst.msk [vmem:[#allocation5 + $0x38] sm:$0xff] %vm3821, %v3814
      %v3823 = vld [vmem:[%s3] sm:$0xff]
      %3825 = vset.pattern.permute.xlu0 0
      %3826 = vperm.xlu0 %3825, %v3823
      %v3827 = vpop.permute.xlu0 %3826
      %v3829 = vadd.f32 %v3816, %v3827
      %v3830 = vadd.f32 %v3818, %v3827
      %v3831 = vmax.f32 %v3829, 0.0
      %v3832 = vmax.f32 %v3830, 0.0
      %v3833 = vld [vmem:[%s5 + $0x6] sm:$0x3]
      %v3835 = vlaneseq
      %v3836 = vshrl.u32 %v3835, 7
      %v3837 = vsub.s32 0, %v3836
      %v3838 = vrot.slane %v3833, %v3837
      %v3839 = vlaneseq
      %v3840 = vshrl.u32 %v3839, 7
      %v3841 = vsub.s32 1, %v3840
      %v3842 = vrot.slane %v3833, %v3841
      %v3845 = vmul.f32 %v3831, %v3838
      %v3846 = vmul.f32 %v3832, %v3842
      %v3847 = vpack.c.bf16 %v3845, %v3845
      %v3848 = vpack.c.bf16 %v3846, %v3846
      %v3851 = vunpack.c.l.b16 %v3847
      %v3852 = vunpack.c.l.b16 %v3848
      %v3853 = vpack.c.b16 %v3852, %v3851
      %vm3855 = vcmask 1043456
      %vm3856 = vmor %vm259, %vm3855
      %3857 = vst.msk [vmem:[#allocation2 + $0x1c] sm:$0xff] %vm3856, %v3853
      %v3858 = vld [vmem:[#allocation2] sm:$0xff]
      %v3859 = vld [vmem:[#allocation2 + $0x8] sm:$0xf]
      %3862 = vrot.lane.b32.xlu0 %v3858, 111
      %v3863 = vpop.permute.xlu0 %3862
      %3864 = vrot.lane.b32.xlu0 %v3859, 111
      %v3865 = vpop.permute.xlu0 %3864
      %v3866 = vrot.slane %v3863, 4
      %v3867 = vrot.slane %v3865, 4
      %vm3868 = vcmask 1043456
      %v3869 = vsel %vm3868, %v3866, %v3867
      %v3870 = vsel %vm286, %v3863, %v3869
      %3872 = vst [vmem:[#allocation4] sm:$0xff] %v3870
      %v3873 = vld [vmem:[#allocation2] sm:$0xff]
      %v3874 = vld [vmem:[#allocation2 + $0x8] sm:$0xf]
      %3877 = vrot.lane.b32.xlu0 %v3873, 110
      %v3878 = vpop.permute.xlu0 %3877
      %3879 = vrot.lane.b32.xlu0 %v3874, 110
      %v3880 = vpop.permute.xlu0 %3879
      %v3881 = vrot.slane %v3878, 4
      %v3882 = vrot.slane %v3880, 4
      %v3883 = vsel %vm3868, %v3881, %v3882
      %v3884 = vsel %vm317, %v3878, %v3883
      %3886 = vst [vmem:[#allocation4 + $0x8] sm:$0xff] %v3884
      %v3887 = vld [vmem:[#allocation2] sm:$0xff]
      %v3888 = vld [vmem:[#allocation2 + $0x8] sm:$0xf]
      %3891 = vrot.lane.b32.xlu0 %v3887, 109
      %v3892 = vpop.permute.xlu0 %3891
      %3893 = vrot.lane.b32.xlu0 %v3888, 109
      %v3894 = vpop.permute.xlu0 %3893
      %v3895 = vrot.slane %v3892, 4
      %v3896 = vrot.slane %v3894, 4
      %v3897 = vsel %vm3868, %v3895, %v3896
      %v3898 = vsel %vm349, %v3892, %v3897
      %3900 = vst [vmem:[#allocation4 + $0x10] sm:$0xff] %v3898
      %v3901 = vld [vmem:[#allocation2] sm:$0xff]
      %v3902 = vld [vmem:[#allocation2 + $0x8] sm:$0xf]
      %3905 = vrot.lane.b32.xlu0 %v3901, 101
      %v3906 = vpop.permute.xlu0 %3905
      %3907 = vrot.lane.b32.xlu0 %v3902, 101
      %v3908 = vpop.permute.xlu0 %3907
      %v3909 = vrot.slane %v3906, 4
      %v3910 = vrot.slane %v3908, 4
      %v3911 = vsel %vm3868, %v3909, %v3910
      %v3912 = vsel %vm381, %v3906, %v3911
      %3914 = vst [vmem:[#allocation4 + $0x18] sm:$0xff] %v3912
      %v3915 = vld [vmem:[#allocation2] sm:$0xff]
      %v3916 = vld [vmem:[#allocation2 + $0x8] sm:$0xf]
      %3919 = vrot.lane.b32.xlu0 %v3915, 100
      %v3920 = vpop.permute.xlu0 %3919
      %3921 = vrot.lane.b32.xlu0 %v3916, 100
      %v3922 = vpop.permute.xlu0 %3921
      %v3923 = vrot.slane %v3920, 4
      %v3924 = vrot.slane %v3922, 4
      %v3925 = vsel %vm3868, %v3923, %v3924
      %v3926 = vsel %vm412, %v3920, %v3925
      %3928 = vst [vmem:[#allocation4 + $0x20] sm:$0xff] %v3926
      %v3929 = vld [vmem:[#allocation2] sm:$0xff]
      %v3930 = vld [vmem:[#allocation2 + $0x8] sm:$0xf]
      %3933 = vrot.lane.b32.xlu0 %v3929, 99
      %v3934 = vpop.permute.xlu0 %3933
      %3935 = vrot.lane.b32.xlu0 %v3930, 99
      %v3936 = vpop.permute.xlu0 %3935
      %v3937 = vrot.slane %v3934, 4
      %v3938 = vrot.slane %v3936, 4
      %v3939 = vsel %vm3868, %v3937, %v3938
      %v3940 = vsel %vm443, %v3934, %v3939
      %3942 = vst [vmem:[#allocation4 + $0x28] sm:$0xff] %v3940
      %v3943 = vld [vmem:[#allocation2] sm:$0xff]
      %v3944 = vld [vmem:[#allocation2 + $0x8] sm:$0xf]
      %3947 = vrot.lane.b32.xlu0 %v3943, 91
      %v3948 = vpop.permute.xlu0 %3947
      %3949 = vrot.lane.b32.xlu0 %v3944, 91
      %v3950 = vpop.permute.xlu0 %3949
      %v3951 = vrot.slane %v3948, 4
      %v3952 = vrot.slane %v3950, 4
      %v3953 = vsel %vm3868, %v3951, %v3952
      %v3954 = vsel %vm475, %v3948, %v3953
      %3956 = vst [vmem:[#allocation4 + $0x30] sm:$0xff] %v3954
      %v3957 = vld [vmem:[#allocation2] sm:$0xff]
      %v3958 = vld [vmem:[#allocation2 + $0x8] sm:$0xf]
      %3961 = vrot.lane.b32.xlu0 %v3957, 90
      %v3962 = vpop.permute.xlu0 %3961
      %3963 = vrot.lane.b32.xlu0 %v3958, 90
      %v3964 = vpop.permute.xlu0 %3963
      %v3965 = vrot.slane %v3962, 4
      %v3966 = vrot.slane %v3964, 4
      %v3967 = vsel %vm3868, %v3965, %v3966
      %v3968 = vsel %vm507, %v3962, %v3967
      %3970 = vst [vmem:[#allocation4 + $0x38] sm:$0xff] %v3968
      %v3971 = vld [vmem:[#allocation2] sm:$0xff]
      %v3972 = vld [vmem:[#allocation2 + $0x8] sm:$0xf]
      %3975 = vrot.lane.b32.xlu0 %v3971, 89
      %v3976 = vpop.permute.xlu0 %3975
      %3977 = vrot.lane.b32.xlu0 %v3972, 89
      %v3978 = vpop.permute.xlu0 %3977
      %v3979 = vrot.slane %v3976, 4
      %v3980 = vrot.slane %v3978, 4
      %v3981 = vsel %vm3868, %v3979, %v3980
      %v3982 = vsel %vm538, %v3976, %v3981
      %3984 = vst [vmem:[#allocation4 + $0x40] sm:$0xff] %v3982
      %v3985 = vld [vmem:[#allocation2] sm:$0xff]
      %v3986 = vld [vmem:[#allocation2 + $0x8] sm:$0xf]
      %3989 = vrot.lane.b32.xlu0 %v3985, 11
      %v3990 = vpop.permute.xlu0 %3989
      %3991 = vrot.lane.b32.xlu0 %v3986, 11
      %v3992 = vpop.permute.xlu0 %3991
      %v3993 = vrot.slane %v3990, 4
      %v3994 = vrot.slane %v3992, 4
      %v3995 = vsel %vm3868, %v3993, %v3994
      %v3996 = vsel %vm569, %v3990, %v3995
      %3998 = vst [vmem:[#allocation4 + $0x48] sm:$0xff] %v3996
      %v3999 = vld [vmem:[#allocation2] sm:$0xff]
      %v4000 = vld [vmem:[#allocation2 + $0x8] sm:$0xf]
      %4003 = vrot.lane.b32.xlu0 %v3999, 10
      %v4004 = vpop.permute.xlu0 %4003
      %4005 = vrot.lane.b32.xlu0 %v4000, 10
      %v4006 = vpop.permute.xlu0 %4005
      %v4007 = vrot.slane %v4004, 4
      %v4008 = vrot.slane %v4006, 4
      %v4009 = vsel %vm3868, %v4007, %v4008
      %v4010 = vsel %vm601, %v4004, %v4009
      %4012 = vst [vmem:[#allocation4 + $0x50] sm:$0xff] %v4010
      %v4013 = vld [vmem:[#allocation2] sm:$0xff]
      %v4014 = vld [vmem:[#allocation2 + $0x8] sm:$0xf]
      %4017 = vrot.lane.b32.xlu0 %v4013, 9
      %v4018 = vpop.permute.xlu0 %4017
      %4019 = vrot.lane.b32.xlu0 %v4014, 9
      %v4020 = vpop.permute.xlu0 %4019
      %v4021 = vrot.slane %v4018, 4
      %v4022 = vrot.slane %v4020, 4
      %v4023 = vsel %vm3868, %v4021, %v4022
      %v4024 = vsel %vm633, %v4018, %v4023
      %4026 = vst [vmem:[#allocation4 + $0x58] sm:$0xff] %v4024
      %v4027 = vld [vmem:[#allocation2] sm:$0xff]
      %v4028 = vld [vmem:[#allocation2 + $0x8] sm:$0xf]
      %4031 = vrot.lane.b32.xlu0 %v4027, 1
      %v4032 = vpop.permute.xlu0 %4031
      %4033 = vrot.lane.b32.xlu0 %v4028, 1
      %v4034 = vpop.permute.xlu0 %4033
      %v4035 = vrot.slane %v4032, 4
      %v4036 = vrot.slane %v4034, 4
      %v4037 = vsel %vm3868, %v4035, %v4036
      %v4038 = vsel %vm664, %v4032, %v4037
      %4040 = vst [vmem:[#allocation4 + $0x60] sm:$0xff] %v4038
      %v4041 = vld [vmem:[#allocation2 + $0x4] sm:$0xff]
      %4042 = vst [vmem:[#allocation4 + $0x68] sm:$0xff] %v4041
      %v4043 = vld [vmem:[#allocation2 + $0x4] sm:$0xff]
      %v4044 = vld [vmem:[#allocation2 + $0xc] sm:$0xf]
      %4047 = vrot.lane.b32.xlu0 %v4043, 127
      %v4048 = vpop.permute.xlu0 %4047
      %4049 = vrot.lane.b32.xlu0 %v4044, 127
      %v4050 = vpop.permute.xlu0 %4049
      %v4051 = vrot.slane %v4048, 4
      %v4052 = vrot.slane %v4050, 4
      %v4053 = vsel %vm3868, %v4051, %v4052
      %v4054 = vsel %vm711, %v4048, %v4053
      %4056 = vst [vmem:[#allocation4 + $0x70] sm:$0xff] %v4054
      %v4057 = vld [vmem:[#allocation2 + $0x4] sm:$0xff]
      %v4058 = vld [vmem:[#allocation2 + $0xc] sm:$0xf]
      %4061 = vrot.lane.b32.xlu0 %v4057, 119
      %v4062 = vpop.permute.xlu0 %4061
      %4063 = vrot.lane.b32.xlu0 %v4058, 119
      %v4064 = vpop.permute.xlu0 %4063
      %v4065 = vrot.slane %v4062, 4
      %v4066 = vrot.slane %v4064, 4
      %v4067 = vsel %vm3868, %v4065, %v4066
      %v4068 = vsel %vm743, %v4062, %v4067
      %4070 = vst [vmem:[#allocation4 + $0x78] sm:$0xff] %v4068
      %v4071 = vld [vmem:[#allocation2 + $0x4] sm:$0xff]
      %v4072 = vld [vmem:[#allocation2 + $0xc] sm:$0xf]
      %4075 = vrot.lane.b32.xlu0 %v4071, 118
      %v4076 = vpop.permute.xlu0 %4075
      %4077 = vrot.lane.b32.xlu0 %v4072, 118
      %v4078 = vpop.permute.xlu0 %4077
      %v4079 = vrot.slane %v4076, 4
      %v4080 = vrot.slane %v4078, 4
      %v4081 = vsel %vm3868, %v4079, %v4080
      %v4082 = vsel %vm774, %v4076, %v4081
      %4084 = vst [vmem:[#allocation4 + $0x80] sm:$0xff] %v4082
      %v4085 = vld [vmem:[#allocation2 + $0x4] sm:$0xff]
      %v4086 = vld [vmem:[#allocation2 + $0xc] sm:$0xf]
      %4089 = vrot.lane.b32.xlu0 %v4085, 117
      %v4090 = vpop.permute.xlu0 %4089
      %4091 = vrot.lane.b32.xlu0 %v4086, 117
      %v4092 = vpop.permute.xlu0 %4091
      %v4093 = vrot.slane %v4090, 4
      %v4094 = vrot.slane %v4092, 4
      %v4095 = vsel %vm3868, %v4093, %v4094
      %v4096 = vsel %vm805, %v4090, %v4095
      %4098 = vst [vmem:[#allocation4 + $0x88] sm:$0xff] %v4096
      %v4099 = vld [vmem:[#allocation2 + $0x4] sm:$0xff]
      %v4100 = vld [vmem:[#allocation2 + $0xc] sm:$0xf]
      %4103 = vrot.lane.b32.xlu0 %v4099, 39
      %v4104 = vpop.permute.xlu0 %4103
      %4105 = vrot.lane.b32.xlu0 %v4100, 39
      %v4106 = vpop.permute.xlu0 %4105
      %v4107 = vrot.slane %v4104, 4
      %v4108 = vrot.slane %v4106, 4
      %v4109 = vsel %vm3868, %v4107, %v4108
      %v4110 = vsel %vm837, %v4104, %v4109
      %4112 = vst [vmem:[#allocation4 + $0x90] sm:$0xff] %v4110
      %v4113 = vld [vmem:[#allocation2 + $0x4] sm:$0xff]
      %v4114 = vld [vmem:[#allocation2 + $0xc] sm:$0xf]
      %4117 = vrot.lane.b32.xlu0 %v4113, 38
      %v4118 = vpop.permute.xlu0 %4117
      %4119 = vrot.lane.b32.xlu0 %v4114, 38
      %v4120 = vpop.permute.xlu0 %4119
      %v4121 = vrot.slane %v4118, 4
      %v4122 = vrot.slane %v4120, 4
      %v4123 = vsel %vm3868, %v4121, %v4122
      %v4124 = vsel %vm869, %v4118, %v4123
      %4126 = vst [vmem:[#allocation4 + $0x98] sm:$0xff] %v4124
      %v4127 = vld [vmem:[#allocation2 + $0x4] sm:$0xff]
      %v4128 = vld [vmem:[#allocation2 + $0xc] sm:$0xf]
      %4131 = vrot.lane.b32.xlu0 %v4127, 37
      %v4132 = vpop.permute.xlu0 %4131
      %4133 = vrot.lane.b32.xlu0 %v4128, 37
      %v4134 = vpop.permute.xlu0 %4133
      %v4135 = vrot.slane %v4132, 4
      %v4136 = vrot.slane %v4134, 4
      %v4137 = vsel %vm3868, %v4135, %v4136
      %v4138 = vsel %vm900, %v4132, %v4137
      %4140 = vst [vmem:[#allocation4 + $0xa0] sm:$0xff] %v4138
      %v4141 = vld [vmem:[#allocation2 + $0x4] sm:$0xff]
      %v4142 = vld [vmem:[#allocation2 + $0xc] sm:$0xf]
      %4145 = vrot.lane.b32.xlu0 %v4141, 29
      %v4146 = vpop.permute.xlu0 %4145
      %4147 = vrot.lane.b32.xlu0 %v4142, 29
      %v4148 = vpop.permute.xlu0 %4147
      %v4149 = vrot.slane %v4146, 4
      %v4150 = vrot.slane %v4148, 4
      %v4151 = vsel %vm3868, %v4149, %v4150
      %v4152 = vsel %vm931, %v4146, %v4151
      %4154 = vst [vmem:[#allocation4 + $0xa8] sm:$0xff] %v4152
      %v4155 = vld [vmem:[#allocation2 + $0x4] sm:$0xff]
      %v4156 = vld [vmem:[#allocation2 + $0xc] sm:$0xf]
      %4159 = vrot.lane.b32.xlu0 %v4155, 28
      %v4160 = vpop.permute.xlu0 %4159
      %4161 = vrot.lane.b32.xlu0 %v4156, 28
      %v4162 = vpop.permute.xlu0 %4161
      %v4163 = vrot.slane %v4160, 4
      %v4164 = vrot.slane %v4162, 4
      %v4165 = vsel %vm3868, %v4163, %v4164
      %v4166 = vsel %vm963, %v4160, %v4165
      %4168 = vst [vmem:[#allocation4 + $0xb0] sm:$0xff] %v4166
      %v4169 = vld [vmem:[#allocation2 + $0x4] sm:$0xff]
      %v4170 = vld [vmem:[#allocation2 + $0xc] sm:$0xf]
      %4173 = vrot.lane.b32.xlu0 %v4169, 27
      %v4174 = vpop.permute.xlu0 %4173
      %4175 = vrot.lane.b32.xlu0 %v4170, 27
      %v4176 = vpop.permute.xlu0 %4175
      %v4177 = vrot.slane %v4174, 4
      %v4178 = vrot.slane %v4176, 4
      %v4179 = vsel %vm3868, %v4177, %v4178
      %v4180 = vsel %vm995, %v4174, %v4179
      %4182 = vst [vmem:[#allocation4 + $0xb8] sm:$0xff] %v4180
      %v4183 = vld [vmem:[#allocation2 + $0x4] sm:$0xff]
      %v4184 = vld [vmem:[#allocation2 + $0xc] sm:$0xf]
      %4187 = vrot.lane.b32.xlu0 %v4183, 19
      %v4188 = vpop.permute.xlu0 %4187
      %4189 = vrot.lane.b32.xlu0 %v4184, 19
      %v4190 = vpop.permute.xlu0 %4189
      %v4191 = vrot.slane %v4188, 4
      %v4192 = vrot.slane %v4190, 4
      %v4193 = vsel %vm3868, %v4191, %v4192
      %v4194 = vsel %vm1026, %v4188, %v4193
      %4196 = vst [vmem:[#allocation4 + $0xc0] sm:$0xff] %v4194
      %v4197 = vld [vmem:[#allocation2 + $0x4] sm:$0xff]
      %v4198 = vld [vmem:[#allocation2 + $0xc] sm:$0xf]
      %4201 = vrot.lane.b32.xlu0 %v4197, 18
      %v4202 = vpop.permute.xlu0 %4201
      %4203 = vrot.lane.b32.xlu0 %v4198, 18
      %v4204 = vpop.permute.xlu0 %4203
      %v4205 = vrot.slane %v4202, 4
      %v4206 = vrot.slane %v4204, 4
      %v4207 = vsel %vm3868, %v4205, %v4206
      %v4208 = vsel %vm1057, %v4202, %v4207
      %4210 = vst [vmem:[#allocation4 + $0xc8] sm:$0xff] %v4208
      %v4211 = vld [vmem:[#allocation2 + $0x4] sm:$0xff]
      %v4212 = vld [vmem:[#allocation2 + $0xc] sm:$0xf]
      %4215 = vrot.lane.b32.xlu0 %v4211, 17
      %v4216 = vpop.permute.xlu0 %4215
      %4217 = vrot.lane.b32.xlu0 %v4212, 17
      %v4218 = vpop.permute.xlu0 %4217
      %v4219 = vrot.slane %v4216, 4
      %v4220 = vrot.slane %v4218, 4
      %v4221 = vsel %vm3868, %v4219, %v4220
      %v4222 = vsel %vm1089, %v4216, %v4221
      %4224 = vst [vmem:[#allocation4 + $0xd0] sm:$0xff] %v4222
      %v4225 = vld [vmem:[%s2] sm:$0xff]
      %v4226 = vld [vmem:[#allocation4] sm:$0xff]
      %v4227 = vld [vmem:[#allocation4 + $0x8] sm:$0xff]
      %v4228 = vld [vmem:[#allocation4 + $0x10] sm:$0xff]
      %v4229 = vld [vmem:[#allocation4 + $0x18] sm:$0xff]
      %v4230 = vld [vmem:[#allocation4 + $0x20] sm:$0xff]
      %v4231 = vld [vmem:[#allocation4 + $0x28] sm:$0xff]
      %v4232 = vld [vmem:[#allocation4 + $0x30] sm:$0xff]
      %v4233 = vld [vmem:[#allocation4 + $0x38] sm:$0xff]
      %v4234 = vld [vmem:[#allocation4 + $0x40] sm:$0xff]
      %v4235 = vld [vmem:[#allocation4 + $0x48] sm:$0xff]
      %v4236 = vld [vmem:[#allocation4 + $0x50] sm:$0xff]
      %v4237 = vld [vmem:[#allocation4 + $0x58] sm:$0xff]
      %v4238 = vld [vmem:[#allocation4 + $0x60] sm:$0xff]
      %v4239 = vld [vmem:[#allocation4 + $0x68] sm:$0xff]
      %v4240 = vld [vmem:[#allocation4 + $0x70] sm:$0xff]
      %v4241 = vld [vmem:[#allocation4 + $0x78] sm:$0xff]
      %v4242 = vld [vmem:[#allocation4 + $0x80] sm:$0xff]
      %v4243 = vld [vmem:[#allocation4 + $0x88] sm:$0xff]
      %v4244 = vld [vmem:[#allocation4 + $0x90] sm:$0xff]
      %v4245 = vld [vmem:[#allocation4 + $0x98] sm:$0xff]
      %v4246 = vld [vmem:[#allocation4 + $0xa0] sm:$0xff]
      %v4247 = vld [vmem:[#allocation4 + $0xa8] sm:$0xff]
      %v4248 = vld [vmem:[#allocation4 + $0xb0] sm:$0xff]
      %v4249 = vld [vmem:[#allocation4 + $0xb8] sm:$0xff]
      %v4250 = vld [vmem:[#allocation4 + $0xc0] sm:$0xff]
      %v4251 = vld [vmem:[#allocation4 + $0xc8] sm:$0xff]
      %v4252 = vld [vmem:[#allocation4 + $0xd0] sm:$0xff]
      %v4253 = vld [vmem:[%s4] sm:$0xff]
      %4255 = vset.pattern.permute.xlu0 0
      %4256 = vperm.xlu0 %4255, %v4253
      %v4257 = vpop.permute.xlu0 %4256
      %v4260 = vunpack.c.l.b16 %v4225
      %v4261 = vunpack.c.h.b16 %v4225
      %v4262 = vpack.c.b16 %v4260, %v4260
      %v4263 = vpack.c.b16 %v4261, %v4261
      %v4292 = vunpack.c.l.b16 %v4226
      %v4293 = vunpack.c.h.b16 %v4226
      %v4294 = vunpack.c.l.b16 %v4227
      %v4295 = vunpack.c.h.b16 %v4227
      %v4296 = vunpack.c.l.b16 %v4228
      %v4297 = vunpack.c.h.b16 %v4228
      %v4298 = vunpack.c.l.b16 %v4229
      %v4299 = vunpack.c.h.b16 %v4229
      %v4300 = vunpack.c.l.b16 %v4230
      %v4301 = vunpack.c.h.b16 %v4230
      %v4302 = vunpack.c.l.b16 %v4231
      %v4303 = vunpack.c.h.b16 %v4231
      %v4304 = vunpack.c.l.b16 %v4232
      %v4305 = vunpack.c.h.b16 %v4232
      %v4306 = vunpack.c.l.b16 %v4233
      %v4307 = vunpack.c.h.b16 %v4233
      %v4308 = vunpack.c.l.b16 %v4234
      %v4309 = vunpack.c.h.b16 %v4234
      %v4310 = vunpack.c.l.b16 %v4235
      %v4311 = vunpack.c.h.b16 %v4235
      %v4312 = vunpack.c.l.b16 %v4236
      %v4313 = vunpack.c.h.b16 %v4236
      %v4314 = vunpack.c.l.b16 %v4237
      %v4315 = vunpack.c.h.b16 %v4237
      %v4316 = vunpack.c.l.b16 %v4238
      %v4317 = vunpack.c.h.b16 %v4238
      %v4318 = vunpack.c.l.b16 %v4239
      %v4319 = vunpack.c.h.b16 %v4239
      %v4320 = vunpack.c.l.b16 %v4240
      %v4321 = vunpack.c.h.b16 %v4240
      %v4322 = vunpack.c.l.b16 %v4241
      %v4323 = vunpack.c.h.b16 %v4241
      %v4324 = vunpack.c.l.b16 %v4242
      %v4325 = vunpack.c.h.b16 %v4242
      %v4326 = vunpack.c.l.b16 %v4243
      %v4327 = vunpack.c.h.b16 %v4243
      %v4328 = vunpack.c.l.b16 %v4244
      %v4329 = vunpack.c.h.b16 %v4244
      %v4330 = vunpack.c.l.b16 %v4245
      %v4331 = vunpack.c.h.b16 %v4245
      %v4332 = vunpack.c.l.b16 %v4246
      %v4333 = vunpack.c.h.b16 %v4246
      %v4334 = vunpack.c.l.b16 %v4247
      %v4335 = vunpack.c.h.b16 %v4247
      %v4336 = vunpack.c.l.b16 %v4248
      %v4337 = vunpack.c.h.b16 %v4248
      %v4338 = vunpack.c.l.b16 %v4249
      %v4339 = vunpack.c.h.b16 %v4249
      %v4340 = vunpack.c.l.b16 %v4250
      %v4341 = vunpack.c.h.b16 %v4250
      %v4342 = vunpack.c.l.b16 %v4251
      %v4343 = vunpack.c.h.b16 %v4251
      %v4344 = vunpack.c.l.b16 %v4252
      %v4345 = vunpack.c.h.b16 %v4252
      %v4346 = vpack.c.b16 %v4294, %v4292
      %v4347 = vpack.c.b16 %v4295, %v4293
      %v4348 = vpack.c.b16 %v4298, %v4296
      %v4349 = vpack.c.b16 %v4299, %v4297
      %v4350 = vpack.c.b16 %v4302, %v4300
      %v4351 = vpack.c.b16 %v4303, %v4301
      %v4352 = vpack.c.b16 %v4306, %v4304
      %v4353 = vpack.c.b16 %v4307, %v4305
      %v4354 = vpack.c.b16 %v4310, %v4308
      %v4355 = vpack.c.b16 %v4311, %v4309
      %v4356 = vpack.c.b16 %v4314, %v4312
      %v4357 = vpack.c.b16 %v4315, %v4313
      %v4358 = vpack.c.b16 %v4318, %v4316
      %v4359 = vpack.c.b16 %v4319, %v4317
      %v4360 = vpack.c.b16 %v4322, %v4320
      %v4361 = vpack.c.b16 %v4323, %v4321
      %v4362 = vpack.c.b16 %v4326, %v4324
      %v4363 = vpack.c.b16 %v4327, %v4325
      %v4364 = vpack.c.b16 %v4330, %v4328
      %v4365 = vpack.c.b16 %v4331, %v4329
      %v4366 = vpack.c.b16 %v4334, %v4332
      %v4367 = vpack.c.b16 %v4335, %v4333
      %v4368 = vpack.c.b16 %v4338, %v4336
      %v4369 = vpack.c.b16 %v4339, %v4337
      %v4370 = vpack.c.b16 %v4342, %v4340
      %v4371 = vpack.c.b16 %v4343, %v4341
      %v4372 = vpack.c.b16 %v4344, %v4344
      %v4373 = vpack.c.b16 %v4345, %v4345
      %vm4400 = vcmask 719872
      %v4402 = vsel %vm4400, %v4263, 0
      %v4405 = vsel %vm3855, %v4372, 0
      %v4408 = vsel %vm3855, %v4373, 0
      %4410 = vmatprep.subr.bf16.mxu0 %v4347
      %4411 = vmatpush1.bf16.msra.mxu0 %v4346
      %4412 = vmatprep.subr.bf16.mxu0 %v4349
      %4413 = vmatpush1.bf16.msra.mxu0 %v4348
      %4414 = vmatprep.subr.bf16.mxu0 %v4351
      %4415 = vmatpush1.bf16.msra.mxu0 %v4350
      %4416 = vmatprep.subr.bf16.mxu0 %v4353
      %4417 = vmatpush1.bf16.msra.mxu0 %v4352
      %4418 = vmatprep.subr.bf16.mxu0 %v4355
      %4419 = vmatpush1.bf16.msra.mxu0 %v4354
      %4420 = vmatprep.subr.bf16.mxu0 %v4357
      %4421 = vmatpush1.bf16.msra.mxu0 %v4356
      %4422 = vmatprep.subr.bf16.mxu0 %v4359
      %4423 = vmatpush1.bf16.msra.mxu0 %v4358
      %4424 = vmatprep.subr.bf16.mxu0 %v4361
      %4425 = vmatpush1.bf16.msra.mxu0 %v4360
      %4426 = vmatprep.subr.bf16.mxu0 %v4363
      %4427 = vmatpush1.bf16.msra.mxu0 %v4362
      %4428 = vmatprep.subr.bf16.mxu0 %v4365
      %4429 = vmatpush1.bf16.msra.mxu0 %v4364
      %4430 = vmatprep.subr.bf16.mxu0 %v4367
      %4431 = vmatpush1.bf16.msra.mxu0 %v4366
      %4432 = vmatprep.subr.bf16.mxu0 %v4369
      %4433 = vmatpush1.bf16.msra.mxu0 %v4368
      %4434 = vmatprep.subr.bf16.mxu0 %v4371
      %4435 = vmatpush1.bf16.msra.mxu0 %v4370
      %4436 = vmatprep.subr.bf16.mxu0 %v4408
      %4437 = vmatpush1.bf16.msra.mxu0 %v4405
      %4438 = vmatprep.subr.bf16.mxu0 0
      %4439 = vmatpush1.bf16.msra.mxu0 0
      %4440 = vmatprep.subr.bf16.mxu0 0
      %4441 = vmatpush1.bf16.msra.mxu0 0
      %4442 = vmatprep.mubr.bf16.mxu0 %v4402
      %4443 = vmatmul.mubr.bf16.gmra.mrb[0].mxu0 %v4262
      %v4444 = vpop.f32.mrb[0].mxu0
      %v4445 = vadd.f32 %v4257, %v4444
      %v4446 = vpop.f32.mrb[0].mxu0
      %v4447 = vadd.f32 %v4257, %v4446
      %v4448 = vpop.f32.mrb[0].mxu0
      %v4449 = vpop.f32.mrb[0].mxu0
      %4450 = vdwg.mxu0
      %v4451 = vld [vmem:[#allocation5] sm:$0xff]
      %v4452 = vld [vmem:[#allocation5 + $0x8] sm:$0xff]
      %v4453 = vadd.f32 %v4445, %v4451
      %v4454 = vadd.f32 %v4447, %v4452
      %v4455 = vmax.f32 %v4453, 0.0
      %v4456 = vmax.f32 %v4454, 0.0
      %4457 = vst [vmem:[%s251] sm:$0xff] %v4455
      %4458 = vst [vmem:[%s251 + $0x8] sm:$0xff] %v4456
      %v4459 = vld [vmem:[#allocation2 + $0x8] sm:$0xff]
      %v4460 = vld [vmem:[#allocation2 + $0x10] sm:$0xf]
      %4463 = vrot.lane.b32.xlu0 %v4459, 111
      %v4464 = vpop.permute.xlu0 %4463
      %4465 = vrot.lane.b32.xlu0 %v4460, 111
      %v4466 = vpop.permute.xlu0 %4465
      %v4467 = vrot.slane %v4464, 4
      %v4468 = vrot.slane %v4466, 4
      %v4469 = vsel %vm3868, %v4467, %v4468
      %v4470 = vsel %vm286, %v4464, %v4469
      %4472 = vst [vmem:[#allocation4] sm:$0xff] %v4470
      %v4473 = vld [vmem:[#allocation2 + $0x8] sm:$0xff]
      %v4474 = vld [vmem:[#allocation2 + $0x10] sm:$0xf]
      %4477 = vrot.lane.b32.xlu0 %v4473, 110
      %v4478 = vpop.permute.xlu0 %4477
      %4479 = vrot.lane.b32.xlu0 %v4474, 110
      %v4480 = vpop.permute.xlu0 %4479
      %v4481 = vrot.slane %v4478, 4
      %v4482 = vrot.slane %v4480, 4
      %v4483 = vsel %vm3868, %v4481, %v4482
      %v4484 = vsel %vm317, %v4478, %v4483
      %4486 = vst [vmem:[#allocation4 + $0x8] sm:$0xff] %v4484
      %v4487 = vld [vmem:[#allocation2 + $0x8] sm:$0xff]
      %v4488 = vld [vmem:[#allocation2 + $0x10] sm:$0xf]
      %4491 = vrot.lane.b32.xlu0 %v4487, 109
      %v4492 = vpop.permute.xlu0 %4491
      %4493 = vrot.lane.b32.xlu0 %v4488, 109
      %v4494 = vpop.permute.xlu0 %4493
      %v4495 = vrot.slane %v4492, 4
      %v4496 = vrot.slane %v4494, 4
      %v4497 = vsel %vm3868, %v4495, %v4496
      %v4498 = vsel %vm349, %v4492, %v4497
      %4500 = vst [vmem:[#allocation4 + $0x10] sm:$0xff] %v4498
      %v4501 = vld [vmem:[#allocation2 + $0x8] sm:$0xff]
      %v4502 = vld [vmem:[#allocation2 + $0x10] sm:$0xf]
      %4505 = vrot.lane.b32.xlu0 %v4501, 101
      %v4506 = vpop.permute.xlu0 %4505
      %4507 = vrot.lane.b32.xlu0 %v4502, 101
      %v4508 = vpop.permute.xlu0 %4507
      %v4509 = vrot.slane %v4506, 4
      %v4510 = vrot.slane %v4508, 4
      %v4511 = vsel %vm3868, %v4509, %v4510
      %v4512 = vsel %vm381, %v4506, %v4511
      %4514 = vst [vmem:[#allocation4 + $0x18] sm:$0xff] %v4512
      %v4515 = vld [vmem:[#allocation2 + $0x8] sm:$0xff]
      %v4516 = vld [vmem:[#allocation2 + $0x10] sm:$0xf]
      %4519 = vrot.lane.b32.xlu0 %v4515, 100
      %v4520 = vpop.permute.xlu0 %4519
      %4521 = vrot.lane.b32.xlu0 %v4516, 100
      %v4522 = vpop.permute.xlu0 %4521
      %v4523 = vrot.slane %v4520, 4
      %v4524 = vrot.slane %v4522, 4
      %v4525 = vsel %vm3868, %v4523, %v4524
      %v4526 = vsel %vm412, %v4520, %v4525
      %4528 = vst [vmem:[#allocation4 + $0x20] sm:$0xff] %v4526
      %v4529 = vld [vmem:[#allocation2 + $0x8] sm:$0xff]
      %v4530 = vld [vmem:[#allocation2 + $0x10] sm:$0xf]
      %4533 = vrot.lane.b32.xlu0 %v4529, 99
      %v4534 = vpop.permute.xlu0 %4533
      %4535 = vrot.lane.b32.xlu0 %v4530, 99
      %v4536 = vpop.permute.xlu0 %4535
      %v4537 = vrot.slane %v4534, 4
      %v4538 = vrot.slane %v4536, 4
      %v4539 = vsel %vm3868, %v4537, %v4538
      %v4540 = vsel %vm443, %v4534, %v4539
      %4542 = vst [vmem:[#allocation4 + $0x28] sm:$0xff] %v4540
      %v4543 = vld [vmem:[#allocation2 + $0x8] sm:$0xff]
      %v4544 = vld [vmem:[#allocation2 + $0x10] sm:$0xf]
      %4547 = vrot.lane.b32.xlu0 %v4543, 91
      %v4548 = vpop.permute.xlu0 %4547
      %4549 = vrot.lane.b32.xlu0 %v4544, 91
      %v4550 = vpop.permute.xlu0 %4549
      %v4551 = vrot.slane %v4548, 4
      %v4552 = vrot.slane %v4550, 4
      %v4553 = vsel %vm3868, %v4551, %v4552
      %v4554 = vsel %vm475, %v4548, %v4553
      %4556 = vst [vmem:[#allocation4 + $0x30] sm:$0xff] %v4554
      %v4557 = vld [vmem:[#allocation2 + $0x8] sm:$0xff]
      %v4558 = vld [vmem:[#allocation2 + $0x10] sm:$0xf]
      %4561 = vrot.lane.b32.xlu0 %v4557, 90
      %v4562 = vpop.permute.xlu0 %4561
      %4563 = vrot.lane.b32.xlu0 %v4558, 90
      %v4564 = vpop.permute.xlu0 %4563
      %v4565 = vrot.slane %v4562, 4
      %v4566 = vrot.slane %v4564, 4
      %v4567 = vsel %vm3868, %v4565, %v4566
      %v4568 = vsel %vm507, %v4562, %v4567
      %4570 = vst [vmem:[#allocation4 + $0x38] sm:$0xff] %v4568
      %v4571 = vld [vmem:[#allocation2 + $0x8] sm:$0xff]
      %v4572 = vld [vmem:[#allocation2 + $0x10] sm:$0xf]
      %4575 = vrot.lane.b32.xlu0 %v4571, 89
      %v4576 = vpop.permute.xlu0 %4575
      %4577 = vrot.lane.b32.xlu0 %v4572, 89
      %v4578 = vpop.permute.xlu0 %4577
      %v4579 = vrot.slane %v4576, 4
      %v4580 = vrot.slane %v4578, 4
      %v4581 = vsel %vm3868, %v4579, %v4580
      %v4582 = vsel %vm538, %v4576, %v4581
      %4584 = vst [vmem:[#allocation4 + $0x40] sm:$0xff] %v4582
      %v4585 = vld [vmem:[#allocation2 + $0x8] sm:$0xff]
      %v4586 = vld [vmem:[#allocation2 + $0x10] sm:$0xf]
      %4589 = vrot.lane.b32.xlu0 %v4585, 11
      %v4590 = vpop.permute.xlu0 %4589
      %4591 = vrot.lane.b32.xlu0 %v4586, 11
      %v4592 = vpop.permute.xlu0 %4591
      %v4593 = vrot.slane %v4590, 4
      %v4594 = vrot.slane %v4592, 4
      %v4595 = vsel %vm3868, %v4593, %v4594
      %v4596 = vsel %vm569, %v4590, %v4595
      %4598 = vst [vmem:[#allocation4 + $0x48] sm:$0xff] %v4596
      %v4599 = vld [vmem:[#allocation2 + $0x8] sm:$0xff]
      %v4600 = vld [vmem:[#allocation2 + $0x10] sm:$0xf]
      %4603 = vrot.lane.b32.xlu0 %v4599, 10
      %v4604 = vpop.permute.xlu0 %4603
      %4605 = vrot.lane.b32.xlu0 %v4600, 10
      %v4606 = vpop.permute.xlu0 %4605
      %v4607 = vrot.slane %v4604, 4
      %v4608 = vrot.slane %v4606, 4
      %v4609 = vsel %vm3868, %v4607, %v4608
      %v4610 = vsel %vm601, %v4604, %v4609
      %4612 = vst [vmem:[#allocation4 + $0x50] sm:$0xff] %v4610
      %v4613 = vld [vmem:[#allocation2 + $0x8] sm:$0xff]
      %v4614 = vld [vmem:[#allocation2 + $0x10] sm:$0xf]
      %4617 = vrot.lane.b32.xlu0 %v4613, 9
      %v4618 = vpop.permute.xlu0 %4617
      %4619 = vrot.lane.b32.xlu0 %v4614, 9
      %v4620 = vpop.permute.xlu0 %4619
      %v4621 = vrot.slane %v4618, 4
      %v4622 = vrot.slane %v4620, 4
      %v4623 = vsel %vm3868, %v4621, %v4622
      %v4624 = vsel %vm633, %v4618, %v4623
      %4626 = vst [vmem:[#allocation4 + $0x58] sm:$0xff] %v4624
      %v4627 = vld [vmem:[#allocation2 + $0x8] sm:$0xff]
      %v4628 = vld [vmem:[#allocation2 + $0x10] sm:$0xf]
      %4631 = vrot.lane.b32.xlu0 %v4627, 1
      %v4632 = vpop.permute.xlu0 %4631
      %4633 = vrot.lane.b32.xlu0 %v4628, 1
      %v4634 = vpop.permute.xlu0 %4633
      %v4635 = vrot.slane %v4632, 4
      %v4636 = vrot.slane %v4634, 4
      %v4637 = vsel %vm3868, %v4635, %v4636
      %v4638 = vsel %vm664, %v4632, %v4637
      %4640 = vst [vmem:[#allocation4 + $0x60] sm:$0xff] %v4638
      %v4641 = vld [vmem:[#allocation2 + $0xc] sm:$0xff]
      %4642 = vst [vmem:[#allocation4 + $0x68] sm:$0xff] %v4641
      %v4643 = vld [vmem:[#allocation2 + $0xc] sm:$0xff]
      %v4644 = vld [vmem:[#allocation2 + $0x14] sm:$0xf]
      %4647 = vrot.lane.b32.xlu0 %v4643, 127
      %v4648 = vpop.permute.xlu0 %4647
      %4649 = vrot.lane.b32.xlu0 %v4644, 127
      %v4650 = vpop.permute.xlu0 %4649
      %v4651 = vrot.slane %v4648, 4
      %v4652 = vrot.slane %v4650, 4
      %v4653 = vsel %vm3868, %v4651, %v4652
      %v4654 = vsel %vm711, %v4648, %v4653
      %4656 = vst [vmem:[#allocation4 + $0x70] sm:$0xff] %v4654
      %v4657 = vld [vmem:[#allocation2 + $0xc] sm:$0xff]
      %v4658 = vld [vmem:[#allocation2 + $0x14] sm:$0xf]
      %4661 = vrot.lane.b32.xlu0 %v4657, 119
      %v4662 = vpop.permute.xlu0 %4661
      %4663 = vrot.lane.b32.xlu0 %v4658, 119
      %v4664 = vpop.permute.xlu0 %4663
      %v4665 = vrot.slane %v4662, 4
      %v4666 = vrot.slane %v4664, 4
      %v4667 = vsel %vm3868, %v4665, %v4666
      %v4668 = vsel %vm743, %v4662, %v4667
      %4670 = vst [vmem:[#allocation4 + $0x78] sm:$0xff] %v4668
      %v4671 = vld [vmem:[#allocation2 + $0xc] sm:$0xff]
      %v4672 = vld [vmem:[#allocation2 + $0x14] sm:$0xf]
      %4675 = vrot.lane.b32.xlu0 %v4671, 118
      %v4676 = vpop.permute.xlu0 %4675
      %4677 = vrot.lane.b32.xlu0 %v4672, 118
      %v4678 = vpop.permute.xlu0 %4677
      %v4679 = vrot.slane %v4676, 4
      %v4680 = vrot.slane %v4678, 4
      %v4681 = vsel %vm3868, %v4679, %v4680
      %v4682 = vsel %vm774, %v4676, %v4681
      %4684 = vst [vmem:[#allocation4 + $0x80] sm:$0xff] %v4682
      %v4685 = vld [vmem:[#allocation2 + $0xc] sm:$0xff]
      %v4686 = vld [vmem:[#allocation2 + $0x14] sm:$0xf]
      %4689 = vrot.lane.b32.xlu0 %v4685, 117
      %v4690 = vpop.permute.xlu0 %4689
      %4691 = vrot.lane.b32.xlu0 %v4686, 117
      %v4692 = vpop.permute.xlu0 %4691
      %v4693 = vrot.slane %v4690, 4
      %v4694 = vrot.slane %v4692, 4
      %v4695 = vsel %vm3868, %v4693, %v4694
      %v4696 = vsel %vm805, %v4690, %v4695
      %4698 = vst [vmem:[#allocation4 + $0x88] sm:$0xff] %v4696
      %v4699 = vld [vmem:[#allocation2 + $0xc] sm:$0xff]
      %v4700 = vld [vmem:[#allocation2 + $0x14] sm:$0xf]
      %4703 = vrot.lane.b32.xlu0 %v4699, 39
      %v4704 = vpop.permute.xlu0 %4703
      %4705 = vrot.lane.b32.xlu0 %v4700, 39
      %v4706 = vpop.permute.xlu0 %4705
      %v4707 = vrot.slane %v4704, 4
      %v4708 = vrot.slane %v4706, 4
      %v4709 = vsel %vm3868, %v4707, %v4708
      %v4710 = vsel %vm837, %v4704, %v4709
      %4712 = vst [vmem:[#allocation4 + $0x90] sm:$0xff] %v4710
      %v4713 = vld [vmem:[#allocation2 + $0xc] sm:$0xff]
      %v4714 = vld [vmem:[#allocation2 + $0x14] sm:$0xf]
      %4717 = vrot.lane.b32.xlu0 %v4713, 38
      %v4718 = vpop.permute.xlu0 %4717
      %4719 = vrot.lane.b32.xlu0 %v4714, 38
      %v4720 = vpop.permute.xlu0 %4719
      %v4721 = vrot.slane %v4718, 4
      %v4722 = vrot.slane %v4720, 4
      %v4723 = vsel %vm3868, %v4721, %v4722
      %v4724 = vsel %vm869, %v4718, %v4723
      %4726 = vst [vmem:[#allocation4 + $0x98] sm:$0xff] %v4724
      %v4727 = vld [vmem:[#allocation2 + $0xc] sm:$0xff]
      %v4728 = vld [vmem:[#allocation2 + $0x14] sm:$0xf]
      %4731 = vrot.lane.b32.xlu0 %v4727, 37
      %v4732 = vpop.permute.xlu0 %4731
      %4733 = vrot.lane.b32.xlu0 %v4728, 37
      %v4734 = vpop.permute.xlu0 %4733
      %v4735 = vrot.slane %v4732, 4
      %v4736 = vrot.slane %v4734, 4
      %v4737 = vsel %vm3868, %v4735, %v4736
      %v4738 = vsel %vm900, %v4732, %v4737
      %4740 = vst [vmem:[#allocation4 + $0xa0] sm:$0xff] %v4738
      %v4741 = vld [vmem:[#allocation2 + $0xc] sm:$0xff]
      %v4742 = vld [vmem:[#allocation2 + $0x14] sm:$0xf]
      %4745 = vrot.lane.b32.xlu0 %v4741, 29
      %v4746 = vpop.permute.xlu0 %4745
      %4747 = vrot.lane.b32.xlu0 %v4742, 29
      %v4748 = vpop.permute.xlu0 %4747
      %v4749 = vrot.slane %v4746, 4
      %v4750 = vrot.slane %v4748, 4
      %v4751 = vsel %vm3868, %v4749, %v4750
      %v4752 = vsel %vm931, %v4746, %v4751
      %4754 = vst [vmem:[#allocation4 + $0xa8] sm:$0xff] %v4752
      %v4755 = vld [vmem:[#allocation2 + $0xc] sm:$0xff]
      %v4756 = vld [vmem:[#allocation2 + $0x14] sm:$0xf]
      %4759 = vrot.lane.b32.xlu0 %v4755, 28
      %v4760 = vpop.permute.xlu0 %4759
      %4761 = vrot.lane.b32.xlu0 %v4756, 28
      %v4762 = vpop.permute.xlu0 %4761
      %v4763 = vrot.slane %v4760, 4
      %v4764 = vrot.slane %v4762, 4
      %v4765 = vsel %vm3868, %v4763, %v4764
      %v4766 = vsel %vm963, %v4760, %v4765
      %4768 = vst [vmem:[#allocation4 + $0xb0] sm:$0xff] %v4766
      %v4769 = vld [vmem:[#allocation2 + $0xc] sm:$0xff]
      %v4770 = vld [vmem:[#allocation2 + $0x14] sm:$0xf]
      %4773 = vrot.lane.b32.xlu0 %v4769, 27
      %v4774 = vpop.permute.xlu0 %4773
      %4775 = vrot.lane.b32.xlu0 %v4770, 27
      %v4776 = vpop.permute.xlu0 %4775
      %v4777 = vrot.slane %v4774, 4
      %v4778 = vrot.slane %v4776, 4
      %v4779 = vsel %vm3868, %v4777, %v4778
      %v4780 = vsel %vm995, %v4774, %v4779
      %4782 = vst [vmem:[#allocation4 + $0xb8] sm:$0xff] %v4780
      %v4783 = vld [vmem:[#allocation2 + $0xc] sm:$0xff]
      %v4784 = vld [vmem:[#allocation2 + $0x14] sm:$0xf]
      %4787 = vrot.lane.b32.xlu0 %v4783, 19
      %v4788 = vpop.permute.xlu0 %4787
      %4789 = vrot.lane.b32.xlu0 %v4784, 19
      %v4790 = vpop.permute.xlu0 %4789
      %v4791 = vrot.slane %v4788, 4
      %v4792 = vrot.slane %v4790, 4
      %v4793 = vsel %vm3868, %v4791, %v4792
      %v4794 = vsel %vm1026, %v4788, %v4793
      %4796 = vst [vmem:[#allocation4 + $0xc0] sm:$0xff] %v4794
      %v4797 = vld [vmem:[#allocation2 + $0xc] sm:$0xff]
      %v4798 = vld [vmem:[#allocation2 + $0x14] sm:$0xf]
      %4801 = vrot.lane.b32.xlu0 %v4797, 18
      %v4802 = vpop.permute.xlu0 %4801
      %4803 = vrot.lane.b32.xlu0 %v4798, 18
      %v4804 = vpop.permute.xlu0 %4803
      %v4805 = vrot.slane %v4802, 4
      %v4806 = vrot.slane %v4804, 4
      %v4807 = vsel %vm3868, %v4805, %v4806
      %v4808 = vsel %vm1057, %v4802, %v4807
      %4810 = vst [vmem:[#allocation4 + $0xc8] sm:$0xff] %v4808
      %v4811 = vld [vmem:[#allocation2 + $0xc] sm:$0xff]
      %v4812 = vld [vmem:[#allocation2 + $0x14] sm:$0xf]
      %4815 = vrot.lane.b32.xlu0 %v4811, 17
      %v4816 = vpop.permute.xlu0 %4815
      %4817 = vrot.lane.b32.xlu0 %v4812, 17
      %v4818 = vpop.permute.xlu0 %4817
      %v4819 = vrot.slane %v4816, 4
      %v4820 = vrot.slane %v4818, 4
      %v4821 = vsel %vm3868, %v4819, %v4820
      %v4822 = vsel %vm1089, %v4816, %v4821
      %4824 = vst [vmem:[#allocation4 + $0xd0] sm:$0xff] %v4822
      %v4825 = vld [vmem:[%s2] sm:$0xff]
      %v4826 = vld [vmem:[#allocation4] sm:$0xff]
      %v4827 = vld [vmem:[#allocation4 + $0x8] sm:$0xff]
      %v4828 = vld [vmem:[#allocation4 + $0x10] sm:$0xff]
      %v4829 = vld [vmem:[#allocation4 + $0x18] sm:$0xff]
      %v4830 = vld [vmem:[#allocation4 + $0x20] sm:$0xff]
      %v4831 = vld [vmem:[#allocation4 + $0x28] sm:$0xff]
      %v4832 = vld [vmem:[#allocation4 + $0x30] sm:$0xff]
      %v4833 = vld [vmem:[#allocation4 + $0x38] sm:$0xff]
      %v4834 = vld [vmem:[#allocation4 + $0x40] sm:$0xff]
      %v4835 = vld [vmem:[#allocation4 + $0x48] sm:$0xff]
      %v4836 = vld [vmem:[#allocation4 + $0x50] sm:$0xff]
      %v4837 = vld [vmem:[#allocation4 + $0x58] sm:$0xff]
      %v4838 = vld [vmem:[#allocation4 + $0x60] sm:$0xff]
      %v4839 = vld [vmem:[#allocation4 + $0x68] sm:$0xff]
      %v4840 = vld [vmem:[#allocation4 + $0x70] sm:$0xff]
      %v4841 = vld [vmem:[#allocation4 + $0x78] sm:$0xff]
      %v4842 = vld [vmem:[#allocation4 + $0x80] sm:$0xff]
      %v4843 = vld [vmem:[#allocation4 + $0x88] sm:$0xff]
      %v4844 = vld [vmem:[#allocation4 + $0x90] sm:$0xff]
      %v4845 = vld [vmem:[#allocation4 + $0x98] sm:$0xff]
      %v4846 = vld [vmem:[#allocation4 + $0xa0] sm:$0xff]
      %v4847 = vld [vmem:[#allocation4 + $0xa8] sm:$0xff]
      %v4848 = vld [vmem:[#allocation4 + $0xb0] sm:$0xff]
      %v4849 = vld [vmem:[#allocation4 + $0xb8] sm:$0xff]
      %v4850 = vld [vmem:[#allocation4 + $0xc0] sm:$0xff]
      %v4851 = vld [vmem:[#allocation4 + $0xc8] sm:$0xff]
      %v4852 = vld [vmem:[#allocation4 + $0xd0] sm:$0xff]
      %v4853 = vld [vmem:[%s4] sm:$0xff]
      %4855 = vset.pattern.permute.xlu0 0
      %4856 = vperm.xlu0 %4855, %v4853
      %v4857 = vpop.permute.xlu0 %4856
      %v4860 = vunpack.c.l.b16 %v4825
      %v4861 = vunpack.c.h.b16 %v4825
      %v4862 = vpack.c.b16 %v4860, %v4860
      %v4863 = vpack.c.b16 %v4861, %v4861
      %v4892 = vunpack.c.l.b16 %v4826
      %v4893 = vunpack.c.h.b16 %v4826
      %v4894 = vunpack.c.l.b16 %v4827
      %v4895 = vunpack.c.h.b16 %v4827
      %v4896 = vunpack.c.l.b16 %v4828
      %v4897 = vunpack.c.h.b16 %v4828
      %v4898 = vunpack.c.l.b16 %v4829
      %v4899 = vunpack.c.h.b16 %v4829
      %v4900 = vunpack.c.l.b16 %v4830
      %v4901 = vunpack.c.h.b16 %v4830
      %v4902 = vunpack.c.l.b16 %v4831
      %v4903 = vunpack.c.h.b16 %v4831
      %v4904 = vunpack.c.l.b16 %v4832
      %v4905 = vunpack.c.h.b16 %v4832
      %v4906 = vunpack.c.l.b16 %v4833
      %v4907 = vunpack.c.h.b16 %v4833
      %v4908 = vunpack.c.l.b16 %v4834
      %v4909 = vunpack.c.h.b16 %v4834
      %v4910 = vunpack.c.l.b16 %v4835
      %v4911 = vunpack.c.h.b16 %v4835
      %v4912 = vunpack.c.l.b16 %v4836
      %v4913 = vunpack.c.h.b16 %v4836
      %v4914 = vunpack.c.l.b16 %v4837
      %v4915 = vunpack.c.h.b16 %v4837
      %v4916 = vunpack.c.l.b16 %v4838
      %v4917 = vunpack.c.h.b16 %v4838
      %v4918 = vunpack.c.l.b16 %v4839
      %v4919 = vunpack.c.h.b16 %v4839
      %v4920 = vunpack.c.l.b16 %v4840
      %v4921 = vunpack.c.h.b16 %v4840
      %v4922 = vunpack.c.l.b16 %v4841
      %v4923 = vunpack.c.h.b16 %v4841
      %v4924 = vunpack.c.l.b16 %v4842
      %v4925 = vunpack.c.h.b16 %v4842
      %v4926 = vunpack.c.l.b16 %v4843
      %v4927 = vunpack.c.h.b16 %v4843
      %v4928 = vunpack.c.l.b16 %v4844
      %v4929 = vunpack.c.h.b16 %v4844
      %v4930 = vunpack.c.l.b16 %v4845
      %v4931 = vunpack.c.h.b16 %v4845
      %v4932 = vunpack.c.l.b16 %v4846
      %v4933 = vunpack.c.h.b16 %v4846
      %v4934 = vunpack.c.l.b16 %v4847
      %v4935 = vunpack.c.h.b16 %v4847
      %v4936 = vunpack.c.l.b16 %v4848
      %v4937 = vunpack.c.h.b16 %v4848
      %v4938 = vunpack.c.l.b16 %v4849
      %v4939 = vunpack.c.h.b16 %v4849
      %v4940 = vunpack.c.l.b16 %v4850
      %v4941 = vunpack.c.h.b16 %v4850
      %v4942 = vunpack.c.l.b16 %v4851
      %v4943 = vunpack.c.h.b16 %v4851
      %v4944 = vunpack.c.l.b16 %v4852
      %v4945 = vunpack.c.h.b16 %v4852
      %v4946 = vpack.c.b16 %v4894, %v4892
      %v4947 = vpack.c.b16 %v4895, %v4893
      %v4948 = vpack.c.b16 %v4898, %v4896
      %v4949 = vpack.c.b16 %v4899, %v4897
      %v4950 = vpack.c.b16 %v4902, %v4900
      %v4951 = vpack.c.b16 %v4903, %v4901
      %v4952 = vpack.c.b16 %v4906, %v4904
      %v4953 = vpack.c.b16 %v4907, %v4905
      %v4954 = vpack.c.b16 %v4910, %v4908
      %v4955 = vpack.c.b16 %v4911, %v4909
      %v4956 = vpack.c.b16 %v4914, %v4912
      %v4957 = vpack.c.b16 %v4915, %v4913
      %v4958 = vpack.c.b16 %v4918, %v4916
      %v4959 = vpack.c.b16 %v4919, %v4917
      %v4960 = vpack.c.b16 %v4922, %v4920
      %v4961 = vpack.c.b16 %v4923, %v4921
      %v4962 = vpack.c.b16 %v4926, %v4924
      %v4963 = vpack.c.b16 %v4927, %v4925
      %v4964 = vpack.c.b16 %v4930, %v4928
      %v4965 = vpack.c.b16 %v4931, %v4929
      %v4966 = vpack.c.b16 %v4934, %v4932
      %v4967 = vpack.c.b16 %v4935, %v4933
      %v4968 = vpack.c.b16 %v4938, %v4936
      %v4969 = vpack.c.b16 %v4939, %v4937
      %v4970 = vpack.c.b16 %v4942, %v4940
      %v4971 = vpack.c.b16 %v4943, %v4941
      %v4972 = vpack.c.b16 %v4944, %v4944
      %v4973 = vpack.c.b16 %v4945, %v4945
      %v5001 = vsel %vm4400, %v4863, 0
      %v5004 = vsel %vm3855, %v4972, 0
      %v5007 = vsel %vm3855, %v4973, 0
      %5009 = vmatprep.subr.bf16.mxu0 %v4947
      %5010 = vmatpush1.bf16.msra.mxu0 %v4946
      %5011 = vmatprep.subr.bf16.mxu0 %v4949
      %5012 = vmatpush1.bf16.msra.mxu0 %v4948
      %5013 = vmatprep.subr.bf16.mxu0 %v4951
      %5014 = vmatpush1.bf16.msra.mxu0 %v4950
      %5015 = vmatprep.subr.bf16.mxu0 %v4953
      %5016 = vmatpush1.bf16.msra.mxu0 %v4952
      %5017 = vmatprep.subr.bf16.mxu0 %v4955
      %5018 = vmatpush1.bf16.msra.mxu0 %v4954
      %5019 = vmatprep.subr.bf16.mxu0 %v4957
      %5020 = vmatpush1.bf16.msra.mxu0 %v4956
      %5021 = vmatprep.subr.bf16.mxu0 %v4959
      %5022 = vmatpush1.bf16.msra.mxu0 %v4958
      %5023 = vmatprep.subr.bf16.mxu0 %v4961
      %5024 = vmatpush1.bf16.msra.mxu0 %v4960
      %5025 = vmatprep.subr.bf16.mxu0 %v4963
      %5026 = vmatpush1.bf16.msra.mxu0 %v4962
      %5027 = vmatprep.subr.bf16.mxu0 %v4965
      %5028 = vmatpush1.bf16.msra.mxu0 %v4964
      %5029 = vmatprep.subr.bf16.mxu0 %v4967
      %5030 = vmatpush1.bf16.msra.mxu0 %v4966
      %5031 = vmatprep.subr.bf16.mxu0 %v4969
      %5032 = vmatpush1.bf16.msra.mxu0 %v4968
      %5033 = vmatprep.subr.bf16.mxu0 %v4971
      %5034 = vmatpush1.bf16.msra.mxu0 %v4970
      %5035 = vmatprep.subr.bf16.mxu0 %v5007
      %5036 = vmatpush1.bf16.msra.mxu0 %v5004
      %5037 = vmatprep.subr.bf16.mxu0 0
      %5038 = vmatpush1.bf16.msra.mxu0 0
      %5039 = vmatprep.subr.bf16.mxu0 0
      %5040 = vmatpush1.bf16.msra.mxu0 0
      %5041 = vmatprep.mubr.bf16.mxu0 %v5001
      %5042 = vmatmul.mubr.bf16.gmra.mrb[0].mxu0 %v4862
      %v5043 = vpop.f32.mrb[0].mxu0
      %v5044 = vadd.f32 %v4857, %v5043
      %v5045 = vpop.f32.mrb[0].mxu0
      %v5046 = vadd.f32 %v4857, %v5045
      %v5047 = vpop.f32.mrb[0].mxu0
      %v5048 = vpop.f32.mrb[0].mxu0
      %5049 = vdwg.mxu0
      %v5050 = vld [vmem:[#allocation5 + $0x10] sm:$0xff]
      %v5051 = vld [vmem:[#allocation5 + $0x18] sm:$0xff]
      %v5052 = vadd.f32 %v5044, %v5050
      %v5053 = vadd.f32 %v5046, %v5051
      %v5054 = vmax.f32 %v5052, 0.0
      %v5055 = vmax.f32 %v5053, 0.0
      %5056 = vst [vmem:[%s251 + $0x10] sm:$0xff] %v5054
      %5057 = vst [vmem:[%s251 + $0x18] sm:$0xff] %v5055
      %v5058 = vld [vmem:[#allocation2 + $0x10] sm:$0xff]
      %v5059 = vld [vmem:[#allocation2 + $0x18] sm:$0xf]
      %5062 = vrot.lane.b32.xlu0 %v5058, 111
      %v5063 = vpop.permute.xlu0 %5062
      %5064 = vrot.lane.b32.xlu0 %v5059, 111
      %v5065 = vpop.permute.xlu0 %5064
      %v5066 = vrot.slane %v5063, 4
      %v5067 = vrot.slane %v5065, 4
      %v5068 = vsel %vm3868, %v5066, %v5067
      %v5069 = vsel %vm286, %v5063, %v5068
      %5071 = vst [vmem:[#allocation4] sm:$0xff] %v5069
      %v5072 = vld [vmem:[#allocation2 + $0x10] sm:$0xff]
      %v5073 = vld [vmem:[#allocation2 + $0x18] sm:$0xf]
      %5076 = vrot.lane.b32.xlu0 %v5072, 110
      %v5077 = vpop.permute.xlu0 %5076
      %5078 = vrot.lane.b32.xlu0 %v5073, 110
      %v5079 = vpop.permute.xlu0 %5078
      %v5080 = vrot.slane %v5077, 4
      %v5081 = vrot.slane %v5079, 4
      %v5082 = vsel %vm3868, %v5080, %v5081
      %v5083 = vsel %vm317, %v5077, %v5082
      %5085 = vst [vmem:[#allocation4 + $0x8] sm:$0xff] %v5083
      %v5086 = vld [vmem:[#allocation2 + $0x10] sm:$0xff]
      %v5087 = vld [vmem:[#allocation2 + $0x18] sm:$0xf]
      %5090 = vrot.lane.b32.xlu0 %v5086, 109
      %v5091 = vpop.permute.xlu0 %5090
      %5092 = vrot.lane.b32.xlu0 %v5087, 109
      %v5093 = vpop.permute.xlu0 %5092
      %v5094 = vrot.slane %v5091, 4
      %v5095 = vrot.slane %v5093, 4
      %v5096 = vsel %vm3868, %v5094, %v5095
      %v5097 = vsel %vm349, %v5091, %v5096
      %5099 = vst [vmem:[#allocation4 + $0x10] sm:$0xff] %v5097
      %v5100 = vld [vmem:[#allocation2 + $0x10] sm:$0xff]
      %v5101 = vld [vmem:[#allocation2 + $0x18] sm:$0xf]
      %5104 = vrot.lane.b32.xlu0 %v5100, 101
      %v5105 = vpop.permute.xlu0 %5104
      %5106 = vrot.lane.b32.xlu0 %v5101, 101
      %v5107 = vpop.permute.xlu0 %5106
      %v5108 = vrot.slane %v5105, 4
      %v5109 = vrot.slane %v5107, 4
      %v5110 = vsel %vm3868, %v5108, %v5109
      %v5111 = vsel %vm381, %v5105, %v5110
      %5113 = vst [vmem:[#allocation4 + $0x18] sm:$0xff] %v5111
      %v5114 = vld [vmem:[#allocation2 + $0x10] sm:$0xff]
      %v5115 = vld [vmem:[#allocation2 + $0x18] sm:$0xf]
      %5118 = vrot.lane.b32.xlu0 %v5114, 100
      %v5119 = vpop.permute.xlu0 %5118
      %5120 = vrot.lane.b32.xlu0 %v5115, 100
      %v5121 = vpop.permute.xlu0 %5120
      %v5122 = vrot.slane %v5119, 4
      %v5123 = vrot.slane %v5121, 4
      %v5124 = vsel %vm3868, %v5122, %v5123
      %v5125 = vsel %vm412, %v5119, %v5124
      %5127 = vst [vmem:[#allocation4 + $0x20] sm:$0xff] %v5125
      %v5128 = vld [vmem:[#allocation2 + $0x10] sm:$0xff]
      %v5129 = vld [vmem:[#allocation2 + $0x18] sm:$0xf]
      %5132 = vrot.lane.b32.xlu0 %v5128, 99
      %v5133 = vpop.permute.xlu0 %5132
      %5134 = vrot.lane.b32.xlu0 %v5129, 99
      %v5135 = vpop.permute.xlu0 %5134
      %v5136 = vrot.slane %v5133, 4
      %v5137 = vrot.slane %v5135, 4
      %v5138 = vsel %vm3868, %v5136, %v5137
      %v5139 = vsel %vm443, %v5133, %v5138
      %5141 = vst [vmem:[#allocation4 + $0x28] sm:$0xff] %v5139
      %v5142 = vld [vmem:[#allocation2 + $0x10] sm:$0xff]
      %v5143 = vld [vmem:[#allocation2 + $0x18] sm:$0xf]
      %5146 = vrot.lane.b32.xlu0 %v5142, 91
      %v5147 = vpop.permute.xlu0 %5146
      %5148 = vrot.lane.b32.xlu0 %v5143, 91
      %v5149 = vpop.permute.xlu0 %5148
      %v5150 = vrot.slane %v5147, 4
      %v5151 = vrot.slane %v5149, 4
      %v5152 = vsel %vm3868, %v5150, %v5151
      %v5153 = vsel %vm475, %v5147, %v5152
      %5155 = vst [vmem:[#allocation4 + $0x30] sm:$0xff] %v5153
      %v5156 = vld [vmem:[#allocation2 + $0x10] sm:$0xff]
      %v5157 = vld [vmem:[#allocation2 + $0x18] sm:$0xf]
      %5160 = vrot.lane.b32.xlu0 %v5156, 90
      %v5161 = vpop.permute.xlu0 %5160
      %5162 = vrot.lane.b32.xlu0 %v5157, 90
      %v5163 = vpop.permute.xlu0 %5162
      %v5164 = vrot.slane %v5161, 4
      %v5165 = vrot.slane %v5163, 4
      %v5166 = vsel %vm3868, %v5164, %v5165
      %v5167 = vsel %vm507, %v5161, %v5166
      %5169 = vst [vmem:[#allocation4 + $0x38] sm:$0xff] %v5167
      %v5170 = vld [vmem:[#allocation2 + $0x10] sm:$0xff]
      %v5171 = vld [vmem:[#allocation2 + $0x18] sm:$0xf]
      %5174 = vrot.lane.b32.xlu0 %v5170, 89
      %v5175 = vpop.permute.xlu0 %5174
      %5176 = vrot.lane.b32.xlu0 %v5171, 89
      %v5177 = vpop.permute.xlu0 %5176
      %v5178 = vrot.slane %v5175, 4
      %v5179 = vrot.slane %v5177, 4
      %v5180 = vsel %vm3868, %v5178, %v5179
      %v5181 = vsel %vm538, %v5175, %v5180
      %5183 = vst [vmem:[#allocation4 + $0x40] sm:$0xff] %v5181
      %v5184 = vld [vmem:[#allocation2 + $0x10] sm:$0xff]
      %v5185 = vld [vmem:[#allocation2 + $0x18] sm:$0xf]
      %5188 = vrot.lane.b32.xlu0 %v5184, 11
      %v5189 = vpop.permute.xlu0 %5188
      %5190 = vrot.lane.b32.xlu0 %v5185, 11
      %v5191 = vpop.permute.xlu0 %5190
      %v5192 = vrot.slane %v5189, 4
      %v5193 = vrot.slane %v5191, 4
      %v5194 = vsel %vm3868, %v5192, %v5193
      %v5195 = vsel %vm569, %v5189, %v5194
      %5197 = vst [vmem:[#allocation4 + $0x48] sm:$0xff] %v5195
      %v5198 = vld [vmem:[#allocation2 + $0x10] sm:$0xff]
      %v5199 = vld [vmem:[#allocation2 + $0x18] sm:$0xf]
      %5202 = vrot.lane.b32.xlu0 %v5198, 10
      %v5203 = vpop.permute.xlu0 %5202
      %5204 = vrot.lane.b32.xlu0 %v5199, 10
      %v5205 = vpop.permute.xlu0 %5204
      %v5206 = vrot.slane %v5203, 4
      %v5207 = vrot.slane %v5205, 4
      %v5208 = vsel %vm3868, %v5206, %v5207
      %v5209 = vsel %vm601, %v5203, %v5208
      %5211 = vst [vmem:[#allocation4 + $0x50] sm:$0xff] %v5209
      %v5212 = vld [vmem:[#allocation2 + $0x10] sm:$0xff]
      %v5213 = vld [vmem:[#allocation2 + $0x18] sm:$0xf]
      %5216 = vrot.lane.b32.xlu0 %v5212, 9
      %v5217 = vpop.permute.xlu0 %5216
      %5218 = vrot.lane.b32.xlu0 %v5213, 9
      %v5219 = vpop.permute.xlu0 %5218
      %v5220 = vrot.slane %v5217, 4
      %v5221 = vrot.slane %v5219, 4
      %v5222 = vsel %vm3868, %v5220, %v5221
      %v5223 = vsel %vm633, %v5217, %v5222
      %5225 = vst [vmem:[#allocation4 + $0x58] sm:$0xff] %v5223
      %v5226 = vld [vmem:[#allocation2 + $0x10] sm:$0xff]
      %v5227 = vld [vmem:[#allocation2 + $0x18] sm:$0xf]
      %5230 = vrot.lane.b32.xlu0 %v5226, 1
      %v5231 = vpop.permute.xlu0 %5230
      %5232 = vrot.lane.b32.xlu0 %v5227, 1
      %v5233 = vpop.permute.xlu0 %5232
      %v5234 = vrot.slane %v5231, 4
      %v5235 = vrot.slane %v5233, 4
      %v5236 = vsel %vm3868, %v5234, %v5235
      %v5237 = vsel %vm664, %v5231, %v5236
      %5239 = vst [vmem:[#allocation4 + $0x60] sm:$0xff] %v5237
      %v5240 = vld [vmem:[#allocation2 + $0x14] sm:$0xff]
      %5241 = vst [vmem:[#allocation4 + $0x68] sm:$0xff] %v5240
      %v5242 = vld [vmem:[#allocation2 + $0x14] sm:$0xff]
      %v5243 = vld [vmem:[#allocation2 + $0x1c] sm:$0xf]
      %5246 = vrot.lane.b32.xlu0 %v5242, 127
      %v5247 = vpop.permute.xlu0 %5246
      %5248 = vrot.lane.b32.xlu0 %v5243, 127
      %v5249 = vpop.permute.xlu0 %5248
      %v5250 = vrot.slane %v5247, 4
      %v5251 = vrot.slane %v5249, 4
      %v5252 = vsel %vm3868, %v5250, %v5251
      %v5253 = vsel %vm711, %v5247, %v5252
      %5255 = vst [vmem:[#allocation4 + $0x70] sm:$0xff] %v5253
      %v5256 = vld [vmem:[#allocation2 + $0x14] sm:$0xff]
      %v5257 = vld [vmem:[#allocation2 + $0x1c] sm:$0xf]
      %5260 = vrot.lane.b32.xlu0 %v5256, 119
      %v5261 = vpop.permute.xlu0 %5260
      %5262 = vrot.lane.b32.xlu0 %v5257, 119
      %v5263 = vpop.permute.xlu0 %5262
      %v5264 = vrot.slane %v5261, 4
      %v5265 = vrot.slane %v5263, 4
      %v5266 = vsel %vm3868, %v5264, %v5265
      %v5267 = vsel %vm743, %v5261, %v5266
      %5269 = vst [vmem:[#allocation4 + $0x78] sm:$0xff] %v5267
      %v5270 = vld [vmem:[#allocation2 + $0x14] sm:$0xff]
      %v5271 = vld [vmem:[#allocation2 + $0x1c] sm:$0xf]
      %5274 = vrot.lane.b32.xlu0 %v5270, 118
      %v5275 = vpop.permute.xlu0 %5274
      %5276 = vrot.lane.b32.xlu0 %v5271, 118
      %v5277 = vpop.permute.xlu0 %5276
      %v5278 = vrot.slane %v5275, 4
      %v5279 = vrot.slane %v5277, 4
      %v5280 = vsel %vm3868, %v5278, %v5279
      %v5281 = vsel %vm774, %v5275, %v5280
      %5283 = vst [vmem:[#allocation4 + $0x80] sm:$0xff] %v5281
      %v5284 = vld [vmem:[#allocation2 + $0x14] sm:$0xff]
      %v5285 = vld [vmem:[#allocation2 + $0x1c] sm:$0xf]
      %5288 = vrot.lane.b32.xlu0 %v5284, 117
      %v5289 = vpop.permute.xlu0 %5288
      %5290 = vrot.lane.b32.xlu0 %v5285, 117
      %v5291 = vpop.permute.xlu0 %5290
      %v5292 = vrot.slane %v5289, 4
      %v5293 = vrot.slane %v5291, 4
      %v5294 = vsel %vm3868, %v5292, %v5293
      %v5295 = vsel %vm805, %v5289, %v5294
      %5297 = vst [vmem:[#allocation4 + $0x88] sm:$0xff] %v5295
      %v5298 = vld [vmem:[#allocation2 + $0x14] sm:$0xff]
      %v5299 = vld [vmem:[#allocation2 + $0x1c] sm:$0xf]
      %5302 = vrot.lane.b32.xlu0 %v5298, 39
      %v5303 = vpop.permute.xlu0 %5302
      %5304 = vrot.lane.b32.xlu0 %v5299, 39
      %v5305 = vpop.permute.xlu0 %5304
      %v5306 = vrot.slane %v5303, 4
      %v5307 = vrot.slane %v5305, 4
      %v5308 = vsel %vm3868, %v5306, %v5307
      %v5309 = vsel %vm837, %v5303, %v5308
      %5311 = vst [vmem:[#allocation4 + $0x90] sm:$0xff] %v5309
      %v5312 = vld [vmem:[#allocation2 + $0x14] sm:$0xff]
      %v5313 = vld [vmem:[#allocation2 + $0x1c] sm:$0xf]
      %5316 = vrot.lane.b32.xlu0 %v5312, 38
      %v5317 = vpop.permute.xlu0 %5316
      %5318 = vrot.lane.b32.xlu0 %v5313, 38
      %v5319 = vpop.permute.xlu0 %5318
      %v5320 = vrot.slane %v5317, 4
      %v5321 = vrot.slane %v5319, 4
      %v5322 = vsel %vm3868, %v5320, %v5321
      %v5323 = vsel %vm869, %v5317, %v5322
      %5325 = vst [vmem:[#allocation4 + $0x98] sm:$0xff] %v5323
      %v5326 = vld [vmem:[#allocation2 + $0x14] sm:$0xff]
      %v5327 = vld [vmem:[#allocation2 + $0x1c] sm:$0xf]
      %5330 = vrot.lane.b32.xlu0 %v5326, 37
      %v5331 = vpop.permute.xlu0 %5330
      %5332 = vrot.lane.b32.xlu0 %v5327, 37
      %v5333 = vpop.permute.xlu0 %5332
      %v5334 = vrot.slane %v5331, 4
      %v5335 = vrot.slane %v5333, 4
      %v5336 = vsel %vm3868, %v5334, %v5335
      %v5337 = vsel %vm900, %v5331, %v5336
      %5339 = vst [vmem:[#allocation4 + $0xa0] sm:$0xff] %v5337
      %v5340 = vld [vmem:[#allocation2 + $0x14] sm:$0xff]
      %v5341 = vld [vmem:[#allocation2 + $0x1c] sm:$0xf]
      %5344 = vrot.lane.b32.xlu0 %v5340, 29
      %v5345 = vpop.permute.xlu0 %5344
      %5346 = vrot.lane.b32.xlu0 %v5341, 29
      %v5347 = vpop.permute.xlu0 %5346
      %v5348 = vrot.slane %v5345, 4
      %v5349 = vrot.slane %v5347, 4
      %v5350 = vsel %vm3868, %v5348, %v5349
      %v5351 = vsel %vm931, %v5345, %v5350
      %5353 = vst [vmem:[#allocation4 + $0xa8] sm:$0xff] %v5351
      %v5354 = vld [vmem:[#allocation2 + $0x14] sm:$0xff]
      %v5355 = vld [vmem:[#allocation2 + $0x1c] sm:$0xf]
      %5358 = vrot.lane.b32.xlu0 %v5354, 28
      %v5359 = vpop.permute.xlu0 %5358
      %5360 = vrot.lane.b32.xlu0 %v5355, 28
      %v5361 = vpop.permute.xlu0 %5360
      %v5362 = vrot.slane %v5359, 4
      %v5363 = vrot.slane %v5361, 4
      %v5364 = vsel %vm3868, %v5362, %v5363
      %v5365 = vsel %vm963, %v5359, %v5364
      %5367 = vst [vmem:[#allocation4 + $0xb0] sm:$0xff] %v5365
      %v5368 = vld [vmem:[#allocation2 + $0x14] sm:$0xff]
      %v5369 = vld [vmem:[#allocation2 + $0x1c] sm:$0xf]
      %5372 = vrot.lane.b32.xlu0 %v5368, 27
      %v5373 = vpop.permute.xlu0 %5372
      %5374 = vrot.lane.b32.xlu0 %v5369, 27
      %v5375 = vpop.permute.xlu0 %5374
      %v5376 = vrot.slane %v5373, 4
      %v5377 = vrot.slane %v5375, 4
      %v5378 = vsel %vm3868, %v5376, %v5377
      %v5379 = vsel %vm995, %v5373, %v5378
      %5381 = vst [vmem:[#allocation4 + $0xb8] sm:$0xff] %v5379
      %v5382 = vld [vmem:[#allocation2 + $0x14] sm:$0xff]
      %v5383 = vld [vmem:[#allocation2 + $0x1c] sm:$0xf]
      %5386 = vrot.lane.b32.xlu0 %v5382, 19
      %v5387 = vpop.permute.xlu0 %5386
      %5388 = vrot.lane.b32.xlu0 %v5383, 19
      %v5389 = vpop.permute.xlu0 %5388
      %v5390 = vrot.slane %v5387, 4
      %v5391 = vrot.slane %v5389, 4
      %v5392 = vsel %vm3868, %v5390, %v5391
      %v5393 = vsel %vm1026, %v5387, %v5392
      %5395 = vst [vmem:[#allocation4 + $0xc0] sm:$0xff] %v5393
      %v5396 = vld [vmem:[#allocation2 + $0x14] sm:$0xff]
      %v5397 = vld [vmem:[#allocation2 + $0x1c] sm:$0xf]
      %5400 = vrot.lane.b32.xlu0 %v5396, 18
      %v5401 = vpop.permute.xlu0 %5400
      %5402 = vrot.lane.b32.xlu0 %v5397, 18
      %v5403 = vpop.permute.xlu0 %5402
      %v5404 = vrot.slane %v5401, 4
      %v5405 = vrot.slane %v5403, 4
      %v5406 = vsel %vm3868, %v5404, %v5405
      %v5407 = vsel %vm1057, %v5401, %v5406
      %5409 = vst [vmem:[#allocation4 + $0xc8] sm:$0xff] %v5407
      %v5410 = vld [vmem:[#allocation2 + $0x14] sm:$0xff]
      %v5411 = vld [vmem:[#allocation2 + $0x1c] sm:$0xf]
      %5414 = vrot.lane.b32.xlu0 %v5410, 17
      %v5415 = vpop.permute.xlu0 %5414
      %5416 = vrot.lane.b32.xlu0 %v5411, 17
      %v5417 = vpop.permute.xlu0 %5416
      %v5418 = vrot.slane %v5415, 4
      %v5419 = vrot.slane %v5417, 4
      %v5420 = vsel %vm3868, %v5418, %v5419
      %v5421 = vsel %vm1089, %v5415, %v5420
      %5423 = vst [vmem:[#allocation4 + $0xd0] sm:$0xff] %v5421
      %v5424 = vld [vmem:[%s2] sm:$0xff]
      %v5425 = vld [vmem:[#allocation4] sm:$0xff]
      %v5426 = vld [vmem:[#allocation4 + $0x8] sm:$0xff]
      %v5427 = vld [vmem:[#allocation4 + $0x10] sm:$0xff]
      %v5428 = vld [vmem:[#allocation4 + $0x18] sm:$0xff]
      %v5429 = vld [vmem:[#allocation4 + $0x20] sm:$0xff]
      %v5430 = vld [vmem:[#allocation4 + $0x28] sm:$0xff]
      %v5431 = vld [vmem:[#allocation4 + $0x30] sm:$0xff]
      %v5432 = vld [vmem:[#allocation4 + $0x38] sm:$0xff]
      %v5433 = vld [vmem:[#allocation4 + $0x40] sm:$0xff]
      %v5434 = vld [vmem:[#allocation4 + $0x48] sm:$0xff]
      %v5435 = vld [vmem:[#allocation4 + $0x50] sm:$0xff]
      %v5436 = vld [vmem:[#allocation4 + $0x58] sm:$0xff]
      %v5437 = vld [vmem:[#allocation4 + $0x60] sm:$0xff]
      %v5438 = vld [vmem:[#allocation4 + $0x68] sm:$0xff]
      %v5439 = vld [vmem:[#allocation4 + $0x70] sm:$0xff]
      %v5440 = vld [vmem:[#allocation4 + $0x78] sm:$0xff]
      %v5441 = vld [vmem:[#allocation4 + $0x80] sm:$0xff]
      %v5442 = vld [vmem:[#allocation4 + $0x88] sm:$0xff]
      %v5443 = vld [vmem:[#allocation4 + $0x90] sm:$0xff]
      %v5444 = vld [vmem:[#allocation4 + $0x98] sm:$0xff]
      %v5445 = vld [vmem:[#allocation4 + $0xa0] sm:$0xff]
      %v5446 = vld [vmem:[#allocation4 + $0xa8] sm:$0xff]
      %v5447 = vld [vmem:[#allocation4 + $0xb0] sm:$0xff]
      %v5448 = vld [vmem:[#allocation4 + $0xb8] sm:$0xff]
      %v5449 = vld [vmem:[#allocation4 + $0xc0] sm:$0xff]
      %v5450 = vld [vmem:[#allocation4 + $0xc8] sm:$0xff]
      %v5451 = vld [vmem:[#allocation4 + $0xd0] sm:$0xff]
      %v5452 = vld [vmem:[%s4] sm:$0xff]
      %5454 = vset.pattern.permute.xlu0 0
      %5455 = vperm.xlu0 %5454, %v5452
      %v5456 = vpop.permute.xlu0 %5455
      %v5459 = vunpack.c.l.b16 %v5424
      %v5460 = vunpack.c.h.b16 %v5424
      %v5461 = vpack.c.b16 %v5459, %v5459
      %v5462 = vpack.c.b16 %v5460, %v5460
      %v5491 = vunpack.c.l.b16 %v5425
      %v5492 = vunpack.c.h.b16 %v5425
      %v5493 = vunpack.c.l.b16 %v5426
      %v5494 = vunpack.c.h.b16 %v5426
      %v5495 = vunpack.c.l.b16 %v5427
      %v5496 = vunpack.c.h.b16 %v5427
      %v5497 = vunpack.c.l.b16 %v5428
      %v5498 = vunpack.c.h.b16 %v5428
      %v5499 = vunpack.c.l.b16 %v5429
      %v5500 = vunpack.c.h.b16 %v5429
      %v5501 = vunpack.c.l.b16 %v5430
      %v5502 = vunpack.c.h.b16 %v5430
      %v5503 = vunpack.c.l.b16 %v5431
      %v5504 = vunpack.c.h.b16 %v5431
      %v5505 = vunpack.c.l.b16 %v5432
      %v5506 = vunpack.c.h.b16 %v5432
      %v5507 = vunpack.c.l.b16 %v5433
      %v5508 = vunpack.c.h.b16 %v5433
      %v5509 = vunpack.c.l.b16 %v5434
      %v5510 = vunpack.c.h.b16 %v5434
      %v5511 = vunpack.c.l.b16 %v5435
      %v5512 = vunpack.c.h.b16 %v5435
      %v5513 = vunpack.c.l.b16 %v5436
      %v5514 = vunpack.c.h.b16 %v5436
      %v5515 = vunpack.c.l.b16 %v5437
      %v5516 = vunpack.c.h.b16 %v5437
      %v5517 = vunpack.c.l.b16 %v5438
      %v5518 = vunpack.c.h.b16 %v5438
      %v5519 = vunpack.c.l.b16 %v5439
      %v5520 = vunpack.c.h.b16 %v5439
      %v5521 = vunpack.c.l.b16 %v5440
      %v5522 = vunpack.c.h.b16 %v5440
      %v5523 = vunpack.c.l.b16 %v5441
      %v5524 = vunpack.c.h.b16 %v5441
      %v5525 = vunpack.c.l.b16 %v5442
      %v5526 = vunpack.c.h.b16 %v5442
      %v5527 = vunpack.c.l.b16 %v5443
      %v5528 = vunpack.c.h.b16 %v5443
      %v5529 = vunpack.c.l.b16 %v5444
      %v5530 = vunpack.c.h.b16 %v5444
      %v5531 = vunpack.c.l.b16 %v5445
      %v5532 = vunpack.c.h.b16 %v5445
      %v5533 = vunpack.c.l.b16 %v5446
      %v5534 = vunpack.c.h.b16 %v5446
      %v5535 = vunpack.c.l.b16 %v5447
      %v5536 = vunpack.c.h.b16 %v5447
      %v5537 = vunpack.c.l.b16 %v5448
      %v5538 = vunpack.c.h.b16 %v5448
      %v5539 = vunpack.c.l.b16 %v5449
      %v5540 = vunpack.c.h.b16 %v5449
      %v5541 = vunpack.c.l.b16 %v5450
      %v5542 = vunpack.c.h.b16 %v5450
      %v5543 = vunpack.c.l.b16 %v5451
      %v5544 = vunpack.c.h.b16 %v5451
      %v5545 = vpack.c.b16 %v5493, %v5491
      %v5546 = vpack.c.b16 %v5494, %v5492
      %v5547 = vpack.c.b16 %v5497, %v5495
      %v5548 = vpack.c.b16 %v5498, %v5496
      %v5549 = vpack.c.b16 %v5501, %v5499
      %v5550 = vpack.c.b16 %v5502, %v5500
      %v5551 = vpack.c.b16 %v5505, %v5503
      %v5552 = vpack.c.b16 %v5506, %v5504
      %v5553 = vpack.c.b16 %v5509, %v5507
      %v5554 = vpack.c.b16 %v5510, %v5508
      %v5555 = vpack.c.b16 %v5513, %v5511
      %v5556 = vpack.c.b16 %v5514, %v5512
      %v5557 = vpack.c.b16 %v5517, %v5515
      %v5558 = vpack.c.b16 %v5518, %v5516
      %v5559 = vpack.c.b16 %v5521, %v5519
      %v5560 = vpack.c.b16 %v5522, %v5520
      %v5561 = vpack.c.b16 %v5525, %v5523
      %v5562 = vpack.c.b16 %v5526, %v5524
      %v5563 = vpack.c.b16 %v5529, %v5527
      %v5564 = vpack.c.b16 %v5530, %v5528
      %v5565 = vpack.c.b16 %v5533, %v5531
      %v5566 = vpack.c.b16 %v5534, %v5532
      %v5567 = vpack.c.b16 %v5537, %v5535
      %v5568 = vpack.c.b16 %v5538, %v5536
      %v5569 = vpack.c.b16 %v5541, %v5539
      %v5570 = vpack.c.b16 %v5542, %v5540
      %v5571 = vpack.c.b16 %v5543, %v5543
      %v5572 = vpack.c.b16 %v5544, %v5544
      %v5600 = vsel %vm4400, %v5462, 0
      %v5603 = vsel %vm3855, %v5571, 0
      %v5606 = vsel %vm3855, %v5572, 0
      %5608 = vmatprep.subr.bf16.mxu0 %v5546
      %5609 = vmatpush1.bf16.msra.mxu0 %v5545
      %5610 = vmatprep.subr.bf16.mxu0 %v5548
      %5611 = vmatpush1.bf16.msra.mxu0 %v5547
      %5612 = vmatprep.subr.bf16.mxu0 %v5550
      %5613 = vmatpush1.bf16.msra.mxu0 %v5549
      %5614 = vmatprep.subr.bf16.mxu0 %v5552
      %5615 = vmatpush1.bf16.msra.mxu0 %v5551
      %5616 = vmatprep.subr.bf16.mxu0 %v5554
      %5617 = vmatpush1.bf16.msra.mxu0 %v5553
      %5618 = vmatprep.subr.bf16.mxu0 %v5556
      %5619 = vmatpush1.bf16.msra.mxu0 %v5555
      %5620 = vmatprep.subr.bf16.mxu0 %v5558
      %5621 = vmatpush1.bf16.msra.mxu0 %v5557
      %5622 = vmatprep.subr.bf16.mxu0 %v5560
      %5623 = vmatpush1.bf16.msra.mxu0 %v5559
      %5624 = vmatprep.subr.bf16.mxu0 %v5562
      %5625 = vmatpush1.bf16.msra.mxu0 %v5561
      %5626 = vmatprep.subr.bf16.mxu0 %v5564
      %5627 = vmatpush1.bf16.msra.mxu0 %v5563
      %5628 = vmatprep.subr.bf16.mxu0 %v5566
      %5629 = vmatpush1.bf16.msra.mxu0 %v5565
      %5630 = vmatprep.subr.bf16.mxu0 %v5568
      %5631 = vmatpush1.bf16.msra.mxu0 %v5567
      %5632 = vmatprep.subr.bf16.mxu0 %v5570
      %5633 = vmatpush1.bf16.msra.mxu0 %v5569
      %5634 = vmatprep.subr.bf16.mxu0 %v5606
      %5635 = vmatpush1.bf16.msra.mxu0 %v5603
      %5636 = vmatprep.subr.bf16.mxu0 0
      %5637 = vmatpush1.bf16.msra.mxu0 0
      %5638 = vmatprep.subr.bf16.mxu0 0
      %5639 = vmatpush1.bf16.msra.mxu0 0
      %5640 = vmatprep.mubr.bf16.mxu0 %v5600
      %5641 = vmatmul.mubr.bf16.gmra.mrb[0].mxu0 %v5461
      %v5642 = vpop.f32.mrb[0].mxu0
      %v5643 = vadd.f32 %v5456, %v5642
      %v5644 = vpop.f32.mrb[0].mxu0
      %v5645 = vadd.f32 %v5456, %v5644
      %v5646 = vpop.f32.mrb[0].mxu0
      %v5647 = vpop.f32.mrb[0].mxu0
      %5648 = vdwg.mxu0
      %v5649 = vld [vmem:[#allocation5 + $0x20] sm:$0xff]
      %v5650 = vld [vmem:[#allocation5 + $0x28] sm:$0xff]
      %v5651 = vadd.f32 %v5643, %v5649
      %v5652 = vadd.f32 %v5645, %v5650
      %v5653 = vmax.f32 %v5651, 0.0
      %v5654 = vmax.f32 %v5652, 0.0
      %5655 = vst [vmem:[%s251 + $0x20] sm:$0xff] %v5653
      %5656 = vst [vmem:[%s251 + $0x28] sm:$0xff] %v5654
      %v5657 = vld [vmem:[#allocation2 + $0x18] sm:$0xff]
      %5659 = vrot.lane.b32.xlu0 %v5657, 111
      %v5660 = vpop.permute.xlu0 %5659
      %v5661 = vrot.slane %v5660, 4
      %v5662 = vsel %vm286, %v5660, %v5661
      %5664 = vst.msk [vmem:[#allocation4] sm:$0xff] %vm3856, %v5662
      %v5665 = vld [vmem:[#allocation2 + $0x18] sm:$0xff]
      %5667 = vrot.lane.b32.xlu0 %v5665, 110
      %v5668 = vpop.permute.xlu0 %5667
      %v5669 = vrot.slane %v5668, 4
      %v5670 = vsel %vm317, %v5668, %v5669
      %5672 = vst.msk [vmem:[#allocation4 + $0x8] sm:$0xff] %vm3856, %v5670
      %v5673 = vld [vmem:[#allocation2 + $0x18] sm:$0xff]
      %5675 = vrot.lane.b32.xlu0 %v5673, 109
      %v5676 = vpop.permute.xlu0 %5675
      %v5677 = vrot.slane %v5676, 4
      %v5678 = vsel %vm349, %v5676, %v5677
      %5680 = vst.msk [vmem:[#allocation4 + $0x10] sm:$0xff] %vm3856, %v5678
      %v5681 = vld [vmem:[#allocation2 + $0x18] sm:$0xff]
      %v5682 = vld [vmem:[#allocation2 + $0x20] sm:$0xf]
      %5685 = vrot.lane.b32.xlu0 %v5681, 101
      %v5686 = vpop.permute.xlu0 %5685
      %5687 = vrot.lane.b32.xlu0 %v5682, 101
      %v5688 = vpop.permute.xlu0 %5687
      %v5689 = vrot.slane %v5686, 4
      %v5690 = vrot.slane %v5688, 4
      %v5691 = vsel %vm3868, %v5689, %v5690
      %v5692 = vsel %vm381, %v5686, %v5691
      %5694 = vst.msk [vmem:[#allocation4 + $0x18] sm:$0xff] %vm3856, %v5692
      %v5695 = vld [vmem:[#allocation2 + $0x18] sm:$0xff]
      %v5696 = vld [vmem:[#allocation2 + $0x20] sm:$0xf]
      %5699 = vrot.lane.b32.xlu0 %v5695, 100
      %v5700 = vpop.permute.xlu0 %5699
      %5701 = vrot.lane.b32.xlu0 %v5696, 100
      %v5702 = vpop.permute.xlu0 %5701
      %v5703 = vrot.slane %v5700, 4
      %v5704 = vrot.slane %v5702, 4
      %v5705 = vsel %vm3868, %v5703, %v5704
      %v5706 = vsel %vm412, %v5700, %v5705
      %5708 = vst.msk [vmem:[#allocation4 + $0x20] sm:$0xff] %vm3856, %v5706
      %v5709 = vld [vmem:[#allocation2 + $0x18] sm:$0xff]
      %v5710 = vld [vmem:[#allocation2 + $0x20] sm:$0xf]
      %5713 = vrot.lane.b32.xlu0 %v5709, 99
      %v5714 = vpop.permute.xlu0 %5713
      %5715 = vrot.lane.b32.xlu0 %v5710, 99
      %v5716 = vpop.permute.xlu0 %5715
      %v5717 = vrot.slane %v5714, 4
      %v5718 = vrot.slane %v5716, 4
      %v5719 = vsel %vm3868, %v5717, %v5718
      %v5720 = vsel %vm443, %v5714, %v5719
      %5722 = vst.msk [vmem:[#allocation4 + $0x28] sm:$0xff] %vm3856, %v5720
      %v5723 = vld [vmem:[#allocation2 + $0x18] sm:$0xff]
      %v5724 = vld [vmem:[#allocation2 + $0x20] sm:$0xf]
      %5727 = vrot.lane.b32.xlu0 %v5723, 91
      %v5728 = vpop.permute.xlu0 %5727
      %5729 = vrot.lane.b32.xlu0 %v5724, 91
      %v5730 = vpop.permute.xlu0 %5729
      %v5731 = vrot.slane %v5728, 4
      %v5732 = vrot.slane %v5730, 4
      %v5733 = vsel %vm3868, %v5731, %v5732
      %v5734 = vsel %vm475, %v5728, %v5733
      %5736 = vst.msk [vmem:[#allocation4 + $0x30] sm:$0xff] %vm3856, %v5734
      %v5737 = vld [vmem:[#allocation2 + $0x18] sm:$0xff]
      %v5738 = vld [vmem:[#allocation2 + $0x20] sm:$0xf]
      %5741 = vrot.lane.b32.xlu0 %v5737, 90
      %v5742 = vpop.permute.xlu0 %5741
      %5743 = vrot.lane.b32.xlu0 %v5738, 90
      %v5744 = vpop.permute.xlu0 %5743
      %v5745 = vrot.slane %v5742, 4
      %v5746 = vrot.slane %v5744, 4
      %v5747 = vsel %vm3868, %v5745, %v5746
      %v5748 = vsel %vm507, %v5742, %v5747
      %5750 = vst.msk [vmem:[#allocation4 + $0x38] sm:$0xff] %vm3856, %v5748
      %v5751 = vld [vmem:[#allocation2 + $0x18] sm:$0xff]
      %v5752 = vld [vmem:[#allocation2 + $0x20] sm:$0xf]
      %5755 = vrot.lane.b32.xlu0 %v5751, 89
      %v5756 = vpop.permute.xlu0 %5755
      %5757 = vrot.lane.b32.xlu0 %v5752, 89
      %v5758 = vpop.permute.xlu0 %5757
      %v5759 = vrot.slane %v5756, 4
      %v5760 = vrot.slane %v5758, 4
      %v5761 = vsel %vm3868, %v5759, %v5760
      %v5762 = vsel %vm538, %v5756, %v5761
      %5764 = vst.msk [vmem:[#allocation4 + $0x40] sm:$0xff] %vm3856, %v5762
      %v5765 = vld [vmem:[#allocation2 + $0x18] sm:$0xff]
      %v5766 = vld [vmem:[#allocation2 + $0x20] sm:$0xf]
      %5769 = vrot.lane.b32.xlu0 %v5765, 11
      %v5770 = vpop.permute.xlu0 %5769
      %5771 = vrot.lane.b32.xlu0 %v5766, 11
      %v5772 = vpop.permute.xlu0 %5771
      %v5773 = vrot.slane %v5770, 4
      %v5774 = vrot.slane %v5772, 4
      %v5775 = vsel %vm3868, %v5773, %v5774
      %v5776 = vsel %vm569, %v5770, %v5775
      %5778 = vst.msk [vmem:[#allocation4 + $0x48] sm:$0xff] %vm3856, %v5776
      %v5779 = vld [vmem:[#allocation2 + $0x18] sm:$0xff]
      %v5780 = vld [vmem:[#allocation2 + $0x20] sm:$0xf]
      %5783 = vrot.lane.b32.xlu0 %v5779, 10
      %v5784 = vpop.permute.xlu0 %5783
      %5785 = vrot.lane.b32.xlu0 %v5780, 10
      %v5786 = vpop.permute.xlu0 %5785
      %v5787 = vrot.slane %v5784, 4
      %v5788 = vrot.slane %v5786, 4
      %v5789 = vsel %vm3868, %v5787, %v5788
      %v5790 = vsel %vm601, %v5784, %v5789
      %5792 = vst.msk [vmem:[#allocation4 + $0x50] sm:$0xff] %vm3856, %v5790
      %v5793 = vld [vmem:[#allocation2 + $0x18] sm:$0xff]
      %v5794 = vld [vmem:[#allocation2 + $0x20] sm:$0xf]
      %5797 = vrot.lane.b32.xlu0 %v5793, 9
      %v5798 = vpop.permute.xlu0 %5797
      %5799 = vrot.lane.b32.xlu0 %v5794, 9
      %v5800 = vpop.permute.xlu0 %5799
      %v5801 = vrot.slane %v5798, 4
      %v5802 = vrot.slane %v5800, 4
      %v5803 = vsel %vm3868, %v5801, %v5802
      %v5804 = vsel %vm633, %v5798, %v5803
      %5806 = vst.msk [vmem:[#allocation4 + $0x58] sm:$0xff] %vm3856, %v5804
      %v5807 = vld [vmem:[#allocation2 + $0x18] sm:$0xff]
      %v5808 = vld [vmem:[#allocation2 + $0x20] sm:$0xf]
      %5811 = vrot.lane.b32.xlu0 %v5807, 1
      %v5812 = vpop.permute.xlu0 %5811
      %5813 = vrot.lane.b32.xlu0 %v5808, 1
      %v5814 = vpop.permute.xlu0 %5813
      %v5815 = vrot.slane %v5812, 4
      %v5816 = vrot.slane %v5814, 4
      %v5817 = vsel %vm3868, %v5815, %v5816
      %v5818 = vsel %vm664, %v5812, %v5817
      %5820 = vst.msk [vmem:[#allocation4 + $0x60] sm:$0xff] %vm3856, %v5818
      %v5821 = vld [vmem:[#allocation2 + $0x1c] sm:$0xff]
      %5822 = vst.msk [vmem:[#allocation4 + $0x68] sm:$0xff] %vm3856, %v5821
      %v5823 = vld [vmem:[#allocation2 + $0x1c] sm:$0xff]
      %5825 = vrot.lane.b32.xlu0 %v5823, 127
      %v5826 = vpop.permute.xlu0 %5825
      %v5827 = vrot.slane %v5826, 4
      %v5828 = vsel %vm711, %v5826, %v5827
      %5830 = vst.msk [vmem:[#allocation4 + $0x70] sm:$0xff] %vm3856, %v5828
      %v5831 = vld [vmem:[#allocation2 + $0x1c] sm:$0xff]
      %5833 = vrot.lane.b32.xlu0 %v5831, 119
      %v5834 = vpop.permute.xlu0 %5833
      %v5835 = vrot.slane %v5834, 4
      %v5836 = vsel %vm743, %v5834, %v5835
      %5838 = vst.msk [vmem:[#allocation4 + $0x78] sm:$0xff] %vm3856, %v5836
      %v5839 = vld [vmem:[#allocation2 + $0x1c] sm:$0xff]
      %5841 = vrot.lane.b32.xlu0 %v5839, 118
      %v5842 = vpop.permute.xlu0 %5841
      %v5843 = vrot.slane %v5842, 4
      %v5844 = vsel %vm774, %v5842, %v5843
      %5846 = vst.msk [vmem:[#allocation4 + $0x80] sm:$0xff] %vm3856, %v5844
      %v5847 = vld [vmem:[#allocation2 + $0x1c] sm:$0xff]
      %5849 = vrot.lane.b32.xlu0 %v5847, 117
      %v5850 = vpop.permute.xlu0 %5849
      %v5851 = vrot.slane %v5850, 4
      %v5852 = vsel %vm805, %v5850, %v5851
      %5854 = vst.msk [vmem:[#allocation4 + $0x88] sm:$0xff] %vm3856, %v5852
      %v5855 = vld [vmem:[#allocation2 + $0x1c] sm:$0xff]
      %v5856 = vld [vmem:[#allocation2 + $0x24] sm:$0xf]
      %5859 = vrot.lane.b32.xlu0 %v5855, 39
      %v5860 = vpop.permute.xlu0 %5859
      %5861 = vrot.lane.b32.xlu0 %v5856, 39
      %v5862 = vpop.permute.xlu0 %5861
      %v5863 = vrot.slane %v5860, 4
      %v5864 = vrot.slane %v5862, 4
      %v5865 = vsel %vm3868, %v5863, %v5864
      %v5866 = vsel %vm837, %v5860, %v5865
      %5868 = vst.msk [vmem:[#allocation4 + $0x90] sm:$0xff] %vm3856, %v5866
      %v5869 = vld [vmem:[#allocation2 + $0x1c] sm:$0xff]
      %v5870 = vld [vmem:[#allocation2 + $0x24] sm:$0xf]
      %5873 = vrot.lane.b32.xlu0 %v5869, 38
      %v5874 = vpop.permute.xlu0 %5873
      %5875 = vrot.lane.b32.xlu0 %v5870, 38
      %v5876 = vpop.permute.xlu0 %5875
      %v5877 = vrot.slane %v5874, 4
      %v5878 = vrot.slane %v5876, 4
      %v5879 = vsel %vm3868, %v5877, %v5878
      %v5880 = vsel %vm869, %v5874, %v5879
      %5882 = vst.msk [vmem:[#allocation4 + $0x98] sm:$0xff] %vm3856, %v5880
      %v5883 = vld [vmem:[#allocation2 + $0x1c] sm:$0xff]
      %v5884 = vld [vmem:[#allocation2 + $0x24] sm:$0xf]
      %5887 = vrot.lane.b32.xlu0 %v5883, 37
      %v5888 = vpop.permute.xlu0 %5887
      %5889 = vrot.lane.b32.xlu0 %v5884, 37
      %v5890 = vpop.permute.xlu0 %5889
      %v5891 = vrot.slane %v5888, 4
      %v5892 = vrot.slane %v5890, 4
      %v5893 = vsel %vm3868, %v5891, %v5892
      %v5894 = vsel %vm900, %v5888, %v5893
      %5896 = vst.msk [vmem:[#allocation4 + $0xa0] sm:$0xff] %vm3856, %v5894
      %v5897 = vld [vmem:[#allocation2 + $0x1c] sm:$0xff]
      %v5898 = vld [vmem:[#allocation2 + $0x24] sm:$0xf]
      %5901 = vrot.lane.b32.xlu0 %v5897, 29
      %v5902 = vpop.permute.xlu0 %5901
      %5903 = vrot.lane.b32.xlu0 %v5898, 29
      %v5904 = vpop.permute.xlu0 %5903
      %v5905 = vrot.slane %v5902, 4
      %v5906 = vrot.slane %v5904, 4
      %v5907 = vsel %vm3868, %v5905, %v5906
      %v5908 = vsel %vm931, %v5902, %v5907
      %5910 = vst.msk [vmem:[#allocation4 + $0xa8] sm:$0xff] %vm3856, %v5908
      %v5911 = vld [vmem:[#allocation2 + $0x1c] sm:$0xff]
      %v5912 = vld [vmem:[#allocation2 + $0x24] sm:$0xf]
      %5915 = vrot.lane.b32.xlu0 %v5911, 28
      %v5916 = vpop.permute.xlu0 %5915
      %5917 = vrot.lane.b32.xlu0 %v5912, 28
      %v5918 = vpop.permute.xlu0 %5917
      %v5919 = vrot.slane %v5916, 4
      %v5920 = vrot.slane %v5918, 4
      %v5921 = vsel %vm3868, %v5919, %v5920
      %v5922 = vsel %vm963, %v5916, %v5921
      %5924 = vst.msk [vmem:[#allocation4 + $0xb0] sm:$0xff] %vm3856, %v5922
      %v5925 = vld [vmem:[#allocation2 + $0x1c] sm:$0xff]
      %v5926 = vld [vmem:[#allocation2 + $0x24] sm:$0xf]
      %5929 = vrot.lane.b32.xlu0 %v5925, 27
      %v5930 = vpop.permute.xlu0 %5929
      %5931 = vrot.lane.b32.xlu0 %v5926, 27
      %v5932 = vpop.permute.xlu0 %5931
      %v5933 = vrot.slane %v5930, 4
      %v5934 = vrot.slane %v5932, 4
      %v5935 = vsel %vm3868, %v5933, %v5934
      %v5936 = vsel %vm995, %v5930, %v5935
      %5938 = vst.msk [vmem:[#allocation4 + $0xb8] sm:$0xff] %vm3856, %v5936
      %v5939 = vld [vmem:[#allocation2 + $0x1c] sm:$0xff]
      %v5940 = vld [vmem:[#allocation2 + $0x24] sm:$0xf]
      %5943 = vrot.lane.b32.xlu0 %v5939, 19
      %v5944 = vpop.permute.xlu0 %5943
      %5945 = vrot.lane.b32.xlu0 %v5940, 19
      %v5946 = vpop.permute.xlu0 %5945
      %v5947 = vrot.slane %v5944, 4
      %v5948 = vrot.slane %v5946, 4
      %v5949 = vsel %vm3868, %v5947, %v5948
      %v5950 = vsel %vm1026, %v5944, %v5949
      %5952 = vst.msk [vmem:[#allocation4 + $0xc0] sm:$0xff] %vm3856, %v5950
      %v5953 = vld [vmem:[#allocation2 + $0x1c] sm:$0xff]
      %v5954 = vld [vmem:[#allocation2 + $0x24] sm:$0xf]
      %5957 = vrot.lane.b32.xlu0 %v5953, 18
      %v5958 = vpop.permute.xlu0 %5957
      %5959 = vrot.lane.b32.xlu0 %v5954, 18
      %v5960 = vpop.permute.xlu0 %5959
      %v5961 = vrot.slane %v5958, 4
      %v5962 = vrot.slane %v5960, 4
      %v5963 = vsel %vm3868, %v5961, %v5962
      %v5964 = vsel %vm1057, %v5958, %v5963
      %5966 = vst.msk [vmem:[#allocation4 + $0xc8] sm:$0xff] %vm3856, %v5964
      %v5967 = vld [vmem:[#allocation2 + $0x1c] sm:$0xff]
      %v5968 = vld [vmem:[#allocation2 + $0x24] sm:$0xf]
      %5971 = vrot.lane.b32.xlu0 %v5967, 17
      %v5972 = vpop.permute.xlu0 %5971
      %5973 = vrot.lane.b32.xlu0 %v5968, 17
      %v5974 = vpop.permute.xlu0 %5973
      %v5975 = vrot.slane %v5972, 4
      %v5976 = vrot.slane %v5974, 4
      %v5977 = vsel %vm3868, %v5975, %v5976
      %v5978 = vsel %vm1089, %v5972, %v5977
      %5980 = vst.msk [vmem:[#allocation4 + $0xd0] sm:$0xff] %vm3856, %v5978
      %v5981 = vld [vmem:[%s2] sm:$0xff]
      %v5982 = vld [vmem:[#allocation4] sm:$0xff]
      %v5983 = vld [vmem:[#allocation4 + $0x8] sm:$0xff]
      %v5984 = vld [vmem:[#allocation4 + $0x10] sm:$0xff]
      %v5985 = vld [vmem:[#allocation4 + $0x18] sm:$0xff]
      %v5986 = vld [vmem:[#allocation4 + $0x20] sm:$0xff]
      %v5987 = vld [vmem:[#allocation4 + $0x28] sm:$0xff]
      %v5988 = vld [vmem:[#allocation4 + $0x30] sm:$0xff]
      %v5989 = vld [vmem:[#allocation4 + $0x38] sm:$0xff]
      %v5990 = vld [vmem:[#allocation4 + $0x40] sm:$0xff]
      %v5991 = vld [vmem:[#allocation4 + $0x48] sm:$0xff]
      %v5992 = vld [vmem:[#allocation4 + $0x50] sm:$0xff]
      %v5993 = vld [vmem:[#allocation4 + $0x58] sm:$0xff]
      %v5994 = vld [vmem:[#allocation4 + $0x60] sm:$0xff]
      %v5995 = vld [vmem:[#allocation4 + $0x68] sm:$0xff]
      %v5996 = vld [vmem:[#allocation4 + $0x70] sm:$0xff]
      %v5997 = vld [vmem:[#allocation4 + $0x78] sm:$0xff]
      %v5998 = vld [vmem:[#allocation4 + $0x80] sm:$0xff]
      %v5999 = vld [vmem:[#allocation4 + $0x88] sm:$0xff]
      %v6000 = vld [vmem:[#allocation4 + $0x90] sm:$0xff]
      %v6001 = vld [vmem:[#allocation4 + $0x98] sm:$0xff]
      %v6002 = vld [vmem:[#allocation4 + $0xa0] sm:$0xff]
      %v6003 = vld [vmem:[#allocation4 + $0xa8] sm:$0xff]
      %v6004 = vld [vmem:[#allocation4 + $0xb0] sm:$0xff]
      %v6005 = vld [vmem:[#allocation4 + $0xb8] sm:$0xff]
      %v6006 = vld [vmem:[#allocation4 + $0xc0] sm:$0xff]
      %v6007 = vld [vmem:[#allocation4 + $0xc8] sm:$0xff]
      %v6008 = vld [vmem:[#allocation4 + $0xd0] sm:$0xff]
      %v6009 = vld [vmem:[%s4] sm:$0xff]
      %6011 = vset.pattern.permute.xlu0 0
      %6012 = vperm.xlu0 %6011, %v6009
      %v6013 = vpop.permute.xlu0 %6012
      %v6016 = vunpack.c.l.b16 %v5981
      %v6017 = vunpack.c.h.b16 %v5981
      %v6018 = vpack.c.b16 %v6016, %v6016
      %v6019 = vpack.c.b16 %v6017, %v6017
      %v6048 = vunpack.c.l.b16 %v5982
      %v6049 = vunpack.c.h.b16 %v5982
      %v6050 = vunpack.c.l.b16 %v5983
      %v6051 = vunpack.c.h.b16 %v5983
      %v6052 = vunpack.c.l.b16 %v5984
      %v6053 = vunpack.c.h.b16 %v5984
      %v6054 = vunpack.c.l.b16 %v5985
      %v6055 = vunpack.c.h.b16 %v5985
      %v6056 = vunpack.c.l.b16 %v5986
      %v6057 = vunpack.c.h.b16 %v5986
      %v6058 = vunpack.c.l.b16 %v5987
      %v6059 = vunpack.c.h.b16 %v5987
      %v6060 = vunpack.c.l.b16 %v5988
      %v6061 = vunpack.c.h.b16 %v5988
      %v6062 = vunpack.c.l.b16 %v5989
      %v6063 = vunpack.c.h.b16 %v5989
      %v6064 = vunpack.c.l.b16 %v5990
      %v6065 = vunpack.c.h.b16 %v5990
      %v6066 = vunpack.c.l.b16 %v5991
      %v6067 = vunpack.c.h.b16 %v5991
      %v6068 = vunpack.c.l.b16 %v5992
      %v6069 = vunpack.c.h.b16 %v5992
      %v6070 = vunpack.c.l.b16 %v5993
      %v6071 = vunpack.c.h.b16 %v5993
      %v6072 = vunpack.c.l.b16 %v5994
      %v6073 = vunpack.c.h.b16 %v5994
      %v6074 = vunpack.c.l.b16 %v5995
      %v6075 = vunpack.c.h.b16 %v5995
      %v6076 = vunpack.c.l.b16 %v5996
      %v6077 = vunpack.c.h.b16 %v5996
      %v6078 = vunpack.c.l.b16 %v5997
      %v6079 = vunpack.c.h.b16 %v5997
      %v6080 = vunpack.c.l.b16 %v5998
      %v6081 = vunpack.c.h.b16 %v5998
      %v6082 = vunpack.c.l.b16 %v5999
      %v6083 = vunpack.c.h.b16 %v5999
      %v6084 = vunpack.c.l.b16 %v6000
      %v6085 = vunpack.c.h.b16 %v6000
      %v6086 = vunpack.c.l.b16 %v6001
      %v6087 = vunpack.c.h.b16 %v6001
      %v6088 = vunpack.c.l.b16 %v6002
      %v6089 = vunpack.c.h.b16 %v6002
      %v6090 = vunpack.c.l.b16 %v6003
      %v6091 = vunpack.c.h.b16 %v6003
      %v6092 = vunpack.c.l.b16 %v6004
      %v6093 = vunpack.c.h.b16 %v6004
      %v6094 = vunpack.c.l.b16 %v6005
      %v6095 = vunpack.c.h.b16 %v6005
      %v6096 = vunpack.c.l.b16 %v6006
      %v6097 = vunpack.c.h.b16 %v6006
      %v6098 = vunpack.c.l.b16 %v6007
      %v6099 = vunpack.c.h.b16 %v6007
      %v6100 = vunpack.c.l.b16 %v6008
      %v6101 = vunpack.c.h.b16 %v6008
      %v6102 = vpack.c.b16 %v6050, %v6048
      %v6103 = vpack.c.b16 %v6051, %v6049
      %v6104 = vpack.c.b16 %v6054, %v6052
      %v6105 = vpack.c.b16 %v6055, %v6053
      %v6106 = vpack.c.b16 %v6058, %v6056
      %v6107 = vpack.c.b16 %v6059, %v6057
      %v6108 = vpack.c.b16 %v6062, %v6060
      %v6109 = vpack.c.b16 %v6063, %v6061
      %v6110 = vpack.c.b16 %v6066, %v6064
      %v6111 = vpack.c.b16 %v6067, %v6065
      %v6112 = vpack.c.b16 %v6070, %v6068
      %v6113 = vpack.c.b16 %v6071, %v6069
      %v6114 = vpack.c.b16 %v6074, %v6072
      %v6115 = vpack.c.b16 %v6075, %v6073
      %v6116 = vpack.c.b16 %v6078, %v6076
      %v6117 = vpack.c.b16 %v6079, %v6077
      %v6118 = vpack.c.b16 %v6082, %v6080
      %v6119 = vpack.c.b16 %v6083, %v6081
      %v6120 = vpack.c.b16 %v6086, %v6084
      %v6121 = vpack.c.b16 %v6087, %v6085
      %v6122 = vpack.c.b16 %v6090, %v6088
      %v6123 = vpack.c.b16 %v6091, %v6089
      %v6124 = vpack.c.b16 %v6094, %v6092
      %v6125 = vpack.c.b16 %v6095, %v6093
      %v6126 = vpack.c.b16 %v6098, %v6096
      %v6127 = vpack.c.b16 %v6099, %v6097
      %v6128 = vpack.c.b16 %v6100, %v6100
      %v6129 = vpack.c.b16 %v6101, %v6101
      %v6157 = vsel %vm4400, %v6019, 0
      %v6160 = vsel %vm3855, %v6128, 0
      %v6163 = vsel %vm3855, %v6129, 0
      %6165 = vmatprep.subr.bf16.mxu0 %v6103
      %6166 = vmatpush1.bf16.msra.mxu0 %v6102
      %6167 = vmatprep.subr.bf16.mxu0 %v6105
      %6168 = vmatpush1.bf16.msra.mxu0 %v6104
      %6169 = vmatprep.subr.bf16.mxu0 %v6107
      %6170 = vmatpush1.bf16.msra.mxu0 %v6106
      %6171 = vmatprep.subr.bf16.mxu0 %v6109
      %6172 = vmatpush1.bf16.msra.mxu0 %v6108
      %6173 = vmatprep.subr.bf16.mxu0 %v6111
      %6174 = vmatpush1.bf16.msra.mxu0 %v6110
      %6175 = vmatprep.subr.bf16.mxu0 %v6113
      %6176 = vmatpush1.bf16.msra.mxu0 %v6112
      %6177 = vmatprep.subr.bf16.mxu0 %v6115
      %6178 = vmatpush1.bf16.msra.mxu0 %v6114
      %6179 = vmatprep.subr.bf16.mxu0 %v6117
      %6180 = vmatpush1.bf16.msra.mxu0 %v6116
      %6181 = vmatprep.subr.bf16.mxu0 %v6119
      %6182 = vmatpush1.bf16.msra.mxu0 %v6118
      %6183 = vmatprep.subr.bf16.mxu0 %v6121
      %6184 = vmatpush1.bf16.msra.mxu0 %v6120
      %6185 = vmatprep.subr.bf16.mxu0 %v6123
      %6186 = vmatpush1.bf16.msra.mxu0 %v6122
      %6187 = vmatprep.subr.bf16.mxu0 %v6125
      %6188 = vmatpush1.bf16.msra.mxu0 %v6124
      %6189 = vmatprep.subr.bf16.mxu0 %v6127
      %6190 = vmatpush1.bf16.msra.mxu0 %v6126
      %6191 = vmatprep.subr.bf16.mxu0 %v6163
      %6192 = vmatpush1.bf16.msra.mxu0 %v6160
      %6193 = vmatprep.subr.bf16.mxu0 0
      %6194 = vmatpush1.bf16.msra.mxu0 0
      %6195 = vmatprep.subr.bf16.mxu0 0
      %6196 = vmatpush1.bf16.msra.mxu0 0
      %6197 = vmatprep.mubr.bf16.mxu0 %v6157
      %6198 = vmatmul.mubr.bf16.gmra.mrb[0].mxu0 %v6018
      %v6199 = vpop.f32.mrb[0].mxu0
      %v6200 = vadd.f32 %v6013, %v6199
      %v6201 = vpop.f32.mrb[0].mxu0
      %v6202 = vadd.f32 %v6013, %v6201
      %v6203 = vpop.f32.mrb[0].mxu0
      %v6204 = vpop.f32.mrb[0].mxu0
      %6205 = vdwg.mxu0
      %v6206 = vld [vmem:[#allocation5 + $0x30] sm:$0xff]
      %v6207 = vld [vmem:[#allocation5 + $0x38] sm:$0xff]
      %v6208 = vadd.f32 %v6200, %v6206
      %v6209 = vadd.f32 %v6202, %v6207
      %v6210 = vmax.f32 %v6208, 0.0
      %v6211 = vmax.f32 %v6209, 0.0
      %6212 = vst [vmem:[%s251 + $0x30] sm:$0xff] %v6210
      %6213 = vst.msk [vmem:[%s251 + $0x38] sm:$0xff] %vm3821, %v6211
      %p6214 = scmp.lt.s32.totalorder %s17, 1
      %s6215 = scalar_select %p6214, %s17, 1
      %s6216 = smul.addr %s6215, 8
      %s6217 = smul.addr %s6216, 8
      %s6218 = scalar_lea.vmem %s6, %s6217
      // Predicated region
      $region45: #{basic_block_forward.1} parent=43 // pred_check
        %p6219 = pneg %p166
      $region46: #{basic_block_forward.1} parent=43 // pred_check_branch
        %6221 = sbr.rel (%p6219) target = $region48
      $region47: #{basic_block_forward.1} parent=43 // pred_region
        _
      $region48: #{basic_block_forward.1} parent=43 // pred_fallthru
        _
    $region44: #{basic_block_forward.1} parent=5 // pred_fallthru
      _
    %p6222 = scmp.le.s32.totalorder 2, %s12
    // Predicated region
    $region49: #{basic_block_forward.1} parent=5 // pred_check
      %p6223 = pneg %p6222
    $region50: #{basic_block_forward.1} parent=5 // pred_check_branch
      %6225 = sbr.rel (%p6223) target = $region52
    $region51: #{basic_block_forward.1} parent=5 // pred_region
      %s6226 = ssub.s32 %s12, 2
      // Predicated region
      $region53: #{basic_block_forward.1} parent=51 // pred_check
        %p6227 = pneg %p172
      $region54: #{basic_block_forward.1} parent=51 // pred_check_branch
        %6229 = sbr.rel (%p6227) target = $region56
      $region55: #{basic_block_forward.1} parent=51 // pred_region
        %p6230 = scmp.lt.s32.totalorder %s18, 1
        %s6231 = scalar_select %p6230, %s18, 1
        %s6232 = smul.addr %s6231, 8
        %s6233 = smul.addr %s6232, 8
        %s6234 = scalar_lea.vmem %s6, %s6233
      $region56: #{basic_block_forward.1} parent=51 // pred_fallthru
        _
    $region52: #{basic_block_forward.1} parent=5 // pred_fallthru
      _
  $region6: #{basic_block_forward.1} parent=0 // loop_footer
    %s16 = sadd.s32 1, %s12
  $region7: #{basic_block_forward.1} parent=0 // loop_footer_branch
    %11 = sbr.rel target = $region3
  $region8: #{basic_block_forward.1} parent=0 // loop_exit
    _

</llo_original>
